<compile_context>
chip_gen: v7x
topology: tpu7x:2x2x1
jax: 0.10.0
libtpu: 0.0.40
codegen_flags: <defaults>
</compile_context>

<pallas_src>
import jax
import jax.numpy as jnp
from jax import lax
from jax.experimental import pallas as pl
from jax.experimental.pallas import tpu as pltpu

# ---------------- shapes consistent with the module (scaled down) ----------------
B = 2            # batch
T = 8            # clip length (frames)
C = 3            # image channels
H = W = 16       # spatial
HW = H * W
D = 32           # feature dim (self._d), divisible by nhead
NHEAD = 8
HEAD_DIM = D // NHEAD
FF = 64          # dim_feedforward (1024 in module; scaled down)
NUM_LAYERS = 2   # TransformerEncoder num_layers
K = 8            # num_clusters in TemporalPooling
NUM_CLASSES = 4
NUM_OUT = NUM_CLASSES + 1
LN_EPS = 1e-5
ATTN_SCALE = 1.0 / float(HEAD_DIM) ** 0.5

NT_DIMS = (((1,), (1,)), ((), ()))   # A @ B.T dot_general dimension numbers

# ---- W32 slab: (N_SEG32, D, 128); each segment is one (D, width<=128) matrix ----
SEG_QKV = (0, 1)     # width 3*D = 96 (per layer)
SEG_WO = (2, 3)      # width D  = 32
SEG_W1 = (4, 5)      # width FF = 64
SEG_WIH = 6          # width 4*D = 128
SEG_WHH = 7          # width 4*D = 128
SEG_WATT = 8         # width K  = 8
N_SEG32 = 9

# ---- VEC slab: (N_VEC_ROWS, 128); each row is one small parameter vector ----
ROW_BQKV = (0, 1)    # width 96
ROW_BO = (2, 3)      # width 32
ROW_LN1W = (4, 5)
ROW_LN1B = (6, 7)
ROW_LN2W = (8, 9)
ROW_LN2B = (10, 11)
ROW_B1 = (12, 13)    # width 64
ROW_B2 = (14, 15)    # width 32
ROW_BLSTM = 16       # width 128  (b_ih + b_hh pre-summed)
ROW_BATT = 17        # width 8
ROW_BFC = 18         # width NUM_OUT
ROW_CENTERS = 24     # 8 rows, width 32   (8-aligned start)
ROW_PE = 32          # 8 rows, width 32   (pe + stem bias folded in)
ROW_WSTEM = 40       # 3 rows, width 32   (stem weight w/ /255 + ImageNet norm folded)
N_VEC_ROWS = 48


# ========================= helpers =========================

def _layer_norm(y, w, b):
    mu = jnp.mean(y, axis=-1, keepdims=True)
    var = jnp.mean((y - mu) ** 2, axis=-1, keepdims=True)
    return (y - mu) * lax.rsqrt(var + LN_EPS) * w + b


# ========================= fused kernel =========================

def fused_forward_kernel(x_ref, w32_ref, w64_ref, vec_ref, wfct_ref, o_ref):
    bb = x_ref.shape[1] // T            # batch elements handled by this grid step
    vec = vec_ref[...]                  # (N_VEC_ROWS, 128)  all small params
    w64 = w64_ref[...]                  # (FF, NUM_LAYERS*D) ffn second weight
    wfct = wfct_ref[...]                # (8, K*D)           final FC (transposed)

    def vrow(r, width):                 # one packed (1, width) parameter row
        return vec[r:r + 1, :width]

    # ---- stage 1+2: GAP over spatial; /255 + ImageNet mean/std folded into the
    #      stem weight; positional encoding (+ stem bias) added from the VEC slab.
    gap = jnp.concatenate(
        [jnp.mean(x_ref[c], axis=-1, keepdims=True) for c in range(C)],
        axis=-1)                                                     # (bb*T, C)
    w_stem = vec[ROW_WSTEM:ROW_WSTEM + C, :D]                        # (C, D)
    pe = vec[ROW_PE:ROW_PE + T, :D]                                  # (T, D)
    pe = pe if bb == 1 else jnp.concatenate([pe] * bb, axis=0)       # (bb*T, D)
    h = jnp.dot(gap, w_stem, preferred_element_type=jnp.float32) + pe

    # ---- stage 3: NUM_LAYERS x post-norm TransformerEncoderLayer (ReLU, eval)
    for l in range(NUM_LAYERS):
        # fused QKV: ONE (bb*T, D) @ (D, 3D) push; 1/sqrt(hd) folded into Q cols.
        wqkv = w32_ref[SEG_QKV[l]][:, :3 * D]
        qkv = (jnp.dot(h, wqkv, preferred_element_type=jnp.float32)
               + vrow(ROW_BQKV[l], 3 * D))                           # (bb*T, 3D)
        ctx_rows = []
        for b in range(bb):
            qkv_b = qkv[b * T:(b + 1) * T, :]
            head_ctx = []
            for hh in range(NHEAD):
                q = qkv_b[:, hh * HEAD_DIM:(hh + 1) * HEAD_DIM]
                k = qkv_b[:, D + hh * HEAD_DIM:D + (hh + 1) * HEAD_DIM]
                v = qkv_b[:, 2 * D + hh * HEAD_DIM:2 * D + (hh + 1) * HEAD_DIM]
                s = lax.dot_general(q, k, NT_DIMS,
                                    preferred_element_type=jnp.float32)  # (T, T)
                p = jax.nn.softmax(s, axis=-1)
                head_ctx.append(
                    jnp.dot(p, v, preferred_element_type=jnp.float32))   # (T, hd)
            ctx_rows.append(jnp.concatenate(head_ctx, axis=-1))      # (T, D)
        ctx = ctx_rows[0] if bb == 1 else jnp.concatenate(ctx_rows, axis=0)
        # single output projection (== concat-heads + proj): ONE (bb*T,D)@(D,D) push
        wo = w32_ref[SEG_WO[l]][:, :D]
        attn = (jnp.dot(ctx, wo, preferred_element_type=jnp.float32)
                + vrow(ROW_BO[l], D))
        h = _layer_norm(h + attn, vrow(ROW_LN1W[l], D), vrow(ROW_LN1B[l], D))
        w1 = w32_ref[SEG_W1[l]][:, :FF]
        ffh = jnp.maximum(
            jnp.dot(h, w1, preferred_element_type=jnp.float32)
            + vrow(ROW_B1[l], FF), 0.0)                              # (bb*T, FF)
        w2 = w64[:, l * D:(l + 1) * D]                               # (FF, D)
        ff = (jnp.dot(ffh, w2, preferred_element_type=jnp.float32)
              + vrow(ROW_B2[l], D))
        h = _layer_norm(h + ff, vrow(ROW_LN2W[l], D), vrow(ROW_LN2B[l], D))

    # ---- stage 4: single-layer LSTM; input projection hoisted out of the
    #      serial recurrence (one (bb*T, D) @ (D, 4D) push up front).
    x_proj = (jnp.dot(h, w32_ref[SEG_WIH], preferred_element_type=jnp.float32)
              + vrow(ROW_BLSTM, 4 * D))                              # (bb*T, 4D)
    whh = w32_ref[SEG_WHH]                                           # (D, 4D)
    watt = w32_ref[SEG_WATT][:, :K]                                  # (D, K)
    centers = vec[ROW_CENTERS:ROW_CENTERS + K, :D]                   # (K, D)
    batt = vrow(ROW_BATT, K)
    bfc = vrow(ROW_BFC, NUM_OUT)

    for b in range(bb):
        h_t = jnp.zeros((1, D), jnp.float32)
        c_t = jnp.zeros((1, D), jnp.float32)
        rows = []
        for t in range(T):   # PyTorch gate order (i, f, g, o); b_ih+b_hh pre-summed
            g = (x_proj[b * T + t:b * T + t + 1, :]
                 + jnp.dot(h_t, whh, preferred_element_type=jnp.float32))  # (1, 4D)
            i_g = jax.nn.sigmoid(g[:, 0 * D:1 * D])
            f_g = jax.nn.sigmoid(g[:, 1 * D:2 * D])
            g_g = jnp.tanh(g[:, 2 * D:3 * D])
            o_g = jax.nn.sigmoid(g[:, 3 * D:4 * D])
            c_t = f_g * c_t + i_g * g_g
            h_t = o_g * jnp.tanh(c_t)
            rows.append(h_t)
        lstm_b = jnp.concatenate(rows, axis=0)                       # (T, D)

        # ---- stage 5: TemporalPooling + global L2-normalize + final FC
        sa = jax.nn.softmax(
            jnp.dot(lstm_b, watt, preferred_element_type=jnp.float32) + batt,
            axis=-1)                                                 # (T, K)
        sa_t = sa.T                                                  # (K, T)
        ssum = jnp.sum(sa_t, axis=1, keepdims=True)                  # (K, 1)
        pooled = (jnp.dot(sa_t, lstm_b, preferred_element_type=jnp.float32)
                  - centers * ssum)                                  # (K, D)
        sq = jnp.sum(pooled * pooled, axis=(0, 1), keepdims=True)    # (1, 1)
        inv_norm = 1.0 / jnp.maximum(jnp.sqrt(sq), 1e-12)
        # row-major flatten (K, D) -> (1, K*D); ONE MXU push against the
        # transposed lane-dense FC weight, scalar L2-normalization applied after.
        pooled_flat = jnp.concatenate(
            [pooled[k:k + 1, :] for k in range(K)], axis=-1)         # (1, K*D)
        logits = lax.dot_general(pooled_flat, wfct, NT_DIMS,
                                 preferred_element_type=jnp.float32)  # (1, 8)
        o_ref[b] = logits[:, :NUM_OUT] * inv_norm + bfc              # (1, NUM_OUT)


# ========================= wrapper =========================

def _default_batch_per_step():
    # v7x has two TensorCores per chip: keep a 2-step "parallel" grid so each
    # batch element lands on its own core.  v5e / v6e are single-core: merge the
    # whole batch into one grid step (no 2nd-step overhead, 2x rows per matmul).
    try:
        kind = jax.devices()[0].device_kind.lower()
    except Exception:
        kind = ""
    return 1 if "v7" in kind else B


def hybrid_forward(x, p, batch_per_step=None):
    # x: (B, T, C, H, W) float32, raw pixel values in [0, 255]
    bb = batch_per_step or _default_batch_per_step()
    steps = B // bb
    # Channel-major pixel layout: block trailing dims (bb*T, HW) are dense
    # (8,128) tiles, so the pixel DMA moves exactly the real bytes.
    xcm = jnp.transpose(x.reshape(B * T, C, HW), (1, 0, 2))          # (C, B*T, HW)

    def const_spec(shape):
        rank = len(shape)
        return pl.BlockSpec(shape, lambda g, _r=rank: (0,) * _r)

    return pl.pallas_call(
        fused_forward_kernel,
        out_shape=jax.ShapeDtypeStruct((B, 1, NUM_OUT), jnp.float32),
        grid_spec=pltpu.PrefetchScalarGridSpec(
            num_scalar_prefetch=0,
            grid=(steps,),
            in_specs=[
                pl.BlockSpec((C, bb * T, HW), lambda g: (0, g, 0)),
                const_spec(p["w32"].shape),
                const_spec(p["w64"].shape),
                const_spec(p["vec"].shape),
                const_spec(p["wfct"].shape),
            ],
            out_specs=pl.BlockSpec((bb, 1, NUM_OUT), lambda g: (g, 0, 0)),
        ),
        compiler_params=pltpu.CompilerParams(
            dimension_semantics=("parallel",)),
    )(xcm, p["w32"], p["w64"], p["vec"], p["wfct"])


# ========================= parameters (natural -> packed slabs) =========================

def make_params():
    key = jax.random.PRNGKey(42)
    ks = iter(jax.random.split(key, 64))

    def init(shape, scale=0.1):
        return (scale * jax.random.normal(next(ks), shape)).astype(jnp.float32)

    # sinusoidal positional encoding (T, D)
    position = jnp.arange(T, dtype=jnp.float32)[:, None]
    div_term = jnp.exp(jnp.arange(0, D, 2, dtype=jnp.float32)
                       * (-jnp.log(10000.0) / D))
    pe = jnp.zeros((T, D), jnp.float32)
    pe = pe.at[:, 0::2].set(jnp.sin(position * div_term))
    pe = pe.at[:, 1::2].set(jnp.cos(position * div_term))

    # stem linear with /255 and ImageNet mean/std folded in algebraically:
    #   ((gap/255 - mean)/std) @ W + b == gap @ (W/(255*std)) + (b - (mean/std)@W)
    mean = jnp.array([0.485, 0.456, 0.406], jnp.float32)
    std = jnp.array([0.229, 0.224, 0.225], jnp.float32)
    w_stem = init((C, D))
    b_stem = init((1, D))
    w_stem_eff = w_stem / (255.0 * std[:, None])
    b_stem_eff = b_stem - (mean / std)[None, :] @ w_stem

    # transformer encoder layers (natural orientations)
    wqkv = [init((D, 3 * D)) for _ in range(NUM_LAYERS)]
    bqkv = [init((3 * D,)) for _ in range(NUM_LAYERS)]
    wo = [init((D, D)) for _ in range(NUM_LAYERS)]
    bo = [init((D,)) for _ in range(NUM_LAYERS)]
    w1 = [init((D, FF)) for _ in range(NUM_LAYERS)]
    b1 = [init((FF,)) for _ in range(NUM_LAYERS)]
    w2 = [init((FF, D)) for _ in range(NUM_LAYERS)]
    b2 = [init((D,)) for _ in range(NUM_LAYERS)]
    ln1w = [jnp.ones((D,), jnp.float32) for _ in range(NUM_LAYERS)]
    ln1b = [jnp.zeros((D,), jnp.float32) for _ in range(NUM_LAYERS)]
    ln2w = [jnp.ones((D,), jnp.float32) for _ in range(NUM_LAYERS)]
    ln2b = [jnp.zeros((D,), jnp.float32) for _ in range(NUM_LAYERS)]
    # fold the 1/sqrt(head_dim) attention scale into the Q projection
    for l in range(NUM_LAYERS):
        wqkv[l] = wqkv[l].at[:, :D].multiply(ATTN_SCALE)
        bqkv[l] = bqkv[l].at[:D].multiply(ATTN_SCALE)

    # LSTM (single layer); PyTorch keeps two biases, summed at pack time below.
    wih = init((D, 4 * D))
    whh = init((D, 4 * D))
    b_ih = init((4 * D,))
    b_hh = init((4 * D,))

    # temporal pooling + final FC
    watt = init((D, K))
    batt = init((K,))
    centers = jax.random.normal(next(ks), (K, D)).astype(jnp.float32)
    wfc = init((K * D, NUM_OUT))
    bfc = init((NUM_OUT,))

    # ---------------- pack into slabs ----------------
    def seg128(wmat):                      # (D, width) -> (D, 128)
        return jnp.pad(wmat, ((0, 0), (0, 128 - wmat.shape[1])))

    w32 = jnp.stack(
        [seg128(wqkv[0]), seg128(wqkv[1]),
         seg128(wo[0]), seg128(wo[1]),
         seg128(w1[0]), seg128(w1[1]),
         seg128(wih), seg128(whh), seg128(watt)], axis=0)            # (9, D, 128)

    w64 = jnp.concatenate([w2[0], w2[1]], axis=1)                    # (FF, 2*D)

    def row128(v):                          # flatten + pad to a 128-lane row
        v = jnp.reshape(v, (-1,)).astype(jnp.float32)
        return jnp.pad(v, (0, 128 - v.shape[0]))

    rows = [jnp.zeros((128,), jnp.float32) for _ in range(N_VEC_ROWS)]
    for l in range(NUM_LAYERS):
        rows[ROW_BQKV[l]] = row128(bqkv[l])
        rows[ROW_BO[l]] = row128(bo[l])
        rows[ROW_LN1W[l]] = row128(ln1w[l])
        rows[ROW_LN1B[l]] = row128(ln1b[l])
        rows[ROW_LN2W[l]] = row128(ln2w[l])
        rows[ROW_LN2B[l]] = row128(ln2b[l])
        rows[ROW_B1[l]] = row128(b1[l])
        rows[ROW_B2[l]] = row128(b2[l])
    rows[ROW_BLSTM] = row128(b_ih + b_hh)       # nn.LSTM's two biases pre-summed
    rows[ROW_BATT] = row128(batt)
    rows[ROW_BFC] = row128(bfc)
    for k in range(K):
        rows[ROW_CENTERS + k] = row128(centers[k])
    pe_b = pe + b_stem_eff                      # stem bias folded into PE rows
    for t in range(T):
        rows[ROW_PE + t] = row128(pe_b[t])
    for c in range(C):
        rows[ROW_WSTEM + c] = row128(w_stem_eff[c])
    vec = jnp.stack(rows, axis=0)                                    # (48, 128)

    wfct = jnp.pad(wfc.T, ((0, 8 - NUM_OUT), (0, 0)))                # (8, K*D)

    return dict(w32=w32, w64=w64, vec=vec, wfct=wfct)


# ========================= driver =========================

if __name__ == "__main__":
    params = make_params()
    x = jax.random.uniform(jax.random.PRNGKey(0), (B, T, C, H, W),
                           minval=0.0, maxval=255.0, dtype=jnp.float32)
    fwd = jax.jit(hybrid_forward)
    out = jax.block_until_ready(fwd(x, params))
    assert out.shape == (B, 1, NUM_OUT), out.shape
    assert bool(jnp.all(jnp.isfinite(out)))
    print("KERNEL_OK")
</pallas_src>

<mosaic_0001>
module attributes {stable_mosaic.version = 11 : i64} {
  func.func @fused_forward_kernel(%arg0: i32, %arg1: memref<3x16x256xf32, #tpu.memory_space<vmem>>, %arg2: memref<9x32x128xf32, #tpu.memory_space<vmem>>, %arg3: memref<64x64xf32, #tpu.memory_space<vmem>>, %arg4: memref<48x128xf32, #tpu.memory_space<vmem>>, %arg5: memref<8x256xf32, #tpu.memory_space<vmem>>, %arg6: memref<2x1x5xf32, #tpu.memory_space<vmem>>) attributes {dimension_semantics = [#tpu.dimension_semantics<parallel>], iteration_bounds = array<i64: 1>, scalar_prefetch = 0 : i64, scratch_operands = 0 : i64, tpu.core_type = #tpu.core_type<tc>, window_params = [{transform_indices = @transform_0, window_bounds = array<i64: 3, 16, 256>}, {pipeline_mode = #tpu.pipeline_mode<synchronous>, transform_indices = @transform_1, window_bounds = array<i64: 9, 32, 128>}, {pipeline_mode = #tpu.pipeline_mode<synchronous>, transform_indices = @transform_2, window_bounds = array<i64: 64, 64>}, {pipeline_mode = #tpu.pipeline_mode<synchronous>, transform_indices = @transform_3, window_bounds = array<i64: 48, 128>}, {pipeline_mode = #tpu.pipeline_mode<synchronous>, transform_indices = @transform_4, window_bounds = array<i64: 8, 256>}, {transform_indices = @transform_5, window_bounds = array<i64: 2, 1, 5>}]} {
    %c0 = arith.constant 0 : index
    %c0_0 = arith.constant 0 : index
    %0 = vector.load %arg4[%c0, %c0_0] : memref<48x128xf32, #tpu.memory_space<vmem>>, vector<48x128xf32>
    %c0_1 = arith.constant 0 : index
    %c0_2 = arith.constant 0 : index
    %1 = vector.load %arg3[%c0_1, %c0_2] : memref<64x64xf32, #tpu.memory_space<vmem>>, vector<64x64xf32>
    %c0_3 = arith.constant 0 : index
    %c0_4 = arith.constant 0 : index
    %2 = vector.load %arg5[%c0_3, %c0_4] : memref<8x256xf32, #tpu.memory_space<vmem>>, vector<8x256xf32>
    %c0_5 = arith.constant 0 : index
    %c0_6 = arith.constant 0 : index
    %c0_7 = arith.constant 0 : index
    %3 = vector.load %arg1[%c0_5, %c0_6, %c0_7] : memref<3x16x256xf32, #tpu.memory_space<vmem>>, vector<1x16x256xf32>
    %4 = vector.shape_cast %3 : vector<1x16x256xf32> to vector<16x256xf32>
    %cst = arith.constant dense<0.000000e+00> : vector<16xf32>
    %5 = vector.multi_reduction <add>, %4, %cst [1] : vector<16x256xf32> to vector<16xf32>
    %6 = vector.shape_cast %5 : vector<16xf32> to vector<16x1xf32>
    %cst_8 = arith.constant 2.560000e+02 : f32
    %7 = vector.broadcast %cst_8 : f32 to vector<16x1xf32>
    %8 = arith.divf %6, %7 : vector<16x1xf32>
    %c1 = arith.constant 1 : index
    %c0_9 = arith.constant 0 : index
    %c0_10 = arith.constant 0 : index
    %9 = vector.load %arg1[%c1, %c0_9, %c0_10] : memref<3x16x256xf32, #tpu.memory_space<vmem>>, vector<1x16x256xf32>
    %10 = vector.shape_cast %9 : vector<1x16x256xf32> to vector<16x256xf32>
    %cst_11 = arith.constant dense<0.000000e+00> : vector<16xf32>
    %11 = vector.multi_reduction <add>, %10, %cst_11 [1] : vector<16x256xf32> to vector<16xf32>
    %12 = vector.shape_cast %11 : vector<16xf32> to vector<16x1xf32>
    %cst_12 = arith.constant 2.560000e+02 : f32
    %13 = vector.broadcast %cst_12 : f32 to vector<16x1xf32>
    %14 = arith.divf %12, %13 : vector<16x1xf32>
    %c2 = arith.constant 2 : index
    %c0_13 = arith.constant 0 : index
    %c0_14 = arith.constant 0 : index
    %15 = vector.load %arg1[%c2, %c0_13, %c0_14] : memref<3x16x256xf32, #tpu.memory_space<vmem>>, vector<1x16x256xf32>
    %16 = vector.shape_cast %15 : vector<1x16x256xf32> to vector<16x256xf32>
    %cst_15 = arith.constant dense<0.000000e+00> : vector<16xf32>
    %17 = vector.multi_reduction <add>, %16, %cst_15 [1] : vector<16x256xf32> to vector<16xf32>
    %18 = vector.shape_cast %17 : vector<16xf32> to vector<16x1xf32>
    %cst_16 = arith.constant 2.560000e+02 : f32
    %19 = vector.broadcast %cst_16 : f32 to vector<16x1xf32>
    %20 = arith.divf %18, %19 : vector<16x1xf32>
    %21 = tpu.concatenate %8, %14, %20 in 1 : vector<16x1xf32>, vector<16x1xf32>, vector<16x1xf32> -> vector<16x3xf32>
    %22 = vector.extract_strided_slice %0 {offsets = [40, 0], sizes = [3, 32], strides = [1, 1]} : vector<48x128xf32> to vector<3x32xf32>
    %23 = vector.extract_strided_slice %0 {offsets = [32, 0], sizes = [8, 32], strides = [1, 1]} : vector<48x128xf32> to vector<8x32xf32>
    %24 = tpu.concatenate %23, %23 in 0 : vector<8x32xf32>, vector<8x32xf32> -> vector<16x32xf32>
    %cst_17 = arith.constant dense<0.000000e+00> : vector<16x32xf32>
    %25 = tpu.matmul %21, %22, %cst_17 {dimension_numbers = #tpu.dot_dimension_numbers<[1], [0], [0], [1], [0, 0, 1, 1], [], []>} : vector<16x3xf32>, vector<3x32xf32>, vector<16x32xf32> -> vector<16x32xf32>
    %26 = arith.addf %25, %24 : vector<16x32xf32>
    %c0_18 = arith.constant 0 : index
    %c0_19 = arith.constant 0 : index
    %c0_20 = arith.constant 0 : index
    %27 = vector.load %arg2[%c0_18, %c0_19, %c0_20] : memref<9x32x128xf32, #tpu.memory_space<vmem>>, vector<1x32x128xf32>
    %28 = vector.shape_cast %27 : vector<1x32x128xf32> to vector<32x128xf32>
    %29 = vector.extract_strided_slice %28 {offsets = [0, 0], sizes = [32, 96], strides = [1, 1]} : vector<32x128xf32> to vector<32x96xf32>
    %cst_21 = arith.constant dense<0.000000e+00> : vector<16x96xf32>
    %30 = tpu.matmul %26, %29, %cst_21 {dimension_numbers = #tpu.dot_dimension_numbers<[1], [0], [0], [1], [0, 0, 1, 1], [], []>} : vector<16x32xf32>, vector<32x96xf32>, vector<16x96xf32> -> vector<16x96xf32>
    %31 = vector.extract_strided_slice %0 {offsets = [0, 0], sizes = [1, 96], strides = [1, 1]} : vector<48x128xf32> to vector<1x96xf32>
    %32 = vector.broadcast %31 : vector<1x96xf32> to vector<16x96xf32>
    %33 = arith.addf %30, %32 : vector<16x96xf32>
    %34 = vector.extract_strided_slice %33 {offsets = [0, 0], sizes = [8, 96], strides = [1, 1]} : vector<16x96xf32> to vector<8x96xf32>
    %35 = vector.extract_strided_slice %34 {offsets = [0, 0], sizes = [8, 4], strides = [1, 1]} : vector<8x96xf32> to vector<8x4xf32>
    %36 = vector.extract_strided_slice %34 {offsets = [0, 32], sizes = [8, 4], strides = [1, 1]} : vector<8x96xf32> to vector<8x4xf32>
    %37 = vector.extract_strided_slice %34 {offsets = [0, 64], sizes = [8, 4], strides = [1, 1]} : vector<8x96xf32> to vector<8x4xf32>
    %cst_22 = arith.constant dense<0.000000e+00> : vector<8x8xf32>
    %38 = tpu.matmul %35, %36, %cst_22 {dimension_numbers = #tpu.dot_dimension_numbers<[1], [1], [0], [0], [0, 0, 1, 0], [], []>} : vector<8x4xf32>, vector<8x4xf32>, vector<8x8xf32> -> vector<8x8xf32>
    %cst_23 = arith.constant dense<0xFF800000> : vector<8xf32>
    %39 = vector.multi_reduction <maximumf>, %38, %cst_23 [1] : vector<8x8xf32> to vector<8xf32>
    %cst_24 = arith.constant 0xFF800000 : f32
    %40 = vector.broadcast %cst_24 : f32 to vector<8xf32>
    %41 = arith.maximumf %40, %39 : vector<8xf32>
    %42 = vector.shape_cast %41 : vector<8xf32> to vector<8x1xf32>
    %43 = vector.broadcast %42 : vector<8x1xf32> to vector<8x8xf32>
    %44 = arith.subf %38, %43 : vector<8x8xf32>
    %45 = math.exp %44 : vector<8x8xf32>
    %cst_25 = arith.constant dense<0.000000e+00> : vector<8xf32>
    %46 = vector.multi_reduction <add>, %45, %cst_25 [1] : vector<8x8xf32> to vector<8xf32>
    %47 = vector.shape_cast %46 : vector<8xf32> to vector<8x1xf32>
    %48 = vector.broadcast %47 : vector<8x1xf32> to vector<8x8xf32>
    %49 = arith.divf %45, %48 : vector<8x8xf32>
    %cst_26 = arith.constant dense<0.000000e+00> : vector<8x4xf32>
    %50 = tpu.matmul %49, %37, %cst_26 {dimension_numbers = #tpu.dot_dimension_numbers<[1], [0], [0], [1], [0, 0, 1, 1], [], []>} : vector<8x8xf32>, vector<8x4xf32>, vector<8x4xf32> -> vector<8x4xf32>
    %51 = vector.extract_strided_slice %34 {offsets = [0, 4], sizes = [8, 4], strides = [1, 1]} : vector<8x96xf32> to vector<8x4xf32>
    %52 = vector.extract_strided_slice %34 {offsets = [0, 36], sizes = [8, 4], strides = [1, 1]} : vector<8x96xf32> to vector<8x4xf32>
    %53 = vector.extract_strided_slice %34 {offsets = [0, 68], sizes = [8, 4], strides = [1, 1]} : vector<8x96xf32> to vector<8x4xf32>
    %cst_27 = arith.constant dense<0.000000e+00> : vector<8x8xf32>
    %54 = tpu.matmul %51, %52, %cst_27 {dimension_numbers = #tpu.dot_dimension_numbers<[1], [1], [0], [0], [0, 0, 1, 0], [], []>} : vector<8x4xf32>, vector<8x4xf32>, vector<8x8xf32> -> vector<8x8xf32>
    %cst_28 = arith.constant dense<0xFF800000> : vector<8xf32>
    %55 = vector.multi_reduction <maximumf>, %54, %cst_28 [1] : vector<8x8xf32> to vector<8xf32>
    %cst_29 = arith.constant 0xFF800000 : f32
    %56 = vector.broadcast %cst_29 : f32 to vector<8xf32>
    %57 = arith.maximumf %56, %55 : vector<8xf32>
    %58 = vector.shape_cast %57 : vector<8xf32> to vector<8x1xf32>
    %59 = vector.broadcast %58 : vector<8x1xf32> to vector<8x8xf32>
    %60 = arith.subf %54, %59 : vector<8x8xf32>
    %61 = math.exp %60 : vector<8x8xf32>
    %cst_30 = arith.constant dense<0.000000e+00> : vector<8xf32>
    %62 = vector.multi_reduction <add>, %61, %cst_30 [1] : vector<8x8xf32> to vector<8xf32>
    %63 = vector.shape_cast %62 : vector<8xf32> to vector<8x1xf32>
    %64 = vector.broadcast %63 : vector<8x1xf32> to vector<8x8xf32>
    %65 = arith.divf %61, %64 : vector<8x8xf32>
    %cst_31 = arith.constant dense<0.000000e+00> : vector<8x4xf32>
    %66 = tpu.matmul %65, %53, %cst_31 {dimension_numbers = #tpu.dot_dimension_numbers<[1], [0], [0], [1], [0, 0, 1, 1], [], []>} : vector<8x8xf32>, vector<8x4xf32>, vector<8x4xf32> -> vector<8x4xf32>
    %67 = vector.extract_strided_slice %34 {offsets = [0, 8], sizes = [8, 4], strides = [1, 1]} : vector<8x96xf32> to vector<8x4xf32>
    %68 = vector.extract_strided_slice %34 {offsets = [0, 40], sizes = [8, 4], strides = [1, 1]} : vector<8x96xf32> to vector<8x4xf32>
    %69 = vector.extract_strided_slice %34 {offsets = [0, 72], sizes = [8, 4], strides = [1, 1]} : vector<8x96xf32> to vector<8x4xf32>
    %cst_32 = arith.constant dense<0.000000e+00> : vector<8x8xf32>
    %70 = tpu.matmul %67, %68, %cst_32 {dimension_numbers = #tpu.dot_dimension_numbers<[1], [1], [0], [0], [0, 0, 1, 0], [], []>} : vector<8x4xf32>, vector<8x4xf32>, vector<8x8xf32> -> vector<8x8xf32>
    %cst_33 = arith.constant dense<0xFF800000> : vector<8xf32>
    %71 = vector.multi_reduction <maximumf>, %70, %cst_33 [1] : vector<8x8xf32> to vector<8xf32>
    %cst_34 = arith.constant 0xFF800000 : f32
    %72 = vector.broadcast %cst_34 : f32 to vector<8xf32>
    %73 = arith.maximumf %72, %71 : vector<8xf32>
    %74 = vector.shape_cast %73 : vector<8xf32> to vector<8x1xf32>
    %75 = vector.broadcast %74 : vector<8x1xf32> to vector<8x8xf32>
    %76 = arith.subf %70, %75 : vector<8x8xf32>
    %77 = math.exp %76 : vector<8x8xf32>
    %cst_35 = arith.constant dense<0.000000e+00> : vector<8xf32>
    %78 = vector.multi_reduction <add>, %77, %cst_35 [1] : vector<8x8xf32> to vector<8xf32>
    %79 = vector.shape_cast %78 : vector<8xf32> to vector<8x1xf32>
    %80 = vector.broadcast %79 : vector<8x1xf32> to vector<8x8xf32>
    %81 = arith.divf %77, %80 : vector<8x8xf32>
    %cst_36 = arith.constant dense<0.000000e+00> : vector<8x4xf32>
    %82 = tpu.matmul %81, %69, %cst_36 {dimension_numbers = #tpu.dot_dimension_numbers<[1], [0], [0], [1], [0, 0, 1, 1], [], []>} : vector<8x8xf32>, vector<8x4xf32>, vector<8x4xf32> -> vector<8x4xf32>
    %83 = vector.extract_strided_slice %34 {offsets = [0, 12], sizes = [8, 4], strides = [1, 1]} : vector<8x96xf32> to vector<8x4xf32>
    %84 = vector.extract_strided_slice %34 {offsets = [0, 44], sizes = [8, 4], strides = [1, 1]} : vector<8x96xf32> to vector<8x4xf32>
    %85 = vector.extract_strided_slice %34 {offsets = [0, 76], sizes = [8, 4], strides = [1, 1]} : vector<8x96xf32> to vector<8x4xf32>
    %cst_37 = arith.constant dense<0.000000e+00> : vector<8x8xf32>
    %86 = tpu.matmul %83, %84, %cst_37 {dimension_numbers = #tpu.dot_dimension_numbers<[1], [1], [0], [0], [0, 0, 1, 0], [], []>} : vector<8x4xf32>, vector<8x4xf32>, vector<8x8xf32> -> vector<8x8xf32>
    %cst_38 = arith.constant dense<0xFF800000> : vector<8xf32>
    %87 = vector.multi_reduction <maximumf>, %86, %cst_38 [1] : vector<8x8xf32> to vector<8xf32>
    %cst_39 = arith.constant 0xFF800000 : f32
    %88 = vector.broadcast %cst_39 : f32 to vector<8xf32>
    %89 = arith.maximumf %88, %87 : vector<8xf32>
    %90 = vector.shape_cast %89 : vector<8xf32> to vector<8x1xf32>
    %91 = vector.broadcast %90 : vector<8x1xf32> to vector<8x8xf32>
    %92 = arith.subf %86, %91 : vector<8x8xf32>
    %93 = math.exp %92 : vector<8x8xf32>
    %cst_40 = arith.constant dense<0.000000e+00> : vector<8xf32>
    %94 = vector.multi_reduction <add>, %93, %cst_40 [1] : vector<8x8xf32> to vector<8xf32>
    %95 = vector.shape_cast %94 : vector<8xf32> to vector<8x1xf32>
    %96 = vector.broadcast %95 : vector<8x1xf32> to vector<8x8xf32>
    %97 = arith.divf %93, %96 : vector<8x8xf32>
    %cst_41 = arith.constant dense<0.000000e+00> : vector<8x4xf32>
    %98 = tpu.matmul %97, %85, %cst_41 {dimension_numbers = #tpu.dot_dimension_numbers<[1], [0], [0], [1], [0, 0, 1, 1], [], []>} : vector<8x8xf32>, vector<8x4xf32>, vector<8x4xf32> -> vector<8x4xf32>
    %99 = vector.extract_strided_slice %34 {offsets = [0, 16], sizes = [8, 4], strides = [1, 1]} : vector<8x96xf32> to vector<8x4xf32>
    %100 = vector.extract_strided_slice %34 {offsets = [0, 48], sizes = [8, 4], strides = [1, 1]} : vector<8x96xf32> to vector<8x4xf32>
    %101 = vector.extract_strided_slice %34 {offsets = [0, 80], sizes = [8, 4], strides = [1, 1]} : vector<8x96xf32> to vector<8x4xf32>
    %cst_42 = arith.constant dense<0.000000e+00> : vector<8x8xf32>
    %102 = tpu.matmul %99, %100, %cst_42 {dimension_numbers = #tpu.dot_dimension_numbers<[1], [1], [0], [0], [0, 0, 1, 0], [], []>} : vector<8x4xf32>, vector<8x4xf32>, vector<8x8xf32> -> vector<8x8xf32>
    %cst_43 = arith.constant dense<0xFF800000> : vector<8xf32>
    %103 = vector.multi_reduction <maximumf>, %102, %cst_43 [1] : vector<8x8xf32> to vector<8xf32>
    %cst_44 = arith.constant 0xFF800000 : f32
    %104 = vector.broadcast %cst_44 : f32 to vector<8xf32>
    %105 = arith.maximumf %104, %103 : vector<8xf32>
    %106 = vector.shape_cast %105 : vector<8xf32> to vector<8x1xf32>
    %107 = vector.broadcast %106 : vector<8x1xf32> to vector<8x8xf32>
    %108 = arith.subf %102, %107 : vector<8x8xf32>
    %109 = math.exp %108 : vector<8x8xf32>
    %cst_45 = arith.constant dense<0.000000e+00> : vector<8xf32>
    %110 = vector.multi_reduction <add>, %109, %cst_45 [1] : vector<8x8xf32> to vector<8xf32>
    %111 = vector.shape_cast %110 : vector<8xf32> to vector<8x1xf32>
    %112 = vector.broadcast %111 : vector<8x1xf32> to vector<8x8xf32>
    %113 = arith.divf %109, %112 : vector<8x8xf32>
    %cst_46 = arith.constant dense<0.000000e+00> : vector<8x4xf32>
    %114 = tpu.matmul %113, %101, %cst_46 {dimension_numbers = #tpu.dot_dimension_numbers<[1], [0], [0], [1], [0, 0, 1, 1], [], []>} : vector<8x8xf32>, vector<8x4xf32>, vector<8x4xf32> -> vector<8x4xf32>
    %115 = vector.extract_strided_slice %34 {offsets = [0, 20], sizes = [8, 4], strides = [1, 1]} : vector<8x96xf32> to vector<8x4xf32>
    %116 = vector.extract_strided_slice %34 {offsets = [0, 52], sizes = [8, 4], strides = [1, 1]} : vector<8x96xf32> to vector<8x4xf32>
    %117 = vector.extract_strided_slice %34 {offsets = [0, 84], sizes = [8, 4], strides = [1, 1]} : vector<8x96xf32> to vector<8x4xf32>
    %cst_47 = arith.constant dense<0.000000e+00> : vector<8x8xf32>
    %118 = tpu.matmul %115, %116, %cst_47 {dimension_numbers = #tpu.dot_dimension_numbers<[1], [1], [0], [0], [0, 0, 1, 0], [], []>} : vector<8x4xf32>, vector<8x4xf32>, vector<8x8xf32> -> vector<8x8xf32>
    %cst_48 = arith.constant dense<0xFF800000> : vector<8xf32>
    %119 = vector.multi_reduction <maximumf>, %118, %cst_48 [1] : vector<8x8xf32> to vector<8xf32>
    %cst_49 = arith.constant 0xFF800000 : f32
    %120 = vector.broadcast %cst_49 : f32 to vector<8xf32>
    %121 = arith.maximumf %120, %119 : vector<8xf32>
    %122 = vector.shape_cast %121 : vector<8xf32> to vector<8x1xf32>
    %123 = vector.broadcast %122 : vector<8x1xf32> to vector<8x8xf32>
    %124 = arith.subf %118, %123 : vector<8x8xf32>
    %125 = math.exp %124 : vector<8x8xf32>
    %cst_50 = arith.constant dense<0.000000e+00> : vector<8xf32>
    %126 = vector.multi_reduction <add>, %125, %cst_50 [1] : vector<8x8xf32> to vector<8xf32>
    %127 = vector.shape_cast %126 : vector<8xf32> to vector<8x1xf32>
    %128 = vector.broadcast %127 : vector<8x1xf32> to vector<8x8xf32>
    %129 = arith.divf %125, %128 : vector<8x8xf32>
    %cst_51 = arith.constant dense<0.000000e+00> : vector<8x4xf32>
    %130 = tpu.matmul %129, %117, %cst_51 {dimension_numbers = #tpu.dot_dimension_numbers<[1], [0], [0], [1], [0, 0, 1, 1], [], []>} : vector<8x8xf32>, vector<8x4xf32>, vector<8x4xf32> -> vector<8x4xf32>
    %131 = vector.extract_strided_slice %34 {offsets = [0, 24], sizes = [8, 4], strides = [1, 1]} : vector<8x96xf32> to vector<8x4xf32>
    %132 = vector.extract_strided_slice %34 {offsets = [0, 56], sizes = [8, 4], strides = [1, 1]} : vector<8x96xf32> to vector<8x4xf32>
    %133 = vector.extract_strided_slice %34 {offsets = [0, 88], sizes = [8, 4], strides = [1, 1]} : vector<8x96xf32> to vector<8x4xf32>
    %cst_52 = arith.constant dense<0.000000e+00> : vector<8x8xf32>
    %134 = tpu.matmul %131, %132, %cst_52 {dimension_numbers = #tpu.dot_dimension_numbers<[1], [1], [0], [0], [0, 0, 1, 0], [], []>} : vector<8x4xf32>, vector<8x4xf32>, vector<8x8xf32> -> vector<8x8xf32>
    %cst_53 = arith.constant dense<0xFF800000> : vector<8xf32>
    %135 = vector.multi_reduction <maximumf>, %134, %cst_53 [1] : vector<8x8xf32> to vector<8xf32>
    %cst_54 = arith.constant 0xFF800000 : f32
    %136 = vector.broadcast %cst_54 : f32 to vector<8xf32>
    %137 = arith.maximumf %136, %135 : vector<8xf32>
    %138 = vector.shape_cast %137 : vector<8xf32> to vector<8x1xf32>
    %139 = vector.broadcast %138 : vector<8x1xf32> to vector<8x8xf32>
    %140 = arith.subf %134, %139 : vector<8x8xf32>
    %141 = math.exp %140 : vector<8x8xf32>
    %cst_55 = arith.constant dense<0.000000e+00> : vector<8xf32>
    %142 = vector.multi_reduction <add>, %141, %cst_55 [1] : vector<8x8xf32> to vector<8xf32>
    %143 = vector.shape_cast %142 : vector<8xf32> to vector<8x1xf32>
    %144 = vector.broadcast %143 : vector<8x1xf32> to vector<8x8xf32>
    %145 = arith.divf %141, %144 : vector<8x8xf32>
    %cst_56 = arith.constant dense<0.000000e+00> : vector<8x4xf32>
    %146 = tpu.matmul %145, %133, %cst_56 {dimension_numbers = #tpu.dot_dimension_numbers<[1], [0], [0], [1], [0, 0, 1, 1], [], []>} : vector<8x8xf32>, vector<8x4xf32>, vector<8x4xf32> -> vector<8x4xf32>
    %147 = vector.extract_strided_slice %34 {offsets = [0, 28], sizes = [8, 4], strides = [1, 1]} : vector<8x96xf32> to vector<8x4xf32>
    %148 = vector.extract_strided_slice %34 {offsets = [0, 60], sizes = [8, 4], strides = [1, 1]} : vector<8x96xf32> to vector<8x4xf32>
    %149 = vector.extract_strided_slice %34 {offsets = [0, 92], sizes = [8, 4], strides = [1, 1]} : vector<8x96xf32> to vector<8x4xf32>
    %cst_57 = arith.constant dense<0.000000e+00> : vector<8x8xf32>
    %150 = tpu.matmul %147, %148, %cst_57 {dimension_numbers = #tpu.dot_dimension_numbers<[1], [1], [0], [0], [0, 0, 1, 0], [], []>} : vector<8x4xf32>, vector<8x4xf32>, vector<8x8xf32> -> vector<8x8xf32>
    %cst_58 = arith.constant dense<0xFF800000> : vector<8xf32>
    %151 = vector.multi_reduction <maximumf>, %150, %cst_58 [1] : vector<8x8xf32> to vector<8xf32>
    %cst_59 = arith.constant 0xFF800000 : f32
    %152 = vector.broadcast %cst_59 : f32 to vector<8xf32>
    %153 = arith.maximumf %152, %151 : vector<8xf32>
    %154 = vector.shape_cast %153 : vector<8xf32> to vector<8x1xf32>
    %155 = vector.broadcast %154 : vector<8x1xf32> to vector<8x8xf32>
    %156 = arith.subf %150, %155 : vector<8x8xf32>
    %157 = math.exp %156 : vector<8x8xf32>
    %cst_60 = arith.constant dense<0.000000e+00> : vector<8xf32>
    %158 = vector.multi_reduction <add>, %157, %cst_60 [1] : vector<8x8xf32> to vector<8xf32>
    %159 = vector.shape_cast %158 : vector<8xf32> to vector<8x1xf32>
    %160 = vector.broadcast %159 : vector<8x1xf32> to vector<8x8xf32>
    %161 = arith.divf %157, %160 : vector<8x8xf32>
    %cst_61 = arith.constant dense<0.000000e+00> : vector<8x4xf32>
    %162 = tpu.matmul %161, %149, %cst_61 {dimension_numbers = #tpu.dot_dimension_numbers<[1], [0], [0], [1], [0, 0, 1, 1], [], []>} : vector<8x8xf32>, vector<8x4xf32>, vector<8x4xf32> -> vector<8x4xf32>
    %163 = tpu.concatenate %50, %66, %82, %98, %114, %130, %146, %162 in 1 : vector<8x4xf32>, vector<8x4xf32>, vector<8x4xf32>, vector<8x4xf32>, vector<8x4xf32>, vector<8x4xf32>, vector<8x4xf32>, vector<8x4xf32> -> vector<8x32xf32>
    %164 = vector.extract_strided_slice %33 {offsets = [8, 0], sizes = [8, 96], strides = [1, 1]} : vector<16x96xf32> to vector<8x96xf32>
    %165 = vector.extract_strided_slice %164 {offsets = [0, 0], sizes = [8, 4], strides = [1, 1]} : vector<8x96xf32> to vector<8x4xf32>
    %166 = vector.extract_strided_slice %164 {offsets = [0, 32], sizes = [8, 4], strides = [1, 1]} : vector<8x96xf32> to vector<8x4xf32>
    %167 = vector.extract_strided_slice %164 {offsets = [0, 64], sizes = [8, 4], strides = [1, 1]} : vector<8x96xf32> to vector<8x4xf32>
    %cst_62 = arith.constant dense<0.000000e+00> : vector<8x8xf32>
    %168 = tpu.matmul %165, %166, %cst_62 {dimension_numbers = #tpu.dot_dimension_numbers<[1], [1], [0], [0], [0, 0, 1, 0], [], []>} : vector<8x4xf32>, vector<8x4xf32>, vector<8x8xf32> -> vector<8x8xf32>
    %cst_63 = arith.constant dense<0xFF800000> : vector<8xf32>
    %169 = vector.multi_reduction <maximumf>, %168, %cst_63 [1] : vector<8x8xf32> to vector<8xf32>
    %cst_64 = arith.constant 0xFF800000 : f32
    %170 = vector.broadcast %cst_64 : f32 to vector<8xf32>
    %171 = arith.maximumf %170, %169 : vector<8xf32>
    %172 = vector.shape_cast %171 : vector<8xf32> to vector<8x1xf32>
    %173 = vector.broadcast %172 : vector<8x1xf32> to vector<8x8xf32>
    %174 = arith.subf %168, %173 : vector<8x8xf32>
    %175 = math.exp %174 : vector<8x8xf32>
    %cst_65 = arith.constant dense<0.000000e+00> : vector<8xf32>
    %176 = vector.multi_reduction <add>, %175, %cst_65 [1] : vector<8x8xf32> to vector<8xf32>
    %177 = vector.shape_cast %176 : vector<8xf32> to vector<8x1xf32>
    %178 = vector.broadcast %177 : vector<8x1xf32> to vector<8x8xf32>
    %179 = arith.divf %175, %178 : vector<8x8xf32>
    %cst_66 = arith.constant dense<0.000000e+00> : vector<8x4xf32>
    %180 = tpu.matmul %179, %167, %cst_66 {dimension_numbers = #tpu.dot_dimension_numbers<[1], [0], [0], [1], [0, 0, 1, 1], [], []>} : vector<8x8xf32>, vector<8x4xf32>, vector<8x4xf32> -> vector<8x4xf32>
    %181 = vector.extract_strided_slice %164 {offsets = [0, 4], sizes = [8, 4], strides = [1, 1]} : vector<8x96xf32> to vector<8x4xf32>
    %182 = vector.extract_strided_slice %164 {offsets = [0, 36], sizes = [8, 4], strides = [1, 1]} : vector<8x96xf32> to vector<8x4xf32>
    %183 = vector.extract_strided_slice %164 {offsets = [0, 68], sizes = [8, 4], strides = [1, 1]} : vector<8x96xf32> to vector<8x4xf32>
    %cst_67 = arith.constant dense<0.000000e+00> : vector<8x8xf32>
    %184 = tpu.matmul %181, %182, %cst_67 {dimension_numbers = #tpu.dot_dimension_numbers<[1], [1], [0], [0], [0, 0, 1, 0], [], []>} : vector<8x4xf32>, vector<8x4xf32>, vector<8x8xf32> -> vector<8x8xf32>
    %cst_68 = arith.constant dense<0xFF800000> : vector<8xf32>
    %185 = vector.multi_reduction <maximumf>, %184, %cst_68 [1] : vector<8x8xf32> to vector<8xf32>
    %cst_69 = arith.constant 0xFF800000 : f32
    %186 = vector.broadcast %cst_69 : f32 to vector<8xf32>
    %187 = arith.maximumf %186, %185 : vector<8xf32>
    %188 = vector.shape_cast %187 : vector<8xf32> to vector<8x1xf32>
    %189 = vector.broadcast %188 : vector<8x1xf32> to vector<8x8xf32>
    %190 = arith.subf %184, %189 : vector<8x8xf32>
    %191 = math.exp %190 : vector<8x8xf32>
    %cst_70 = arith.constant dense<0.000000e+00> : vector<8xf32>
    %192 = vector.multi_reduction <add>, %191, %cst_70 [1] : vector<8x8xf32> to vector<8xf32>
    %193 = vector.shape_cast %192 : vector<8xf32> to vector<8x1xf32>
    %194 = vector.broadcast %193 : vector<8x1xf32> to vector<8x8xf32>
    %195 = arith.divf %191, %194 : vector<8x8xf32>
    %cst_71 = arith.constant dense<0.000000e+00> : vector<8x4xf32>
    %196 = tpu.matmul %195, %183, %cst_71 {dimension_numbers = #tpu.dot_dimension_numbers<[1], [0], [0], [1], [0, 0, 1, 1], [], []>} : vector<8x8xf32>, vector<8x4xf32>, vector<8x4xf32> -> vector<8x4xf32>
    %197 = vector.extract_strided_slice %164 {offsets = [0, 8], sizes = [8, 4], strides = [1, 1]} : vector<8x96xf32> to vector<8x4xf32>
    %198 = vector.extract_strided_slice %164 {offsets = [0, 40], sizes = [8, 4], strides = [1, 1]} : vector<8x96xf32> to vector<8x4xf32>
    %199 = vector.extract_strided_slice %164 {offsets = [0, 72], sizes = [8, 4], strides = [1, 1]} : vector<8x96xf32> to vector<8x4xf32>
    %cst_72 = arith.constant dense<0.000000e+00> : vector<8x8xf32>
    %200 = tpu.matmul %197, %198, %cst_72 {dimension_numbers = #tpu.dot_dimension_numbers<[1], [1], [0], [0], [0, 0, 1, 0], [], []>} : vector<8x4xf32>, vector<8x4xf32>, vector<8x8xf32> -> vector<8x8xf32>
    %cst_73 = arith.constant dense<0xFF800000> : vector<8xf32>
    %201 = vector.multi_reduction <maximumf>, %200, %cst_73 [1] : vector<8x8xf32> to vector<8xf32>
    %cst_74 = arith.constant 0xFF800000 : f32
    %202 = vector.broadcast %cst_74 : f32 to vector<8xf32>
    %203 = arith.maximumf %202, %201 : vector<8xf32>
    %204 = vector.shape_cast %203 : vector<8xf32> to vector<8x1xf32>
    %205 = vector.broadcast %204 : vector<8x1xf32> to vector<8x8xf32>
    %206 = arith.subf %200, %205 : vector<8x8xf32>
    %207 = math.exp %206 : vector<8x8xf32>
    %cst_75 = arith.constant dense<0.000000e+00> : vector<8xf32>
    %208 = vector.multi_reduction <add>, %207, %cst_75 [1] : vector<8x8xf32> to vector<8xf32>
    %209 = vector.shape_cast %208 : vector<8xf32> to vector<8x1xf32>
    %210 = vector.broadcast %209 : vector<8x1xf32> to vector<8x8xf32>
    %211 = arith.divf %207, %210 : vector<8x8xf32>
    %cst_76 = arith.constant dense<0.000000e+00> : vector<8x4xf32>
    %212 = tpu.matmul %211, %199, %cst_76 {dimension_numbers = #tpu.dot_dimension_numbers<[1], [0], [0], [1], [0, 0, 1, 1], [], []>} : vector<8x8xf32>, vector<8x4xf32>, vector<8x4xf32> -> vector<8x4xf32>
    %213 = vector.extract_strided_slice %164 {offsets = [0, 12], sizes = [8, 4], strides = [1, 1]} : vector<8x96xf32> to vector<8x4xf32>
    %214 = vector.extract_strided_slice %164 {offsets = [0, 44], sizes = [8, 4], strides = [1, 1]} : vector<8x96xf32> to vector<8x4xf32>
    %215 = vector.extract_strided_slice %164 {offsets = [0, 76], sizes = [8, 4], strides = [1, 1]} : vector<8x96xf32> to vector<8x4xf32>
    %cst_77 = arith.constant dense<0.000000e+00> : vector<8x8xf32>
    %216 = tpu.matmul %213, %214, %cst_77 {dimension_numbers = #tpu.dot_dimension_numbers<[1], [1], [0], [0], [0, 0, 1, 0], [], []>} : vector<8x4xf32>, vector<8x4xf32>, vector<8x8xf32> -> vector<8x8xf32>
    %cst_78 = arith.constant dense<0xFF800000> : vector<8xf32>
    %217 = vector.multi_reduction <maximumf>, %216, %cst_78 [1] : vector<8x8xf32> to vector<8xf32>
    %cst_79 = arith.constant 0xFF800000 : f32
    %218 = vector.broadcast %cst_79 : f32 to vector<8xf32>
    %219 = arith.maximumf %218, %217 : vector<8xf32>
    %220 = vector.shape_cast %219 : vector<8xf32> to vector<8x1xf32>
    %221 = vector.broadcast %220 : vector<8x1xf32> to vector<8x8xf32>
    %222 = arith.subf %216, %221 : vector<8x8xf32>
    %223 = math.exp %222 : vector<8x8xf32>
    %cst_80 = arith.constant dense<0.000000e+00> : vector<8xf32>
    %224 = vector.multi_reduction <add>, %223, %cst_80 [1] : vector<8x8xf32> to vector<8xf32>
    %225 = vector.shape_cast %224 : vector<8xf32> to vector<8x1xf32>
    %226 = vector.broadcast %225 : vector<8x1xf32> to vector<8x8xf32>
    %227 = arith.divf %223, %226 : vector<8x8xf32>
    %cst_81 = arith.constant dense<0.000000e+00> : vector<8x4xf32>
    %228 = tpu.matmul %227, %215, %cst_81 {dimension_numbers = #tpu.dot_dimension_numbers<[1], [0], [0], [1], [0, 0, 1, 1], [], []>} : vector<8x8xf32>, vector<8x4xf32>, vector<8x4xf32> -> vector<8x4xf32>
    %229 = vector.extract_strided_slice %164 {offsets = [0, 16], sizes = [8, 4], strides = [1, 1]} : vector<8x96xf32> to vector<8x4xf32>
    %230 = vector.extract_strided_slice %164 {offsets = [0, 48], sizes = [8, 4], strides = [1, 1]} : vector<8x96xf32> to vector<8x4xf32>
    %231 = vector.extract_strided_slice %164 {offsets = [0, 80], sizes = [8, 4], strides = [1, 1]} : vector<8x96xf32> to vector<8x4xf32>
    %cst_82 = arith.constant dense<0.000000e+00> : vector<8x8xf32>
    %232 = tpu.matmul %229, %230, %cst_82 {dimension_numbers = #tpu.dot_dimension_numbers<[1], [1], [0], [0], [0, 0, 1, 0], [], []>} : vector<8x4xf32>, vector<8x4xf32>, vector<8x8xf32> -> vector<8x8xf32>
    %cst_83 = arith.constant dense<0xFF800000> : vector<8xf32>
    %233 = vector.multi_reduction <maximumf>, %232, %cst_83 [1] : vector<8x8xf32> to vector<8xf32>
    %cst_84 = arith.constant 0xFF800000 : f32
    %234 = vector.broadcast %cst_84 : f32 to vector<8xf32>
    %235 = arith.maximumf %234, %233 : vector<8xf32>
    %236 = vector.shape_cast %235 : vector<8xf32> to vector<8x1xf32>
    %237 = vector.broadcast %236 : vector<8x1xf32> to vector<8x8xf32>
    %238 = arith.subf %232, %237 : vector<8x8xf32>
    %239 = math.exp %238 : vector<8x8xf32>
    %cst_85 = arith.constant dense<0.000000e+00> : vector<8xf32>
    %240 = vector.multi_reduction <add>, %239, %cst_85 [1] : vector<8x8xf32> to vector<8xf32>
    %241 = vector.shape_cast %240 : vector<8xf32> to vector<8x1xf32>
    %242 = vector.broadcast %241 : vector<8x1xf32> to vector<8x8xf32>
    %243 = arith.divf %239, %242 : vector<8x8xf32>
    %cst_86 = arith.constant dense<0.000000e+00> : vector<8x4xf32>
    %244 = tpu.matmul %243, %231, %cst_86 {dimension_numbers = #tpu.dot_dimension_numbers<[1], [0], [0], [1], [0, 0, 1, 1], [], []>} : vector<8x8xf32>, vector<8x4xf32>, vector<8x4xf32> -> vector<8x4xf32>
    %245 = vector.extract_strided_slice %164 {offsets = [0, 20], sizes = [8, 4], strides = [1, 1]} : vector<8x96xf32> to vector<8x4xf32>
    %246 = vector.extract_strided_slice %164 {offsets = [0, 52], sizes = [8, 4], strides = [1, 1]} : vector<8x96xf32> to vector<8x4xf32>
    %247 = vector.extract_strided_slice %164 {offsets = [0, 84], sizes = [8, 4], strides = [1, 1]} : vector<8x96xf32> to vector<8x4xf32>
    %cst_87 = arith.constant dense<0.000000e+00> : vector<8x8xf32>
    %248 = tpu.matmul %245, %246, %cst_87 {dimension_numbers = #tpu.dot_dimension_numbers<[1], [1], [0], [0], [0, 0, 1, 0], [], []>} : vector<8x4xf32>, vector<8x4xf32>, vector<8x8xf32> -> vector<8x8xf32>
    %cst_88 = arith.constant dense<0xFF800000> : vector<8xf32>
    %249 = vector.multi_reduction <maximumf>, %248, %cst_88 [1] : vector<8x8xf32> to vector<8xf32>
    %cst_89 = arith.constant 0xFF800000 : f32
    %250 = vector.broadcast %cst_89 : f32 to vector<8xf32>
    %251 = arith.maximumf %250, %249 : vector<8xf32>
    %252 = vector.shape_cast %251 : vector<8xf32> to vector<8x1xf32>
    %253 = vector.broadcast %252 : vector<8x1xf32> to vector<8x8xf32>
    %254 = arith.subf %248, %253 : vector<8x8xf32>
    %255 = math.exp %254 : vector<8x8xf32>
    %cst_90 = arith.constant dense<0.000000e+00> : vector<8xf32>
    %256 = vector.multi_reduction <add>, %255, %cst_90 [1] : vector<8x8xf32> to vector<8xf32>
    %257 = vector.shape_cast %256 : vector<8xf32> to vector<8x1xf32>
    %258 = vector.broadcast %257 : vector<8x1xf32> to vector<8x8xf32>
    %259 = arith.divf %255, %258 : vector<8x8xf32>
    %cst_91 = arith.constant dense<0.000000e+00> : vector<8x4xf32>
    %260 = tpu.matmul %259, %247, %cst_91 {dimension_numbers = #tpu.dot_dimension_numbers<[1], [0], [0], [1], [0, 0, 1, 1], [], []>} : vector<8x8xf32>, vector<8x4xf32>, vector<8x4xf32> -> vector<8x4xf32>
    %261 = vector.extract_strided_slice %164 {offsets = [0, 24], sizes = [8, 4], strides = [1, 1]} : vector<8x96xf32> to vector<8x4xf32>
    %262 = vector.extract_strided_slice %164 {offsets = [0, 56], sizes = [8, 4], strides = [1, 1]} : vector<8x96xf32> to vector<8x4xf32>
    %263 = vector.extract_strided_slice %164 {offsets = [0, 88], sizes = [8, 4], strides = [1, 1]} : vector<8x96xf32> to vector<8x4xf32>
    %cst_92 = arith.constant dense<0.000000e+00> : vector<8x8xf32>
    %264 = tpu.matmul %261, %262, %cst_92 {dimension_numbers = #tpu.dot_dimension_numbers<[1], [1], [0], [0], [0, 0, 1, 0], [], []>} : vector<8x4xf32>, vector<8x4xf32>, vector<8x8xf32> -> vector<8x8xf32>
    %cst_93 = arith.constant dense<0xFF800000> : vector<8xf32>
    %265 = vector.multi_reduction <maximumf>, %264, %cst_93 [1] : vector<8x8xf32> to vector<8xf32>
    %cst_94 = arith.constant 0xFF800000 : f32
    %266 = vector.broadcast %cst_94 : f32 to vector<8xf32>
    %267 = arith.maximumf %266, %265 : vector<8xf32>
    %268 = vector.shape_cast %267 : vector<8xf32> to vector<8x1xf32>
    %269 = vector.broadcast %268 : vector<8x1xf32> to vector<8x8xf32>
    %270 = arith.subf %264, %269 : vector<8x8xf32>
    %271 = math.exp %270 : vector<8x8xf32>
    %cst_95 = arith.constant dense<0.000000e+00> : vector<8xf32>
    %272 = vector.multi_reduction <add>, %271, %cst_95 [1] : vector<8x8xf32> to vector<8xf32>
    %273 = vector.shape_cast %272 : vector<8xf32> to vector<8x1xf32>
    %274 = vector.broadcast %273 : vector<8x1xf32> to vector<8x8xf32>
    %275 = arith.divf %271, %274 : vector<8x8xf32>
    %cst_96 = arith.constant dense<0.000000e+00> : vector<8x4xf32>
    %276 = tpu.matmul %275, %263, %cst_96 {dimension_numbers = #tpu.dot_dimension_numbers<[1], [0], [0], [1], [0, 0, 1, 1], [], []>} : vector<8x8xf32>, vector<8x4xf32>, vector<8x4xf32> -> vector<8x4xf32>
    %277 = vector.extract_strided_slice %164 {offsets = [0, 28], sizes = [8, 4], strides = [1, 1]} : vector<8x96xf32> to vector<8x4xf32>
    %278 = vector.extract_strided_slice %164 {offsets = [0, 60], sizes = [8, 4], strides = [1, 1]} : vector<8x96xf32> to vector<8x4xf32>
    %279 = vector.extract_strided_slice %164 {offsets = [0, 92], sizes = [8, 4], strides = [1, 1]} : vector<8x96xf32> to vector<8x4xf32>
    %cst_97 = arith.constant dense<0.000000e+00> : vector<8x8xf32>
    %280 = tpu.matmul %277, %278, %cst_97 {dimension_numbers = #tpu.dot_dimension_numbers<[1], [1], [0], [0], [0, 0, 1, 0], [], []>} : vector<8x4xf32>, vector<8x4xf32>, vector<8x8xf32> -> vector<8x8xf32>
    %cst_98 = arith.constant dense<0xFF800000> : vector<8xf32>
    %281 = vector.multi_reduction <maximumf>, %280, %cst_98 [1] : vector<8x8xf32> to vector<8xf32>
    %cst_99 = arith.constant 0xFF800000 : f32
    %282 = vector.broadcast %cst_99 : f32 to vector<8xf32>
    %283 = arith.maximumf %282, %281 : vector<8xf32>
    %284 = vector.shape_cast %283 : vector<8xf32> to vector<8x1xf32>
    %285 = vector.broadcast %284 : vector<8x1xf32> to vector<8x8xf32>
    %286 = arith.subf %280, %285 : vector<8x8xf32>
    %287 = math.exp %286 : vector<8x8xf32>
    %cst_100 = arith.constant dense<0.000000e+00> : vector<8xf32>
    %288 = vector.multi_reduction <add>, %287, %cst_100 [1] : vector<8x8xf32> to vector<8xf32>
    %289 = vector.shape_cast %288 : vector<8xf32> to vector<8x1xf32>
    %290 = vector.broadcast %289 : vector<8x1xf32> to vector<8x8xf32>
    %291 = arith.divf %287, %290 : vector<8x8xf32>
    %cst_101 = arith.constant dense<0.000000e+00> : vector<8x4xf32>
    %292 = tpu.matmul %291, %279, %cst_101 {dimension_numbers = #tpu.dot_dimension_numbers<[1], [0], [0], [1], [0, 0, 1, 1], [], []>} : vector<8x8xf32>, vector<8x4xf32>, vector<8x4xf32> -> vector<8x4xf32>
    %293 = tpu.concatenate %180, %196, %212, %228, %244, %260, %276, %292 in 1 : vector<8x4xf32>, vector<8x4xf32>, vector<8x4xf32>, vector<8x4xf32>, vector<8x4xf32>, vector<8x4xf32>, vector<8x4xf32>, vector<8x4xf32> -> vector<8x32xf32>
    %294 = tpu.concatenate %163, %293 in 0 : vector<8x32xf32>, vector<8x32xf32> -> vector<16x32xf32>
    %c2_102 = arith.constant 2 : index
    %c0_103 = arith.constant 0 : index
    %c0_104 = arith.constant 0 : index
    %295 = vector.load %arg2[%c2_102, %c0_103, %c0_104] : memref<9x32x128xf32, #tpu.memory_space<vmem>>, vector<1x32x128xf32>
    %296 = vector.shape_cast %295 : vector<1x32x128xf32> to vector<32x128xf32>
    %297 = vector.extract_strided_slice %296 {offsets = [0, 0], sizes = [32, 32], strides = [1, 1]} : vector<32x128xf32> to vector<32x32xf32>
    %cst_105 = arith.constant dense<0.000000e+00> : vector<16x32xf32>
    %298 = tpu.matmul %294, %297, %cst_105 {dimension_numbers = #tpu.dot_dimension_numbers<[1], [0], [0], [1], [0, 0, 1, 1], [], []>} : vector<16x32xf32>, vector<32x32xf32>, vector<16x32xf32> -> vector<16x32xf32>
    %299 = vector.extract_strided_slice %0 {offsets = [2, 0], sizes = [1, 32], strides = [1, 1]} : vector<48x128xf32> to vector<1x32xf32>
    %300 = vector.broadcast %299 : vector<1x32xf32> to vector<16x32xf32>
    %301 = arith.addf %298, %300 : vector<16x32xf32>
    %302 = arith.addf %26, %301 : vector<16x32xf32>
    %303 = vector.extract_strided_slice %0 {offsets = [4, 0], sizes = [1, 32], strides = [1, 1]} : vector<48x128xf32> to vector<1x32xf32>
    %304 = vector.extract_strided_slice %0 {offsets = [6, 0], sizes = [1, 32], strides = [1, 1]} : vector<48x128xf32> to vector<1x32xf32>
    %cst_106 = arith.constant dense<0.000000e+00> : vector<16xf32>
    %305 = vector.multi_reduction <add>, %302, %cst_106 [1] : vector<16x32xf32> to vector<16xf32>
    %306 = vector.shape_cast %305 : vector<16xf32> to vector<16x1xf32>
    %cst_107 = arith.constant 3.200000e+01 : f32
    %307 = vector.broadcast %cst_107 : f32 to vector<16x1xf32>
    %308 = arith.divf %306, %307 : vector<16x1xf32>
    %309 = vector.broadcast %308 : vector<16x1xf32> to vector<16x32xf32>
    %310 = arith.subf %302, %309 : vector<16x32xf32>
    %311 = arith.mulf %310, %310 : vector<16x32xf32>
    %cst_108 = arith.constant dense<0.000000e+00> : vector<16xf32>
    %312 = vector.multi_reduction <add>, %311, %cst_108 [1] : vector<16x32xf32> to vector<16xf32>
    %313 = vector.shape_cast %312 : vector<16xf32> to vector<16x1xf32>
    %cst_109 = arith.constant 3.200000e+01 : f32
    %314 = vector.broadcast %cst_109 : f32 to vector<16x1xf32>
    %315 = arith.divf %313, %314 : vector<16x1xf32>
    %316 = vector.broadcast %308 : vector<16x1xf32> to vector<16x32xf32>
    %317 = arith.subf %302, %316 : vector<16x32xf32>
    %cst_110 = arith.constant 9.99999974E-6 : f32
    %318 = vector.broadcast %cst_110 : f32 to vector<16x1xf32>
    %319 = arith.addf %315, %318 : vector<16x1xf32>
    %320 = math.rsqrt %319 : vector<16x1xf32>
    %321 = vector.broadcast %320 : vector<16x1xf32> to vector<16x32xf32>
    %322 = arith.mulf %317, %321 : vector<16x32xf32>
    %323 = vector.broadcast %303 : vector<1x32xf32> to vector<16x32xf32>
    %324 = arith.mulf %322, %323 : vector<16x32xf32>
    %325 = vector.broadcast %304 : vector<1x32xf32> to vector<16x32xf32>
    %326 = arith.addf %324, %325 : vector<16x32xf32>
    %c4 = arith.constant 4 : index
    %c0_111 = arith.constant 0 : index
    %c0_112 = arith.constant 0 : index
    %327 = vector.load %arg2[%c4, %c0_111, %c0_112] : memref<9x32x128xf32, #tpu.memory_space<vmem>>, vector<1x32x128xf32>
    %328 = vector.shape_cast %327 : vector<1x32x128xf32> to vector<32x128xf32>
    %329 = vector.extract_strided_slice %328 {offsets = [0, 0], sizes = [32, 64], strides = [1, 1]} : vector<32x128xf32> to vector<32x64xf32>
    %cst_113 = arith.constant dense<0.000000e+00> : vector<16x64xf32>
    %330 = tpu.matmul %326, %329, %cst_113 {dimension_numbers = #tpu.dot_dimension_numbers<[1], [0], [0], [1], [0, 0, 1, 1], [], []>} : vector<16x32xf32>, vector<32x64xf32>, vector<16x64xf32> -> vector<16x64xf32>
    %331 = vector.extract_strided_slice %0 {offsets = [12, 0], sizes = [1, 64], strides = [1, 1]} : vector<48x128xf32> to vector<1x64xf32>
    %332 = vector.broadcast %331 : vector<1x64xf32> to vector<16x64xf32>
    %333 = arith.addf %330, %332 : vector<16x64xf32>
    %cst_114 = arith.constant 0.000000e+00 : f32
    %334 = vector.broadcast %cst_114 : f32 to vector<16x64xf32>
    %335 = arith.maximumf %333, %334 : vector<16x64xf32>
    %336 = vector.extract_strided_slice %1 {offsets = [0, 0], sizes = [64, 32], strides = [1, 1]} : vector<64x64xf32> to vector<64x32xf32>
    %cst_115 = arith.constant dense<0.000000e+00> : vector<16x32xf32>
    %337 = tpu.matmul %335, %336, %cst_115 {dimension_numbers = #tpu.dot_dimension_numbers<[1], [0], [0], [1], [0, 0, 1, 1], [], []>} : vector<16x64xf32>, vector<64x32xf32>, vector<16x32xf32> -> vector<16x32xf32>
    %338 = vector.extract_strided_slice %0 {offsets = [14, 0], sizes = [1, 32], strides = [1, 1]} : vector<48x128xf32> to vector<1x32xf32>
    %339 = vector.broadcast %338 : vector<1x32xf32> to vector<16x32xf32>
    %340 = arith.addf %337, %339 : vector<16x32xf32>
    %341 = arith.addf %326, %340 : vector<16x32xf32>
    %342 = vector.extract_strided_slice %0 {offsets = [8, 0], sizes = [1, 32], strides = [1, 1]} : vector<48x128xf32> to vector<1x32xf32>
    %343 = vector.extract_strided_slice %0 {offsets = [10, 0], sizes = [1, 32], strides = [1, 1]} : vector<48x128xf32> to vector<1x32xf32>
    %cst_116 = arith.constant dense<0.000000e+00> : vector<16xf32>
    %344 = vector.multi_reduction <add>, %341, %cst_116 [1] : vector<16x32xf32> to vector<16xf32>
    %345 = vector.shape_cast %344 : vector<16xf32> to vector<16x1xf32>
    %cst_117 = arith.constant 3.200000e+01 : f32
    %346 = vector.broadcast %cst_117 : f32 to vector<16x1xf32>
    %347 = arith.divf %345, %346 : vector<16x1xf32>
    %348 = vector.broadcast %347 : vector<16x1xf32> to vector<16x32xf32>
    %349 = arith.subf %341, %348 : vector<16x32xf32>
    %350 = arith.mulf %349, %349 : vector<16x32xf32>
    %cst_118 = arith.constant dense<0.000000e+00> : vector<16xf32>
    %351 = vector.multi_reduction <add>, %350, %cst_118 [1] : vector<16x32xf32> to vector<16xf32>
    %352 = vector.shape_cast %351 : vector<16xf32> to vector<16x1xf32>
    %cst_119 = arith.constant 3.200000e+01 : f32
    %353 = vector.broadcast %cst_119 : f32 to vector<16x1xf32>
    %354 = arith.divf %352, %353 : vector<16x1xf32>
    %355 = vector.broadcast %347 : vector<16x1xf32> to vector<16x32xf32>
    %356 = arith.subf %341, %355 : vector<16x32xf32>
    %cst_120 = arith.constant 9.99999974E-6 : f32
    %357 = vector.broadcast %cst_120 : f32 to vector<16x1xf32>
    %358 = arith.addf %354, %357 : vector<16x1xf32>
    %359 = math.rsqrt %358 : vector<16x1xf32>
    %360 = vector.broadcast %359 : vector<16x1xf32> to vector<16x32xf32>
    %361 = arith.mulf %356, %360 : vector<16x32xf32>
    %362 = vector.broadcast %342 : vector<1x32xf32> to vector<16x32xf32>
    %363 = arith.mulf %361, %362 : vector<16x32xf32>
    %364 = vector.broadcast %343 : vector<1x32xf32> to vector<16x32xf32>
    %365 = arith.addf %363, %364 : vector<16x32xf32>
    %c1_121 = arith.constant 1 : index
    %c0_122 = arith.constant 0 : index
    %c0_123 = arith.constant 0 : index
    %366 = vector.load %arg2[%c1_121, %c0_122, %c0_123] : memref<9x32x128xf32, #tpu.memory_space<vmem>>, vector<1x32x128xf32>
    %367 = vector.shape_cast %366 : vector<1x32x128xf32> to vector<32x128xf32>
    %368 = vector.extract_strided_slice %367 {offsets = [0, 0], sizes = [32, 96], strides = [1, 1]} : vector<32x128xf32> to vector<32x96xf32>
    %cst_124 = arith.constant dense<0.000000e+00> : vector<16x96xf32>
    %369 = tpu.matmul %365, %368, %cst_124 {dimension_numbers = #tpu.dot_dimension_numbers<[1], [0], [0], [1], [0, 0, 1, 1], [], []>} : vector<16x32xf32>, vector<32x96xf32>, vector<16x96xf32> -> vector<16x96xf32>
    %370 = vector.extract_strided_slice %0 {offsets = [1, 0], sizes = [1, 96], strides = [1, 1]} : vector<48x128xf32> to vector<1x96xf32>
    %371 = vector.broadcast %370 : vector<1x96xf32> to vector<16x96xf32>
    %372 = arith.addf %369, %371 : vector<16x96xf32>
    %373 = vector.extract_strided_slice %372 {offsets = [0, 0], sizes = [8, 96], strides = [1, 1]} : vector<16x96xf32> to vector<8x96xf32>
    %374 = vector.extract_strided_slice %373 {offsets = [0, 0], sizes = [8, 4], strides = [1, 1]} : vector<8x96xf32> to vector<8x4xf32>
    %375 = vector.extract_strided_slice %373 {offsets = [0, 32], sizes = [8, 4], strides = [1, 1]} : vector<8x96xf32> to vector<8x4xf32>
    %376 = vector.extract_strided_slice %373 {offsets = [0, 64], sizes = [8, 4], strides = [1, 1]} : vector<8x96xf32> to vector<8x4xf32>
    %cst_125 = arith.constant dense<0.000000e+00> : vector<8x8xf32>
    %377 = tpu.matmul %374, %375, %cst_125 {dimension_numbers = #tpu.dot_dimension_numbers<[1], [1], [0], [0], [0, 0, 1, 0], [], []>} : vector<8x4xf32>, vector<8x4xf32>, vector<8x8xf32> -> vector<8x8xf32>
    %cst_126 = arith.constant dense<0xFF800000> : vector<8xf32>
    %378 = vector.multi_reduction <maximumf>, %377, %cst_126 [1] : vector<8x8xf32> to vector<8xf32>
    %cst_127 = arith.constant 0xFF800000 : f32
    %379 = vector.broadcast %cst_127 : f32 to vector<8xf32>
    %380 = arith.maximumf %379, %378 : vector<8xf32>
    %381 = vector.shape_cast %380 : vector<8xf32> to vector<8x1xf32>
    %382 = vector.broadcast %381 : vector<8x1xf32> to vector<8x8xf32>
    %383 = arith.subf %377, %382 : vector<8x8xf32>
    %384 = math.exp %383 : vector<8x8xf32>
    %cst_128 = arith.constant dense<0.000000e+00> : vector<8xf32>
    %385 = vector.multi_reduction <add>, %384, %cst_128 [1] : vector<8x8xf32> to vector<8xf32>
    %386 = vector.shape_cast %385 : vector<8xf32> to vector<8x1xf32>
    %387 = vector.broadcast %386 : vector<8x1xf32> to vector<8x8xf32>
    %388 = arith.divf %384, %387 : vector<8x8xf32>
    %cst_129 = arith.constant dense<0.000000e+00> : vector<8x4xf32>
    %389 = tpu.matmul %388, %376, %cst_129 {dimension_numbers = #tpu.dot_dimension_numbers<[1], [0], [0], [1], [0, 0, 1, 1], [], []>} : vector<8x8xf32>, vector<8x4xf32>, vector<8x4xf32> -> vector<8x4xf32>
    %390 = vector.extract_strided_slice %373 {offsets = [0, 4], sizes = [8, 4], strides = [1, 1]} : vector<8x96xf32> to vector<8x4xf32>
    %391 = vector.extract_strided_slice %373 {offsets = [0, 36], sizes = [8, 4], strides = [1, 1]} : vector<8x96xf32> to vector<8x4xf32>
    %392 = vector.extract_strided_slice %373 {offsets = [0, 68], sizes = [8, 4], strides = [1, 1]} : vector<8x96xf32> to vector<8x4xf32>
    %cst_130 = arith.constant dense<0.000000e+00> : vector<8x8xf32>
    %393 = tpu.matmul %390, %391, %cst_130 {dimension_numbers = #tpu.dot_dimension_numbers<[1], [1], [0], [0], [0, 0, 1, 0], [], []>} : vector<8x4xf32>, vector<8x4xf32>, vector<8x8xf32> -> vector<8x8xf32>
    %cst_131 = arith.constant dense<0xFF800000> : vector<8xf32>
    %394 = vector.multi_reduction <maximumf>, %393, %cst_131 [1] : vector<8x8xf32> to vector<8xf32>
    %cst_132 = arith.constant 0xFF800000 : f32
    %395 = vector.broadcast %cst_132 : f32 to vector<8xf32>
    %396 = arith.maximumf %395, %394 : vector<8xf32>
    %397 = vector.shape_cast %396 : vector<8xf32> to vector<8x1xf32>
    %398 = vector.broadcast %397 : vector<8x1xf32> to vector<8x8xf32>
    %399 = arith.subf %393, %398 : vector<8x8xf32>
    %400 = math.exp %399 : vector<8x8xf32>
    %cst_133 = arith.constant dense<0.000000e+00> : vector<8xf32>
    %401 = vector.multi_reduction <add>, %400, %cst_133 [1] : vector<8x8xf32> to vector<8xf32>
    %402 = vector.shape_cast %401 : vector<8xf32> to vector<8x1xf32>
    %403 = vector.broadcast %402 : vector<8x1xf32> to vector<8x8xf32>
    %404 = arith.divf %400, %403 : vector<8x8xf32>
    %cst_134 = arith.constant dense<0.000000e+00> : vector<8x4xf32>
    %405 = tpu.matmul %404, %392, %cst_134 {dimension_numbers = #tpu.dot_dimension_numbers<[1], [0], [0], [1], [0, 0, 1, 1], [], []>} : vector<8x8xf32>, vector<8x4xf32>, vector<8x4xf32> -> vector<8x4xf32>
    %406 = vector.extract_strided_slice %373 {offsets = [0, 8], sizes = [8, 4], strides = [1, 1]} : vector<8x96xf32> to vector<8x4xf32>
    %407 = vector.extract_strided_slice %373 {offsets = [0, 40], sizes = [8, 4], strides = [1, 1]} : vector<8x96xf32> to vector<8x4xf32>
    %408 = vector.extract_strided_slice %373 {offsets = [0, 72], sizes = [8, 4], strides = [1, 1]} : vector<8x96xf32> to vector<8x4xf32>
    %cst_135 = arith.constant dense<0.000000e+00> : vector<8x8xf32>
    %409 = tpu.matmul %406, %407, %cst_135 {dimension_numbers = #tpu.dot_dimension_numbers<[1], [1], [0], [0], [0, 0, 1, 0], [], []>} : vector<8x4xf32>, vector<8x4xf32>, vector<8x8xf32> -> vector<8x8xf32>
    %cst_136 = arith.constant dense<0xFF800000> : vector<8xf32>
    %410 = vector.multi_reduction <maximumf>, %409, %cst_136 [1] : vector<8x8xf32> to vector<8xf32>
    %cst_137 = arith.constant 0xFF800000 : f32
    %411 = vector.broadcast %cst_137 : f32 to vector<8xf32>
    %412 = arith.maximumf %411, %410 : vector<8xf32>
    %413 = vector.shape_cast %412 : vector<8xf32> to vector<8x1xf32>
    %414 = vector.broadcast %413 : vector<8x1xf32> to vector<8x8xf32>
    %415 = arith.subf %409, %414 : vector<8x8xf32>
    %416 = math.exp %415 : vector<8x8xf32>
    %cst_138 = arith.constant dense<0.000000e+00> : vector<8xf32>
    %417 = vector.multi_reduction <add>, %416, %cst_138 [1] : vector<8x8xf32> to vector<8xf32>
    %418 = vector.shape_cast %417 : vector<8xf32> to vector<8x1xf32>
    %419 = vector.broadcast %418 : vector<8x1xf32> to vector<8x8xf32>
    %420 = arith.divf %416, %419 : vector<8x8xf32>
    %cst_139 = arith.constant dense<0.000000e+00> : vector<8x4xf32>
    %421 = tpu.matmul %420, %408, %cst_139 {dimension_numbers = #tpu.dot_dimension_numbers<[1], [0], [0], [1], [0, 0, 1, 1], [], []>} : vector<8x8xf32>, vector<8x4xf32>, vector<8x4xf32> -> vector<8x4xf32>
    %422 = vector.extract_strided_slice %373 {offsets = [0, 12], sizes = [8, 4], strides = [1, 1]} : vector<8x96xf32> to vector<8x4xf32>
    %423 = vector.extract_strided_slice %373 {offsets = [0, 44], sizes = [8, 4], strides = [1, 1]} : vector<8x96xf32> to vector<8x4xf32>
    %424 = vector.extract_strided_slice %373 {offsets = [0, 76], sizes = [8, 4], strides = [1, 1]} : vector<8x96xf32> to vector<8x4xf32>
    %cst_140 = arith.constant dense<0.000000e+00> : vector<8x8xf32>
    %425 = tpu.matmul %422, %423, %cst_140 {dimension_numbers = #tpu.dot_dimension_numbers<[1], [1], [0], [0], [0, 0, 1, 0], [], []>} : vector<8x4xf32>, vector<8x4xf32>, vector<8x8xf32> -> vector<8x8xf32>
    %cst_141 = arith.constant dense<0xFF800000> : vector<8xf32>
    %426 = vector.multi_reduction <maximumf>, %425, %cst_141 [1] : vector<8x8xf32> to vector<8xf32>
    %cst_142 = arith.constant 0xFF800000 : f32
    %427 = vector.broadcast %cst_142 : f32 to vector<8xf32>
    %428 = arith.maximumf %427, %426 : vector<8xf32>
    %429 = vector.shape_cast %428 : vector<8xf32> to vector<8x1xf32>
    %430 = vector.broadcast %429 : vector<8x1xf32> to vector<8x8xf32>
    %431 = arith.subf %425, %430 : vector<8x8xf32>
    %432 = math.exp %431 : vector<8x8xf32>
    %cst_143 = arith.constant dense<0.000000e+00> : vector<8xf32>
    %433 = vector.multi_reduction <add>, %432, %cst_143 [1] : vector<8x8xf32> to vector<8xf32>
    %434 = vector.shape_cast %433 : vector<8xf32> to vector<8x1xf32>
    %435 = vector.broadcast %434 : vector<8x1xf32> to vector<8x8xf32>
    %436 = arith.divf %432, %435 : vector<8x8xf32>
    %cst_144 = arith.constant dense<0.000000e+00> : vector<8x4xf32>
    %437 = tpu.matmul %436, %424, %cst_144 {dimension_numbers = #tpu.dot_dimension_numbers<[1], [0], [0], [1], [0, 0, 1, 1], [], []>} : vector<8x8xf32>, vector<8x4xf32>, vector<8x4xf32> -> vector<8x4xf32>
    %438 = vector.extract_strided_slice %373 {offsets = [0, 16], sizes = [8, 4], strides = [1, 1]} : vector<8x96xf32> to vector<8x4xf32>
    %439 = vector.extract_strided_slice %373 {offsets = [0, 48], sizes = [8, 4], strides = [1, 1]} : vector<8x96xf32> to vector<8x4xf32>
    %440 = vector.extract_strided_slice %373 {offsets = [0, 80], sizes = [8, 4], strides = [1, 1]} : vector<8x96xf32> to vector<8x4xf32>
    %cst_145 = arith.constant dense<0.000000e+00> : vector<8x8xf32>
    %441 = tpu.matmul %438, %439, %cst_145 {dimension_numbers = #tpu.dot_dimension_numbers<[1], [1], [0], [0], [0, 0, 1, 0], [], []>} : vector<8x4xf32>, vector<8x4xf32>, vector<8x8xf32> -> vector<8x8xf32>
    %cst_146 = arith.constant dense<0xFF800000> : vector<8xf32>
    %442 = vector.multi_reduction <maximumf>, %441, %cst_146 [1] : vector<8x8xf32> to vector<8xf32>
    %cst_147 = arith.constant 0xFF800000 : f32
    %443 = vector.broadcast %cst_147 : f32 to vector<8xf32>
    %444 = arith.maximumf %443, %442 : vector<8xf32>
    %445 = vector.shape_cast %444 : vector<8xf32> to vector<8x1xf32>
    %446 = vector.broadcast %445 : vector<8x1xf32> to vector<8x8xf32>
    %447 = arith.subf %441, %446 : vector<8x8xf32>
    %448 = math.exp %447 : vector<8x8xf32>
    %cst_148 = arith.constant dense<0.000000e+00> : vector<8xf32>
    %449 = vector.multi_reduction <add>, %448, %cst_148 [1] : vector<8x8xf32> to vector<8xf32>
    %450 = vector.shape_cast %449 : vector<8xf32> to vector<8x1xf32>
    %451 = vector.broadcast %450 : vector<8x1xf32> to vector<8x8xf32>
    %452 = arith.divf %448, %451 : vector<8x8xf32>
    %cst_149 = arith.constant dense<0.000000e+00> : vector<8x4xf32>
    %453 = tpu.matmul %452, %440, %cst_149 {dimension_numbers = #tpu.dot_dimension_numbers<[1], [0], [0], [1], [0, 0, 1, 1], [], []>} : vector<8x8xf32>, vector<8x4xf32>, vector<8x4xf32> -> vector<8x4xf32>
    %454 = vector.extract_strided_slice %373 {offsets = [0, 20], sizes = [8, 4], strides = [1, 1]} : vector<8x96xf32> to vector<8x4xf32>
    %455 = vector.extract_strided_slice %373 {offsets = [0, 52], sizes = [8, 4], strides = [1, 1]} : vector<8x96xf32> to vector<8x4xf32>
    %456 = vector.extract_strided_slice %373 {offsets = [0, 84], sizes = [8, 4], strides = [1, 1]} : vector<8x96xf32> to vector<8x4xf32>
    %cst_150 = arith.constant dense<0.000000e+00> : vector<8x8xf32>
    %457 = tpu.matmul %454, %455, %cst_150 {dimension_numbers = #tpu.dot_dimension_numbers<[1], [1], [0], [0], [0, 0, 1, 0], [], []>} : vector<8x4xf32>, vector<8x4xf32>, vector<8x8xf32> -> vector<8x8xf32>
    %cst_151 = arith.constant dense<0xFF800000> : vector<8xf32>
    %458 = vector.multi_reduction <maximumf>, %457, %cst_151 [1] : vector<8x8xf32> to vector<8xf32>
    %cst_152 = arith.constant 0xFF800000 : f32
    %459 = vector.broadcast %cst_152 : f32 to vector<8xf32>
    %460 = arith.maximumf %459, %458 : vector<8xf32>
    %461 = vector.shape_cast %460 : vector<8xf32> to vector<8x1xf32>
    %462 = vector.broadcast %461 : vector<8x1xf32> to vector<8x8xf32>
    %463 = arith.subf %457, %462 : vector<8x8xf32>
    %464 = math.exp %463 : vector<8x8xf32>
    %cst_153 = arith.constant dense<0.000000e+00> : vector<8xf32>
    %465 = vector.multi_reduction <add>, %464, %cst_153 [1] : vector<8x8xf32> to vector<8xf32>
    %466 = vector.shape_cast %465 : vector<8xf32> to vector<8x1xf32>
    %467 = vector.broadcast %466 : vector<8x1xf32> to vector<8x8xf32>
    %468 = arith.divf %464, %467 : vector<8x8xf32>
    %cst_154 = arith.constant dense<0.000000e+00> : vector<8x4xf32>
    %469 = tpu.matmul %468, %456, %cst_154 {dimension_numbers = #tpu.dot_dimension_numbers<[1], [0], [0], [1], [0, 0, 1, 1], [], []>} : vector<8x8xf32>, vector<8x4xf32>, vector<8x4xf32> -> vector<8x4xf32>
    %470 = vector.extract_strided_slice %373 {offsets = [0, 24], sizes = [8, 4], strides = [1, 1]} : vector<8x96xf32> to vector<8x4xf32>
    %471 = vector.extract_strided_slice %373 {offsets = [0, 56], sizes = [8, 4], strides = [1, 1]} : vector<8x96xf32> to vector<8x4xf32>
    %472 = vector.extract_strided_slice %373 {offsets = [0, 88], sizes = [8, 4], strides = [1, 1]} : vector<8x96xf32> to vector<8x4xf32>
    %cst_155 = arith.constant dense<0.000000e+00> : vector<8x8xf32>
    %473 = tpu.matmul %470, %471, %cst_155 {dimension_numbers = #tpu.dot_dimension_numbers<[1], [1], [0], [0], [0, 0, 1, 0], [], []>} : vector<8x4xf32>, vector<8x4xf32>, vector<8x8xf32> -> vector<8x8xf32>
    %cst_156 = arith.constant dense<0xFF800000> : vector<8xf32>
    %474 = vector.multi_reduction <maximumf>, %473, %cst_156 [1] : vector<8x8xf32> to vector<8xf32>
    %cst_157 = arith.constant 0xFF800000 : f32
    %475 = vector.broadcast %cst_157 : f32 to vector<8xf32>
    %476 = arith.maximumf %475, %474 : vector<8xf32>
    %477 = vector.shape_cast %476 : vector<8xf32> to vector<8x1xf32>
    %478 = vector.broadcast %477 : vector<8x1xf32> to vector<8x8xf32>
    %479 = arith.subf %473, %478 : vector<8x8xf32>
    %480 = math.exp %479 : vector<8x8xf32>
    %cst_158 = arith.constant dense<0.000000e+00> : vector<8xf32>
    %481 = vector.multi_reduction <add>, %480, %cst_158 [1] : vector<8x8xf32> to vector<8xf32>
    %482 = vector.shape_cast %481 : vector<8xf32> to vector<8x1xf32>
    %483 = vector.broadcast %482 : vector<8x1xf32> to vector<8x8xf32>
    %484 = arith.divf %480, %483 : vector<8x8xf32>
    %cst_159 = arith.constant dense<0.000000e+00> : vector<8x4xf32>
    %485 = tpu.matmul %484, %472, %cst_159 {dimension_numbers = #tpu.dot_dimension_numbers<[1], [0], [0], [1], [0, 0, 1, 1], [], []>} : vector<8x8xf32>, vector<8x4xf32>, vector<8x4xf32> -> vector<8x4xf32>
    %486 = vector.extract_strided_slice %373 {offsets = [0, 28], sizes = [8, 4], strides = [1, 1]} : vector<8x96xf32> to vector<8x4xf32>
    %487 = vector.extract_strided_slice %373 {offsets = [0, 60], sizes = [8, 4], strides = [1, 1]} : vector<8x96xf32> to vector<8x4xf32>
    %488 = vector.extract_strided_slice %373 {offsets = [0, 92], sizes = [8, 4], strides = [1, 1]} : vector<8x96xf32> to vector<8x4xf32>
    %cst_160 = arith.constant dense<0.000000e+00> : vector<8x8xf32>
    %489 = tpu.matmul %486, %487, %cst_160 {dimension_numbers = #tpu.dot_dimension_numbers<[1], [1], [0], [0], [0, 0, 1, 0], [], []>} : vector<8x4xf32>, vector<8x4xf32>, vector<8x8xf32> -> vector<8x8xf32>
    %cst_161 = arith.constant dense<0xFF800000> : vector<8xf32>
    %490 = vector.multi_reduction <maximumf>, %489, %cst_161 [1] : vector<8x8xf32> to vector<8xf32>
    %cst_162 = arith.constant 0xFF800000 : f32
    %491 = vector.broadcast %cst_162 : f32 to vector<8xf32>
    %492 = arith.maximumf %491, %490 : vector<8xf32>
    %493 = vector.shape_cast %492 : vector<8xf32> to vector<8x1xf32>
    %494 = vector.broadcast %493 : vector<8x1xf32> to vector<8x8xf32>
    %495 = arith.subf %489, %494 : vector<8x8xf32>
    %496 = math.exp %495 : vector<8x8xf32>
    %cst_163 = arith.constant dense<0.000000e+00> : vector<8xf32>
    %497 = vector.multi_reduction <add>, %496, %cst_163 [1] : vector<8x8xf32> to vector<8xf32>
    %498 = vector.shape_cast %497 : vector<8xf32> to vector<8x1xf32>
    %499 = vector.broadcast %498 : vector<8x1xf32> to vector<8x8xf32>
    %500 = arith.divf %496, %499 : vector<8x8xf32>
    %cst_164 = arith.constant dense<0.000000e+00> : vector<8x4xf32>
    %501 = tpu.matmul %500, %488, %cst_164 {dimension_numbers = #tpu.dot_dimension_numbers<[1], [0], [0], [1], [0, 0, 1, 1], [], []>} : vector<8x8xf32>, vector<8x4xf32>, vector<8x4xf32> -> vector<8x4xf32>
    %502 = tpu.concatenate %389, %405, %421, %437, %453, %469, %485, %501 in 1 : vector<8x4xf32>, vector<8x4xf32>, vector<8x4xf32>, vector<8x4xf32>, vector<8x4xf32>, vector<8x4xf32>, vector<8x4xf32>, vector<8x4xf32> -> vector<8x32xf32>
    %503 = vector.extract_strided_slice %372 {offsets = [8, 0], sizes = [8, 96], strides = [1, 1]} : vector<16x96xf32> to vector<8x96xf32>
    %504 = vector.extract_strided_slice %503 {offsets = [0, 0], sizes = [8, 4], strides = [1, 1]} : vector<8x96xf32> to vector<8x4xf32>
    %505 = vector.extract_strided_slice %503 {offsets = [0, 32], sizes = [8, 4], strides = [1, 1]} : vector<8x96xf32> to vector<8x4xf32>
    %506 = vector.extract_strided_slice %503 {offsets = [0, 64], sizes = [8, 4], strides = [1, 1]} : vector<8x96xf32> to vector<8x4xf32>
    %cst_165 = arith.constant dense<0.000000e+00> : vector<8x8xf32>
    %507 = tpu.matmul %504, %505, %cst_165 {dimension_numbers = #tpu.dot_dimension_numbers<[1], [1], [0], [0], [0, 0, 1, 0], [], []>} : vector<8x4xf32>, vector<8x4xf32>, vector<8x8xf32> -> vector<8x8xf32>
    %cst_166 = arith.constant dense<0xFF800000> : vector<8xf32>
    %508 = vector.multi_reduction <maximumf>, %507, %cst_166 [1] : vector<8x8xf32> to vector<8xf32>
    %cst_167 = arith.constant 0xFF800000 : f32
    %509 = vector.broadcast %cst_167 : f32 to vector<8xf32>
    %510 = arith.maximumf %509, %508 : vector<8xf32>
    %511 = vector.shape_cast %510 : vector<8xf32> to vector<8x1xf32>
    %512 = vector.broadcast %511 : vector<8x1xf32> to vector<8x8xf32>
    %513 = arith.subf %507, %512 : vector<8x8xf32>
    %514 = math.exp %513 : vector<8x8xf32>
    %cst_168 = arith.constant dense<0.000000e+00> : vector<8xf32>
    %515 = vector.multi_reduction <add>, %514, %cst_168 [1] : vector<8x8xf32> to vector<8xf32>
    %516 = vector.shape_cast %515 : vector<8xf32> to vector<8x1xf32>
    %517 = vector.broadcast %516 : vector<8x1xf32> to vector<8x8xf32>
    %518 = arith.divf %514, %517 : vector<8x8xf32>
    %cst_169 = arith.constant dense<0.000000e+00> : vector<8x4xf32>
    %519 = tpu.matmul %518, %506, %cst_169 {dimension_numbers = #tpu.dot_dimension_numbers<[1], [0], [0], [1], [0, 0, 1, 1], [], []>} : vector<8x8xf32>, vector<8x4xf32>, vector<8x4xf32> -> vector<8x4xf32>
    %520 = vector.extract_strided_slice %503 {offsets = [0, 4], sizes = [8, 4], strides = [1, 1]} : vector<8x96xf32> to vector<8x4xf32>
    %521 = vector.extract_strided_slice %503 {offsets = [0, 36], sizes = [8, 4], strides = [1, 1]} : vector<8x96xf32> to vector<8x4xf32>
    %522 = vector.extract_strided_slice %503 {offsets = [0, 68], sizes = [8, 4], strides = [1, 1]} : vector<8x96xf32> to vector<8x4xf32>
    %cst_170 = arith.constant dense<0.000000e+00> : vector<8x8xf32>
    %523 = tpu.matmul %520, %521, %cst_170 {dimension_numbers = #tpu.dot_dimension_numbers<[1], [1], [0], [0], [0, 0, 1, 0], [], []>} : vector<8x4xf32>, vector<8x4xf32>, vector<8x8xf32> -> vector<8x8xf32>
    %cst_171 = arith.constant dense<0xFF800000> : vector<8xf32>
    %524 = vector.multi_reduction <maximumf>, %523, %cst_171 [1] : vector<8x8xf32> to vector<8xf32>
    %cst_172 = arith.constant 0xFF800000 : f32
    %525 = vector.broadcast %cst_172 : f32 to vector<8xf32>
    %526 = arith.maximumf %525, %524 : vector<8xf32>
    %527 = vector.shape_cast %526 : vector<8xf32> to vector<8x1xf32>
    %528 = vector.broadcast %527 : vector<8x1xf32> to vector<8x8xf32>
    %529 = arith.subf %523, %528 : vector<8x8xf32>
    %530 = math.exp %529 : vector<8x8xf32>
    %cst_173 = arith.constant dense<0.000000e+00> : vector<8xf32>
    %531 = vector.multi_reduction <add>, %530, %cst_173 [1] : vector<8x8xf32> to vector<8xf32>
    %532 = vector.shape_cast %531 : vector<8xf32> to vector<8x1xf32>
    %533 = vector.broadcast %532 : vector<8x1xf32> to vector<8x8xf32>
    %534 = arith.divf %530, %533 : vector<8x8xf32>
    %cst_174 = arith.constant dense<0.000000e+00> : vector<8x4xf32>
    %535 = tpu.matmul %534, %522, %cst_174 {dimension_numbers = #tpu.dot_dimension_numbers<[1], [0], [0], [1], [0, 0, 1, 1], [], []>} : vector<8x8xf32>, vector<8x4xf32>, vector<8x4xf32> -> vector<8x4xf32>
    %536 = vector.extract_strided_slice %503 {offsets = [0, 8], sizes = [8, 4], strides = [1, 1]} : vector<8x96xf32> to vector<8x4xf32>
    %537 = vector.extract_strided_slice %503 {offsets = [0, 40], sizes = [8, 4], strides = [1, 1]} : vector<8x96xf32> to vector<8x4xf32>
    %538 = vector.extract_strided_slice %503 {offsets = [0, 72], sizes = [8, 4], strides = [1, 1]} : vector<8x96xf32> to vector<8x4xf32>
    %cst_175 = arith.constant dense<0.000000e+00> : vector<8x8xf32>
    %539 = tpu.matmul %536, %537, %cst_175 {dimension_numbers = #tpu.dot_dimension_numbers<[1], [1], [0], [0], [0, 0, 1, 0], [], []>} : vector<8x4xf32>, vector<8x4xf32>, vector<8x8xf32> -> vector<8x8xf32>
    %cst_176 = arith.constant dense<0xFF800000> : vector<8xf32>
    %540 = vector.multi_reduction <maximumf>, %539, %cst_176 [1] : vector<8x8xf32> to vector<8xf32>
    %cst_177 = arith.constant 0xFF800000 : f32
    %541 = vector.broadcast %cst_177 : f32 to vector<8xf32>
    %542 = arith.maximumf %541, %540 : vector<8xf32>
    %543 = vector.shape_cast %542 : vector<8xf32> to vector<8x1xf32>
    %544 = vector.broadcast %543 : vector<8x1xf32> to vector<8x8xf32>
    %545 = arith.subf %539, %544 : vector<8x8xf32>
    %546 = math.exp %545 : vector<8x8xf32>
    %cst_178 = arith.constant dense<0.000000e+00> : vector<8xf32>
    %547 = vector.multi_reduction <add>, %546, %cst_178 [1] : vector<8x8xf32> to vector<8xf32>
    %548 = vector.shape_cast %547 : vector<8xf32> to vector<8x1xf32>
    %549 = vector.broadcast %548 : vector<8x1xf32> to vector<8x8xf32>
    %550 = arith.divf %546, %549 : vector<8x8xf32>
    %cst_179 = arith.constant dense<0.000000e+00> : vector<8x4xf32>
    %551 = tpu.matmul %550, %538, %cst_179 {dimension_numbers = #tpu.dot_dimension_numbers<[1], [0], [0], [1], [0, 0, 1, 1], [], []>} : vector<8x8xf32>, vector<8x4xf32>, vector<8x4xf32> -> vector<8x4xf32>
    %552 = vector.extract_strided_slice %503 {offsets = [0, 12], sizes = [8, 4], strides = [1, 1]} : vector<8x96xf32> to vector<8x4xf32>
    %553 = vector.extract_strided_slice %503 {offsets = [0, 44], sizes = [8, 4], strides = [1, 1]} : vector<8x96xf32> to vector<8x4xf32>
    %554 = vector.extract_strided_slice %503 {offsets = [0, 76], sizes = [8, 4], strides = [1, 1]} : vector<8x96xf32> to vector<8x4xf32>
    %cst_180 = arith.constant dense<0.000000e+00> : vector<8x8xf32>
    %555 = tpu.matmul %552, %553, %cst_180 {dimension_numbers = #tpu.dot_dimension_numbers<[1], [1], [0], [0], [0, 0, 1, 0], [], []>} : vector<8x4xf32>, vector<8x4xf32>, vector<8x8xf32> -> vector<8x8xf32>
    %cst_181 = arith.constant dense<0xFF800000> : vector<8xf32>
    %556 = vector.multi_reduction <maximumf>, %555, %cst_181 [1] : vector<8x8xf32> to vector<8xf32>
    %cst_182 = arith.constant 0xFF800000 : f32
    %557 = vector.broadcast %cst_182 : f32 to vector<8xf32>
    %558 = arith.maximumf %557, %556 : vector<8xf32>
    %559 = vector.shape_cast %558 : vector<8xf32> to vector<8x1xf32>
    %560 = vector.broadcast %559 : vector<8x1xf32> to vector<8x8xf32>
    %561 = arith.subf %555, %560 : vector<8x8xf32>
    %562 = math.exp %561 : vector<8x8xf32>
    %cst_183 = arith.constant dense<0.000000e+00> : vector<8xf32>
    %563 = vector.multi_reduction <add>, %562, %cst_183 [1] : vector<8x8xf32> to vector<8xf32>
    %564 = vector.shape_cast %563 : vector<8xf32> to vector<8x1xf32>
    %565 = vector.broadcast %564 : vector<8x1xf32> to vector<8x8xf32>
    %566 = arith.divf %562, %565 : vector<8x8xf32>
    %cst_184 = arith.constant dense<0.000000e+00> : vector<8x4xf32>
    %567 = tpu.matmul %566, %554, %cst_184 {dimension_numbers = #tpu.dot_dimension_numbers<[1], [0], [0], [1], [0, 0, 1, 1], [], []>} : vector<8x8xf32>, vector<8x4xf32>, vector<8x4xf32> -> vector<8x4xf32>
    %568 = vector.extract_strided_slice %503 {offsets = [0, 16], sizes = [8, 4], strides = [1, 1]} : vector<8x96xf32> to vector<8x4xf32>
    %569 = vector.extract_strided_slice %503 {offsets = [0, 48], sizes = [8, 4], strides = [1, 1]} : vector<8x96xf32> to vector<8x4xf32>
    %570 = vector.extract_strided_slice %503 {offsets = [0, 80], sizes = [8, 4], strides = [1, 1]} : vector<8x96xf32> to vector<8x4xf32>
    %cst_185 = arith.constant dense<0.000000e+00> : vector<8x8xf32>
    %571 = tpu.matmul %568, %569, %cst_185 {dimension_numbers = #tpu.dot_dimension_numbers<[1], [1], [0], [0], [0, 0, 1, 0], [], []>} : vector<8x4xf32>, vector<8x4xf32>, vector<8x8xf32> -> vector<8x8xf32>
    %cst_186 = arith.constant dense<0xFF800000> : vector<8xf32>
    %572 = vector.multi_reduction <maximumf>, %571, %cst_186 [1] : vector<8x8xf32> to vector<8xf32>
    %cst_187 = arith.constant 0xFF800000 : f32
    %573 = vector.broadcast %cst_187 : f32 to vector<8xf32>
    %574 = arith.maximumf %573, %572 : vector<8xf32>
    %575 = vector.shape_cast %574 : vector<8xf32> to vector<8x1xf32>
    %576 = vector.broadcast %575 : vector<8x1xf32> to vector<8x8xf32>
    %577 = arith.subf %571, %576 : vector<8x8xf32>
    %578 = math.exp %577 : vector<8x8xf32>
    %cst_188 = arith.constant dense<0.000000e+00> : vector<8xf32>
    %579 = vector.multi_reduction <add>, %578, %cst_188 [1] : vector<8x8xf32> to vector<8xf32>
    %580 = vector.shape_cast %579 : vector<8xf32> to vector<8x1xf32>
    %581 = vector.broadcast %580 : vector<8x1xf32> to vector<8x8xf32>
    %582 = arith.divf %578, %581 : vector<8x8xf32>
    %cst_189 = arith.constant dense<0.000000e+00> : vector<8x4xf32>
    %583 = tpu.matmul %582, %570, %cst_189 {dimension_numbers = #tpu.dot_dimension_numbers<[1], [0], [0], [1], [0, 0, 1, 1], [], []>} : vector<8x8xf32>, vector<8x4xf32>, vector<8x4xf32> -> vector<8x4xf32>
    %584 = vector.extract_strided_slice %503 {offsets = [0, 20], sizes = [8, 4], strides = [1, 1]} : vector<8x96xf32> to vector<8x4xf32>
    %585 = vector.extract_strided_slice %503 {offsets = [0, 52], sizes = [8, 4], strides = [1, 1]} : vector<8x96xf32> to vector<8x4xf32>
    %586 = vector.extract_strided_slice %503 {offsets = [0, 84], sizes = [8, 4], strides = [1, 1]} : vector<8x96xf32> to vector<8x4xf32>
    %cst_190 = arith.constant dense<0.000000e+00> : vector<8x8xf32>
    %587 = tpu.matmul %584, %585, %cst_190 {dimension_numbers = #tpu.dot_dimension_numbers<[1], [1], [0], [0], [0, 0, 1, 0], [], []>} : vector<8x4xf32>, vector<8x4xf32>, vector<8x8xf32> -> vector<8x8xf32>
    %cst_191 = arith.constant dense<0xFF800000> : vector<8xf32>
    %588 = vector.multi_reduction <maximumf>, %587, %cst_191 [1] : vector<8x8xf32> to vector<8xf32>
    %cst_192 = arith.constant 0xFF800000 : f32
    %589 = vector.broadcast %cst_192 : f32 to vector<8xf32>
    %590 = arith.maximumf %589, %588 : vector<8xf32>
    %591 = vector.shape_cast %590 : vector<8xf32> to vector<8x1xf32>
    %592 = vector.broadcast %591 : vector<8x1xf32> to vector<8x8xf32>
    %593 = arith.subf %587, %592 : vector<8x8xf32>
    %594 = math.exp %593 : vector<8x8xf32>
    %cst_193 = arith.constant dense<0.000000e+00> : vector<8xf32>
    %595 = vector.multi_reduction <add>, %594, %cst_193 [1] : vector<8x8xf32> to vector<8xf32>
    %596 = vector.shape_cast %595 : vector<8xf32> to vector<8x1xf32>
    %597 = vector.broadcast %596 : vector<8x1xf32> to vector<8x8xf32>
    %598 = arith.divf %594, %597 : vector<8x8xf32>
    %cst_194 = arith.constant dense<0.000000e+00> : vector<8x4xf32>
    %599 = tpu.matmul %598, %586, %cst_194 {dimension_numbers = #tpu.dot_dimension_numbers<[1], [0], [0], [1], [0, 0, 1, 1], [], []>} : vector<8x8xf32>, vector<8x4xf32>, vector<8x4xf32> -> vector<8x4xf32>
    %600 = vector.extract_strided_slice %503 {offsets = [0, 24], sizes = [8, 4], strides = [1, 1]} : vector<8x96xf32> to vector<8x4xf32>
    %601 = vector.extract_strided_slice %503 {offsets = [0, 56], sizes = [8, 4], strides = [1, 1]} : vector<8x96xf32> to vector<8x4xf32>
    %602 = vector.extract_strided_slice %503 {offsets = [0, 88], sizes = [8, 4], strides = [1, 1]} : vector<8x96xf32> to vector<8x4xf32>
    %cst_195 = arith.constant dense<0.000000e+00> : vector<8x8xf32>
    %603 = tpu.matmul %600, %601, %cst_195 {dimension_numbers = #tpu.dot_dimension_numbers<[1], [1], [0], [0], [0, 0, 1, 0], [], []>} : vector<8x4xf32>, vector<8x4xf32>, vector<8x8xf32> -> vector<8x8xf32>
    %cst_196 = arith.constant dense<0xFF800000> : vector<8xf32>
    %604 = vector.multi_reduction <maximumf>, %603, %cst_196 [1] : vector<8x8xf32> to vector<8xf32>
    %cst_197 = arith.constant 0xFF800000 : f32
    %605 = vector.broadcast %cst_197 : f32 to vector<8xf32>
    %606 = arith.maximumf %605, %604 : vector<8xf32>
    %607 = vector.shape_cast %606 : vector<8xf32> to vector<8x1xf32>
    %608 = vector.broadcast %607 : vector<8x1xf32> to vector<8x8xf32>
    %609 = arith.subf %603, %608 : vector<8x8xf32>
    %610 = math.exp %609 : vector<8x8xf32>
    %cst_198 = arith.constant dense<0.000000e+00> : vector<8xf32>
    %611 = vector.multi_reduction <add>, %610, %cst_198 [1] : vector<8x8xf32> to vector<8xf32>
    %612 = vector.shape_cast %611 : vector<8xf32> to vector<8x1xf32>
    %613 = vector.broadcast %612 : vector<8x1xf32> to vector<8x8xf32>
    %614 = arith.divf %610, %613 : vector<8x8xf32>
    %cst_199 = arith.constant dense<0.000000e+00> : vector<8x4xf32>
    %615 = tpu.matmul %614, %602, %cst_199 {dimension_numbers = #tpu.dot_dimension_numbers<[1], [0], [0], [1], [0, 0, 1, 1], [], []>} : vector<8x8xf32>, vector<8x4xf32>, vector<8x4xf32> -> vector<8x4xf32>
    %616 = vector.extract_strided_slice %503 {offsets = [0, 28], sizes = [8, 4], strides = [1, 1]} : vector<8x96xf32> to vector<8x4xf32>
    %617 = vector.extract_strided_slice %503 {offsets = [0, 60], sizes = [8, 4], strides = [1, 1]} : vector<8x96xf32> to vector<8x4xf32>
    %618 = vector.extract_strided_slice %503 {offsets = [0, 92], sizes = [8, 4], strides = [1, 1]} : vector<8x96xf32> to vector<8x4xf32>
    %cst_200 = arith.constant dense<0.000000e+00> : vector<8x8xf32>
    %619 = tpu.matmul %616, %617, %cst_200 {dimension_numbers = #tpu.dot_dimension_numbers<[1], [1], [0], [0], [0, 0, 1, 0], [], []>} : vector<8x4xf32>, vector<8x4xf32>, vector<8x8xf32> -> vector<8x8xf32>
    %cst_201 = arith.constant dense<0xFF800000> : vector<8xf32>
    %620 = vector.multi_reduction <maximumf>, %619, %cst_201 [1] : vector<8x8xf32> to vector<8xf32>
    %cst_202 = arith.constant 0xFF800000 : f32
    %621 = vector.broadcast %cst_202 : f32 to vector<8xf32>
    %622 = arith.maximumf %621, %620 : vector<8xf32>
    %623 = vector.shape_cast %622 : vector<8xf32> to vector<8x1xf32>
    %624 = vector.broadcast %623 : vector<8x1xf32> to vector<8x8xf32>
    %625 = arith.subf %619, %624 : vector<8x8xf32>
    %626 = math.exp %625 : vector<8x8xf32>
    %cst_203 = arith.constant dense<0.000000e+00> : vector<8xf32>
    %627 = vector.multi_reduction <add>, %626, %cst_203 [1] : vector<8x8xf32> to vector<8xf32>
    %628 = vector.shape_cast %627 : vector<8xf32> to vector<8x1xf32>
    %629 = vector.broadcast %628 : vector<8x1xf32> to vector<8x8xf32>
    %630 = arith.divf %626, %629 : vector<8x8xf32>
    %cst_204 = arith.constant dense<0.000000e+00> : vector<8x4xf32>
    %631 = tpu.matmul %630, %618, %cst_204 {dimension_numbers = #tpu.dot_dimension_numbers<[1], [0], [0], [1], [0, 0, 1, 1], [], []>} : vector<8x8xf32>, vector<8x4xf32>, vector<8x4xf32> -> vector<8x4xf32>
    %632 = tpu.concatenate %519, %535, %551, %567, %583, %599, %615, %631 in 1 : vector<8x4xf32>, vector<8x4xf32>, vector<8x4xf32>, vector<8x4xf32>, vector<8x4xf32>, vector<8x4xf32>, vector<8x4xf32>, vector<8x4xf32> -> vector<8x32xf32>
    %633 = tpu.concatenate %502, %632 in 0 : vector<8x32xf32>, vector<8x32xf32> -> vector<16x32xf32>
    %c3 = arith.constant 3 : index
    %c0_205 = arith.constant 0 : index
    %c0_206 = arith.constant 0 : index
    %634 = vector.load %arg2[%c3, %c0_205, %c0_206] : memref<9x32x128xf32, #tpu.memory_space<vmem>>, vector<1x32x128xf32>
    %635 = vector.shape_cast %634 : vector<1x32x128xf32> to vector<32x128xf32>
    %636 = vector.extract_strided_slice %635 {offsets = [0, 0], sizes = [32, 32], strides = [1, 1]} : vector<32x128xf32> to vector<32x32xf32>
    %cst_207 = arith.constant dense<0.000000e+00> : vector<16x32xf32>
    %637 = tpu.matmul %633, %636, %cst_207 {dimension_numbers = #tpu.dot_dimension_numbers<[1], [0], [0], [1], [0, 0, 1, 1], [], []>} : vector<16x32xf32>, vector<32x32xf32>, vector<16x32xf32> -> vector<16x32xf32>
    %638 = vector.extract_strided_slice %0 {offsets = [3, 0], sizes = [1, 32], strides = [1, 1]} : vector<48x128xf32> to vector<1x32xf32>
    %639 = vector.broadcast %638 : vector<1x32xf32> to vector<16x32xf32>
    %640 = arith.addf %637, %639 : vector<16x32xf32>
    %641 = arith.addf %365, %640 : vector<16x32xf32>
    %642 = vector.extract_strided_slice %0 {offsets = [5, 0], sizes = [1, 32], strides = [1, 1]} : vector<48x128xf32> to vector<1x32xf32>
    %643 = vector.extract_strided_slice %0 {offsets = [7, 0], sizes = [1, 32], strides = [1, 1]} : vector<48x128xf32> to vector<1x32xf32>
    %cst_208 = arith.constant dense<0.000000e+00> : vector<16xf32>
    %644 = vector.multi_reduction <add>, %641, %cst_208 [1] : vector<16x32xf32> to vector<16xf32>
    %645 = vector.shape_cast %644 : vector<16xf32> to vector<16x1xf32>
    %cst_209 = arith.constant 3.200000e+01 : f32
    %646 = vector.broadcast %cst_209 : f32 to vector<16x1xf32>
    %647 = arith.divf %645, %646 : vector<16x1xf32>
    %648 = vector.broadcast %647 : vector<16x1xf32> to vector<16x32xf32>
    %649 = arith.subf %641, %648 : vector<16x32xf32>
    %650 = arith.mulf %649, %649 : vector<16x32xf32>
    %cst_210 = arith.constant dense<0.000000e+00> : vector<16xf32>
    %651 = vector.multi_reduction <add>, %650, %cst_210 [1] : vector<16x32xf32> to vector<16xf32>
    %652 = vector.shape_cast %651 : vector<16xf32> to vector<16x1xf32>
    %cst_211 = arith.constant 3.200000e+01 : f32
    %653 = vector.broadcast %cst_211 : f32 to vector<16x1xf32>
    %654 = arith.divf %652, %653 : vector<16x1xf32>
    %655 = vector.broadcast %647 : vector<16x1xf32> to vector<16x32xf32>
    %656 = arith.subf %641, %655 : vector<16x32xf32>
    %cst_212 = arith.constant 9.99999974E-6 : f32
    %657 = vector.broadcast %cst_212 : f32 to vector<16x1xf32>
    %658 = arith.addf %654, %657 : vector<16x1xf32>
    %659 = math.rsqrt %658 : vector<16x1xf32>
    %660 = vector.broadcast %659 : vector<16x1xf32> to vector<16x32xf32>
    %661 = arith.mulf %656, %660 : vector<16x32xf32>
    %662 = vector.broadcast %642 : vector<1x32xf32> to vector<16x32xf32>
    %663 = arith.mulf %661, %662 : vector<16x32xf32>
    %664 = vector.broadcast %643 : vector<1x32xf32> to vector<16x32xf32>
    %665 = arith.addf %663, %664 : vector<16x32xf32>
    %c5 = arith.constant 5 : index
    %c0_213 = arith.constant 0 : index
    %c0_214 = arith.constant 0 : index
    %666 = vector.load %arg2[%c5, %c0_213, %c0_214] : memref<9x32x128xf32, #tpu.memory_space<vmem>>, vector<1x32x128xf32>
    %667 = vector.shape_cast %666 : vector<1x32x128xf32> to vector<32x128xf32>
    %668 = vector.extract_strided_slice %667 {offsets = [0, 0], sizes = [32, 64], strides = [1, 1]} : vector<32x128xf32> to vector<32x64xf32>
    %cst_215 = arith.constant dense<0.000000e+00> : vector<16x64xf32>
    %669 = tpu.matmul %665, %668, %cst_215 {dimension_numbers = #tpu.dot_dimension_numbers<[1], [0], [0], [1], [0, 0, 1, 1], [], []>} : vector<16x32xf32>, vector<32x64xf32>, vector<16x64xf32> -> vector<16x64xf32>
    %670 = vector.extract_strided_slice %0 {offsets = [13, 0], sizes = [1, 64], strides = [1, 1]} : vector<48x128xf32> to vector<1x64xf32>
    %671 = vector.broadcast %670 : vector<1x64xf32> to vector<16x64xf32>
    %672 = arith.addf %669, %671 : vector<16x64xf32>
    %cst_216 = arith.constant 0.000000e+00 : f32
    %673 = vector.broadcast %cst_216 : f32 to vector<16x64xf32>
    %674 = arith.maximumf %672, %673 : vector<16x64xf32>
    %675 = vector.extract_strided_slice %1 {offsets = [0, 32], sizes = [64, 32], strides = [1, 1]} : vector<64x64xf32> to vector<64x32xf32>
    %cst_217 = arith.constant dense<0.000000e+00> : vector<16x32xf32>
    %676 = tpu.matmul %674, %675, %cst_217 {dimension_numbers = #tpu.dot_dimension_numbers<[1], [0], [0], [1], [0, 0, 1, 1], [], []>} : vector<16x64xf32>, vector<64x32xf32>, vector<16x32xf32> -> vector<16x32xf32>
    %677 = vector.extract_strided_slice %0 {offsets = [15, 0], sizes = [1, 32], strides = [1, 1]} : vector<48x128xf32> to vector<1x32xf32>
    %678 = vector.broadcast %677 : vector<1x32xf32> to vector<16x32xf32>
    %679 = arith.addf %676, %678 : vector<16x32xf32>
    %680 = arith.addf %665, %679 : vector<16x32xf32>
    %681 = vector.extract_strided_slice %0 {offsets = [9, 0], sizes = [1, 32], strides = [1, 1]} : vector<48x128xf32> to vector<1x32xf32>
    %682 = vector.extract_strided_slice %0 {offsets = [11, 0], sizes = [1, 32], strides = [1, 1]} : vector<48x128xf32> to vector<1x32xf32>
    %cst_218 = arith.constant dense<0.000000e+00> : vector<16xf32>
    %683 = vector.multi_reduction <add>, %680, %cst_218 [1] : vector<16x32xf32> to vector<16xf32>
    %684 = vector.shape_cast %683 : vector<16xf32> to vector<16x1xf32>
    %cst_219 = arith.constant 3.200000e+01 : f32
    %685 = vector.broadcast %cst_219 : f32 to vector<16x1xf32>
    %686 = arith.divf %684, %685 : vector<16x1xf32>
    %687 = vector.broadcast %686 : vector<16x1xf32> to vector<16x32xf32>
    %688 = arith.subf %680, %687 : vector<16x32xf32>
    %689 = arith.mulf %688, %688 : vector<16x32xf32>
    %cst_220 = arith.constant dense<0.000000e+00> : vector<16xf32>
    %690 = vector.multi_reduction <add>, %689, %cst_220 [1] : vector<16x32xf32> to vector<16xf32>
    %691 = vector.shape_cast %690 : vector<16xf32> to vector<16x1xf32>
    %cst_221 = arith.constant 3.200000e+01 : f32
    %692 = vector.broadcast %cst_221 : f32 to vector<16x1xf32>
    %693 = arith.divf %691, %692 : vector<16x1xf32>
    %694 = vector.broadcast %686 : vector<16x1xf32> to vector<16x32xf32>
    %695 = arith.subf %680, %694 : vector<16x32xf32>
    %cst_222 = arith.constant 9.99999974E-6 : f32
    %696 = vector.broadcast %cst_222 : f32 to vector<16x1xf32>
    %697 = arith.addf %693, %696 : vector<16x1xf32>
    %698 = math.rsqrt %697 : vector<16x1xf32>
    %699 = vector.broadcast %698 : vector<16x1xf32> to vector<16x32xf32>
    %700 = arith.mulf %695, %699 : vector<16x32xf32>
    %701 = vector.broadcast %681 : vector<1x32xf32> to vector<16x32xf32>
    %702 = arith.mulf %700, %701 : vector<16x32xf32>
    %703 = vector.broadcast %682 : vector<1x32xf32> to vector<16x32xf32>
    %704 = arith.addf %702, %703 : vector<16x32xf32>
    %c6 = arith.constant 6 : index
    %c0_223 = arith.constant 0 : index
    %c0_224 = arith.constant 0 : index
    %705 = vector.load %arg2[%c6, %c0_223, %c0_224] : memref<9x32x128xf32, #tpu.memory_space<vmem>>, vector<1x32x128xf32>
    %706 = vector.shape_cast %705 : vector<1x32x128xf32> to vector<32x128xf32>
    %cst_225 = arith.constant dense<0.000000e+00> : vector<16x128xf32>
    %707 = tpu.matmul %704, %706, %cst_225 {dimension_numbers = #tpu.dot_dimension_numbers<[1], [0], [0], [1], [0, 0, 1, 1], [], []>} : vector<16x32xf32>, vector<32x128xf32>, vector<16x128xf32> -> vector<16x128xf32>
    %708 = vector.extract_strided_slice %0 {offsets = [16, 0], sizes = [1, 128], strides = [1, 1]} : vector<48x128xf32> to vector<1x128xf32>
    %709 = vector.broadcast %708 : vector<1x128xf32> to vector<16x128xf32>
    %710 = arith.addf %707, %709 : vector<16x128xf32>
    %c7 = arith.constant 7 : index
    %c0_226 = arith.constant 0 : index
    %c0_227 = arith.constant 0 : index
    %711 = vector.load %arg2[%c7, %c0_226, %c0_227] : memref<9x32x128xf32, #tpu.memory_space<vmem>>, vector<1x32x128xf32>
    %712 = vector.shape_cast %711 : vector<1x32x128xf32> to vector<32x128xf32>
    %c8 = arith.constant 8 : index
    %c0_228 = arith.constant 0 : index
    %c0_229 = arith.constant 0 : index
    %713 = vector.load %arg2[%c8, %c0_228, %c0_229] : memref<9x32x128xf32, #tpu.memory_space<vmem>>, vector<1x32x128xf32>
    %714 = vector.shape_cast %713 : vector<1x32x128xf32> to vector<32x128xf32>
    %715 = vector.extract_strided_slice %714 {offsets = [0, 0], sizes = [32, 8], strides = [1, 1]} : vector<32x128xf32> to vector<32x8xf32>
    %716 = vector.extract_strided_slice %0 {offsets = [24, 0], sizes = [8, 32], strides = [1, 1]} : vector<48x128xf32> to vector<8x32xf32>
    %717 = vector.extract_strided_slice %0 {offsets = [17, 0], sizes = [1, 8], strides = [1, 1]} : vector<48x128xf32> to vector<1x8xf32>
    %718 = vector.extract_strided_slice %0 {offsets = [18, 0], sizes = [1, 5], strides = [1, 1]} : vector<48x128xf32> to vector<1x5xf32>
    %cst_230 = arith.constant 0.000000e+00 : f32
    %719 = vector.broadcast %cst_230 : f32 to vector<1x32xf32>
    %cst_231 = arith.constant 0.000000e+00 : f32
    %720 = vector.broadcast %cst_231 : f32 to vector<1x32xf32>
    %721 = vector.extract_strided_slice %710 {offsets = [0, 0], sizes = [1, 128], strides = [1, 1]} : vector<16x128xf32> to vector<1x128xf32>
    %cst_232 = arith.constant dense<0.000000e+00> : vector<1x128xf32>
    %722 = tpu.matmul %719, %712, %cst_232 {dimension_numbers = #tpu.dot_dimension_numbers<[1], [0], [0], [1], [0, 0, 1, 1], [], []>} : vector<1x32xf32>, vector<32x128xf32>, vector<1x128xf32> -> vector<1x128xf32>
    %723 = arith.addf %721, %722 : vector<1x128xf32>
    %724 = vector.extract_strided_slice %723 {offsets = [0, 0], sizes = [1, 32], strides = [1, 1]} : vector<1x128xf32> to vector<1x32xf32>
    %725 = arith.negf %724 : vector<1x32xf32>
    %726 = math.exp %725 : vector<1x32xf32>
    %cst_233 = arith.constant 1.000000e+00 : f32
    %727 = vector.broadcast %cst_233 : f32 to vector<1x32xf32>
    %728 = arith.addf %727, %726 : vector<1x32xf32>
    %729 = arith.divf %727, %728 : vector<1x32xf32>
    %730 = vector.extract_strided_slice %723 {offsets = [0, 32], sizes = [1, 32], strides = [1, 1]} : vector<1x128xf32> to vector<1x32xf32>
    %731 = arith.negf %730 : vector<1x32xf32>
    %732 = math.exp %731 : vector<1x32xf32>
    %cst_234 = arith.constant 1.000000e+00 : f32
    %733 = vector.broadcast %cst_234 : f32 to vector<1x32xf32>
    %734 = arith.addf %733, %732 : vector<1x32xf32>
    %735 = arith.divf %733, %734 : vector<1x32xf32>
    %736 = vector.extract_strided_slice %723 {offsets = [0, 64], sizes = [1, 32], strides = [1, 1]} : vector<1x128xf32> to vector<1x32xf32>
    %737 = math.tanh %736 : vector<1x32xf32>
    %738 = vector.extract_strided_slice %723 {offsets = [0, 96], sizes = [1, 32], strides = [1, 1]} : vector<1x128xf32> to vector<1x32xf32>
    %739 = arith.negf %738 : vector<1x32xf32>
    %740 = math.exp %739 : vector<1x32xf32>
    %cst_235 = arith.constant 1.000000e+00 : f32
    %741 = vector.broadcast %cst_235 : f32 to vector<1x32xf32>
    %742 = arith.addf %741, %740 : vector<1x32xf32>
    %743 = arith.divf %741, %742 : vector<1x32xf32>
    %744 = arith.mulf %735, %720 : vector<1x32xf32>
    %745 = arith.mulf %729, %737 : vector<1x32xf32>
    %746 = arith.addf %744, %745 : vector<1x32xf32>
    %747 = math.tanh %746 : vector<1x32xf32>
    %748 = arith.mulf %743, %747 : vector<1x32xf32>
    %749 = vector.extract_strided_slice %710 {offsets = [1, 0], sizes = [1, 128], strides = [1, 1]} : vector<16x128xf32> to vector<1x128xf32>
    %cst_236 = arith.constant dense<0.000000e+00> : vector<1x128xf32>
    %750 = tpu.matmul %748, %712, %cst_236 {dimension_numbers = #tpu.dot_dimension_numbers<[1], [0], [0], [1], [0, 0, 1, 1], [], []>} : vector<1x32xf32>, vector<32x128xf32>, vector<1x128xf32> -> vector<1x128xf32>
    %751 = arith.addf %749, %750 : vector<1x128xf32>
    %752 = vector.extract_strided_slice %751 {offsets = [0, 0], sizes = [1, 32], strides = [1, 1]} : vector<1x128xf32> to vector<1x32xf32>
    %753 = arith.negf %752 : vector<1x32xf32>
    %754 = math.exp %753 : vector<1x32xf32>
    %cst_237 = arith.constant 1.000000e+00 : f32
    %755 = vector.broadcast %cst_237 : f32 to vector<1x32xf32>
    %756 = arith.addf %755, %754 : vector<1x32xf32>
    %757 = arith.divf %755, %756 : vector<1x32xf32>
    %758 = vector.extract_strided_slice %751 {offsets = [0, 32], sizes = [1, 32], strides = [1, 1]} : vector<1x128xf32> to vector<1x32xf32>
    %759 = arith.negf %758 : vector<1x32xf32>
    %760 = math.exp %759 : vector<1x32xf32>
    %cst_238 = arith.constant 1.000000e+00 : f32
    %761 = vector.broadcast %cst_238 : f32 to vector<1x32xf32>
    %762 = arith.addf %761, %760 : vector<1x32xf32>
    %763 = arith.divf %761, %762 : vector<1x32xf32>
    %764 = vector.extract_strided_slice %751 {offsets = [0, 64], sizes = [1, 32], strides = [1, 1]} : vector<1x128xf32> to vector<1x32xf32>
    %765 = math.tanh %764 : vector<1x32xf32>
    %766 = vector.extract_strided_slice %751 {offsets = [0, 96], sizes = [1, 32], strides = [1, 1]} : vector<1x128xf32> to vector<1x32xf32>
    %767 = arith.negf %766 : vector<1x32xf32>
    %768 = math.exp %767 : vector<1x32xf32>
    %cst_239 = arith.constant 1.000000e+00 : f32
    %769 = vector.broadcast %cst_239 : f32 to vector<1x32xf32>
    %770 = arith.addf %769, %768 : vector<1x32xf32>
    %771 = arith.divf %769, %770 : vector<1x32xf32>
    %772 = arith.mulf %763, %746 : vector<1x32xf32>
    %773 = arith.mulf %757, %765 : vector<1x32xf32>
    %774 = arith.addf %772, %773 : vector<1x32xf32>
    %775 = math.tanh %774 : vector<1x32xf32>
    %776 = arith.mulf %771, %775 : vector<1x32xf32>
    %777 = vector.extract_strided_slice %710 {offsets = [2, 0], sizes = [1, 128], strides = [1, 1]} : vector<16x128xf32> to vector<1x128xf32>
    %cst_240 = arith.constant dense<0.000000e+00> : vector<1x128xf32>
    %778 = tpu.matmul %776, %712, %cst_240 {dimension_numbers = #tpu.dot_dimension_numbers<[1], [0], [0], [1], [0, 0, 1, 1], [], []>} : vector<1x32xf32>, vector<32x128xf32>, vector<1x128xf32> -> vector<1x128xf32>
    %779 = arith.addf %777, %778 : vector<1x128xf32>
    %780 = vector.extract_strided_slice %779 {offsets = [0, 0], sizes = [1, 32], strides = [1, 1]} : vector<1x128xf32> to vector<1x32xf32>
    %781 = arith.negf %780 : vector<1x32xf32>
    %782 = math.exp %781 : vector<1x32xf32>
    %cst_241 = arith.constant 1.000000e+00 : f32
    %783 = vector.broadcast %cst_241 : f32 to vector<1x32xf32>
    %784 = arith.addf %783, %782 : vector<1x32xf32>
    %785 = arith.divf %783, %784 : vector<1x32xf32>
    %786 = vector.extract_strided_slice %779 {offsets = [0, 32], sizes = [1, 32], strides = [1, 1]} : vector<1x128xf32> to vector<1x32xf32>
    %787 = arith.negf %786 : vector<1x32xf32>
    %788 = math.exp %787 : vector<1x32xf32>
    %cst_242 = arith.constant 1.000000e+00 : f32
    %789 = vector.broadcast %cst_242 : f32 to vector<1x32xf32>
    %790 = arith.addf %789, %788 : vector<1x32xf32>
    %791 = arith.divf %789, %790 : vector<1x32xf32>
    %792 = vector.extract_strided_slice %779 {offsets = [0, 64], sizes = [1, 32], strides = [1, 1]} : vector<1x128xf32> to vector<1x32xf32>
    %793 = math.tanh %792 : vector<1x32xf32>
    %794 = vector.extract_strided_slice %779 {offsets = [0, 96], sizes = [1, 32], strides = [1, 1]} : vector<1x128xf32> to vector<1x32xf32>
    %795 = arith.negf %794 : vector<1x32xf32>
    %796 = math.exp %795 : vector<1x32xf32>
    %cst_243 = arith.constant 1.000000e+00 : f32
    %797 = vector.broadcast %cst_243 : f32 to vector<1x32xf32>
    %798 = arith.addf %797, %796 : vector<1x32xf32>
    %799 = arith.divf %797, %798 : vector<1x32xf32>
    %800 = arith.mulf %791, %774 : vector<1x32xf32>
    %801 = arith.mulf %785, %793 : vector<1x32xf32>
    %802 = arith.addf %800, %801 : vector<1x32xf32>
    %803 = math.tanh %802 : vector<1x32xf32>
    %804 = arith.mulf %799, %803 : vector<1x32xf32>
    %805 = vector.extract_strided_slice %710 {offsets = [3, 0], sizes = [1, 128], strides = [1, 1]} : vector<16x128xf32> to vector<1x128xf32>
    %cst_244 = arith.constant dense<0.000000e+00> : vector<1x128xf32>
    %806 = tpu.matmul %804, %712, %cst_244 {dimension_numbers = #tpu.dot_dimension_numbers<[1], [0], [0], [1], [0, 0, 1, 1], [], []>} : vector<1x32xf32>, vector<32x128xf32>, vector<1x128xf32> -> vector<1x128xf32>
    %807 = arith.addf %805, %806 : vector<1x128xf32>
    %808 = vector.extract_strided_slice %807 {offsets = [0, 0], sizes = [1, 32], strides = [1, 1]} : vector<1x128xf32> to vector<1x32xf32>
    %809 = arith.negf %808 : vector<1x32xf32>
    %810 = math.exp %809 : vector<1x32xf32>
    %cst_245 = arith.constant 1.000000e+00 : f32
    %811 = vector.broadcast %cst_245 : f32 to vector<1x32xf32>
    %812 = arith.addf %811, %810 : vector<1x32xf32>
    %813 = arith.divf %811, %812 : vector<1x32xf32>
    %814 = vector.extract_strided_slice %807 {offsets = [0, 32], sizes = [1, 32], strides = [1, 1]} : vector<1x128xf32> to vector<1x32xf32>
    %815 = arith.negf %814 : vector<1x32xf32>
    %816 = math.exp %815 : vector<1x32xf32>
    %cst_246 = arith.constant 1.000000e+00 : f32
    %817 = vector.broadcast %cst_246 : f32 to vector<1x32xf32>
    %818 = arith.addf %817, %816 : vector<1x32xf32>
    %819 = arith.divf %817, %818 : vector<1x32xf32>
    %820 = vector.extract_strided_slice %807 {offsets = [0, 64], sizes = [1, 32], strides = [1, 1]} : vector<1x128xf32> to vector<1x32xf32>
    %821 = math.tanh %820 : vector<1x32xf32>
    %822 = vector.extract_strided_slice %807 {offsets = [0, 96], sizes = [1, 32], strides = [1, 1]} : vector<1x128xf32> to vector<1x32xf32>
    %823 = arith.negf %822 : vector<1x32xf32>
    %824 = math.exp %823 : vector<1x32xf32>
    %cst_247 = arith.constant 1.000000e+00 : f32
    %825 = vector.broadcast %cst_247 : f32 to vector<1x32xf32>
    %826 = arith.addf %825, %824 : vector<1x32xf32>
    %827 = arith.divf %825, %826 : vector<1x32xf32>
    %828 = arith.mulf %819, %802 : vector<1x32xf32>
    %829 = arith.mulf %813, %821 : vector<1x32xf32>
    %830 = arith.addf %828, %829 : vector<1x32xf32>
    %831 = math.tanh %830 : vector<1x32xf32>
    %832 = arith.mulf %827, %831 : vector<1x32xf32>
    %833 = vector.extract_strided_slice %710 {offsets = [4, 0], sizes = [1, 128], strides = [1, 1]} : vector<16x128xf32> to vector<1x128xf32>
    %cst_248 = arith.constant dense<0.000000e+00> : vector<1x128xf32>
    %834 = tpu.matmul %832, %712, %cst_248 {dimension_numbers = #tpu.dot_dimension_numbers<[1], [0], [0], [1], [0, 0, 1, 1], [], []>} : vector<1x32xf32>, vector<32x128xf32>, vector<1x128xf32> -> vector<1x128xf32>
    %835 = arith.addf %833, %834 : vector<1x128xf32>
    %836 = vector.extract_strided_slice %835 {offsets = [0, 0], sizes = [1, 32], strides = [1, 1]} : vector<1x128xf32> to vector<1x32xf32>
    %837 = arith.negf %836 : vector<1x32xf32>
    %838 = math.exp %837 : vector<1x32xf32>
    %cst_249 = arith.constant 1.000000e+00 : f32
    %839 = vector.broadcast %cst_249 : f32 to vector<1x32xf32>
    %840 = arith.addf %839, %838 : vector<1x32xf32>
    %841 = arith.divf %839, %840 : vector<1x32xf32>
    %842 = vector.extract_strided_slice %835 {offsets = [0, 32], sizes = [1, 32], strides = [1, 1]} : vector<1x128xf32> to vector<1x32xf32>
    %843 = arith.negf %842 : vector<1x32xf32>
    %844 = math.exp %843 : vector<1x32xf32>
    %cst_250 = arith.constant 1.000000e+00 : f32
    %845 = vector.broadcast %cst_250 : f32 to vector<1x32xf32>
    %846 = arith.addf %845, %844 : vector<1x32xf32>
    %847 = arith.divf %845, %846 : vector<1x32xf32>
    %848 = vector.extract_strided_slice %835 {offsets = [0, 64], sizes = [1, 32], strides = [1, 1]} : vector<1x128xf32> to vector<1x32xf32>
    %849 = math.tanh %848 : vector<1x32xf32>
    %850 = vector.extract_strided_slice %835 {offsets = [0, 96], sizes = [1, 32], strides = [1, 1]} : vector<1x128xf32> to vector<1x32xf32>
    %851 = arith.negf %850 : vector<1x32xf32>
    %852 = math.exp %851 : vector<1x32xf32>
    %cst_251 = arith.constant 1.000000e+00 : f32
    %853 = vector.broadcast %cst_251 : f32 to vector<1x32xf32>
    %854 = arith.addf %853, %852 : vector<1x32xf32>
    %855 = arith.divf %853, %854 : vector<1x32xf32>
    %856 = arith.mulf %847, %830 : vector<1x32xf32>
    %857 = arith.mulf %841, %849 : vector<1x32xf32>
    %858 = arith.addf %856, %857 : vector<1x32xf32>
    %859 = math.tanh %858 : vector<1x32xf32>
    %860 = arith.mulf %855, %859 : vector<1x32xf32>
    %861 = vector.extract_strided_slice %710 {offsets = [5, 0], sizes = [1, 128], strides = [1, 1]} : vector<16x128xf32> to vector<1x128xf32>
    %cst_252 = arith.constant dense<0.000000e+00> : vector<1x128xf32>
    %862 = tpu.matmul %860, %712, %cst_252 {dimension_numbers = #tpu.dot_dimension_numbers<[1], [0], [0], [1], [0, 0, 1, 1], [], []>} : vector<1x32xf32>, vector<32x128xf32>, vector<1x128xf32> -> vector<1x128xf32>
    %863 = arith.addf %861, %862 : vector<1x128xf32>
    %864 = vector.extract_strided_slice %863 {offsets = [0, 0], sizes = [1, 32], strides = [1, 1]} : vector<1x128xf32> to vector<1x32xf32>
    %865 = arith.negf %864 : vector<1x32xf32>
    %866 = math.exp %865 : vector<1x32xf32>
    %cst_253 = arith.constant 1.000000e+00 : f32
    %867 = vector.broadcast %cst_253 : f32 to vector<1x32xf32>
    %868 = arith.addf %867, %866 : vector<1x32xf32>
    %869 = arith.divf %867, %868 : vector<1x32xf32>
    %870 = vector.extract_strided_slice %863 {offsets = [0, 32], sizes = [1, 32], strides = [1, 1]} : vector<1x128xf32> to vector<1x32xf32>
    %871 = arith.negf %870 : vector<1x32xf32>
    %872 = math.exp %871 : vector<1x32xf32>
    %cst_254 = arith.constant 1.000000e+00 : f32
    %873 = vector.broadcast %cst_254 : f32 to vector<1x32xf32>
    %874 = arith.addf %873, %872 : vector<1x32xf32>
    %875 = arith.divf %873, %874 : vector<1x32xf32>
    %876 = vector.extract_strided_slice %863 {offsets = [0, 64], sizes = [1, 32], strides = [1, 1]} : vector<1x128xf32> to vector<1x32xf32>
    %877 = math.tanh %876 : vector<1x32xf32>
    %878 = vector.extract_strided_slice %863 {offsets = [0, 96], sizes = [1, 32], strides = [1, 1]} : vector<1x128xf32> to vector<1x32xf32>
    %879 = arith.negf %878 : vector<1x32xf32>
    %880 = math.exp %879 : vector<1x32xf32>
    %cst_255 = arith.constant 1.000000e+00 : f32
    %881 = vector.broadcast %cst_255 : f32 to vector<1x32xf32>
    %882 = arith.addf %881, %880 : vector<1x32xf32>
    %883 = arith.divf %881, %882 : vector<1x32xf32>
    %884 = arith.mulf %875, %858 : vector<1x32xf32>
    %885 = arith.mulf %869, %877 : vector<1x32xf32>
    %886 = arith.addf %884, %885 : vector<1x32xf32>
    %887 = math.tanh %886 : vector<1x32xf32>
    %888 = arith.mulf %883, %887 : vector<1x32xf32>
    %889 = vector.extract_strided_slice %710 {offsets = [6, 0], sizes = [1, 128], strides = [1, 1]} : vector<16x128xf32> to vector<1x128xf32>
    %cst_256 = arith.constant dense<0.000000e+00> : vector<1x128xf32>
    %890 = tpu.matmul %888, %712, %cst_256 {dimension_numbers = #tpu.dot_dimension_numbers<[1], [0], [0], [1], [0, 0, 1, 1], [], []>} : vector<1x32xf32>, vector<32x128xf32>, vector<1x128xf32> -> vector<1x128xf32>
    %891 = arith.addf %889, %890 : vector<1x128xf32>
    %892 = vector.extract_strided_slice %891 {offsets = [0, 0], sizes = [1, 32], strides = [1, 1]} : vector<1x128xf32> to vector<1x32xf32>
    %893 = arith.negf %892 : vector<1x32xf32>
    %894 = math.exp %893 : vector<1x32xf32>
    %cst_257 = arith.constant 1.000000e+00 : f32
    %895 = vector.broadcast %cst_257 : f32 to vector<1x32xf32>
    %896 = arith.addf %895, %894 : vector<1x32xf32>
    %897 = arith.divf %895, %896 : vector<1x32xf32>
    %898 = vector.extract_strided_slice %891 {offsets = [0, 32], sizes = [1, 32], strides = [1, 1]} : vector<1x128xf32> to vector<1x32xf32>
    %899 = arith.negf %898 : vector<1x32xf32>
    %900 = math.exp %899 : vector<1x32xf32>
    %cst_258 = arith.constant 1.000000e+00 : f32
    %901 = vector.broadcast %cst_258 : f32 to vector<1x32xf32>
    %902 = arith.addf %901, %900 : vector<1x32xf32>
    %903 = arith.divf %901, %902 : vector<1x32xf32>
    %904 = vector.extract_strided_slice %891 {offsets = [0, 64], sizes = [1, 32], strides = [1, 1]} : vector<1x128xf32> to vector<1x32xf32>
    %905 = math.tanh %904 : vector<1x32xf32>
    %906 = vector.extract_strided_slice %891 {offsets = [0, 96], sizes = [1, 32], strides = [1, 1]} : vector<1x128xf32> to vector<1x32xf32>
    %907 = arith.negf %906 : vector<1x32xf32>
    %908 = math.exp %907 : vector<1x32xf32>
    %cst_259 = arith.constant 1.000000e+00 : f32
    %909 = vector.broadcast %cst_259 : f32 to vector<1x32xf32>
    %910 = arith.addf %909, %908 : vector<1x32xf32>
    %911 = arith.divf %909, %910 : vector<1x32xf32>
    %912 = arith.mulf %903, %886 : vector<1x32xf32>
    %913 = arith.mulf %897, %905 : vector<1x32xf32>
    %914 = arith.addf %912, %913 : vector<1x32xf32>
    %915 = math.tanh %914 : vector<1x32xf32>
    %916 = arith.mulf %911, %915 : vector<1x32xf32>
    %917 = vector.extract_strided_slice %710 {offsets = [7, 0], sizes = [1, 128], strides = [1, 1]} : vector<16x128xf32> to vector<1x128xf32>
    %cst_260 = arith.constant dense<0.000000e+00> : vector<1x128xf32>
    %918 = tpu.matmul %916, %712, %cst_260 {dimension_numbers = #tpu.dot_dimension_numbers<[1], [0], [0], [1], [0, 0, 1, 1], [], []>} : vector<1x32xf32>, vector<32x128xf32>, vector<1x128xf32> -> vector<1x128xf32>
    %919 = arith.addf %917, %918 : vector<1x128xf32>
    %920 = vector.extract_strided_slice %919 {offsets = [0, 0], sizes = [1, 32], strides = [1, 1]} : vector<1x128xf32> to vector<1x32xf32>
    %921 = arith.negf %920 : vector<1x32xf32>
    %922 = math.exp %921 : vector<1x32xf32>
    %cst_261 = arith.constant 1.000000e+00 : f32
    %923 = vector.broadcast %cst_261 : f32 to vector<1x32xf32>
    %924 = arith.addf %923, %922 : vector<1x32xf32>
    %925 = arith.divf %923, %924 : vector<1x32xf32>
    %926 = vector.extract_strided_slice %919 {offsets = [0, 32], sizes = [1, 32], strides = [1, 1]} : vector<1x128xf32> to vector<1x32xf32>
    %927 = arith.negf %926 : vector<1x32xf32>
    %928 = math.exp %927 : vector<1x32xf32>
    %cst_262 = arith.constant 1.000000e+00 : f32
    %929 = vector.broadcast %cst_262 : f32 to vector<1x32xf32>
    %930 = arith.addf %929, %928 : vector<1x32xf32>
    %931 = arith.divf %929, %930 : vector<1x32xf32>
    %932 = vector.extract_strided_slice %919 {offsets = [0, 64], sizes = [1, 32], strides = [1, 1]} : vector<1x128xf32> to vector<1x32xf32>
    %933 = math.tanh %932 : vector<1x32xf32>
    %934 = vector.extract_strided_slice %919 {offsets = [0, 96], sizes = [1, 32], strides = [1, 1]} : vector<1x128xf32> to vector<1x32xf32>
    %935 = arith.negf %934 : vector<1x32xf32>
    %936 = math.exp %935 : vector<1x32xf32>
    %cst_263 = arith.constant 1.000000e+00 : f32
    %937 = vector.broadcast %cst_263 : f32 to vector<1x32xf32>
    %938 = arith.addf %937, %936 : vector<1x32xf32>
    %939 = arith.divf %937, %938 : vector<1x32xf32>
    %940 = arith.mulf %931, %914 : vector<1x32xf32>
    %941 = arith.mulf %925, %933 : vector<1x32xf32>
    %942 = arith.addf %940, %941 : vector<1x32xf32>
    %943 = math.tanh %942 : vector<1x32xf32>
    %944 = arith.mulf %939, %943 : vector<1x32xf32>
    %945 = tpu.concatenate %748, %776, %804, %832, %860, %888, %916, %944 in 0 : vector<1x32xf32>, vector<1x32xf32>, vector<1x32xf32>, vector<1x32xf32>, vector<1x32xf32>, vector<1x32xf32>, vector<1x32xf32>, vector<1x32xf32> -> vector<8x32xf32>
    %cst_264 = arith.constant dense<0.000000e+00> : vector<8x8xf32>
    %946 = tpu.matmul %945, %715, %cst_264 {dimension_numbers = #tpu.dot_dimension_numbers<[1], [0], [0], [1], [0, 0, 1, 1], [], []>} : vector<8x32xf32>, vector<32x8xf32>, vector<8x8xf32> -> vector<8x8xf32>
    %947 = vector.broadcast %717 : vector<1x8xf32> to vector<8x8xf32>
    %948 = arith.addf %946, %947 : vector<8x8xf32>
    %cst_265 = arith.constant dense<0xFF800000> : vector<8xf32>
    %949 = vector.multi_reduction <maximumf>, %948, %cst_265 [1] : vector<8x8xf32> to vector<8xf32>
    %cst_266 = arith.constant 0xFF800000 : f32
    %950 = vector.broadcast %cst_266 : f32 to vector<8xf32>
    %951 = arith.maximumf %950, %949 : vector<8xf32>
    %952 = vector.shape_cast %951 : vector<8xf32> to vector<8x1xf32>
    %953 = vector.broadcast %952 : vector<8x1xf32> to vector<8x8xf32>
    %954 = arith.subf %948, %953 : vector<8x8xf32>
    %955 = math.exp %954 : vector<8x8xf32>
    %cst_267 = arith.constant dense<0.000000e+00> : vector<8xf32>
    %956 = vector.multi_reduction <add>, %955, %cst_267 [1] : vector<8x8xf32> to vector<8xf32>
    %957 = vector.shape_cast %956 : vector<8xf32> to vector<8x1xf32>
    %958 = vector.broadcast %957 : vector<8x1xf32> to vector<8x8xf32>
    %959 = arith.divf %955, %958 : vector<8x8xf32>
    %960 = tpu.transpose %959, [1, 0] : vector<8x8xf32> -> vector<8x8xf32>
    %cst_268 = arith.constant dense<0.000000e+00> : vector<8xf32>
    %961 = vector.multi_reduction <add>, %960, %cst_268 [1] : vector<8x8xf32> to vector<8xf32>
    %962 = vector.shape_cast %961 : vector<8xf32> to vector<8x1xf32>
    %cst_269 = arith.constant dense<0.000000e+00> : vector<8x32xf32>
    %963 = tpu.matmul %960, %945, %cst_269 {dimension_numbers = #tpu.dot_dimension_numbers<[1], [0], [0], [1], [0, 0, 1, 1], [], []>} : vector<8x8xf32>, vector<8x32xf32>, vector<8x32xf32> -> vector<8x32xf32>
    %964 = vector.broadcast %962 : vector<8x1xf32> to vector<8x32xf32>
    %965 = arith.mulf %716, %964 : vector<8x32xf32>
    %966 = arith.subf %963, %965 : vector<8x32xf32>
    %967 = arith.mulf %966, %966 : vector<8x32xf32>
    %968 = vector.shape_cast %967 : vector<8x32xf32> to vector<1x8x32xf32>
    %cst_270 = arith.constant dense<0.000000e+00> : vector<1xf32>
    %969 = vector.multi_reduction <add>, %968, %cst_270 [1, 2] : vector<1x8x32xf32> to vector<1xf32>
    %970 = vector.shape_cast %969 : vector<1xf32> to vector<1x1x1xf32>
    %971 = vector.extract %970[0, 0, 0] : f32 from vector<1x1x1xf32>
    %972 = vector.broadcast %971 : f32 to vector<1x1xf32>
    %973 = math.sqrt %972 : vector<1x1xf32>
    %cst_271 = arith.constant 9.99999996E-13 : f32
    %974 = vector.broadcast %cst_271 : f32 to vector<1x1xf32>
    %975 = arith.maximumf %973, %974 : vector<1x1xf32>
    %cst_272 = arith.constant 1.000000e+00 : f32
    %976 = vector.broadcast %cst_272 : f32 to vector<1x1xf32>
    %977 = arith.divf %976, %975 : vector<1x1xf32>
    %978 = vector.extract_strided_slice %966 {offsets = [0, 0], sizes = [1, 32], strides = [1, 1]} : vector<8x32xf32> to vector<1x32xf32>
    %979 = vector.extract_strided_slice %966 {offsets = [1, 0], sizes = [1, 32], strides = [1, 1]} : vector<8x32xf32> to vector<1x32xf32>
    %980 = vector.extract_strided_slice %966 {offsets = [2, 0], sizes = [1, 32], strides = [1, 1]} : vector<8x32xf32> to vector<1x32xf32>
    %981 = vector.extract_strided_slice %966 {offsets = [3, 0], sizes = [1, 32], strides = [1, 1]} : vector<8x32xf32> to vector<1x32xf32>
    %982 = vector.extract_strided_slice %966 {offsets = [4, 0], sizes = [1, 32], strides = [1, 1]} : vector<8x32xf32> to vector<1x32xf32>
    %983 = vector.extract_strided_slice %966 {offsets = [5, 0], sizes = [1, 32], strides = [1, 1]} : vector<8x32xf32> to vector<1x32xf32>
    %984 = vector.extract_strided_slice %966 {offsets = [6, 0], sizes = [1, 32], strides = [1, 1]} : vector<8x32xf32> to vector<1x32xf32>
    %985 = vector.extract_strided_slice %966 {offsets = [7, 0], sizes = [1, 32], strides = [1, 1]} : vector<8x32xf32> to vector<1x32xf32>
    %986 = tpu.concatenate %978, %979, %980, %981, %982, %983, %984, %985 in 1 : vector<1x32xf32>, vector<1x32xf32>, vector<1x32xf32>, vector<1x32xf32>, vector<1x32xf32>, vector<1x32xf32>, vector<1x32xf32>, vector<1x32xf32> -> vector<1x256xf32>
    %cst_273 = arith.constant dense<0.000000e+00> : vector<1x8xf32>
    %987 = tpu.matmul %986, %2, %cst_273 {dimension_numbers = #tpu.dot_dimension_numbers<[1], [1], [0], [0], [0, 0, 1, 0], [], []>} : vector<1x256xf32>, vector<8x256xf32>, vector<1x8xf32> -> vector<1x8xf32>
    %988 = vector.extract_strided_slice %987 {offsets = [0, 0], sizes = [1, 5], strides = [1, 1]} : vector<1x8xf32> to vector<1x5xf32>
    %989 = vector.broadcast %977 : vector<1x1xf32> to vector<1x5xf32>
    %990 = arith.mulf %988, %989 : vector<1x5xf32>
    %991 = arith.addf %990, %718 : vector<1x5xf32>
    %c0_274 = arith.constant 0 : index
    %c0_275 = arith.constant 0 : index
    %c0_276 = arith.constant 0 : index
    %992 = vector.load %arg6[%c0_274, %c0_275, %c0_276] : memref<2x1x5xf32, #tpu.memory_space<vmem>>, vector<1x1x5xf32>
    %993 = vector.shape_cast %992 : vector<1x1x5xf32> to vector<1x5xf32>
    %994 = vector.shape_cast %991 : vector<1x5xf32> to vector<1x1x5xf32>
    tpu.vector_store %arg6[%c0_274, %c0_275, %c0_276], %994 {strides = array<i32>} : memref<2x1x5xf32, #tpu.memory_space<vmem>>, vector<1x1x5xf32>,
    %cst_277 = arith.constant 0.000000e+00 : f32
    %995 = vector.broadcast %cst_277 : f32 to vector<1x32xf32>
    %cst_278 = arith.constant 0.000000e+00 : f32
    %996 = vector.broadcast %cst_278 : f32 to vector<1x32xf32>
    %997 = vector.extract_strided_slice %710 {offsets = [8, 0], sizes = [1, 128], strides = [1, 1]} : vector<16x128xf32> to vector<1x128xf32>
    %cst_279 = arith.constant dense<0.000000e+00> : vector<1x128xf32>
    %998 = tpu.matmul %995, %712, %cst_279 {dimension_numbers = #tpu.dot_dimension_numbers<[1], [0], [0], [1], [0, 0, 1, 1], [], []>} : vector<1x32xf32>, vector<32x128xf32>, vector<1x128xf32> -> vector<1x128xf32>
    %999 = arith.addf %997, %998 : vector<1x128xf32>
    %1000 = vector.extract_strided_slice %999 {offsets = [0, 0], sizes = [1, 32], strides = [1, 1]} : vector<1x128xf32> to vector<1x32xf32>
    %1001 = arith.negf %1000 : vector<1x32xf32>
    %1002 = math.exp %1001 : vector<1x32xf32>
    %cst_280 = arith.constant 1.000000e+00 : f32
    %1003 = vector.broadcast %cst_280 : f32 to vector<1x32xf32>
    %1004 = arith.addf %1003, %1002 : vector<1x32xf32>
    %1005 = arith.divf %1003, %1004 : vector<1x32xf32>
    %1006 = vector.extract_strided_slice %999 {offsets = [0, 32], sizes = [1, 32], strides = [1, 1]} : vector<1x128xf32> to vector<1x32xf32>
    %1007 = arith.negf %1006 : vector<1x32xf32>
    %1008 = math.exp %1007 : vector<1x32xf32>
    %cst_281 = arith.constant 1.000000e+00 : f32
    %1009 = vector.broadcast %cst_281 : f32 to vector<1x32xf32>
    %1010 = arith.addf %1009, %1008 : vector<1x32xf32>
    %1011 = arith.divf %1009, %1010 : vector<1x32xf32>
    %1012 = vector.extract_strided_slice %999 {offsets = [0, 64], sizes = [1, 32], strides = [1, 1]} : vector<1x128xf32> to vector<1x32xf32>
    %1013 = math.tanh %1012 : vector<1x32xf32>
    %1014 = vector.extract_strided_slice %999 {offsets = [0, 96], sizes = [1, 32], strides = [1, 1]} : vector<1x128xf32> to vector<1x32xf32>
    %1015 = arith.negf %1014 : vector<1x32xf32>
    %1016 = math.exp %1015 : vector<1x32xf32>
    %cst_282 = arith.constant 1.000000e+00 : f32
    %1017 = vector.broadcast %cst_282 : f32 to vector<1x32xf32>
    %1018 = arith.addf %1017, %1016 : vector<1x32xf32>
    %1019 = arith.divf %1017, %1018 : vector<1x32xf32>
    %1020 = arith.mulf %1011, %996 : vector<1x32xf32>
    %1021 = arith.mulf %1005, %1013 : vector<1x32xf32>
    %1022 = arith.addf %1020, %1021 : vector<1x32xf32>
    %1023 = math.tanh %1022 : vector<1x32xf32>
    %1024 = arith.mulf %1019, %1023 : vector<1x32xf32>
    %1025 = vector.extract_strided_slice %710 {offsets = [9, 0], sizes = [1, 128], strides = [1, 1]} : vector<16x128xf32> to vector<1x128xf32>
    %cst_283 = arith.constant dense<0.000000e+00> : vector<1x128xf32>
    %1026 = tpu.matmul %1024, %712, %cst_283 {dimension_numbers = #tpu.dot_dimension_numbers<[1], [0], [0], [1], [0, 0, 1, 1], [], []>} : vector<1x32xf32>, vector<32x128xf32>, vector<1x128xf32> -> vector<1x128xf32>
    %1027 = arith.addf %1025, %1026 : vector<1x128xf32>
    %1028 = vector.extract_strided_slice %1027 {offsets = [0, 0], sizes = [1, 32], strides = [1, 1]} : vector<1x128xf32> to vector<1x32xf32>
    %1029 = arith.negf %1028 : vector<1x32xf32>
    %1030 = math.exp %1029 : vector<1x32xf32>
    %cst_284 = arith.constant 1.000000e+00 : f32
    %1031 = vector.broadcast %cst_284 : f32 to vector<1x32xf32>
    %1032 = arith.addf %1031, %1030 : vector<1x32xf32>
    %1033 = arith.divf %1031, %1032 : vector<1x32xf32>
    %1034 = vector.extract_strided_slice %1027 {offsets = [0, 32], sizes = [1, 32], strides = [1, 1]} : vector<1x128xf32> to vector<1x32xf32>
    %1035 = arith.negf %1034 : vector<1x32xf32>
    %1036 = math.exp %1035 : vector<1x32xf32>
    %cst_285 = arith.constant 1.000000e+00 : f32
    %1037 = vector.broadcast %cst_285 : f32 to vector<1x32xf32>
    %1038 = arith.addf %1037, %1036 : vector<1x32xf32>
    %1039 = arith.divf %1037, %1038 : vector<1x32xf32>
    %1040 = vector.extract_strided_slice %1027 {offsets = [0, 64], sizes = [1, 32], strides = [1, 1]} : vector<1x128xf32> to vector<1x32xf32>
    %1041 = math.tanh %1040 : vector<1x32xf32>
    %1042 = vector.extract_strided_slice %1027 {offsets = [0, 96], sizes = [1, 32], strides = [1, 1]} : vector<1x128xf32> to vector<1x32xf32>
    %1043 = arith.negf %1042 : vector<1x32xf32>
    %1044 = math.exp %1043 : vector<1x32xf32>
    %cst_286 = arith.constant 1.000000e+00 : f32
    %1045 = vector.broadcast %cst_286 : f32 to vector<1x32xf32>
    %1046 = arith.addf %1045, %1044 : vector<1x32xf32>
    %1047 = arith.divf %1045, %1046 : vector<1x32xf32>
    %1048 = arith.mulf %1039, %1022 : vector<1x32xf32>
    %1049 = arith.mulf %1033, %1041 : vector<1x32xf32>
    %1050 = arith.addf %1048, %1049 : vector<1x32xf32>
    %1051 = math.tanh %1050 : vector<1x32xf32>
    %1052 = arith.mulf %1047, %1051 : vector<1x32xf32>
    %1053 = vector.extract_strided_slice %710 {offsets = [10, 0], sizes = [1, 128], strides = [1, 1]} : vector<16x128xf32> to vector<1x128xf32>
    %cst_287 = arith.constant dense<0.000000e+00> : vector<1x128xf32>
    %1054 = tpu.matmul %1052, %712, %cst_287 {dimension_numbers = #tpu.dot_dimension_numbers<[1], [0], [0], [1], [0, 0, 1, 1], [], []>} : vector<1x32xf32>, vector<32x128xf32>, vector<1x128xf32> -> vector<1x128xf32>
    %1055 = arith.addf %1053, %1054 : vector<1x128xf32>
    %1056 = vector.extract_strided_slice %1055 {offsets = [0, 0], sizes = [1, 32], strides = [1, 1]} : vector<1x128xf32> to vector<1x32xf32>
    %1057 = arith.negf %1056 : vector<1x32xf32>
    %1058 = math.exp %1057 : vector<1x32xf32>
    %cst_288 = arith.constant 1.000000e+00 : f32
    %1059 = vector.broadcast %cst_288 : f32 to vector<1x32xf32>
    %1060 = arith.addf %1059, %1058 : vector<1x32xf32>
    %1061 = arith.divf %1059, %1060 : vector<1x32xf32>
    %1062 = vector.extract_strided_slice %1055 {offsets = [0, 32], sizes = [1, 32], strides = [1, 1]} : vector<1x128xf32> to vector<1x32xf32>
    %1063 = arith.negf %1062 : vector<1x32xf32>
    %1064 = math.exp %1063 : vector<1x32xf32>
    %cst_289 = arith.constant 1.000000e+00 : f32
    %1065 = vector.broadcast %cst_289 : f32 to vector<1x32xf32>
    %1066 = arith.addf %1065, %1064 : vector<1x32xf32>
    %1067 = arith.divf %1065, %1066 : vector<1x32xf32>
    %1068 = vector.extract_strided_slice %1055 {offsets = [0, 64], sizes = [1, 32], strides = [1, 1]} : vector<1x128xf32> to vector<1x32xf32>
    %1069 = math.tanh %1068 : vector<1x32xf32>
    %1070 = vector.extract_strided_slice %1055 {offsets = [0, 96], sizes = [1, 32], strides = [1, 1]} : vector<1x128xf32> to vector<1x32xf32>
    %1071 = arith.negf %1070 : vector<1x32xf32>
    %1072 = math.exp %1071 : vector<1x32xf32>
    %cst_290 = arith.constant 1.000000e+00 : f32
    %1073 = vector.broadcast %cst_290 : f32 to vector<1x32xf32>
    %1074 = arith.addf %1073, %1072 : vector<1x32xf32>
    %1075 = arith.divf %1073, %1074 : vector<1x32xf32>
    %1076 = arith.mulf %1067, %1050 : vector<1x32xf32>
    %1077 = arith.mulf %1061, %1069 : vector<1x32xf32>
    %1078 = arith.addf %1076, %1077 : vector<1x32xf32>
    %1079 = math.tanh %1078 : vector<1x32xf32>
    %1080 = arith.mulf %1075, %1079 : vector<1x32xf32>
    %1081 = vector.extract_strided_slice %710 {offsets = [11, 0], sizes = [1, 128], strides = [1, 1]} : vector<16x128xf32> to vector<1x128xf32>
    %cst_291 = arith.constant dense<0.000000e+00> : vector<1x128xf32>
    %1082 = tpu.matmul %1080, %712, %cst_291 {dimension_numbers = #tpu.dot_dimension_numbers<[1], [0], [0], [1], [0, 0, 1, 1], [], []>} : vector<1x32xf32>, vector<32x128xf32>, vector<1x128xf32> -> vector<1x128xf32>
    %1083 = arith.addf %1081, %1082 : vector<1x128xf32>
    %1084 = vector.extract_strided_slice %1083 {offsets = [0, 0], sizes = [1, 32], strides = [1, 1]} : vector<1x128xf32> to vector<1x32xf32>
    %1085 = arith.negf %1084 : vector<1x32xf32>
    %1086 = math.exp %1085 : vector<1x32xf32>
    %cst_292 = arith.constant 1.000000e+00 : f32
    %1087 = vector.broadcast %cst_292 : f32 to vector<1x32xf32>
    %1088 = arith.addf %1087, %1086 : vector<1x32xf32>
    %1089 = arith.divf %1087, %1088 : vector<1x32xf32>
    %1090 = vector.extract_strided_slice %1083 {offsets = [0, 32], sizes = [1, 32], strides = [1, 1]} : vector<1x128xf32> to vector<1x32xf32>
    %1091 = arith.negf %1090 : vector<1x32xf32>
    %1092 = math.exp %1091 : vector<1x32xf32>
    %cst_293 = arith.constant 1.000000e+00 : f32
    %1093 = vector.broadcast %cst_293 : f32 to vector<1x32xf32>
    %1094 = arith.addf %1093, %1092 : vector<1x32xf32>
    %1095 = arith.divf %1093, %1094 : vector<1x32xf32>
    %1096 = vector.extract_strided_slice %1083 {offsets = [0, 64], sizes = [1, 32], strides = [1, 1]} : vector<1x128xf32> to vector<1x32xf32>
    %1097 = math.tanh %1096 : vector<1x32xf32>
    %1098 = vector.extract_strided_slice %1083 {offsets = [0, 96], sizes = [1, 32], strides = [1, 1]} : vector<1x128xf32> to vector<1x32xf32>
    %1099 = arith.negf %1098 : vector<1x32xf32>
    %1100 = math.exp %1099 : vector<1x32xf32>
    %cst_294 = arith.constant 1.000000e+00 : f32
    %1101 = vector.broadcast %cst_294 : f32 to vector<1x32xf32>
    %1102 = arith.addf %1101, %1100 : vector<1x32xf32>
    %1103 = arith.divf %1101, %1102 : vector<1x32xf32>
    %1104 = arith.mulf %1095, %1078 : vector<1x32xf32>
    %1105 = arith.mulf %1089, %1097 : vector<1x32xf32>
    %1106 = arith.addf %1104, %1105 : vector<1x32xf32>
    %1107 = math.tanh %1106 : vector<1x32xf32>
    %1108 = arith.mulf %1103, %1107 : vector<1x32xf32>
    %1109 = vector.extract_strided_slice %710 {offsets = [12, 0], sizes = [1, 128], strides = [1, 1]} : vector<16x128xf32> to vector<1x128xf32>
    %cst_295 = arith.constant dense<0.000000e+00> : vector<1x128xf32>
    %1110 = tpu.matmul %1108, %712, %cst_295 {dimension_numbers = #tpu.dot_dimension_numbers<[1], [0], [0], [1], [0, 0, 1, 1], [], []>} : vector<1x32xf32>, vector<32x128xf32>, vector<1x128xf32> -> vector<1x128xf32>
    %1111 = arith.addf %1109, %1110 : vector<1x128xf32>
    %1112 = vector.extract_strided_slice %1111 {offsets = [0, 0], sizes = [1, 32], strides = [1, 1]} : vector<1x128xf32> to vector<1x32xf32>
    %1113 = arith.negf %1112 : vector<1x32xf32>
    %1114 = math.exp %1113 : vector<1x32xf32>
    %cst_296 = arith.constant 1.000000e+00 : f32
    %1115 = vector.broadcast %cst_296 : f32 to vector<1x32xf32>
    %1116 = arith.addf %1115, %1114 : vector<1x32xf32>
    %1117 = arith.divf %1115, %1116 : vector<1x32xf32>
    %1118 = vector.extract_strided_slice %1111 {offsets = [0, 32], sizes = [1, 32], strides = [1, 1]} : vector<1x128xf32> to vector<1x32xf32>
    %1119 = arith.negf %1118 : vector<1x32xf32>
    %1120 = math.exp %1119 : vector<1x32xf32>
    %cst_297 = arith.constant 1.000000e+00 : f32
    %1121 = vector.broadcast %cst_297 : f32 to vector<1x32xf32>
    %1122 = arith.addf %1121, %1120 : vector<1x32xf32>
    %1123 = arith.divf %1121, %1122 : vector<1x32xf32>
    %1124 = vector.extract_strided_slice %1111 {offsets = [0, 64], sizes = [1, 32], strides = [1, 1]} : vector<1x128xf32> to vector<1x32xf32>
    %1125 = math.tanh %1124 : vector<1x32xf32>
    %1126 = vector.extract_strided_slice %1111 {offsets = [0, 96], sizes = [1, 32], strides = [1, 1]} : vector<1x128xf32> to vector<1x32xf32>
    %1127 = arith.negf %1126 : vector<1x32xf32>
    %1128 = math.exp %1127 : vector<1x32xf32>
    %cst_298 = arith.constant 1.000000e+00 : f32
    %1129 = vector.broadcast %cst_298 : f32 to vector<1x32xf32>
    %1130 = arith.addf %1129, %1128 : vector<1x32xf32>
    %1131 = arith.divf %1129, %1130 : vector<1x32xf32>
    %1132 = arith.mulf %1123, %1106 : vector<1x32xf32>
    %1133 = arith.mulf %1117, %1125 : vector<1x32xf32>
    %1134 = arith.addf %1132, %1133 : vector<1x32xf32>
    %1135 = math.tanh %1134 : vector<1x32xf32>
    %1136 = arith.mulf %1131, %1135 : vector<1x32xf32>
    %1137 = vector.extract_strided_slice %710 {offsets = [13, 0], sizes = [1, 128], strides = [1, 1]} : vector<16x128xf32> to vector<1x128xf32>
    %cst_299 = arith.constant dense<0.000000e+00> : vector<1x128xf32>
    %1138 = tpu.matmul %1136, %712, %cst_299 {dimension_numbers = #tpu.dot_dimension_numbers<[1], [0], [0], [1], [0, 0, 1, 1], [], []>} : vector<1x32xf32>, vector<32x128xf32>, vector<1x128xf32> -> vector<1x128xf32>
    %1139 = arith.addf %1137, %1138 : vector<1x128xf32>
    %1140 = vector.extract_strided_slice %1139 {offsets = [0, 0], sizes = [1, 32], strides = [1, 1]} : vector<1x128xf32> to vector<1x32xf32>
    %1141 = arith.negf %1140 : vector<1x32xf32>
    %1142 = math.exp %1141 : vector<1x32xf32>
    %cst_300 = arith.constant 1.000000e+00 : f32
    %1143 = vector.broadcast %cst_300 : f32 to vector<1x32xf32>
    %1144 = arith.addf %1143, %1142 : vector<1x32xf32>
    %1145 = arith.divf %1143, %1144 : vector<1x32xf32>
    %1146 = vector.extract_strided_slice %1139 {offsets = [0, 32], sizes = [1, 32], strides = [1, 1]} : vector<1x128xf32> to vector<1x32xf32>
    %1147 = arith.negf %1146 : vector<1x32xf32>
    %1148 = math.exp %1147 : vector<1x32xf32>
    %cst_301 = arith.constant 1.000000e+00 : f32
    %1149 = vector.broadcast %cst_301 : f32 to vector<1x32xf32>
    %1150 = arith.addf %1149, %1148 : vector<1x32xf32>
    %1151 = arith.divf %1149, %1150 : vector<1x32xf32>
    %1152 = vector.extract_strided_slice %1139 {offsets = [0, 64], sizes = [1, 32], strides = [1, 1]} : vector<1x128xf32> to vector<1x32xf32>
    %1153 = math.tanh %1152 : vector<1x32xf32>
    %1154 = vector.extract_strided_slice %1139 {offsets = [0, 96], sizes = [1, 32], strides = [1, 1]} : vector<1x128xf32> to vector<1x32xf32>
    %1155 = arith.negf %1154 : vector<1x32xf32>
    %1156 = math.exp %1155 : vector<1x32xf32>
    %cst_302 = arith.constant 1.000000e+00 : f32
    %1157 = vector.broadcast %cst_302 : f32 to vector<1x32xf32>
    %1158 = arith.addf %1157, %1156 : vector<1x32xf32>
    %1159 = arith.divf %1157, %1158 : vector<1x32xf32>
    %1160 = arith.mulf %1151, %1134 : vector<1x32xf32>
    %1161 = arith.mulf %1145, %1153 : vector<1x32xf32>
    %1162 = arith.addf %1160, %1161 : vector<1x32xf32>
    %1163 = math.tanh %1162 : vector<1x32xf32>
    %1164 = arith.mulf %1159, %1163 : vector<1x32xf32>
    %1165 = vector.extract_strided_slice %710 {offsets = [14, 0], sizes = [1, 128], strides = [1, 1]} : vector<16x128xf32> to vector<1x128xf32>
    %cst_303 = arith.constant dense<0.000000e+00> : vector<1x128xf32>
    %1166 = tpu.matmul %1164, %712, %cst_303 {dimension_numbers = #tpu.dot_dimension_numbers<[1], [0], [0], [1], [0, 0, 1, 1], [], []>} : vector<1x32xf32>, vector<32x128xf32>, vector<1x128xf32> -> vector<1x128xf32>
    %1167 = arith.addf %1165, %1166 : vector<1x128xf32>
    %1168 = vector.extract_strided_slice %1167 {offsets = [0, 0], sizes = [1, 32], strides = [1, 1]} : vector<1x128xf32> to vector<1x32xf32>
    %1169 = arith.negf %1168 : vector<1x32xf32>
    %1170 = math.exp %1169 : vector<1x32xf32>
    %cst_304 = arith.constant 1.000000e+00 : f32
    %1171 = vector.broadcast %cst_304 : f32 to vector<1x32xf32>
    %1172 = arith.addf %1171, %1170 : vector<1x32xf32>
    %1173 = arith.divf %1171, %1172 : vector<1x32xf32>
    %1174 = vector.extract_strided_slice %1167 {offsets = [0, 32], sizes = [1, 32], strides = [1, 1]} : vector<1x128xf32> to vector<1x32xf32>
    %1175 = arith.negf %1174 : vector<1x32xf32>
    %1176 = math.exp %1175 : vector<1x32xf32>
    %cst_305 = arith.constant 1.000000e+00 : f32
    %1177 = vector.broadcast %cst_305 : f32 to vector<1x32xf32>
    %1178 = arith.addf %1177, %1176 : vector<1x32xf32>
    %1179 = arith.divf %1177, %1178 : vector<1x32xf32>
    %1180 = vector.extract_strided_slice %1167 {offsets = [0, 64], sizes = [1, 32], strides = [1, 1]} : vector<1x128xf32> to vector<1x32xf32>
    %1181 = math.tanh %1180 : vector<1x32xf32>
    %1182 = vector.extract_strided_slice %1167 {offsets = [0, 96], sizes = [1, 32], strides = [1, 1]} : vector<1x128xf32> to vector<1x32xf32>
    %1183 = arith.negf %1182 : vector<1x32xf32>
    %1184 = math.exp %1183 : vector<1x32xf32>
    %cst_306 = arith.constant 1.000000e+00 : f32
    %1185 = vector.broadcast %cst_306 : f32 to vector<1x32xf32>
    %1186 = arith.addf %1185, %1184 : vector<1x32xf32>
    %1187 = arith.divf %1185, %1186 : vector<1x32xf32>
    %1188 = arith.mulf %1179, %1162 : vector<1x32xf32>
    %1189 = arith.mulf %1173, %1181 : vector<1x32xf32>
    %1190 = arith.addf %1188, %1189 : vector<1x32xf32>
    %1191 = math.tanh %1190 : vector<1x32xf32>
    %1192 = arith.mulf %1187, %1191 : vector<1x32xf32>
    %1193 = vector.extract_strided_slice %710 {offsets = [15, 0], sizes = [1, 128], strides = [1, 1]} : vector<16x128xf32> to vector<1x128xf32>
    %cst_307 = arith.constant dense<0.000000e+00> : vector<1x128xf32>
    %1194 = tpu.matmul %1192, %712, %cst_307 {dimension_numbers = #tpu.dot_dimension_numbers<[1], [0], [0], [1], [0, 0, 1, 1], [], []>} : vector<1x32xf32>, vector<32x128xf32>, vector<1x128xf32> -> vector<1x128xf32>
    %1195 = arith.addf %1193, %1194 : vector<1x128xf32>
    %1196 = vector.extract_strided_slice %1195 {offsets = [0, 0], sizes = [1, 32], strides = [1, 1]} : vector<1x128xf32> to vector<1x32xf32>
    %1197 = arith.negf %1196 : vector<1x32xf32>
    %1198 = math.exp %1197 : vector<1x32xf32>
    %cst_308 = arith.constant 1.000000e+00 : f32
    %1199 = vector.broadcast %cst_308 : f32 to vector<1x32xf32>
    %1200 = arith.addf %1199, %1198 : vector<1x32xf32>
    %1201 = arith.divf %1199, %1200 : vector<1x32xf32>
    %1202 = vector.extract_strided_slice %1195 {offsets = [0, 32], sizes = [1, 32], strides = [1, 1]} : vector<1x128xf32> to vector<1x32xf32>
    %1203 = arith.negf %1202 : vector<1x32xf32>
    %1204 = math.exp %1203 : vector<1x32xf32>
    %cst_309 = arith.constant 1.000000e+00 : f32
    %1205 = vector.broadcast %cst_309 : f32 to vector<1x32xf32>
    %1206 = arith.addf %1205, %1204 : vector<1x32xf32>
    %1207 = arith.divf %1205, %1206 : vector<1x32xf32>
    %1208 = vector.extract_strided_slice %1195 {offsets = [0, 64], sizes = [1, 32], strides = [1, 1]} : vector<1x128xf32> to vector<1x32xf32>
    %1209 = math.tanh %1208 : vector<1x32xf32>
    %1210 = vector.extract_strided_slice %1195 {offsets = [0, 96], sizes = [1, 32], strides = [1, 1]} : vector<1x128xf32> to vector<1x32xf32>
    %1211 = arith.negf %1210 : vector<1x32xf32>
    %1212 = math.exp %1211 : vector<1x32xf32>
    %cst_310 = arith.constant 1.000000e+00 : f32
    %1213 = vector.broadcast %cst_310 : f32 to vector<1x32xf32>
    %1214 = arith.addf %1213, %1212 : vector<1x32xf32>
    %1215 = arith.divf %1213, %1214 : vector<1x32xf32>
    %1216 = arith.mulf %1207, %1190 : vector<1x32xf32>
    %1217 = arith.mulf %1201, %1209 : vector<1x32xf32>
    %1218 = arith.addf %1216, %1217 : vector<1x32xf32>
    %1219 = math.tanh %1218 : vector<1x32xf32>
    %1220 = arith.mulf %1215, %1219 : vector<1x32xf32>
    %1221 = tpu.concatenate %1024, %1052, %1080, %1108, %1136, %1164, %1192, %1220 in 0 : vector<1x32xf32>, vector<1x32xf32>, vector<1x32xf32>, vector<1x32xf32>, vector<1x32xf32>, vector<1x32xf32>, vector<1x32xf32>, vector<1x32xf32> -> vector<8x32xf32>
    %cst_311 = arith.constant dense<0.000000e+00> : vector<8x8xf32>
    %1222 = tpu.matmul %1221, %715, %cst_311 {dimension_numbers = #tpu.dot_dimension_numbers<[1], [0], [0], [1], [0, 0, 1, 1], [], []>} : vector<8x32xf32>, vector<32x8xf32>, vector<8x8xf32> -> vector<8x8xf32>
    %1223 = vector.broadcast %717 : vector<1x8xf32> to vector<8x8xf32>
    %1224 = arith.addf %1222, %1223 : vector<8x8xf32>
    %cst_312 = arith.constant dense<0xFF800000> : vector<8xf32>
    %1225 = vector.multi_reduction <maximumf>, %1224, %cst_312 [1] : vector<8x8xf32> to vector<8xf32>
    %cst_313 = arith.constant 0xFF800000 : f32
    %1226 = vector.broadcast %cst_313 : f32 to vector<8xf32>
    %1227 = arith.maximumf %1226, %1225 : vector<8xf32>
    %1228 = vector.shape_cast %1227 : vector<8xf32> to vector<8x1xf32>
    %1229 = vector.broadcast %1228 : vector<8x1xf32> to vector<8x8xf32>
    %1230 = arith.subf %1224, %1229 : vector<8x8xf32>
    %1231 = math.exp %1230 : vector<8x8xf32>
    %cst_314 = arith.constant dense<0.000000e+00> : vector<8xf32>
    %1232 = vector.multi_reduction <add>, %1231, %cst_314 [1] : vector<8x8xf32> to vector<8xf32>
    %1233 = vector.shape_cast %1232 : vector<8xf32> to vector<8x1xf32>
    %1234 = vector.broadcast %1233 : vector<8x1xf32> to vector<8x8xf32>
    %1235 = arith.divf %1231, %1234 : vector<8x8xf32>
    %1236 = tpu.transpose %1235, [1, 0] : vector<8x8xf32> -> vector<8x8xf32>
    %cst_315 = arith.constant dense<0.000000e+00> : vector<8xf32>
    %1237 = vector.multi_reduction <add>, %1236, %cst_315 [1] : vector<8x8xf32> to vector<8xf32>
    %1238 = vector.shape_cast %1237 : vector<8xf32> to vector<8x1xf32>
    %cst_316 = arith.constant dense<0.000000e+00> : vector<8x32xf32>
    %1239 = tpu.matmul %1236, %1221, %cst_316 {dimension_numbers = #tpu.dot_dimension_numbers<[1], [0], [0], [1], [0, 0, 1, 1], [], []>} : vector<8x8xf32>, vector<8x32xf32>, vector<8x32xf32> -> vector<8x32xf32>
    %1240 = vector.broadcast %1238 : vector<8x1xf32> to vector<8x32xf32>
    %1241 = arith.mulf %716, %1240 : vector<8x32xf32>
    %1242 = arith.subf %1239, %1241 : vector<8x32xf32>
    %1243 = arith.mulf %1242, %1242 : vector<8x32xf32>
    %1244 = vector.shape_cast %1243 : vector<8x32xf32> to vector<1x8x32xf32>
    %cst_317 = arith.constant dense<0.000000e+00> : vector<1xf32>
    %1245 = vector.multi_reduction <add>, %1244, %cst_317 [1, 2] : vector<1x8x32xf32> to vector<1xf32>
    %1246 = vector.shape_cast %1245 : vector<1xf32> to vector<1x1x1xf32>
    %1247 = vector.extract %1246[0, 0, 0] : f32 from vector<1x1x1xf32>
    %1248 = vector.broadcast %1247 : f32 to vector<1x1xf32>
    %1249 = math.sqrt %1248 : vector<1x1xf32>
    %cst_318 = arith.constant 9.99999996E-13 : f32
    %1250 = vector.broadcast %cst_318 : f32 to vector<1x1xf32>
    %1251 = arith.maximumf %1249, %1250 : vector<1x1xf32>
    %cst_319 = arith.constant 1.000000e+00 : f32
    %1252 = vector.broadcast %cst_319 : f32 to vector<1x1xf32>
    %1253 = arith.divf %1252, %1251 : vector<1x1xf32>
    %1254 = vector.extract_strided_slice %1242 {offsets = [0, 0], sizes = [1, 32], strides = [1, 1]} : vector<8x32xf32> to vector<1x32xf32>
    %1255 = vector.extract_strided_slice %1242 {offsets = [1, 0], sizes = [1, 32], strides = [1, 1]} : vector<8x32xf32> to vector<1x32xf32>
    %1256 = vector.extract_strided_slice %1242 {offsets = [2, 0], sizes = [1, 32], strides = [1, 1]} : vector<8x32xf32> to vector<1x32xf32>
    %1257 = vector.extract_strided_slice %1242 {offsets = [3, 0], sizes = [1, 32], strides = [1, 1]} : vector<8x32xf32> to vector<1x32xf32>
    %1258 = vector.extract_strided_slice %1242 {offsets = [4, 0], sizes = [1, 32], strides = [1, 1]} : vector<8x32xf32> to vector<1x32xf32>
    %1259 = vector.extract_strided_slice %1242 {offsets = [5, 0], sizes = [1, 32], strides = [1, 1]} : vector<8x32xf32> to vector<1x32xf32>
    %1260 = vector.extract_strided_slice %1242 {offsets = [6, 0], sizes = [1, 32], strides = [1, 1]} : vector<8x32xf32> to vector<1x32xf32>
    %1261 = vector.extract_strided_slice %1242 {offsets = [7, 0], sizes = [1, 32], strides = [1, 1]} : vector<8x32xf32> to vector<1x32xf32>
    %1262 = tpu.concatenate %1254, %1255, %1256, %1257, %1258, %1259, %1260, %1261 in 1 : vector<1x32xf32>, vector<1x32xf32>, vector<1x32xf32>, vector<1x32xf32>, vector<1x32xf32>, vector<1x32xf32>, vector<1x32xf32>, vector<1x32xf32> -> vector<1x256xf32>
    %cst_320 = arith.constant dense<0.000000e+00> : vector<1x8xf32>
    %1263 = tpu.matmul %1262, %2, %cst_320 {dimension_numbers = #tpu.dot_dimension_numbers<[1], [1], [0], [0], [0, 0, 1, 0], [], []>} : vector<1x256xf32>, vector<8x256xf32>, vector<1x8xf32> -> vector<1x8xf32>
    %1264 = vector.extract_strided_slice %1263 {offsets = [0, 0], sizes = [1, 5], strides = [1, 1]} : vector<1x8xf32> to vector<1x5xf32>
    %1265 = vector.broadcast %1253 : vector<1x1xf32> to vector<1x5xf32>
    %1266 = arith.mulf %1264, %1265 : vector<1x5xf32>
    %1267 = arith.addf %1266, %718 : vector<1x5xf32>
    %c1_321 = arith.constant 1 : index
    %c0_322 = arith.constant 0 : index
    %c0_323 = arith.constant 0 : index
    %1268 = vector.load %arg6[%c1_321, %c0_322, %c0_323] : memref<2x1x5xf32, #tpu.memory_space<vmem>>, vector<1x1x5xf32>
    %1269 = vector.shape_cast %1268 : vector<1x1x5xf32> to vector<1x5xf32>
    %1270 = vector.shape_cast %1267 : vector<1x5xf32> to vector<1x1x5xf32>
    tpu.vector_store %arg6[%c1_321, %c0_322, %c0_323], %1270 {strides = array<i32>} : memref<2x1x5xf32, #tpu.memory_space<vmem>>, vector<1x1x5xf32>,
    return
  }
  func.func @transform_0(%arg0: i32) -> (i32, i32, i32) {
    %c0_i32 = arith.constant 0 : i32
    %c0_i32_0 = arith.constant 0 : i32
    %c0_i32_1 = arith.constant 0 : i32
    return %c0_i32, %arg0, %c0_i32_0 : i32, i32, i32
  }
  func.func @transform_1(%arg0: i32) -> (i32, i32, i32) {
    %c0_i32 = arith.constant 0 : i32
    %c0_i32_0 = arith.constant 0 : i32
    %c0_i32_1 = arith.constant 0 : i32
    %c0_i32_2 = arith.constant 0 : i32
    return %c0_i32, %c0_i32_0, %c0_i32_1 : i32, i32, i32
  }
  func.func @transform_2(%arg0: i32) -> (i32, i32) {
    %c0_i32 = arith.constant 0 : i32
    %c0_i32_0 = arith.constant 0 : i32
    %c0_i32_1 = arith.constant 0 : i32
    return %c0_i32, %c0_i32_0 : i32, i32
  }
  func.func @transform_3(%arg0: i32) -> (i32, i32) {
    %c0_i32 = arith.constant 0 : i32
    %c0_i32_0 = arith.constant 0 : i32
    %c0_i32_1 = arith.constant 0 : i32
    return %c0_i32, %c0_i32_0 : i32, i32
  }
  func.func @transform_4(%arg0: i32) -> (i32, i32) {
    %c0_i32 = arith.constant 0 : i32
    %c0_i32_0 = arith.constant 0 : i32
    %c0_i32_1 = arith.constant 0 : i32
    return %c0_i32, %c0_i32_0 : i32, i32
  }
  func.func @transform_5(%arg0: i32) -> (i32, i32, i32) {
    %c0_i32 = arith.constant 0 : i32
    %c0_i32_0 = arith.constant 0 : i32
    %c0_i32_1 = arith.constant 0 : i32
    return %arg0, %c0_i32, %c0_i32_0 : i32, i32, i32
  }
}

</mosaic_0001>

<llo_original>
// kernel: hybrid_forward.1
$region0: #{hybrid_forward.1}
  #allocation0 [shape = 'u32[]', space=smem, size = 0x4, offset = 0x4, fixed_abs, tag = 'smem constant byte address 0x4 - core index']
  #allocation1 [shape = 'u32[144,128]{1,0:T(1,128)}', space=vmem, size = 0x12000, scoped, tag = 'internal scratch']
  %s0 = inlined_call_operand.vmem [shape: f32[3,16,256], index: 0, kind: input, shape index: {}]
  %s1 = inlined_call_operand.vmem [shape: f32[9,32,128], index: 1, kind: input, shape index: {}]
  %s2 = inlined_call_operand.vmem [shape: f32[64,64], index: 2, kind: input, shape index: {}]
  %s3 = inlined_call_operand.vmem [shape: f32[48,128], index: 3, kind: input, shape index: {}]
  %s4 = inlined_call_operand.vmem [shape: f32[8,256], index: 4, kind: input, shape index: {}]
  %s5 = inlined_call_operand.hbm [shape: f32[2,1,5], index: 5, kind: output, shape index: {}]
  %s6 = sld [smem:[#allocation0]]
  $region30: #{hybrid_forward.1} parent=0
    _
  %s8 = ssub.s32 1, %s6
  %s9 = scalar_select 0, %s8, %s6
  $region1: #{hybrid_forward.1} parent=0
    #allocation2 [shape = 'u8[1024]{0}', space=vmem, size = 0x400, scoped, tag = 'output window, operand 0, single buffered']
    #allocation3 [shape = 's32[1]{0}', space=sflag, size = 0x4, scoped, tag = 'scoped memory for hybrid_forward.1']
    %10 = vsyncpa [#allocation3], 0
    // Predicated region
    $region2: #{hybrid_forward.1} parent=1 // pred_check
      _
    $region3: #{hybrid_forward.1} parent=1 // pred_check_branch
      %12 = sbr.rel (0) target = $region5
    $region4: #{hybrid_forward.1} parent=1 // pred_region
      _
    $region5: #{hybrid_forward.1} parent=1 // pred_fallthru
      _
    // Predicated region
    $region6: #{hybrid_forward.1} parent=1 // pred_check
      _
    $region7: #{hybrid_forward.1} parent=1 // pred_check_branch
      %14 = sbr.rel (0) target = $region9
    $region8: #{hybrid_forward.1} parent=1 // pred_region
      _
    $region9: #{hybrid_forward.1} parent=1 // pred_fallthru
      _
    // Predicated region
    $region10: #{hybrid_forward.1} parent=1 // pred_check
      _
    $region11: #{hybrid_forward.1} parent=1 // pred_check_branch
      %16 = sbr.rel (0) target = $region13
    $region12: #{hybrid_forward.1} parent=1 // pred_region
      _
    $region13: #{hybrid_forward.1} parent=1 // pred_fallthru
      _
    // Predicated region
    $region14: #{hybrid_forward.1} parent=1 // pred_check
      _
    $region15: #{hybrid_forward.1} parent=1 // pred_check_branch
      %18 = sbr.rel (0) target = $region17
    $region16: #{hybrid_forward.1} parent=1 // pred_region
      _
    $region17: #{hybrid_forward.1} parent=1 // pred_fallthru
      _
    // Predicated region
    $region18: #{hybrid_forward.1} parent=1 // pred_check
      _
    $region19: #{hybrid_forward.1} parent=1 // pred_check_branch
      %20 = sbr.rel (0) target = $region21
    $region20: #{hybrid_forward.1} parent=1 // pred_region
      _
    $region21: #{hybrid_forward.1} parent=1 // pred_fallthru
      _
    %v21 = vld [vmem:[%s3] sm:$0xff]
    %v22 = vld [vmem:[%s3 + $0x8] sm:$0xff]
    %v23 = vld [vmem:[%s3 + $0x10] sm:$0xff]
    %v24 = vld [vmem:[%s3 + $0x18] sm:$0xff]
    %v25 = vld [vmem:[%s3 + $0x20] sm:$0xff]
    %v26 = vld [vmem:[%s3 + $0x28] sm:$0xff]
    %v27 = vld [vmem:[%s2] sm:$0xff]
    %v28 = vld [vmem:[%s2 + $0x8] sm:$0xff]
    %v29 = vld [vmem:[%s2 + $0x10] sm:$0xff]
    %v30 = vld [vmem:[%s2 + $0x18] sm:$0xff]
    %v31 = vld [vmem:[%s2 + $0x20] sm:$0xff]
    %v32 = vld [vmem:[%s2 + $0x28] sm:$0xff]
    %v33 = vld [vmem:[%s2 + $0x30] sm:$0xff]
    %v34 = vld [vmem:[%s2 + $0x38] sm:$0xff]
    %v35 = vld [vmem:[%s4] sm:$0xff]
    %v36 = vld [vmem:[%s4 + $0x8] sm:$0xff]
    %v37 = vld [vmem:[%s0] sm:$0xff]
    %v38 = vld [vmem:[%s0 + $0x8] sm:$0xff]
    %v39 = vld [vmem:[%s0 + $0x10] sm:$0xff]
    %v40 = vld [vmem:[%s0 + $0x18] sm:$0xff]
    %v41 = vadd.f32 %v37, %v38
    %42 = vadd.xlane.f32.xlu0 %v41
    %v43 = vpop.xlane.xlu0 %42
    %v44 = vadd.f32 %v39, %v40
    %45 = vadd.xlane.f32.xlu0 %v44
    %v46 = vpop.xlane.xlu0 %45
    %v47 = vrcp.pop 256.0
    %v48 = vmul.f32 %v43, %v47
    %v49 = vmul.f32 %v46, %v47
    %s50 = scalar_lea.vmem %s0, 32
    %v51 = vld [vmem:[%s50] sm:$0xff]
    %v52 = vld [vmem:[%s50 + $0x8] sm:$0xff]
    %v53 = vld [vmem:[%s50 + $0x10] sm:$0xff]
    %v54 = vld [vmem:[%s50 + $0x18] sm:$0xff]
    %v55 = vadd.f32 %v51, %v52
    %56 = vadd.xlane.f32.xlu0 %v55
    %v57 = vpop.xlane.xlu0 %56
    %v58 = vadd.f32 %v53, %v54
    %59 = vadd.xlane.f32.xlu0 %v58
    %v60 = vpop.xlane.xlu0 %59
    %v61 = vmul.f32 %v57, %v47
    %v62 = vmul.f32 %v60, %v47
    %s63 = scalar_lea.vmem %s0, 64
    %v64 = vld [vmem:[%s63] sm:$0xff]
    %v65 = vld [vmem:[%s63 + $0x8] sm:$0xff]
    %v66 = vld [vmem:[%s63 + $0x10] sm:$0xff]
    %v67 = vld [vmem:[%s63 + $0x18] sm:$0xff]
    %v68 = vadd.f32 %v64, %v65
    %69 = vadd.xlane.f32.xlu0 %v68
    %v70 = vpop.xlane.xlu0 %69
    %v71 = vadd.f32 %v66, %v67
    %72 = vadd.xlane.f32.xlu0 %v71
    %v73 = vpop.xlane.xlu0 %72
    %v74 = vmul.f32 %v70, %v47
    %v75 = vmul.f32 %v73, %v47
    %vm76 = vcmask 7168
    %v77 = vsel %vm76, %v48, %v61
    %v78 = vsel %vm76, %v49, %v62
    %vm79 = vcmask 15360
    %v80 = vsel %vm79, %v77, %v74
    %v81 = vsel %vm79, %v78, %v75
    %vm82 = vcmask 23552
    %v84 = vsel %vm82, %v80, 0
    %v87 = vsel %vm82, %v81, 0
    %vm89 = vcmask 1042432
    %v91 = vsel %vm89, %v26, 0
    %93 = vmatprep.subr.mxu0 0.0
    %94 = vmatpush1.msra.mxu0 %v91
    %95 = vmatprep.subr.mxu0 0.0
    %96 = vmatpush1.msra.mxu0 0.0
    %97 = vmatprep.subr.mxu0 0.0
    %98 = vmatpush1.msra.mxu0 0.0
    %99 = vmatprep.subr.mxu0 0.0
    %100 = vmatpush1.msra.mxu0 0.0
    %101 = vmatprep.subr.mxu0 0.0
    %102 = vmatpush1.msra.mxu0 0.0
    %103 = vmatprep.subr.mxu0 0.0
    %104 = vmatpush1.msra.mxu0 0.0
    %105 = vmatprep.subr.mxu0 0.0
    %106 = vmatpush1.msra.mxu0 0.0
    %107 = vmatprep.subr.mxu0 0.0
    %108 = vmatpush1.msra.mxu0 0.0
    %109 = vmatprep.subr.mxu0 0.0
    %110 = vmatpush1.msra.mxu0 0.0
    %111 = vmatprep.subr.mxu0 0.0
    %112 = vmatpush1.msra.mxu0 0.0
    %113 = vmatprep.subr.mxu0 0.0
    %114 = vmatpush1.msra.mxu0 0.0
    %115 = vmatprep.subr.mxu0 0.0
    %116 = vmatpush1.msra.mxu0 0.0
    %117 = vmatprep.subr.mxu0 0.0
    %118 = vmatpush1.msra.mxu0 0.0
    %119 = vmatprep.subr.mxu0 0.0
    %120 = vmatpush1.msra.mxu0 0.0
    %121 = vmatprep.subr.mxu0 0.0
    %122 = vmatpush1.msra.mxu0 0.0
    %123 = vmatprep.subr.mxu0 0.0
    %124 = vmatpush1.msra.mxu0 0.0
    %125 = vmatprep.subr.mxu0 0.0
    %126 = vmatpush1.msra.mxu0 0.0
    %127 = vmatprep.subr.mxu0 0.0
    %128 = vmatpush1.msra.mxu0 0.0
    %129 = vmatprep.subr.mxu0 0.0
    %130 = vmatpush1.msra.mxu0 0.0
    %131 = vmatprep.subr.mxu0 0.0
    %132 = vmatpush1.msra.mxu0 0.0
    %133 = vmatprep.subr.mxu0 0.0
    %134 = vmatpush1.msra.mxu0 0.0
    %135 = vmatprep.subr.mxu0 0.0
    %136 = vmatpush1.msra.mxu0 0.0
    %137 = vmatprep.subr.mxu0 0.0
    %138 = vmatpush1.msra.mxu0 0.0
    %139 = vmatprep.subr.mxu0 0.0
    %140 = vmatpush1.msra.mxu0 0.0
    %141 = vmatprep.subr.mxu0 0.0
    %142 = vmatpush1.msra.mxu0 0.0
    %143 = vmatprep.subr.mxu0 0.0
    %144 = vmatpush1.msra.mxu0 0.0
    %145 = vmatprep.subr.mxu0 0.0
    %146 = vmatpush1.msra.mxu0 0.0
    %147 = vmatprep.subr.mxu0 0.0
    %148 = vmatpush1.msra.mxu0 0.0
    %149 = vmatprep.subr.mxu0 0.0
    %150 = vmatpush1.msra.mxu0 0.0
    %151 = vmatprep.subr.mxu0 0.0
    %152 = vmatpush1.msra.mxu0 0.0
    %153 = vmatprep.subr.mxu0 0.0
    %154 = vmatpush1.msra.mxu0 0.0
    %155 = vmatprep.subr.mxu0 0.0
    %156 = vmatpush1.msra.mxu0 0.0
    %157 = vmatprep.mubr.f32.mxu0 0.0
    %158 = vmatmul.mubr.f32.gmra.mrb[0].mxu0 %v84
    %v159 = vpop.f32.mrb[0].mxu0
    %v160 = vadd.f32 %v25, %v159
    %v161 = vpop.f32.mrb[0].mxu0
    %162 = vmatprep.mubr.f32.mxu0 0.0
    %163 = vmatmul.mubr.f32.gmra.mrb[0].mxu0 %v87
    %v164 = vpop.f32.mrb[0].mxu0
    %v165 = vadd.f32 %v25, %v164
    %v166 = vpop.f32.mrb[0].mxu0
    %167 = vdwg.mxu0
    %v168 = vld [vmem:[%s1] sm:$0xff]
    %v169 = vld [vmem:[%s1 + $0x8] sm:$0xff]
    %v170 = vld [vmem:[%s1 + $0x10] sm:$0xff]
    %v171 = vld [vmem:[%s1 + $0x18] sm:$0xff]
    %v172 = vlaneseq
    %v173 = vshrl.u32 %v172, 7
    %v174 = vsub.s32 0, %v173
    %v175 = vrot.slane %v21, %v174
    %vm176 = vcmask 261120
    %v178 = vsel %vm176, %v160, 0
    %v181 = vsel %vm176, %v165, 0
    %183 = vmatprep.subr.mxu0 0.0
    %184 = vmatpush1.msra.mxu0 %v168
    %185 = vmatprep.subr.mxu0 0.0
    %186 = vmatpush1.msra.mxu0 %v169
    %187 = vmatprep.subr.mxu0 0.0
    %188 = vmatpush1.msra.mxu0 %v170
    %189 = vmatprep.subr.mxu0 0.0
    %190 = vmatpush1.msra.mxu0 %v171
    %191 = vmatprep.subr.mxu0 0.0
    %192 = vmatpush1.msra.mxu0 0.0
    %193 = vmatprep.subr.mxu0 0.0
    %194 = vmatpush1.msra.mxu0 0.0
    %195 = vmatprep.subr.mxu0 0.0
    %196 = vmatpush1.msra.mxu0 0.0
    %197 = vmatprep.subr.mxu0 0.0
    %198 = vmatpush1.msra.mxu0 0.0
    %199 = vmatprep.subr.mxu0 0.0
    %200 = vmatpush1.msra.mxu0 0.0
    %201 = vmatprep.subr.mxu0 0.0
    %202 = vmatpush1.msra.mxu0 0.0
    %203 = vmatprep.subr.mxu0 0.0
    %204 = vmatpush1.msra.mxu0 0.0
    %205 = vmatprep.subr.mxu0 0.0
    %206 = vmatpush1.msra.mxu0 0.0
    %207 = vmatprep.subr.mxu0 0.0
    %208 = vmatpush1.msra.mxu0 0.0
    %209 = vmatprep.subr.mxu0 0.0
    %210 = vmatpush1.msra.mxu0 0.0
    %211 = vmatprep.subr.mxu0 0.0
    %212 = vmatpush1.msra.mxu0 0.0
    %213 = vmatprep.subr.mxu0 0.0
    %214 = vmatpush1.msra.mxu0 0.0
    %215 = vmatprep.subr.mxu0 0.0
    %216 = vmatpush1.msra.mxu0 0.0
    %217 = vmatprep.subr.mxu0 0.0
    %218 = vmatpush1.msra.mxu0 0.0
    %219 = vmatprep.subr.mxu0 0.0
    %220 = vmatpush1.msra.mxu0 0.0
    %221 = vmatprep.subr.mxu0 0.0
    %222 = vmatpush1.msra.mxu0 0.0
    %223 = vmatprep.subr.mxu0 0.0
    %224 = vmatpush1.msra.mxu0 0.0
    %225 = vmatprep.subr.mxu0 0.0
    %226 = vmatpush1.msra.mxu0 0.0
    %227 = vmatprep.subr.mxu0 0.0
    %228 = vmatpush1.msra.mxu0 0.0
    %229 = vmatprep.subr.mxu0 0.0
    %230 = vmatpush1.msra.mxu0 0.0
    %231 = vmatprep.subr.mxu0 0.0
    %232 = vmatpush1.msra.mxu0 0.0
    %233 = vmatprep.subr.mxu0 0.0
    %234 = vmatpush1.msra.mxu0 0.0
    %235 = vmatprep.subr.mxu0 0.0
    %236 = vmatpush1.msra.mxu0 0.0
    %237 = vmatprep.subr.mxu0 0.0
    %238 = vmatpush1.msra.mxu0 0.0
    %239 = vmatprep.subr.mxu0 0.0
    %240 = vmatpush1.msra.mxu0 0.0
    %241 = vmatprep.subr.mxu0 0.0
    %242 = vmatpush1.msra.mxu0 0.0
    %243 = vmatprep.subr.mxu0 0.0
    %244 = vmatpush1.msra.mxu0 0.0
    %245 = vmatprep.subr.mxu0 0.0
    %246 = vmatpush1.msra.mxu0 0.0
    %247 = vmatprep.mubr.f32.mxu0 0.0
    %248 = vmatmul.mubr.f32.gmra.mrb[0].mxu0 %v178
    %v249 = vpop.f32.mrb[0].mxu0
    %v250 = vadd.f32 %v175, %v249
    %v251 = vpop.f32.mrb[0].mxu0
    %252 = vmatprep.mubr.f32.mxu0 0.0
    %253 = vmatmul.mubr.f32.gmra.mrb[0].mxu0 %v181
    %v254 = vpop.f32.mrb[0].mxu0
    %v255 = vadd.f32 %v175, %v254
    %v256 = vpop.f32.mrb[0].mxu0
    %257 = vdwg.mxu0
    %259 = vrot.lane.b32.xlu0 %v250, 96
    %v260 = vpop.permute.xlu0 %259
    %vm261 = vcmask 31744
    %v262 = vsel %vm261, %v250, 0
    %v264 = vsel %vm261, %v260, 0
    %266 = vmatprep.subr.mxu0 0.0
    %267 = vmatpush1.xpose.msra.mxu0 %v264
    %268 = vmatprep.subr.mxu0 0.0
    %269 = vmatpush1.xpose.msra.mxu0 0.0
    %270 = vmatprep.subr.mxu0 0.0
    %271 = vmatpush1.xpose.msra.mxu0 0.0
    %272 = vmatprep.subr.mxu0 0.0
    %273 = vmatpush1.xpose.msra.mxu0 0.0
    %274 = vmatprep.subr.mxu0 0.0
    %275 = vmatpush1.xpose.msra.mxu0 0.0
    %276 = vmatprep.subr.mxu0 0.0
    %277 = vmatpush1.xpose.msra.mxu0 0.0
    %278 = vmatprep.subr.mxu0 0.0
    %279 = vmatpush1.xpose.msra.mxu0 0.0
    %280 = vmatprep.subr.mxu0 0.0
    %281 = vmatpush1.xpose.msra.mxu0 0.0
    %282 = vmatprep.subr.mxu0 0.0
    %283 = vmatpush1.xpose.msra.mxu0 0.0
    %284 = vmatprep.subr.mxu0 0.0
    %285 = vmatpush1.xpose.msra.mxu0 0.0
    %286 = vmatprep.subr.mxu0 0.0
    %287 = vmatpush1.xpose.msra.mxu0 0.0
    %288 = vmatprep.subr.mxu0 0.0
    %289 = vmatpush1.xpose.msra.mxu0 0.0
    %290 = vmatprep.subr.mxu0 0.0
    %291 = vmatpush1.xpose.msra.mxu0 0.0
    %292 = vmatprep.subr.mxu0 0.0
    %293 = vmatpush1.xpose.msra.mxu0 0.0
    %294 = vmatprep.subr.mxu0 0.0
    %295 = vmatpush1.xpose.msra.mxu0 0.0
    %296 = vmatprep.subr.mxu0 0.0
    %297 = vmatpush1.xpose.msra.mxu0 0.0
    %298 = vmatprep.subr.mxu0 0.0
    %299 = vmatpush1.xpose.msra.mxu0 0.0
    %300 = vmatprep.subr.mxu0 0.0
    %301 = vmatpush1.xpose.msra.mxu0 0.0
    %302 = vmatprep.subr.mxu0 0.0
    %303 = vmatpush1.xpose.msra.mxu0 0.0
    %304 = vmatprep.subr.mxu0 0.0
    %305 = vmatpush1.xpose.msra.mxu0 0.0
    %306 = vmatprep.subr.mxu0 0.0
    %307 = vmatpush1.xpose.msra.mxu0 0.0
    %308 = vmatprep.subr.mxu0 0.0
    %309 = vmatpush1.xpose.msra.mxu0 0.0
    %310 = vmatprep.subr.mxu0 0.0
    %311 = vmatpush1.xpose.msra.mxu0 0.0
    %312 = vmatprep.subr.mxu0 0.0
    %313 = vmatpush1.xpose.msra.mxu0 0.0
    %314 = vmatprep.subr.mxu0 0.0
    %315 = vmatpush1.xpose.msra.mxu0 0.0
    %316 = vmatprep.subr.mxu0 0.0
    %317 = vmatpush1.xpose.msra.mxu0 0.0
    %318 = vmatprep.subr.mxu0 0.0
    %319 = vmatpush1.xpose.msra.mxu0 0.0
    %320 = vmatprep.subr.mxu0 0.0
    %321 = vmatpush1.xpose.msra.mxu0 0.0
    %322 = vmatprep.subr.mxu0 0.0
    %323 = vmatpush1.xpose.msra.mxu0 0.0
    %324 = vmatprep.subr.mxu0 0.0
    %325 = vmatpush1.xpose.msra.mxu0 0.0
    %326 = vmatprep.subr.mxu0 0.0
    %327 = vmatpush1.xpose.msra.mxu0 0.0
    %328 = vmatprep.subr.mxu0 0.0
    %329 = vmatpush1.xpose.msra.mxu0 0.0
    %330 = vmatprep.mubr.f32.mxu0 0.0
    %331 = vmatmul.mubr.f32.gmra.mrb[0].mxu0 %v262
    %v332 = vpop.f32.mrb[0].mxu0
    %v333 = vadd.f32 0.0, %v332
    %v334 = vpop.f32.mrb[0].mxu0
    %335 = vdwg.mxu0
    %vm336 = vcmask 64512
    %v337 = vsel %vm336, %v333, -inf
    %338 = vmax.xlane.f32.xlu0 %v337
    %v339 = vpop.xlane.xlu0 %338
    %v340 = vsub.f32 %v333, %v339
    %v341 = vmul.f32 %v340, 1.442695
    %v342 = vpow.pop %v341
    %v343 = vsel %vm336, %v342, 0.0
    %344 = vadd.xlane.f32.xlu0 %v343
    %v345 = vpop.xlane.xlu0 %344
    %v346 = vrcp.pop %v345
    %v347 = vmul.f32 %v342, %v346
    %348 = vrot.lane.b32.xlu0 %v250, 64
    %v349 = vpop.permute.xlu0 %348
    %v352 = vsel %vm336, %v347, 0
    %354 = vmatprep.subr.mxu0 0.0
    %355 = vmatpush1.msra.mxu0 %v349
    %356 = vmatprep.subr.mxu0 0.0
    %357 = vmatpush1.msra.mxu0 0.0
    %358 = vmatprep.subr.mxu0 0.0
    %359 = vmatpush1.msra.mxu0 0.0
    %360 = vmatprep.subr.mxu0 0.0
    %361 = vmatpush1.msra.mxu0 0.0
    %362 = vmatprep.subr.mxu0 0.0
    %363 = vmatpush1.msra.mxu0 0.0
    %364 = vmatprep.subr.mxu0 0.0
    %365 = vmatpush1.msra.mxu0 0.0
    %366 = vmatprep.subr.mxu0 0.0
    %367 = vmatpush1.msra.mxu0 0.0
    %368 = vmatprep.subr.mxu0 0.0
    %369 = vmatpush1.msra.mxu0 0.0
    %370 = vmatprep.subr.mxu0 0.0
    %371 = vmatpush1.msra.mxu0 0.0
    %372 = vmatprep.subr.mxu0 0.0
    %373 = vmatpush1.msra.mxu0 0.0
    %374 = vmatprep.subr.mxu0 0.0
    %375 = vmatpush1.msra.mxu0 0.0
    %376 = vmatprep.subr.mxu0 0.0
    %377 = vmatpush1.msra.mxu0 0.0
    %378 = vmatprep.subr.mxu0 0.0
    %379 = vmatpush1.msra.mxu0 0.0
    %380 = vmatprep.subr.mxu0 0.0
    %381 = vmatpush1.msra.mxu0 0.0
    %382 = vmatprep.subr.mxu0 0.0
    %383 = vmatpush1.msra.mxu0 0.0
    %384 = vmatprep.subr.mxu0 0.0
    %385 = vmatpush1.msra.mxu0 0.0
    %386 = vmatprep.subr.mxu0 0.0
    %387 = vmatpush1.msra.mxu0 0.0
    %388 = vmatprep.subr.mxu0 0.0
    %389 = vmatpush1.msra.mxu0 0.0
    %390 = vmatprep.subr.mxu0 0.0
    %391 = vmatpush1.msra.mxu0 0.0
    %392 = vmatprep.subr.mxu0 0.0
    %393 = vmatpush1.msra.mxu0 0.0
    %394 = vmatprep.subr.mxu0 0.0
    %395 = vmatpush1.msra.mxu0 0.0
    %396 = vmatprep.subr.mxu0 0.0
    %397 = vmatpush1.msra.mxu0 0.0
    %398 = vmatprep.subr.mxu0 0.0
    %399 = vmatpush1.msra.mxu0 0.0
    %400 = vmatprep.subr.mxu0 0.0
    %401 = vmatpush1.msra.mxu0 0.0
    %402 = vmatprep.subr.mxu0 0.0
    %403 = vmatpush1.msra.mxu0 0.0
    %404 = vmatprep.subr.mxu0 0.0
    %405 = vmatpush1.msra.mxu0 0.0
    %406 = vmatprep.subr.mxu0 0.0
    %407 = vmatpush1.msra.mxu0 0.0
    %408 = vmatprep.subr.mxu0 0.0
    %409 = vmatpush1.msra.mxu0 0.0
    %410 = vmatprep.subr.mxu0 0.0
    %411 = vmatpush1.msra.mxu0 0.0
    %412 = vmatprep.subr.mxu0 0.0
    %413 = vmatpush1.msra.mxu0 0.0
    %414 = vmatprep.subr.mxu0 0.0
    %415 = vmatpush1.msra.mxu0 0.0
    %416 = vmatprep.subr.mxu0 0.0
    %417 = vmatpush1.msra.mxu0 0.0
    %418 = vmatprep.mubr.f32.mxu0 0.0
    %419 = vmatmul.mubr.f32.gmra.mrb[0].mxu0 %v352
    %v420 = vpop.f32.mrb[0].mxu0
    %v421 = vadd.f32 0.0, %v420
    %v422 = vpop.f32.mrb[0].mxu0
    %423 = vdwg.mxu0
    %424 = vrot.lane.b32.xlu0 %v250, 124
    %v425 = vpop.permute.xlu0 %424
    %426 = vrot.lane.b32.xlu0 %v250, 92
    %v427 = vpop.permute.xlu0 %426
    %v428 = vsel %vm261, %v425, 0
    %v430 = vsel %vm261, %v427, 0
    %432 = vmatprep.subr.mxu0 0.0
    %433 = vmatpush1.xpose.msra.mxu0 %v430
    %434 = vmatprep.subr.mxu0 0.0
    %435 = vmatpush1.xpose.msra.mxu0 0.0
    %436 = vmatprep.subr.mxu0 0.0
    %437 = vmatpush1.xpose.msra.mxu0 0.0
    %438 = vmatprep.subr.mxu0 0.0
    %439 = vmatpush1.xpose.msra.mxu0 0.0
    %440 = vmatprep.subr.mxu0 0.0
    %441 = vmatpush1.xpose.msra.mxu0 0.0
    %442 = vmatprep.subr.mxu0 0.0
    %443 = vmatpush1.xpose.msra.mxu0 0.0
    %444 = vmatprep.subr.mxu0 0.0
    %445 = vmatpush1.xpose.msra.mxu0 0.0
    %446 = vmatprep.subr.mxu0 0.0
    %447 = vmatpush1.xpose.msra.mxu0 0.0
    %448 = vmatprep.subr.mxu0 0.0
    %449 = vmatpush1.xpose.msra.mxu0 0.0
    %450 = vmatprep.subr.mxu0 0.0
    %451 = vmatpush1.xpose.msra.mxu0 0.0
    %452 = vmatprep.subr.mxu0 0.0
    %453 = vmatpush1.xpose.msra.mxu0 0.0
    %454 = vmatprep.subr.mxu0 0.0
    %455 = vmatpush1.xpose.msra.mxu0 0.0
    %456 = vmatprep.subr.mxu0 0.0
    %457 = vmatpush1.xpose.msra.mxu0 0.0
    %458 = vmatprep.subr.mxu0 0.0
    %459 = vmatpush1.xpose.msra.mxu0 0.0
    %460 = vmatprep.subr.mxu0 0.0
    %461 = vmatpush1.xpose.msra.mxu0 0.0
    %462 = vmatprep.subr.mxu0 0.0
    %463 = vmatpush1.xpose.msra.mxu0 0.0
    %464 = vmatprep.subr.mxu0 0.0
    %465 = vmatpush1.xpose.msra.mxu0 0.0
    %466 = vmatprep.subr.mxu0 0.0
    %467 = vmatpush1.xpose.msra.mxu0 0.0
    %468 = vmatprep.subr.mxu0 0.0
    %469 = vmatpush1.xpose.msra.mxu0 0.0
    %470 = vmatprep.subr.mxu0 0.0
    %471 = vmatpush1.xpose.msra.mxu0 0.0
    %472 = vmatprep.subr.mxu0 0.0
    %473 = vmatpush1.xpose.msra.mxu0 0.0
    %474 = vmatprep.subr.mxu0 0.0
    %475 = vmatpush1.xpose.msra.mxu0 0.0
    %476 = vmatprep.subr.mxu0 0.0
    %477 = vmatpush1.xpose.msra.mxu0 0.0
    %478 = vmatprep.subr.mxu0 0.0
    %479 = vmatpush1.xpose.msra.mxu0 0.0
    %480 = vmatprep.subr.mxu0 0.0
    %481 = vmatpush1.xpose.msra.mxu0 0.0
    %482 = vmatprep.subr.mxu0 0.0
    %483 = vmatpush1.xpose.msra.mxu0 0.0
    %484 = vmatprep.subr.mxu0 0.0
    %485 = vmatpush1.xpose.msra.mxu0 0.0
    %486 = vmatprep.subr.mxu0 0.0
    %487 = vmatpush1.xpose.msra.mxu0 0.0
    %488 = vmatprep.subr.mxu0 0.0
    %489 = vmatpush1.xpose.msra.mxu0 0.0
    %490 = vmatprep.subr.mxu0 0.0
    %491 = vmatpush1.xpose.msra.mxu0 0.0
    %492 = vmatprep.subr.mxu0 0.0
    %493 = vmatpush1.xpose.msra.mxu0 0.0
    %494 = vmatprep.subr.mxu0 0.0
    %495 = vmatpush1.xpose.msra.mxu0 0.0
    %496 = vmatprep.mubr.f32.mxu0 0.0
    %497 = vmatmul.mubr.f32.gmra.mrb[0].mxu0 %v428
    %v498 = vpop.f32.mrb[0].mxu0
    %v499 = vadd.f32 0.0, %v498
    %v500 = vpop.f32.mrb[0].mxu0
    %501 = vdwg.mxu0
    %v502 = vsel %vm336, %v499, -inf
    %503 = vmax.xlane.f32.xlu0 %v502
    %v504 = vpop.xlane.xlu0 %503
    %v505 = vsub.f32 %v499, %v504
    %v506 = vmul.f32 %v505, 1.442695
    %v507 = vpow.pop %v506
    %v508 = vsel %vm336, %v507, 0.0
    %509 = vadd.xlane.f32.xlu0 %v508
    %v510 = vpop.xlane.xlu0 %509
    %v511 = vrcp.pop %v510
    %v512 = vmul.f32 %v507, %v511
    %513 = vrot.lane.b32.xlu0 %v250, 60
    %v514 = vpop.permute.xlu0 %513
    %v517 = vsel %vm336, %v512, 0
    %519 = vmatprep.subr.mxu0 0.0
    %520 = vmatpush1.msra.mxu0 %v514
    %521 = vmatprep.subr.mxu0 0.0
    %522 = vmatpush1.msra.mxu0 0.0
    %523 = vmatprep.subr.mxu0 0.0
    %524 = vmatpush1.msra.mxu0 0.0
    %525 = vmatprep.subr.mxu0 0.0
    %526 = vmatpush1.msra.mxu0 0.0
    %527 = vmatprep.subr.mxu0 0.0
    %528 = vmatpush1.msra.mxu0 0.0
    %529 = vmatprep.subr.mxu0 0.0
    %530 = vmatpush1.msra.mxu0 0.0
    %531 = vmatprep.subr.mxu0 0.0
    %532 = vmatpush1.msra.mxu0 0.0
    %533 = vmatprep.subr.mxu0 0.0
    %534 = vmatpush1.msra.mxu0 0.0
    %535 = vmatprep.subr.mxu0 0.0
    %536 = vmatpush1.msra.mxu0 0.0
    %537 = vmatprep.subr.mxu0 0.0
    %538 = vmatpush1.msra.mxu0 0.0
    %539 = vmatprep.subr.mxu0 0.0
    %540 = vmatpush1.msra.mxu0 0.0
    %541 = vmatprep.subr.mxu0 0.0
    %542 = vmatpush1.msra.mxu0 0.0
    %543 = vmatprep.subr.mxu0 0.0
    %544 = vmatpush1.msra.mxu0 0.0
    %545 = vmatprep.subr.mxu0 0.0
    %546 = vmatpush1.msra.mxu0 0.0
    %547 = vmatprep.subr.mxu0 0.0
    %548 = vmatpush1.msra.mxu0 0.0
    %549 = vmatprep.subr.mxu0 0.0
    %550 = vmatpush1.msra.mxu0 0.0
    %551 = vmatprep.subr.mxu0 0.0
    %552 = vmatpush1.msra.mxu0 0.0
    %553 = vmatprep.subr.mxu0 0.0
    %554 = vmatpush1.msra.mxu0 0.0
    %555 = vmatprep.subr.mxu0 0.0
    %556 = vmatpush1.msra.mxu0 0.0
    %557 = vmatprep.subr.mxu0 0.0
    %558 = vmatpush1.msra.mxu0 0.0
    %559 = vmatprep.subr.mxu0 0.0
    %560 = vmatpush1.msra.mxu0 0.0
    %561 = vmatprep.subr.mxu0 0.0
    %562 = vmatpush1.msra.mxu0 0.0
    %563 = vmatprep.subr.mxu0 0.0
    %564 = vmatpush1.msra.mxu0 0.0
    %565 = vmatprep.subr.mxu0 0.0
    %566 = vmatpush1.msra.mxu0 0.0
    %567 = vmatprep.subr.mxu0 0.0
    %568 = vmatpush1.msra.mxu0 0.0
    %569 = vmatprep.subr.mxu0 0.0
    %570 = vmatpush1.msra.mxu0 0.0
    %571 = vmatprep.subr.mxu0 0.0
    %572 = vmatpush1.msra.mxu0 0.0
    %573 = vmatprep.subr.mxu0 0.0
    %574 = vmatpush1.msra.mxu0 0.0
    %575 = vmatprep.subr.mxu0 0.0
    %576 = vmatpush1.msra.mxu0 0.0
    %577 = vmatprep.subr.mxu0 0.0
    %578 = vmatpush1.msra.mxu0 0.0
    %579 = vmatprep.subr.mxu0 0.0
    %580 = vmatpush1.msra.mxu0 0.0
    %581 = vmatprep.subr.mxu0 0.0
    %582 = vmatpush1.msra.mxu0 0.0
    %583 = vmatprep.mubr.f32.mxu0 0.0
    %584 = vmatmul.mubr.f32.gmra.mrb[0].mxu0 %v517
    %v585 = vpop.f32.mrb[0].mxu0
    %v586 = vadd.f32 0.0, %v585
    %v587 = vpop.f32.mrb[0].mxu0
    %588 = vdwg.mxu0
    %589 = vrot.lane.b32.xlu0 %v250, 120
    %v590 = vpop.permute.xlu0 %589
    %591 = vrot.lane.b32.xlu0 %v250, 88
    %v592 = vpop.permute.xlu0 %591
    %v593 = vsel %vm261, %v590, 0
    %v595 = vsel %vm261, %v592, 0
    %597 = vmatprep.subr.mxu0 0.0
    %598 = vmatpush1.xpose.msra.mxu0 %v595
    %599 = vmatprep.subr.mxu0 0.0
    %600 = vmatpush1.xpose.msra.mxu0 0.0
    %601 = vmatprep.subr.mxu0 0.0
    %602 = vmatpush1.xpose.msra.mxu0 0.0
    %603 = vmatprep.subr.mxu0 0.0
    %604 = vmatpush1.xpose.msra.mxu0 0.0
    %605 = vmatprep.subr.mxu0 0.0
    %606 = vmatpush1.xpose.msra.mxu0 0.0
    %607 = vmatprep.subr.mxu0 0.0
    %608 = vmatpush1.xpose.msra.mxu0 0.0
    %609 = vmatprep.subr.mxu0 0.0
    %610 = vmatpush1.xpose.msra.mxu0 0.0
    %611 = vmatprep.subr.mxu0 0.0
    %612 = vmatpush1.xpose.msra.mxu0 0.0
    %613 = vmatprep.subr.mxu0 0.0
    %614 = vmatpush1.xpose.msra.mxu0 0.0
    %615 = vmatprep.subr.mxu0 0.0
    %616 = vmatpush1.xpose.msra.mxu0 0.0
    %617 = vmatprep.subr.mxu0 0.0
    %618 = vmatpush1.xpose.msra.mxu0 0.0
    %619 = vmatprep.subr.mxu0 0.0
    %620 = vmatpush1.xpose.msra.mxu0 0.0
    %621 = vmatprep.subr.mxu0 0.0
    %622 = vmatpush1.xpose.msra.mxu0 0.0
    %623 = vmatprep.subr.mxu0 0.0
    %624 = vmatpush1.xpose.msra.mxu0 0.0
    %625 = vmatprep.subr.mxu0 0.0
    %626 = vmatpush1.xpose.msra.mxu0 0.0
    %627 = vmatprep.subr.mxu0 0.0
    %628 = vmatpush1.xpose.msra.mxu0 0.0
    %629 = vmatprep.subr.mxu0 0.0
    %630 = vmatpush1.xpose.msra.mxu0 0.0
    %631 = vmatprep.subr.mxu0 0.0
    %632 = vmatpush1.xpose.msra.mxu0 0.0
    %633 = vmatprep.subr.mxu0 0.0
    %634 = vmatpush1.xpose.msra.mxu0 0.0
    %635 = vmatprep.subr.mxu0 0.0
    %636 = vmatpush1.xpose.msra.mxu0 0.0
    %637 = vmatprep.subr.mxu0 0.0
    %638 = vmatpush1.xpose.msra.mxu0 0.0
    %639 = vmatprep.subr.mxu0 0.0
    %640 = vmatpush1.xpose.msra.mxu0 0.0
    %641 = vmatprep.subr.mxu0 0.0
    %642 = vmatpush1.xpose.msra.mxu0 0.0
    %643 = vmatprep.subr.mxu0 0.0
    %644 = vmatpush1.xpose.msra.mxu0 0.0
    %645 = vmatprep.subr.mxu0 0.0
    %646 = vmatpush1.xpose.msra.mxu0 0.0
    %647 = vmatprep.subr.mxu0 0.0
    %648 = vmatpush1.xpose.msra.mxu0 0.0
    %649 = vmatprep.subr.mxu0 0.0
    %650 = vmatpush1.xpose.msra.mxu0 0.0
    %651 = vmatprep.subr.mxu0 0.0
    %652 = vmatpush1.xpose.msra.mxu0 0.0
    %653 = vmatprep.subr.mxu0 0.0
    %654 = vmatpush1.xpose.msra.mxu0 0.0
    %655 = vmatprep.subr.mxu0 0.0
    %656 = vmatpush1.xpose.msra.mxu0 0.0
    %657 = vmatprep.subr.mxu0 0.0
    %658 = vmatpush1.xpose.msra.mxu0 0.0
    %659 = vmatprep.subr.mxu0 0.0
    %660 = vmatpush1.xpose.msra.mxu0 0.0
    %661 = vmatprep.mubr.f32.mxu0 0.0
    %662 = vmatmul.mubr.f32.gmra.mrb[0].mxu0 %v593
    %v663 = vpop.f32.mrb[0].mxu0
    %v664 = vadd.f32 0.0, %v663
    %v665 = vpop.f32.mrb[0].mxu0
    %666 = vdwg.mxu0
    %v667 = vsel %vm336, %v664, -inf
    %668 = vmax.xlane.f32.xlu0 %v667
    %v669 = vpop.xlane.xlu0 %668
    %v670 = vsub.f32 %v664, %v669
    %v671 = vmul.f32 %v670, 1.442695
    %v672 = vpow.pop %v671
    %v673 = vsel %vm336, %v672, 0.0
    %674 = vadd.xlane.f32.xlu0 %v673
    %v675 = vpop.xlane.xlu0 %674
    %v676 = vrcp.pop %v675
    %v677 = vmul.f32 %v672, %v676
    %678 = vrot.lane.b32.xlu0 %v250, 56
    %v679 = vpop.permute.xlu0 %678
    %v682 = vsel %vm336, %v677, 0
    %684 = vmatprep.subr.mxu0 0.0
    %685 = vmatpush1.msra.mxu0 %v679
    %686 = vmatprep.subr.mxu0 0.0
    %687 = vmatpush1.msra.mxu0 0.0
    %688 = vmatprep.subr.mxu0 0.0
    %689 = vmatpush1.msra.mxu0 0.0
    %690 = vmatprep.subr.mxu0 0.0
    %691 = vmatpush1.msra.mxu0 0.0
    %692 = vmatprep.subr.mxu0 0.0
    %693 = vmatpush1.msra.mxu0 0.0
    %694 = vmatprep.subr.mxu0 0.0
    %695 = vmatpush1.msra.mxu0 0.0
    %696 = vmatprep.subr.mxu0 0.0
    %697 = vmatpush1.msra.mxu0 0.0
    %698 = vmatprep.subr.mxu0 0.0
    %699 = vmatpush1.msra.mxu0 0.0
    %700 = vmatprep.subr.mxu0 0.0
    %701 = vmatpush1.msra.mxu0 0.0
    %702 = vmatprep.subr.mxu0 0.0
    %703 = vmatpush1.msra.mxu0 0.0
    %704 = vmatprep.subr.mxu0 0.0
    %705 = vmatpush1.msra.mxu0 0.0
    %706 = vmatprep.subr.mxu0 0.0
    %707 = vmatpush1.msra.mxu0 0.0
    %708 = vmatprep.subr.mxu0 0.0
    %709 = vmatpush1.msra.mxu0 0.0
    %710 = vmatprep.subr.mxu0 0.0
    %711 = vmatpush1.msra.mxu0 0.0
    %712 = vmatprep.subr.mxu0 0.0
    %713 = vmatpush1.msra.mxu0 0.0
    %714 = vmatprep.subr.mxu0 0.0
    %715 = vmatpush1.msra.mxu0 0.0
    %716 = vmatprep.subr.mxu0 0.0
    %717 = vmatpush1.msra.mxu0 0.0
    %718 = vmatprep.subr.mxu0 0.0
    %719 = vmatpush1.msra.mxu0 0.0
    %720 = vmatprep.subr.mxu0 0.0
    %721 = vmatpush1.msra.mxu0 0.0
    %722 = vmatprep.subr.mxu0 0.0
    %723 = vmatpush1.msra.mxu0 0.0
    %724 = vmatprep.subr.mxu0 0.0
    %725 = vmatpush1.msra.mxu0 0.0
    %726 = vmatprep.subr.mxu0 0.0
    %727 = vmatpush1.msra.mxu0 0.0
    %728 = vmatprep.subr.mxu0 0.0
    %729 = vmatpush1.msra.mxu0 0.0
    %730 = vmatprep.subr.mxu0 0.0
    %731 = vmatpush1.msra.mxu0 0.0
    %732 = vmatprep.subr.mxu0 0.0
    %733 = vmatpush1.msra.mxu0 0.0
    %734 = vmatprep.subr.mxu0 0.0
    %735 = vmatpush1.msra.mxu0 0.0
    %736 = vmatprep.subr.mxu0 0.0
    %737 = vmatpush1.msra.mxu0 0.0
    %738 = vmatprep.subr.mxu0 0.0
    %739 = vmatpush1.msra.mxu0 0.0
    %740 = vmatprep.subr.mxu0 0.0
    %741 = vmatpush1.msra.mxu0 0.0
    %742 = vmatprep.subr.mxu0 0.0
    %743 = vmatpush1.msra.mxu0 0.0
    %744 = vmatprep.subr.mxu0 0.0
    %745 = vmatpush1.msra.mxu0 0.0
    %746 = vmatprep.subr.mxu0 0.0
    %747 = vmatpush1.msra.mxu0 0.0
    %748 = vmatprep.mubr.f32.mxu0 0.0
    %749 = vmatmul.mubr.f32.gmra.mrb[0].mxu0 %v682
    %v750 = vpop.f32.mrb[0].mxu0
    %v751 = vadd.f32 0.0, %v750
    %v752 = vpop.f32.mrb[0].mxu0
    %753 = vdwg.mxu0
    %754 = vrot.lane.b32.xlu0 %v250, 116
    %v755 = vpop.permute.xlu0 %754
    %756 = vrot.lane.b32.xlu0 %v250, 84
    %v757 = vpop.permute.xlu0 %756
    %v758 = vsel %vm261, %v755, 0
    %v760 = vsel %vm261, %v757, 0
    %762 = vmatprep.subr.mxu0 0.0
    %763 = vmatpush1.xpose.msra.mxu0 %v760
    %764 = vmatprep.subr.mxu0 0.0
    %765 = vmatpush1.xpose.msra.mxu0 0.0
    %766 = vmatprep.subr.mxu0 0.0
    %767 = vmatpush1.xpose.msra.mxu0 0.0
    %768 = vmatprep.subr.mxu0 0.0
    %769 = vmatpush1.xpose.msra.mxu0 0.0
    %770 = vmatprep.subr.mxu0 0.0
    %771 = vmatpush1.xpose.msra.mxu0 0.0
    %772 = vmatprep.subr.mxu0 0.0
    %773 = vmatpush1.xpose.msra.mxu0 0.0
    %774 = vmatprep.subr.mxu0 0.0
    %775 = vmatpush1.xpose.msra.mxu0 0.0
    %776 = vmatprep.subr.mxu0 0.0
    %777 = vmatpush1.xpose.msra.mxu0 0.0
    %778 = vmatprep.subr.mxu0 0.0
    %779 = vmatpush1.xpose.msra.mxu0 0.0
    %780 = vmatprep.subr.mxu0 0.0
    %781 = vmatpush1.xpose.msra.mxu0 0.0
    %782 = vmatprep.subr.mxu0 0.0
    %783 = vmatpush1.xpose.msra.mxu0 0.0
    %784 = vmatprep.subr.mxu0 0.0
    %785 = vmatpush1.xpose.msra.mxu0 0.0
    %786 = vmatprep.subr.mxu0 0.0
    %787 = vmatpush1.xpose.msra.mxu0 0.0
    %788 = vmatprep.subr.mxu0 0.0
    %789 = vmatpush1.xpose.msra.mxu0 0.0
    %790 = vmatprep.subr.mxu0 0.0
    %791 = vmatpush1.xpose.msra.mxu0 0.0
    %792 = vmatprep.subr.mxu0 0.0
    %793 = vmatpush1.xpose.msra.mxu0 0.0
    %794 = vmatprep.subr.mxu0 0.0
    %795 = vmatpush1.xpose.msra.mxu0 0.0
    %796 = vmatprep.subr.mxu0 0.0
    %797 = vmatpush1.xpose.msra.mxu0 0.0
    %798 = vmatprep.subr.mxu0 0.0
    %799 = vmatpush1.xpose.msra.mxu0 0.0
    %800 = vmatprep.subr.mxu0 0.0
    %801 = vmatpush1.xpose.msra.mxu0 0.0
    %802 = vmatprep.subr.mxu0 0.0
    %803 = vmatpush1.xpose.msra.mxu0 0.0
    %804 = vmatprep.subr.mxu0 0.0
    %805 = vmatpush1.xpose.msra.mxu0 0.0
    %806 = vmatprep.subr.mxu0 0.0
    %807 = vmatpush1.xpose.msra.mxu0 0.0
    %808 = vmatprep.subr.mxu0 0.0
    %809 = vmatpush1.xpose.msra.mxu0 0.0
    %810 = vmatprep.subr.mxu0 0.0
    %811 = vmatpush1.xpose.msra.mxu0 0.0
    %812 = vmatprep.subr.mxu0 0.0
    %813 = vmatpush1.xpose.msra.mxu0 0.0
    %814 = vmatprep.subr.mxu0 0.0
    %815 = vmatpush1.xpose.msra.mxu0 0.0
    %816 = vmatprep.subr.mxu0 0.0
    %817 = vmatpush1.xpose.msra.mxu0 0.0
    %818 = vmatprep.subr.mxu0 0.0
    %819 = vmatpush1.xpose.msra.mxu0 0.0
    %820 = vmatprep.subr.mxu0 0.0
    %821 = vmatpush1.xpose.msra.mxu0 0.0
    %822 = vmatprep.subr.mxu0 0.0
    %823 = vmatpush1.xpose.msra.mxu0 0.0
    %824 = vmatprep.subr.mxu0 0.0
    %825 = vmatpush1.xpose.msra.mxu0 0.0
    %826 = vmatprep.mubr.f32.mxu0 0.0
    %827 = vmatmul.mubr.f32.gmra.mrb[0].mxu0 %v758
    %v828 = vpop.f32.mrb[0].mxu0
    %v829 = vadd.f32 0.0, %v828
    %v830 = vpop.f32.mrb[0].mxu0
    %831 = vdwg.mxu0
    %v832 = vsel %vm336, %v829, -inf
    %833 = vmax.xlane.f32.xlu0 %v832
    %v834 = vpop.xlane.xlu0 %833
    %v835 = vsub.f32 %v829, %v834
    %v836 = vmul.f32 %v835, 1.442695
    %v837 = vpow.pop %v836
    %v838 = vsel %vm336, %v837, 0.0
    %839 = vadd.xlane.f32.xlu0 %v838
    %v840 = vpop.xlane.xlu0 %839
    %v841 = vrcp.pop %v840
    %v842 = vmul.f32 %v837, %v841
    %843 = vrot.lane.b32.xlu0 %v250, 52
    %v844 = vpop.permute.xlu0 %843
    %v847 = vsel %vm336, %v842, 0
    %849 = vmatprep.subr.mxu0 0.0
    %850 = vmatpush1.msra.mxu0 %v844
    %851 = vmatprep.subr.mxu0 0.0
    %852 = vmatpush1.msra.mxu0 0.0
    %853 = vmatprep.subr.mxu0 0.0
    %854 = vmatpush1.msra.mxu0 0.0
    %855 = vmatprep.subr.mxu0 0.0
    %856 = vmatpush1.msra.mxu0 0.0
    %857 = vmatprep.subr.mxu0 0.0
    %858 = vmatpush1.msra.mxu0 0.0
    %859 = vmatprep.subr.mxu0 0.0
    %860 = vmatpush1.msra.mxu0 0.0
    %861 = vmatprep.subr.mxu0 0.0
    %862 = vmatpush1.msra.mxu0 0.0
    %863 = vmatprep.subr.mxu0 0.0
    %864 = vmatpush1.msra.mxu0 0.0
    %865 = vmatprep.subr.mxu0 0.0
    %866 = vmatpush1.msra.mxu0 0.0
    %867 = vmatprep.subr.mxu0 0.0
    %868 = vmatpush1.msra.mxu0 0.0
    %869 = vmatprep.subr.mxu0 0.0
    %870 = vmatpush1.msra.mxu0 0.0
    %871 = vmatprep.subr.mxu0 0.0
    %872 = vmatpush1.msra.mxu0 0.0
    %873 = vmatprep.subr.mxu0 0.0
    %874 = vmatpush1.msra.mxu0 0.0
    %875 = vmatprep.subr.mxu0 0.0
    %876 = vmatpush1.msra.mxu0 0.0
    %877 = vmatprep.subr.mxu0 0.0
    %878 = vmatpush1.msra.mxu0 0.0
    %879 = vmatprep.subr.mxu0 0.0
    %880 = vmatpush1.msra.mxu0 0.0
    %881 = vmatprep.subr.mxu0 0.0
    %882 = vmatpush1.msra.mxu0 0.0
    %883 = vmatprep.subr.mxu0 0.0
    %884 = vmatpush1.msra.mxu0 0.0
    %885 = vmatprep.subr.mxu0 0.0
    %886 = vmatpush1.msra.mxu0 0.0
    %887 = vmatprep.subr.mxu0 0.0
    %888 = vmatpush1.msra.mxu0 0.0
    %889 = vmatprep.subr.mxu0 0.0
    %890 = vmatpush1.msra.mxu0 0.0
    %891 = vmatprep.subr.mxu0 0.0
    %892 = vmatpush1.msra.mxu0 0.0
    %893 = vmatprep.subr.mxu0 0.0
    %894 = vmatpush1.msra.mxu0 0.0
    %895 = vmatprep.subr.mxu0 0.0
    %896 = vmatpush1.msra.mxu0 0.0
    %897 = vmatprep.subr.mxu0 0.0
    %898 = vmatpush1.msra.mxu0 0.0
    %899 = vmatprep.subr.mxu0 0.0
    %900 = vmatpush1.msra.mxu0 0.0
    %901 = vmatprep.subr.mxu0 0.0
    %902 = vmatpush1.msra.mxu0 0.0
    %903 = vmatprep.subr.mxu0 0.0
    %904 = vmatpush1.msra.mxu0 0.0
    %905 = vmatprep.subr.mxu0 0.0
    %906 = vmatpush1.msra.mxu0 0.0
    %907 = vmatprep.subr.mxu0 0.0
    %908 = vmatpush1.msra.mxu0 0.0
    %909 = vmatprep.subr.mxu0 0.0
    %910 = vmatpush1.msra.mxu0 0.0
    %911 = vmatprep.subr.mxu0 0.0
    %912 = vmatpush1.msra.mxu0 0.0
    %913 = vmatprep.mubr.f32.mxu0 0.0
    %914 = vmatmul.mubr.f32.gmra.mrb[0].mxu0 %v847
    %v915 = vpop.f32.mrb[0].mxu0
    %v916 = vadd.f32 0.0, %v915
    %v917 = vpop.f32.mrb[0].mxu0
    %918 = vdwg.mxu0
    %919 = vrot.lane.b32.xlu0 %v250, 112
    %v920 = vpop.permute.xlu0 %919
    %921 = vrot.lane.b32.xlu0 %v250, 80
    %v922 = vpop.permute.xlu0 %921
    %v923 = vsel %vm261, %v920, 0
    %v925 = vsel %vm261, %v922, 0
    %927 = vmatprep.subr.mxu0 0.0
    %928 = vmatpush1.xpose.msra.mxu0 %v925
    %929 = vmatprep.subr.mxu0 0.0
    %930 = vmatpush1.xpose.msra.mxu0 0.0
    %931 = vmatprep.subr.mxu0 0.0
    %932 = vmatpush1.xpose.msra.mxu0 0.0
    %933 = vmatprep.subr.mxu0 0.0
    %934 = vmatpush1.xpose.msra.mxu0 0.0
    %935 = vmatprep.subr.mxu0 0.0
    %936 = vmatpush1.xpose.msra.mxu0 0.0
    %937 = vmatprep.subr.mxu0 0.0
    %938 = vmatpush1.xpose.msra.mxu0 0.0
    %939 = vmatprep.subr.mxu0 0.0
    %940 = vmatpush1.xpose.msra.mxu0 0.0
    %941 = vmatprep.subr.mxu0 0.0
    %942 = vmatpush1.xpose.msra.mxu0 0.0
    %943 = vmatprep.subr.mxu0 0.0
    %944 = vmatpush1.xpose.msra.mxu0 0.0
    %945 = vmatprep.subr.mxu0 0.0
    %946 = vmatpush1.xpose.msra.mxu0 0.0
    %947 = vmatprep.subr.mxu0 0.0
    %948 = vmatpush1.xpose.msra.mxu0 0.0
    %949 = vmatprep.subr.mxu0 0.0
    %950 = vmatpush1.xpose.msra.mxu0 0.0
    %951 = vmatprep.subr.mxu0 0.0
    %952 = vmatpush1.xpose.msra.mxu0 0.0
    %953 = vmatprep.subr.mxu0 0.0
    %954 = vmatpush1.xpose.msra.mxu0 0.0
    %955 = vmatprep.subr.mxu0 0.0
    %956 = vmatpush1.xpose.msra.mxu0 0.0
    %957 = vmatprep.subr.mxu0 0.0
    %958 = vmatpush1.xpose.msra.mxu0 0.0
    %959 = vmatprep.subr.mxu0 0.0
    %960 = vmatpush1.xpose.msra.mxu0 0.0
    %961 = vmatprep.subr.mxu0 0.0
    %962 = vmatpush1.xpose.msra.mxu0 0.0
    %963 = vmatprep.subr.mxu0 0.0
    %964 = vmatpush1.xpose.msra.mxu0 0.0
    %965 = vmatprep.subr.mxu0 0.0
    %966 = vmatpush1.xpose.msra.mxu0 0.0
    %967 = vmatprep.subr.mxu0 0.0
    %968 = vmatpush1.xpose.msra.mxu0 0.0
    %969 = vmatprep.subr.mxu0 0.0
    %970 = vmatpush1.xpose.msra.mxu0 0.0
    %971 = vmatprep.subr.mxu0 0.0
    %972 = vmatpush1.xpose.msra.mxu0 0.0
    %973 = vmatprep.subr.mxu0 0.0
    %974 = vmatpush1.xpose.msra.mxu0 0.0
    %975 = vmatprep.subr.mxu0 0.0
    %976 = vmatpush1.xpose.msra.mxu0 0.0
    %977 = vmatprep.subr.mxu0 0.0
    %978 = vmatpush1.xpose.msra.mxu0 0.0
    %979 = vmatprep.subr.mxu0 0.0
    %980 = vmatpush1.xpose.msra.mxu0 0.0
    %981 = vmatprep.subr.mxu0 0.0
    %982 = vmatpush1.xpose.msra.mxu0 0.0
    %983 = vmatprep.subr.mxu0 0.0
    %984 = vmatpush1.xpose.msra.mxu0 0.0
    %985 = vmatprep.subr.mxu0 0.0
    %986 = vmatpush1.xpose.msra.mxu0 0.0
    %987 = vmatprep.subr.mxu0 0.0
    %988 = vmatpush1.xpose.msra.mxu0 0.0
    %989 = vmatprep.subr.mxu0 0.0
    %990 = vmatpush1.xpose.msra.mxu0 0.0
    %991 = vmatprep.mubr.f32.mxu0 0.0
    %992 = vmatmul.mubr.f32.gmra.mrb[0].mxu0 %v923
    %v993 = vpop.f32.mrb[0].mxu0
    %v994 = vadd.f32 0.0, %v993
    %v995 = vpop.f32.mrb[0].mxu0
    %996 = vdwg.mxu0
    %v997 = vsel %vm336, %v994, -inf
    %998 = vmax.xlane.f32.xlu0 %v997
    %v999 = vpop.xlane.xlu0 %998
    %v1000 = vsub.f32 %v994, %v999
    %v1001 = vmul.f32 %v1000, 1.442695
    %v1002 = vpow.pop %v1001
    %v1003 = vsel %vm336, %v1002, 0.0
    %1004 = vadd.xlane.f32.xlu0 %v1003
    %v1005 = vpop.xlane.xlu0 %1004
    %v1006 = vrcp.pop %v1005
    %v1007 = vmul.f32 %v1002, %v1006
    %1008 = vrot.lane.b32.xlu0 %v250, 48
    %v1009 = vpop.permute.xlu0 %1008
    %v1012 = vsel %vm336, %v1007, 0
    %1014 = vmatprep.subr.mxu0 0.0
    %1015 = vmatpush1.msra.mxu0 %v1009
    %1016 = vmatprep.subr.mxu0 0.0
    %1017 = vmatpush1.msra.mxu0 0.0
    %1018 = vmatprep.subr.mxu0 0.0
    %1019 = vmatpush1.msra.mxu0 0.0
    %1020 = vmatprep.subr.mxu0 0.0
    %1021 = vmatpush1.msra.mxu0 0.0
    %1022 = vmatprep.subr.mxu0 0.0
    %1023 = vmatpush1.msra.mxu0 0.0
    %1024 = vmatprep.subr.mxu0 0.0
    %1025 = vmatpush1.msra.mxu0 0.0
    %1026 = vmatprep.subr.mxu0 0.0
    %1027 = vmatpush1.msra.mxu0 0.0
    %1028 = vmatprep.subr.mxu0 0.0
    %1029 = vmatpush1.msra.mxu0 0.0
    %1030 = vmatprep.subr.mxu0 0.0
    %1031 = vmatpush1.msra.mxu0 0.0
    %1032 = vmatprep.subr.mxu0 0.0
    %1033 = vmatpush1.msra.mxu0 0.0
    %1034 = vmatprep.subr.mxu0 0.0
    %1035 = vmatpush1.msra.mxu0 0.0
    %1036 = vmatprep.subr.mxu0 0.0
    %1037 = vmatpush1.msra.mxu0 0.0
    %1038 = vmatprep.subr.mxu0 0.0
    %1039 = vmatpush1.msra.mxu0 0.0
    %1040 = vmatprep.subr.mxu0 0.0
    %1041 = vmatpush1.msra.mxu0 0.0
    %1042 = vmatprep.subr.mxu0 0.0
    %1043 = vmatpush1.msra.mxu0 0.0
    %1044 = vmatprep.subr.mxu0 0.0
    %1045 = vmatpush1.msra.mxu0 0.0
    %1046 = vmatprep.subr.mxu0 0.0
    %1047 = vmatpush1.msra.mxu0 0.0
    %1048 = vmatprep.subr.mxu0 0.0
    %1049 = vmatpush1.msra.mxu0 0.0
    %1050 = vmatprep.subr.mxu0 0.0
    %1051 = vmatpush1.msra.mxu0 0.0
    %1052 = vmatprep.subr.mxu0 0.0
    %1053 = vmatpush1.msra.mxu0 0.0
    %1054 = vmatprep.subr.mxu0 0.0
    %1055 = vmatpush1.msra.mxu0 0.0
    %1056 = vmatprep.subr.mxu0 0.0
    %1057 = vmatpush1.msra.mxu0 0.0
    %1058 = vmatprep.subr.mxu0 0.0
    %1059 = vmatpush1.msra.mxu0 0.0
    %1060 = vmatprep.subr.mxu0 0.0
    %1061 = vmatpush1.msra.mxu0 0.0
    %1062 = vmatprep.subr.mxu0 0.0
    %1063 = vmatpush1.msra.mxu0 0.0
    %1064 = vmatprep.subr.mxu0 0.0
    %1065 = vmatpush1.msra.mxu0 0.0
    %1066 = vmatprep.subr.mxu0 0.0
    %1067 = vmatpush1.msra.mxu0 0.0
    %1068 = vmatprep.subr.mxu0 0.0
    %1069 = vmatpush1.msra.mxu0 0.0
    %1070 = vmatprep.subr.mxu0 0.0
    %1071 = vmatpush1.msra.mxu0 0.0
    %1072 = vmatprep.subr.mxu0 0.0
    %1073 = vmatpush1.msra.mxu0 0.0
    %1074 = vmatprep.subr.mxu0 0.0
    %1075 = vmatpush1.msra.mxu0 0.0
    %1076 = vmatprep.subr.mxu0 0.0
    %1077 = vmatpush1.msra.mxu0 0.0
    %1078 = vmatprep.mubr.f32.mxu0 0.0
    %1079 = vmatmul.mubr.f32.gmra.mrb[0].mxu0 %v1012
    %v1080 = vpop.f32.mrb[0].mxu0
    %v1081 = vadd.f32 0.0, %v1080
    %v1082 = vpop.f32.mrb[0].mxu0
    %1083 = vdwg.mxu0
    %1084 = vrot.lane.b32.xlu0 %v250, 108
    %v1085 = vpop.permute.xlu0 %1084
    %1086 = vrot.lane.b32.xlu0 %v250, 76
    %v1087 = vpop.permute.xlu0 %1086
    %v1088 = vsel %vm261, %v1085, 0
    %v1090 = vsel %vm261, %v1087, 0
    %1092 = vmatprep.subr.mxu0 0.0
    %1093 = vmatpush1.xpose.msra.mxu0 %v1090
    %1094 = vmatprep.subr.mxu0 0.0
    %1095 = vmatpush1.xpose.msra.mxu0 0.0
    %1096 = vmatprep.subr.mxu0 0.0
    %1097 = vmatpush1.xpose.msra.mxu0 0.0
    %1098 = vmatprep.subr.mxu0 0.0
    %1099 = vmatpush1.xpose.msra.mxu0 0.0
    %1100 = vmatprep.subr.mxu0 0.0
    %1101 = vmatpush1.xpose.msra.mxu0 0.0
    %1102 = vmatprep.subr.mxu0 0.0
    %1103 = vmatpush1.xpose.msra.mxu0 0.0
    %1104 = vmatprep.subr.mxu0 0.0
    %1105 = vmatpush1.xpose.msra.mxu0 0.0
    %1106 = vmatprep.subr.mxu0 0.0
    %1107 = vmatpush1.xpose.msra.mxu0 0.0
    %1108 = vmatprep.subr.mxu0 0.0
    %1109 = vmatpush1.xpose.msra.mxu0 0.0
    %1110 = vmatprep.subr.mxu0 0.0
    %1111 = vmatpush1.xpose.msra.mxu0 0.0
    %1112 = vmatprep.subr.mxu0 0.0
    %1113 = vmatpush1.xpose.msra.mxu0 0.0
    %1114 = vmatprep.subr.mxu0 0.0
    %1115 = vmatpush1.xpose.msra.mxu0 0.0
    %1116 = vmatprep.subr.mxu0 0.0
    %1117 = vmatpush1.xpose.msra.mxu0 0.0
    %1118 = vmatprep.subr.mxu0 0.0
    %1119 = vmatpush1.xpose.msra.mxu0 0.0
    %1120 = vmatprep.subr.mxu0 0.0
    %1121 = vmatpush1.xpose.msra.mxu0 0.0
    %1122 = vmatprep.subr.mxu0 0.0
    %1123 = vmatpush1.xpose.msra.mxu0 0.0
    %1124 = vmatprep.subr.mxu0 0.0
    %1125 = vmatpush1.xpose.msra.mxu0 0.0
    %1126 = vmatprep.subr.mxu0 0.0
    %1127 = vmatpush1.xpose.msra.mxu0 0.0
    %1128 = vmatprep.subr.mxu0 0.0
    %1129 = vmatpush1.xpose.msra.mxu0 0.0
    %1130 = vmatprep.subr.mxu0 0.0
    %1131 = vmatpush1.xpose.msra.mxu0 0.0
    %1132 = vmatprep.subr.mxu0 0.0
    %1133 = vmatpush1.xpose.msra.mxu0 0.0
    %1134 = vmatprep.subr.mxu0 0.0
    %1135 = vmatpush1.xpose.msra.mxu0 0.0
    %1136 = vmatprep.subr.mxu0 0.0
    %1137 = vmatpush1.xpose.msra.mxu0 0.0
    %1138 = vmatprep.subr.mxu0 0.0
    %1139 = vmatpush1.xpose.msra.mxu0 0.0
    %1140 = vmatprep.subr.mxu0 0.0
    %1141 = vmatpush1.xpose.msra.mxu0 0.0
    %1142 = vmatprep.subr.mxu0 0.0
    %1143 = vmatpush1.xpose.msra.mxu0 0.0
    %1144 = vmatprep.subr.mxu0 0.0
    %1145 = vmatpush1.xpose.msra.mxu0 0.0
    %1146 = vmatprep.subr.mxu0 0.0
    %1147 = vmatpush1.xpose.msra.mxu0 0.0
    %1148 = vmatprep.subr.mxu0 0.0
    %1149 = vmatpush1.xpose.msra.mxu0 0.0
    %1150 = vmatprep.subr.mxu0 0.0
    %1151 = vmatpush1.xpose.msra.mxu0 0.0
    %1152 = vmatprep.subr.mxu0 0.0
    %1153 = vmatpush1.xpose.msra.mxu0 0.0
    %1154 = vmatprep.subr.mxu0 0.0
    %1155 = vmatpush1.xpose.msra.mxu0 0.0
    %1156 = vmatprep.mubr.f32.mxu0 0.0
    %1157 = vmatmul.mubr.f32.gmra.mrb[0].mxu0 %v1088
    %v1158 = vpop.f32.mrb[0].mxu0
    %v1159 = vadd.f32 0.0, %v1158
    %v1160 = vpop.f32.mrb[0].mxu0
    %1161 = vdwg.mxu0
    %v1162 = vsel %vm336, %v1159, -inf
    %1163 = vmax.xlane.f32.xlu0 %v1162
    %v1164 = vpop.xlane.xlu0 %1163
    %v1165 = vsub.f32 %v1159, %v1164
    %v1166 = vmul.f32 %v1165, 1.442695
    %v1167 = vpow.pop %v1166
    %v1168 = vsel %vm336, %v1167, 0.0
    %1169 = vadd.xlane.f32.xlu0 %v1168
    %v1170 = vpop.xlane.xlu0 %1169
    %v1171 = vrcp.pop %v1170
    %v1172 = vmul.f32 %v1167, %v1171
    %1173 = vrot.lane.b32.xlu0 %v250, 44
    %v1174 = vpop.permute.xlu0 %1173
    %v1177 = vsel %vm336, %v1172, 0
    %1179 = vmatprep.subr.mxu0 0.0
    %1180 = vmatpush1.msra.mxu0 %v1174
    %1181 = vmatprep.subr.mxu0 0.0
    %1182 = vmatpush1.msra.mxu0 0.0
    %1183 = vmatprep.subr.mxu0 0.0
    %1184 = vmatpush1.msra.mxu0 0.0
    %1185 = vmatprep.subr.mxu0 0.0
    %1186 = vmatpush1.msra.mxu0 0.0
    %1187 = vmatprep.subr.mxu0 0.0
    %1188 = vmatpush1.msra.mxu0 0.0
    %1189 = vmatprep.subr.mxu0 0.0
    %1190 = vmatpush1.msra.mxu0 0.0
    %1191 = vmatprep.subr.mxu0 0.0
    %1192 = vmatpush1.msra.mxu0 0.0
    %1193 = vmatprep.subr.mxu0 0.0
    %1194 = vmatpush1.msra.mxu0 0.0
    %1195 = vmatprep.subr.mxu0 0.0
    %1196 = vmatpush1.msra.mxu0 0.0
    %1197 = vmatprep.subr.mxu0 0.0
    %1198 = vmatpush1.msra.mxu0 0.0
    %1199 = vmatprep.subr.mxu0 0.0
    %1200 = vmatpush1.msra.mxu0 0.0
    %1201 = vmatprep.subr.mxu0 0.0
    %1202 = vmatpush1.msra.mxu0 0.0
    %1203 = vmatprep.subr.mxu0 0.0
    %1204 = vmatpush1.msra.mxu0 0.0
    %1205 = vmatprep.subr.mxu0 0.0
    %1206 = vmatpush1.msra.mxu0 0.0
    %1207 = vmatprep.subr.mxu0 0.0
    %1208 = vmatpush1.msra.mxu0 0.0
    %1209 = vmatprep.subr.mxu0 0.0
    %1210 = vmatpush1.msra.mxu0 0.0
    %1211 = vmatprep.subr.mxu0 0.0
    %1212 = vmatpush1.msra.mxu0 0.0
    %1213 = vmatprep.subr.mxu0 0.0
    %1214 = vmatpush1.msra.mxu0 0.0
    %1215 = vmatprep.subr.mxu0 0.0
    %1216 = vmatpush1.msra.mxu0 0.0
    %1217 = vmatprep.subr.mxu0 0.0
    %1218 = vmatpush1.msra.mxu0 0.0
    %1219 = vmatprep.subr.mxu0 0.0
    %1220 = vmatpush1.msra.mxu0 0.0
    %1221 = vmatprep.subr.mxu0 0.0
    %1222 = vmatpush1.msra.mxu0 0.0
    %1223 = vmatprep.subr.mxu0 0.0
    %1224 = vmatpush1.msra.mxu0 0.0
    %1225 = vmatprep.subr.mxu0 0.0
    %1226 = vmatpush1.msra.mxu0 0.0
    %1227 = vmatprep.subr.mxu0 0.0
    %1228 = vmatpush1.msra.mxu0 0.0
    %1229 = vmatprep.subr.mxu0 0.0
    %1230 = vmatpush1.msra.mxu0 0.0
    %1231 = vmatprep.subr.mxu0 0.0
    %1232 = vmatpush1.msra.mxu0 0.0
    %1233 = vmatprep.subr.mxu0 0.0
    %1234 = vmatpush1.msra.mxu0 0.0
    %1235 = vmatprep.subr.mxu0 0.0
    %1236 = vmatpush1.msra.mxu0 0.0
    %1237 = vmatprep.subr.mxu0 0.0
    %1238 = vmatpush1.msra.mxu0 0.0
    %1239 = vmatprep.subr.mxu0 0.0
    %1240 = vmatpush1.msra.mxu0 0.0
    %1241 = vmatprep.subr.mxu0 0.0
    %1242 = vmatpush1.msra.mxu0 0.0
    %1243 = vmatprep.mubr.f32.mxu0 0.0
    %1244 = vmatmul.mubr.f32.gmra.mrb[0].mxu0 %v1177
    %v1245 = vpop.f32.mrb[0].mxu0
    %v1246 = vadd.f32 0.0, %v1245
    %v1247 = vpop.f32.mrb[0].mxu0
    %1248 = vdwg.mxu0
    %1249 = vrot.lane.b32.xlu0 %v250, 104
    %v1250 = vpop.permute.xlu0 %1249
    %1251 = vrot.lane.b32.xlu0 %v250, 72
    %v1252 = vpop.permute.xlu0 %1251
    %v1253 = vsel %vm261, %v1250, 0
    %v1255 = vsel %vm261, %v1252, 0
    %1257 = vmatprep.subr.mxu0 0.0
    %1258 = vmatpush1.xpose.msra.mxu0 %v1255
    %1259 = vmatprep.subr.mxu0 0.0
    %1260 = vmatpush1.xpose.msra.mxu0 0.0
    %1261 = vmatprep.subr.mxu0 0.0
    %1262 = vmatpush1.xpose.msra.mxu0 0.0
    %1263 = vmatprep.subr.mxu0 0.0
    %1264 = vmatpush1.xpose.msra.mxu0 0.0
    %1265 = vmatprep.subr.mxu0 0.0
    %1266 = vmatpush1.xpose.msra.mxu0 0.0
    %1267 = vmatprep.subr.mxu0 0.0
    %1268 = vmatpush1.xpose.msra.mxu0 0.0
    %1269 = vmatprep.subr.mxu0 0.0
    %1270 = vmatpush1.xpose.msra.mxu0 0.0
    %1271 = vmatprep.subr.mxu0 0.0
    %1272 = vmatpush1.xpose.msra.mxu0 0.0
    %1273 = vmatprep.subr.mxu0 0.0
    %1274 = vmatpush1.xpose.msra.mxu0 0.0
    %1275 = vmatprep.subr.mxu0 0.0
    %1276 = vmatpush1.xpose.msra.mxu0 0.0
    %1277 = vmatprep.subr.mxu0 0.0
    %1278 = vmatpush1.xpose.msra.mxu0 0.0
    %1279 = vmatprep.subr.mxu0 0.0
    %1280 = vmatpush1.xpose.msra.mxu0 0.0
    %1281 = vmatprep.subr.mxu0 0.0
    %1282 = vmatpush1.xpose.msra.mxu0 0.0
    %1283 = vmatprep.subr.mxu0 0.0
    %1284 = vmatpush1.xpose.msra.mxu0 0.0
    %1285 = vmatprep.subr.mxu0 0.0
    %1286 = vmatpush1.xpose.msra.mxu0 0.0
    %1287 = vmatprep.subr.mxu0 0.0
    %1288 = vmatpush1.xpose.msra.mxu0 0.0
    %1289 = vmatprep.subr.mxu0 0.0
    %1290 = vmatpush1.xpose.msra.mxu0 0.0
    %1291 = vmatprep.subr.mxu0 0.0
    %1292 = vmatpush1.xpose.msra.mxu0 0.0
    %1293 = vmatprep.subr.mxu0 0.0
    %1294 = vmatpush1.xpose.msra.mxu0 0.0
    %1295 = vmatprep.subr.mxu0 0.0
    %1296 = vmatpush1.xpose.msra.mxu0 0.0
    %1297 = vmatprep.subr.mxu0 0.0
    %1298 = vmatpush1.xpose.msra.mxu0 0.0
    %1299 = vmatprep.subr.mxu0 0.0
    %1300 = vmatpush1.xpose.msra.mxu0 0.0
    %1301 = vmatprep.subr.mxu0 0.0
    %1302 = vmatpush1.xpose.msra.mxu0 0.0
    %1303 = vmatprep.subr.mxu0 0.0
    %1304 = vmatpush1.xpose.msra.mxu0 0.0
    %1305 = vmatprep.subr.mxu0 0.0
    %1306 = vmatpush1.xpose.msra.mxu0 0.0
    %1307 = vmatprep.subr.mxu0 0.0
    %1308 = vmatpush1.xpose.msra.mxu0 0.0
    %1309 = vmatprep.subr.mxu0 0.0
    %1310 = vmatpush1.xpose.msra.mxu0 0.0
    %1311 = vmatprep.subr.mxu0 0.0
    %1312 = vmatpush1.xpose.msra.mxu0 0.0
    %1313 = vmatprep.subr.mxu0 0.0
    %1314 = vmatpush1.xpose.msra.mxu0 0.0
    %1315 = vmatprep.subr.mxu0 0.0
    %1316 = vmatpush1.xpose.msra.mxu0 0.0
    %1317 = vmatprep.subr.mxu0 0.0
    %1318 = vmatpush1.xpose.msra.mxu0 0.0
    %1319 = vmatprep.subr.mxu0 0.0
    %1320 = vmatpush1.xpose.msra.mxu0 0.0
    %1321 = vmatprep.mubr.f32.mxu0 0.0
    %1322 = vmatmul.mubr.f32.gmra.mrb[0].mxu0 %v1253
    %v1323 = vpop.f32.mrb[0].mxu0
    %v1324 = vadd.f32 0.0, %v1323
    %v1325 = vpop.f32.mrb[0].mxu0
    %1326 = vdwg.mxu0
    %v1327 = vsel %vm336, %v1324, -inf
    %1328 = vmax.xlane.f32.xlu0 %v1327
    %v1329 = vpop.xlane.xlu0 %1328
    %v1330 = vsub.f32 %v1324, %v1329
    %v1331 = vmul.f32 %v1330, 1.442695
    %v1332 = vpow.pop %v1331
    %v1333 = vsel %vm336, %v1332, 0.0
    %1334 = vadd.xlane.f32.xlu0 %v1333
    %v1335 = vpop.xlane.xlu0 %1334
    %v1336 = vrcp.pop %v1335
    %v1337 = vmul.f32 %v1332, %v1336
    %1338 = vrot.lane.b32.xlu0 %v250, 40
    %v1339 = vpop.permute.xlu0 %1338
    %v1342 = vsel %vm336, %v1337, 0
    %1344 = vmatprep.subr.mxu0 0.0
    %1345 = vmatpush1.msra.mxu0 %v1339
    %1346 = vmatprep.subr.mxu0 0.0
    %1347 = vmatpush1.msra.mxu0 0.0
    %1348 = vmatprep.subr.mxu0 0.0
    %1349 = vmatpush1.msra.mxu0 0.0
    %1350 = vmatprep.subr.mxu0 0.0
    %1351 = vmatpush1.msra.mxu0 0.0
    %1352 = vmatprep.subr.mxu0 0.0
    %1353 = vmatpush1.msra.mxu0 0.0
    %1354 = vmatprep.subr.mxu0 0.0
    %1355 = vmatpush1.msra.mxu0 0.0
    %1356 = vmatprep.subr.mxu0 0.0
    %1357 = vmatpush1.msra.mxu0 0.0
    %1358 = vmatprep.subr.mxu0 0.0
    %1359 = vmatpush1.msra.mxu0 0.0
    %1360 = vmatprep.subr.mxu0 0.0
    %1361 = vmatpush1.msra.mxu0 0.0
    %1362 = vmatprep.subr.mxu0 0.0
    %1363 = vmatpush1.msra.mxu0 0.0
    %1364 = vmatprep.subr.mxu0 0.0
    %1365 = vmatpush1.msra.mxu0 0.0
    %1366 = vmatprep.subr.mxu0 0.0
    %1367 = vmatpush1.msra.mxu0 0.0
    %1368 = vmatprep.subr.mxu0 0.0
    %1369 = vmatpush1.msra.mxu0 0.0
    %1370 = vmatprep.subr.mxu0 0.0
    %1371 = vmatpush1.msra.mxu0 0.0
    %1372 = vmatprep.subr.mxu0 0.0
    %1373 = vmatpush1.msra.mxu0 0.0
    %1374 = vmatprep.subr.mxu0 0.0
    %1375 = vmatpush1.msra.mxu0 0.0
    %1376 = vmatprep.subr.mxu0 0.0
    %1377 = vmatpush1.msra.mxu0 0.0
    %1378 = vmatprep.subr.mxu0 0.0
    %1379 = vmatpush1.msra.mxu0 0.0
    %1380 = vmatprep.subr.mxu0 0.0
    %1381 = vmatpush1.msra.mxu0 0.0
    %1382 = vmatprep.subr.mxu0 0.0
    %1383 = vmatpush1.msra.mxu0 0.0
    %1384 = vmatprep.subr.mxu0 0.0
    %1385 = vmatpush1.msra.mxu0 0.0
    %1386 = vmatprep.subr.mxu0 0.0
    %1387 = vmatpush1.msra.mxu0 0.0
    %1388 = vmatprep.subr.mxu0 0.0
    %1389 = vmatpush1.msra.mxu0 0.0
    %1390 = vmatprep.subr.mxu0 0.0
    %1391 = vmatpush1.msra.mxu0 0.0
    %1392 = vmatprep.subr.mxu0 0.0
    %1393 = vmatpush1.msra.mxu0 0.0
    %1394 = vmatprep.subr.mxu0 0.0
    %1395 = vmatpush1.msra.mxu0 0.0
    %1396 = vmatprep.subr.mxu0 0.0
    %1397 = vmatpush1.msra.mxu0 0.0
    %1398 = vmatprep.subr.mxu0 0.0
    %1399 = vmatpush1.msra.mxu0 0.0
    %1400 = vmatprep.subr.mxu0 0.0
    %1401 = vmatpush1.msra.mxu0 0.0
    %1402 = vmatprep.subr.mxu0 0.0
    %1403 = vmatpush1.msra.mxu0 0.0
    %1404 = vmatprep.subr.mxu0 0.0
    %1405 = vmatpush1.msra.mxu0 0.0
    %1406 = vmatprep.subr.mxu0 0.0
    %1407 = vmatpush1.msra.mxu0 0.0
    %1408 = vmatprep.mubr.f32.mxu0 0.0
    %1409 = vmatmul.mubr.f32.gmra.mrb[0].mxu0 %v1342
    %v1410 = vpop.f32.mrb[0].mxu0
    %v1411 = vadd.f32 0.0, %v1410
    %v1412 = vpop.f32.mrb[0].mxu0
    %1413 = vdwg.mxu0
    %1414 = vrot.lane.b32.xlu0 %v250, 100
    %v1415 = vpop.permute.xlu0 %1414
    %1416 = vrot.lane.b32.xlu0 %v250, 68
    %v1417 = vpop.permute.xlu0 %1416
    %v1418 = vsel %vm261, %v1415, 0
    %v1420 = vsel %vm261, %v1417, 0
    %1422 = vmatprep.subr.mxu0 0.0
    %1423 = vmatpush1.xpose.msra.mxu0 %v1420
    %1424 = vmatprep.subr.mxu0 0.0
    %1425 = vmatpush1.xpose.msra.mxu0 0.0
    %1426 = vmatprep.subr.mxu0 0.0
    %1427 = vmatpush1.xpose.msra.mxu0 0.0
    %1428 = vmatprep.subr.mxu0 0.0
    %1429 = vmatpush1.xpose.msra.mxu0 0.0
    %1430 = vmatprep.subr.mxu0 0.0
    %1431 = vmatpush1.xpose.msra.mxu0 0.0
    %1432 = vmatprep.subr.mxu0 0.0
    %1433 = vmatpush1.xpose.msra.mxu0 0.0
    %1434 = vmatprep.subr.mxu0 0.0
    %1435 = vmatpush1.xpose.msra.mxu0 0.0
    %1436 = vmatprep.subr.mxu0 0.0
    %1437 = vmatpush1.xpose.msra.mxu0 0.0
    %1438 = vmatprep.subr.mxu0 0.0
    %1439 = vmatpush1.xpose.msra.mxu0 0.0
    %1440 = vmatprep.subr.mxu0 0.0
    %1441 = vmatpush1.xpose.msra.mxu0 0.0
    %1442 = vmatprep.subr.mxu0 0.0
    %1443 = vmatpush1.xpose.msra.mxu0 0.0
    %1444 = vmatprep.subr.mxu0 0.0
    %1445 = vmatpush1.xpose.msra.mxu0 0.0
    %1446 = vmatprep.subr.mxu0 0.0
    %1447 = vmatpush1.xpose.msra.mxu0 0.0
    %1448 = vmatprep.subr.mxu0 0.0
    %1449 = vmatpush1.xpose.msra.mxu0 0.0
    %1450 = vmatprep.subr.mxu0 0.0
    %1451 = vmatpush1.xpose.msra.mxu0 0.0
    %1452 = vmatprep.subr.mxu0 0.0
    %1453 = vmatpush1.xpose.msra.mxu0 0.0
    %1454 = vmatprep.subr.mxu0 0.0
    %1455 = vmatpush1.xpose.msra.mxu0 0.0
    %1456 = vmatprep.subr.mxu0 0.0
    %1457 = vmatpush1.xpose.msra.mxu0 0.0
    %1458 = vmatprep.subr.mxu0 0.0
    %1459 = vmatpush1.xpose.msra.mxu0 0.0
    %1460 = vmatprep.subr.mxu0 0.0
    %1461 = vmatpush1.xpose.msra.mxu0 0.0
    %1462 = vmatprep.subr.mxu0 0.0
    %1463 = vmatpush1.xpose.msra.mxu0 0.0
    %1464 = vmatprep.subr.mxu0 0.0
    %1465 = vmatpush1.xpose.msra.mxu0 0.0
    %1466 = vmatprep.subr.mxu0 0.0
    %1467 = vmatpush1.xpose.msra.mxu0 0.0
    %1468 = vmatprep.subr.mxu0 0.0
    %1469 = vmatpush1.xpose.msra.mxu0 0.0
    %1470 = vmatprep.subr.mxu0 0.0
    %1471 = vmatpush1.xpose.msra.mxu0 0.0
    %1472 = vmatprep.subr.mxu0 0.0
    %1473 = vmatpush1.xpose.msra.mxu0 0.0
    %1474 = vmatprep.subr.mxu0 0.0
    %1475 = vmatpush1.xpose.msra.mxu0 0.0
    %1476 = vmatprep.subr.mxu0 0.0
    %1477 = vmatpush1.xpose.msra.mxu0 0.0
    %1478 = vmatprep.subr.mxu0 0.0
    %1479 = vmatpush1.xpose.msra.mxu0 0.0
    %1480 = vmatprep.subr.mxu0 0.0
    %1481 = vmatpush1.xpose.msra.mxu0 0.0
    %1482 = vmatprep.subr.mxu0 0.0
    %1483 = vmatpush1.xpose.msra.mxu0 0.0
    %1484 = vmatprep.subr.mxu0 0.0
    %1485 = vmatpush1.xpose.msra.mxu0 0.0
    %1486 = vmatprep.mubr.f32.mxu0 0.0
    %1487 = vmatmul.mubr.f32.gmra.mrb[0].mxu0 %v1418
    %v1488 = vpop.f32.mrb[0].mxu0
    %v1489 = vadd.f32 0.0, %v1488
    %v1490 = vpop.f32.mrb[0].mxu0
    %1491 = vdwg.mxu0
    %v1492 = vsel %vm336, %v1489, -inf
    %1493 = vmax.xlane.f32.xlu0 %v1492
    %v1494 = vpop.xlane.xlu0 %1493
    %v1495 = vsub.f32 %v1489, %v1494
    %v1496 = vmul.f32 %v1495, 1.442695
    %v1497 = vpow.pop %v1496
    %v1498 = vsel %vm336, %v1497, 0.0
    %1499 = vadd.xlane.f32.xlu0 %v1498
    %v1500 = vpop.xlane.xlu0 %1499
    %v1501 = vrcp.pop %v1500
    %v1502 = vmul.f32 %v1497, %v1501
    %1503 = vrot.lane.b32.xlu0 %v250, 36
    %v1504 = vpop.permute.xlu0 %1503
    %v1507 = vsel %vm336, %v1502, 0
    %1509 = vmatprep.subr.mxu0 0.0
    %1510 = vmatpush1.msra.mxu0 %v1504
    %1511 = vmatprep.subr.mxu0 0.0
    %1512 = vmatpush1.msra.mxu0 0.0
    %1513 = vmatprep.subr.mxu0 0.0
    %1514 = vmatpush1.msra.mxu0 0.0
    %1515 = vmatprep.subr.mxu0 0.0
    %1516 = vmatpush1.msra.mxu0 0.0
    %1517 = vmatprep.subr.mxu0 0.0
    %1518 = vmatpush1.msra.mxu0 0.0
    %1519 = vmatprep.subr.mxu0 0.0
    %1520 = vmatpush1.msra.mxu0 0.0
    %1521 = vmatprep.subr.mxu0 0.0
    %1522 = vmatpush1.msra.mxu0 0.0
    %1523 = vmatprep.subr.mxu0 0.0
    %1524 = vmatpush1.msra.mxu0 0.0
    %1525 = vmatprep.subr.mxu0 0.0
    %1526 = vmatpush1.msra.mxu0 0.0
    %1527 = vmatprep.subr.mxu0 0.0
    %1528 = vmatpush1.msra.mxu0 0.0
    %1529 = vmatprep.subr.mxu0 0.0
    %1530 = vmatpush1.msra.mxu0 0.0
    %1531 = vmatprep.subr.mxu0 0.0
    %1532 = vmatpush1.msra.mxu0 0.0
    %1533 = vmatprep.subr.mxu0 0.0
    %1534 = vmatpush1.msra.mxu0 0.0
    %1535 = vmatprep.subr.mxu0 0.0
    %1536 = vmatpush1.msra.mxu0 0.0
    %1537 = vmatprep.subr.mxu0 0.0
    %1538 = vmatpush1.msra.mxu0 0.0
    %1539 = vmatprep.subr.mxu0 0.0
    %1540 = vmatpush1.msra.mxu0 0.0
    %1541 = vmatprep.subr.mxu0 0.0
    %1542 = vmatpush1.msra.mxu0 0.0
    %1543 = vmatprep.subr.mxu0 0.0
    %1544 = vmatpush1.msra.mxu0 0.0
    %1545 = vmatprep.subr.mxu0 0.0
    %1546 = vmatpush1.msra.mxu0 0.0
    %1547 = vmatprep.subr.mxu0 0.0
    %1548 = vmatpush1.msra.mxu0 0.0
    %1549 = vmatprep.subr.mxu0 0.0
    %1550 = vmatpush1.msra.mxu0 0.0
    %1551 = vmatprep.subr.mxu0 0.0
    %1552 = vmatpush1.msra.mxu0 0.0
    %1553 = vmatprep.subr.mxu0 0.0
    %1554 = vmatpush1.msra.mxu0 0.0
    %1555 = vmatprep.subr.mxu0 0.0
    %1556 = vmatpush1.msra.mxu0 0.0
    %1557 = vmatprep.subr.mxu0 0.0
    %1558 = vmatpush1.msra.mxu0 0.0
    %1559 = vmatprep.subr.mxu0 0.0
    %1560 = vmatpush1.msra.mxu0 0.0
    %1561 = vmatprep.subr.mxu0 0.0
    %1562 = vmatpush1.msra.mxu0 0.0
    %1563 = vmatprep.subr.mxu0 0.0
    %1564 = vmatpush1.msra.mxu0 0.0
    %1565 = vmatprep.subr.mxu0 0.0
    %1566 = vmatpush1.msra.mxu0 0.0
    %1567 = vmatprep.subr.mxu0 0.0
    %1568 = vmatpush1.msra.mxu0 0.0
    %1569 = vmatprep.subr.mxu0 0.0
    %1570 = vmatpush1.msra.mxu0 0.0
    %1571 = vmatprep.subr.mxu0 0.0
    %1572 = vmatpush1.msra.mxu0 0.0
    %1573 = vmatprep.mubr.f32.mxu0 0.0
    %1574 = vmatmul.mubr.f32.gmra.mrb[0].mxu0 %v1507
    %v1575 = vpop.f32.mrb[0].mxu0
    %v1576 = vadd.f32 0.0, %v1575
    %v1577 = vpop.f32.mrb[0].mxu0
    %1578 = vdwg.mxu0
    %1580 = vrot.lane.b32.xlu0 %v586, 4
    %v1581 = vpop.permute.xlu0 %1580
    %1584 = vrot.lane.b32.xlu0 %v751, 8
    %v1585 = vpop.permute.xlu0 %1584
    %1588 = vrot.lane.b32.xlu0 %v916, 12
    %v1589 = vpop.permute.xlu0 %1588
    %1592 = vrot.lane.b32.xlu0 %v1081, 16
    %v1593 = vpop.permute.xlu0 %1592
    %1596 = vrot.lane.b32.xlu0 %v1246, 20
    %v1597 = vpop.permute.xlu0 %1596
    %1600 = vrot.lane.b32.xlu0 %v1411, 24
    %v1601 = vpop.permute.xlu0 %1600
    %1604 = vrot.lane.b32.xlu0 %v1576, 28
    %v1605 = vpop.permute.xlu0 %1604
    %v1607 = vsel %vm261, %v421, %v1581
    %v1608 = vsel %vm336, %v1607, %v1585
    %vm1609 = vcmask 97280
    %v1610 = vsel %vm1609, %v1608, %v1589
    %vm1611 = vcmask 130048
    %v1612 = vsel %vm1611, %v1610, %v1593
    %vm1613 = vcmask 162816
    %v1614 = vsel %vm1613, %v1612, %v1597
    %vm1615 = vcmask 195584
    %v1616 = vsel %vm1615, %v1614, %v1601
    %vm1617 = vcmask 228352
    %v1618 = vsel %vm1617, %v1616, %v1605
    %1620 = vrot.lane.b32.xlu0 %v255, 96
    %v1621 = vpop.permute.xlu0 %1620
    %v1622 = vsel %vm261, %v255, 0
    %v1624 = vsel %vm261, %v1621, 0
    %1626 = vmatprep.subr.mxu0 0.0
    %1627 = vmatpush1.xpose.msra.mxu0 %v1624
    %1628 = vmatprep.subr.mxu0 0.0
    %1629 = vmatpush1.xpose.msra.mxu0 0.0
    %1630 = vmatprep.subr.mxu0 0.0
    %1631 = vmatpush1.xpose.msra.mxu0 0.0
    %1632 = vmatprep.subr.mxu0 0.0
    %1633 = vmatpush1.xpose.msra.mxu0 0.0
    %1634 = vmatprep.subr.mxu0 0.0
    %1635 = vmatpush1.xpose.msra.mxu0 0.0
    %1636 = vmatprep.subr.mxu0 0.0
    %1637 = vmatpush1.xpose.msra.mxu0 0.0
    %1638 = vmatprep.subr.mxu0 0.0
    %1639 = vmatpush1.xpose.msra.mxu0 0.0
    %1640 = vmatprep.subr.mxu0 0.0
    %1641 = vmatpush1.xpose.msra.mxu0 0.0
    %1642 = vmatprep.subr.mxu0 0.0
    %1643 = vmatpush1.xpose.msra.mxu0 0.0
    %1644 = vmatprep.subr.mxu0 0.0
    %1645 = vmatpush1.xpose.msra.mxu0 0.0
    %1646 = vmatprep.subr.mxu0 0.0
    %1647 = vmatpush1.xpose.msra.mxu0 0.0
    %1648 = vmatprep.subr.mxu0 0.0
    %1649 = vmatpush1.xpose.msra.mxu0 0.0
    %1650 = vmatprep.subr.mxu0 0.0
    %1651 = vmatpush1.xpose.msra.mxu0 0.0
    %1652 = vmatprep.subr.mxu0 0.0
    %1653 = vmatpush1.xpose.msra.mxu0 0.0
    %1654 = vmatprep.subr.mxu0 0.0
    %1655 = vmatpush1.xpose.msra.mxu0 0.0
    %1656 = vmatprep.subr.mxu0 0.0
    %1657 = vmatpush1.xpose.msra.mxu0 0.0
    %1658 = vmatprep.subr.mxu0 0.0
    %1659 = vmatpush1.xpose.msra.mxu0 0.0
    %1660 = vmatprep.subr.mxu0 0.0
    %1661 = vmatpush1.xpose.msra.mxu0 0.0
    %1662 = vmatprep.subr.mxu0 0.0
    %1663 = vmatpush1.xpose.msra.mxu0 0.0
    %1664 = vmatprep.subr.mxu0 0.0
    %1665 = vmatpush1.xpose.msra.mxu0 0.0
    %1666 = vmatprep.subr.mxu0 0.0
    %1667 = vmatpush1.xpose.msra.mxu0 0.0
    %1668 = vmatprep.subr.mxu0 0.0
    %1669 = vmatpush1.xpose.msra.mxu0 0.0
    %1670 = vmatprep.subr.mxu0 0.0
    %1671 = vmatpush1.xpose.msra.mxu0 0.0
    %1672 = vmatprep.subr.mxu0 0.0
    %1673 = vmatpush1.xpose.msra.mxu0 0.0
    %1674 = vmatprep.subr.mxu0 0.0
    %1675 = vmatpush1.xpose.msra.mxu0 0.0
    %1676 = vmatprep.subr.mxu0 0.0
    %1677 = vmatpush1.xpose.msra.mxu0 0.0
    %1678 = vmatprep.subr.mxu0 0.0
    %1679 = vmatpush1.xpose.msra.mxu0 0.0
    %1680 = vmatprep.subr.mxu0 0.0
    %1681 = vmatpush1.xpose.msra.mxu0 0.0
    %1682 = vmatprep.subr.mxu0 0.0
    %1683 = vmatpush1.xpose.msra.mxu0 0.0
    %1684 = vmatprep.subr.mxu0 0.0
    %1685 = vmatpush1.xpose.msra.mxu0 0.0
    %1686 = vmatprep.subr.mxu0 0.0
    %1687 = vmatpush1.xpose.msra.mxu0 0.0
    %1688 = vmatprep.subr.mxu0 0.0
    %1689 = vmatpush1.xpose.msra.mxu0 0.0
    %1690 = vmatprep.mubr.f32.mxu0 0.0
    %1691 = vmatmul.mubr.f32.gmra.mrb[0].mxu0 %v1622
    %v1692 = vpop.f32.mrb[0].mxu0
    %v1693 = vadd.f32 0.0, %v1692
    %v1694 = vpop.f32.mrb[0].mxu0
    %1695 = vdwg.mxu0
    %v1696 = vsel %vm336, %v1693, -inf
    %1697 = vmax.xlane.f32.xlu0 %v1696
    %v1698 = vpop.xlane.xlu0 %1697
    %v1699 = vsub.f32 %v1693, %v1698
    %v1700 = vmul.f32 %v1699, 1.442695
    %v1701 = vpow.pop %v1700
    %v1702 = vsel %vm336, %v1701, 0.0
    %1703 = vadd.xlane.f32.xlu0 %v1702
    %v1704 = vpop.xlane.xlu0 %1703
    %v1705 = vrcp.pop %v1704
    %v1706 = vmul.f32 %v1701, %v1705
    %1707 = vrot.lane.b32.xlu0 %v255, 64
    %v1708 = vpop.permute.xlu0 %1707
    %v1711 = vsel %vm336, %v1706, 0
    %1713 = vmatprep.subr.mxu0 0.0
    %1714 = vmatpush1.msra.mxu0 %v1708
    %1715 = vmatprep.subr.mxu0 0.0
    %1716 = vmatpush1.msra.mxu0 0.0
    %1717 = vmatprep.subr.mxu0 0.0
    %1718 = vmatpush1.msra.mxu0 0.0
    %1719 = vmatprep.subr.mxu0 0.0
    %1720 = vmatpush1.msra.mxu0 0.0
    %1721 = vmatprep.subr.mxu0 0.0
    %1722 = vmatpush1.msra.mxu0 0.0
    %1723 = vmatprep.subr.mxu0 0.0
    %1724 = vmatpush1.msra.mxu0 0.0
    %1725 = vmatprep.subr.mxu0 0.0
    %1726 = vmatpush1.msra.mxu0 0.0
    %1727 = vmatprep.subr.mxu0 0.0
    %1728 = vmatpush1.msra.mxu0 0.0
    %1729 = vmatprep.subr.mxu0 0.0
    %1730 = vmatpush1.msra.mxu0 0.0
    %1731 = vmatprep.subr.mxu0 0.0
    %1732 = vmatpush1.msra.mxu0 0.0
    %1733 = vmatprep.subr.mxu0 0.0
    %1734 = vmatpush1.msra.mxu0 0.0
    %1735 = vmatprep.subr.mxu0 0.0
    %1736 = vmatpush1.msra.mxu0 0.0
    %1737 = vmatprep.subr.mxu0 0.0
    %1738 = vmatpush1.msra.mxu0 0.0
    %1739 = vmatprep.subr.mxu0 0.0
    %1740 = vmatpush1.msra.mxu0 0.0
    %1741 = vmatprep.subr.mxu0 0.0
    %1742 = vmatpush1.msra.mxu0 0.0
    %1743 = vmatprep.subr.mxu0 0.0
    %1744 = vmatpush1.msra.mxu0 0.0
    %1745 = vmatprep.subr.mxu0 0.0
    %1746 = vmatpush1.msra.mxu0 0.0
    %1747 = vmatprep.subr.mxu0 0.0
    %1748 = vmatpush1.msra.mxu0 0.0
    %1749 = vmatprep.subr.mxu0 0.0
    %1750 = vmatpush1.msra.mxu0 0.0
    %1751 = vmatprep.subr.mxu0 0.0
    %1752 = vmatpush1.msra.mxu0 0.0
    %1753 = vmatprep.subr.mxu0 0.0
    %1754 = vmatpush1.msra.mxu0 0.0
    %1755 = vmatprep.subr.mxu0 0.0
    %1756 = vmatpush1.msra.mxu0 0.0
    %1757 = vmatprep.subr.mxu0 0.0
    %1758 = vmatpush1.msra.mxu0 0.0
    %1759 = vmatprep.subr.mxu0 0.0
    %1760 = vmatpush1.msra.mxu0 0.0
    %1761 = vmatprep.subr.mxu0 0.0
    %1762 = vmatpush1.msra.mxu0 0.0
    %1763 = vmatprep.subr.mxu0 0.0
    %1764 = vmatpush1.msra.mxu0 0.0
    %1765 = vmatprep.subr.mxu0 0.0
    %1766 = vmatpush1.msra.mxu0 0.0
    %1767 = vmatprep.subr.mxu0 0.0
    %1768 = vmatpush1.msra.mxu0 0.0
    %1769 = vmatprep.subr.mxu0 0.0
    %1770 = vmatpush1.msra.mxu0 0.0
    %1771 = vmatprep.subr.mxu0 0.0
    %1772 = vmatpush1.msra.mxu0 0.0
    %1773 = vmatprep.subr.mxu0 0.0
    %1774 = vmatpush1.msra.mxu0 0.0
    %1775 = vmatprep.subr.mxu0 0.0
    %1776 = vmatpush1.msra.mxu0 0.0
    %1777 = vmatprep.mubr.f32.mxu0 0.0
    %1778 = vmatmul.mubr.f32.gmra.mrb[0].mxu0 %v1711
    %v1779 = vpop.f32.mrb[0].mxu0
    %v1780 = vadd.f32 0.0, %v1779
    %v1781 = vpop.f32.mrb[0].mxu0
    %1782 = vdwg.mxu0
    %1783 = vrot.lane.b32.xlu0 %v255, 124
    %v1784 = vpop.permute.xlu0 %1783
    %1785 = vrot.lane.b32.xlu0 %v255, 92
    %v1786 = vpop.permute.xlu0 %1785
    %v1787 = vsel %vm261, %v1784, 0
    %v1789 = vsel %vm261, %v1786, 0
    %1791 = vmatprep.subr.mxu0 0.0
    %1792 = vmatpush1.xpose.msra.mxu0 %v1789
    %1793 = vmatprep.subr.mxu0 0.0
    %1794 = vmatpush1.xpose.msra.mxu0 0.0
    %1795 = vmatprep.subr.mxu0 0.0
    %1796 = vmatpush1.xpose.msra.mxu0 0.0
    %1797 = vmatprep.subr.mxu0 0.0
    %1798 = vmatpush1.xpose.msra.mxu0 0.0
    %1799 = vmatprep.subr.mxu0 0.0
    %1800 = vmatpush1.xpose.msra.mxu0 0.0
    %1801 = vmatprep.subr.mxu0 0.0
    %1802 = vmatpush1.xpose.msra.mxu0 0.0
    %1803 = vmatprep.subr.mxu0 0.0
    %1804 = vmatpush1.xpose.msra.mxu0 0.0
    %1805 = vmatprep.subr.mxu0 0.0
    %1806 = vmatpush1.xpose.msra.mxu0 0.0
    %1807 = vmatprep.subr.mxu0 0.0
    %1808 = vmatpush1.xpose.msra.mxu0 0.0
    %1809 = vmatprep.subr.mxu0 0.0
    %1810 = vmatpush1.xpose.msra.mxu0 0.0
    %1811 = vmatprep.subr.mxu0 0.0
    %1812 = vmatpush1.xpose.msra.mxu0 0.0
    %1813 = vmatprep.subr.mxu0 0.0
    %1814 = vmatpush1.xpose.msra.mxu0 0.0
    %1815 = vmatprep.subr.mxu0 0.0
    %1816 = vmatpush1.xpose.msra.mxu0 0.0
    %1817 = vmatprep.subr.mxu0 0.0
    %1818 = vmatpush1.xpose.msra.mxu0 0.0
    %1819 = vmatprep.subr.mxu0 0.0
    %1820 = vmatpush1.xpose.msra.mxu0 0.0
    %1821 = vmatprep.subr.mxu0 0.0
    %1822 = vmatpush1.xpose.msra.mxu0 0.0
    %1823 = vmatprep.subr.mxu0 0.0
    %1824 = vmatpush1.xpose.msra.mxu0 0.0
    %1825 = vmatprep.subr.mxu0 0.0
    %1826 = vmatpush1.xpose.msra.mxu0 0.0
    %1827 = vmatprep.subr.mxu0 0.0
    %1828 = vmatpush1.xpose.msra.mxu0 0.0
    %1829 = vmatprep.subr.mxu0 0.0
    %1830 = vmatpush1.xpose.msra.mxu0 0.0
    %1831 = vmatprep.subr.mxu0 0.0
    %1832 = vmatpush1.xpose.msra.mxu0 0.0
    %1833 = vmatprep.subr.mxu0 0.0
    %1834 = vmatpush1.xpose.msra.mxu0 0.0
    %1835 = vmatprep.subr.mxu0 0.0
    %1836 = vmatpush1.xpose.msra.mxu0 0.0
    %1837 = vmatprep.subr.mxu0 0.0
    %1838 = vmatpush1.xpose.msra.mxu0 0.0
    %1839 = vmatprep.subr.mxu0 0.0
    %1840 = vmatpush1.xpose.msra.mxu0 0.0
    %1841 = vmatprep.subr.mxu0 0.0
    %1842 = vmatpush1.xpose.msra.mxu0 0.0
    %1843 = vmatprep.subr.mxu0 0.0
    %1844 = vmatpush1.xpose.msra.mxu0 0.0
    %1845 = vmatprep.subr.mxu0 0.0
    %1846 = vmatpush1.xpose.msra.mxu0 0.0
    %1847 = vmatprep.subr.mxu0 0.0
    %1848 = vmatpush1.xpose.msra.mxu0 0.0
    %1849 = vmatprep.subr.mxu0 0.0
    %1850 = vmatpush1.xpose.msra.mxu0 0.0
    %1851 = vmatprep.subr.mxu0 0.0
    %1852 = vmatpush1.xpose.msra.mxu0 0.0
    %1853 = vmatprep.subr.mxu0 0.0
    %1854 = vmatpush1.xpose.msra.mxu0 0.0
    %1855 = vmatprep.mubr.f32.mxu0 0.0
    %1856 = vmatmul.mubr.f32.gmra.mrb[0].mxu0 %v1787
    %v1857 = vpop.f32.mrb[0].mxu0
    %v1858 = vadd.f32 0.0, %v1857
    %v1859 = vpop.f32.mrb[0].mxu0
    %1860 = vdwg.mxu0
    %v1861 = vsel %vm336, %v1858, -inf
    %1862 = vmax.xlane.f32.xlu0 %v1861
    %v1863 = vpop.xlane.xlu0 %1862
    %v1864 = vsub.f32 %v1858, %v1863
    %v1865 = vmul.f32 %v1864, 1.442695
    %v1866 = vpow.pop %v1865
    %v1867 = vsel %vm336, %v1866, 0.0
    %1868 = vadd.xlane.f32.xlu0 %v1867
    %v1869 = vpop.xlane.xlu0 %1868
    %v1870 = vrcp.pop %v1869
    %v1871 = vmul.f32 %v1866, %v1870
    %1872 = vrot.lane.b32.xlu0 %v255, 60
    %v1873 = vpop.permute.xlu0 %1872
    %v1876 = vsel %vm336, %v1871, 0
    %1878 = vmatprep.subr.mxu0 0.0
    %1879 = vmatpush1.msra.mxu0 %v1873
    %1880 = vmatprep.subr.mxu0 0.0
    %1881 = vmatpush1.msra.mxu0 0.0
    %1882 = vmatprep.subr.mxu0 0.0
    %1883 = vmatpush1.msra.mxu0 0.0
    %1884 = vmatprep.subr.mxu0 0.0
    %1885 = vmatpush1.msra.mxu0 0.0
    %1886 = vmatprep.subr.mxu0 0.0
    %1887 = vmatpush1.msra.mxu0 0.0
    %1888 = vmatprep.subr.mxu0 0.0
    %1889 = vmatpush1.msra.mxu0 0.0
    %1890 = vmatprep.subr.mxu0 0.0
    %1891 = vmatpush1.msra.mxu0 0.0
    %1892 = vmatprep.subr.mxu0 0.0
    %1893 = vmatpush1.msra.mxu0 0.0
    %1894 = vmatprep.subr.mxu0 0.0
    %1895 = vmatpush1.msra.mxu0 0.0
    %1896 = vmatprep.subr.mxu0 0.0
    %1897 = vmatpush1.msra.mxu0 0.0
    %1898 = vmatprep.subr.mxu0 0.0
    %1899 = vmatpush1.msra.mxu0 0.0
    %1900 = vmatprep.subr.mxu0 0.0
    %1901 = vmatpush1.msra.mxu0 0.0
    %1902 = vmatprep.subr.mxu0 0.0
    %1903 = vmatpush1.msra.mxu0 0.0
    %1904 = vmatprep.subr.mxu0 0.0
    %1905 = vmatpush1.msra.mxu0 0.0
    %1906 = vmatprep.subr.mxu0 0.0
    %1907 = vmatpush1.msra.mxu0 0.0
    %1908 = vmatprep.subr.mxu0 0.0
    %1909 = vmatpush1.msra.mxu0 0.0
    %1910 = vmatprep.subr.mxu0 0.0
    %1911 = vmatpush1.msra.mxu0 0.0
    %1912 = vmatprep.subr.mxu0 0.0
    %1913 = vmatpush1.msra.mxu0 0.0
    %1914 = vmatprep.subr.mxu0 0.0
    %1915 = vmatpush1.msra.mxu0 0.0
    %1916 = vmatprep.subr.mxu0 0.0
    %1917 = vmatpush1.msra.mxu0 0.0
    %1918 = vmatprep.subr.mxu0 0.0
    %1919 = vmatpush1.msra.mxu0 0.0
    %1920 = vmatprep.subr.mxu0 0.0
    %1921 = vmatpush1.msra.mxu0 0.0
    %1922 = vmatprep.subr.mxu0 0.0
    %1923 = vmatpush1.msra.mxu0 0.0
    %1924 = vmatprep.subr.mxu0 0.0
    %1925 = vmatpush1.msra.mxu0 0.0
    %1926 = vmatprep.subr.mxu0 0.0
    %1927 = vmatpush1.msra.mxu0 0.0
    %1928 = vmatprep.subr.mxu0 0.0
    %1929 = vmatpush1.msra.mxu0 0.0
    %1930 = vmatprep.subr.mxu0 0.0
    %1931 = vmatpush1.msra.mxu0 0.0
    %1932 = vmatprep.subr.mxu0 0.0
    %1933 = vmatpush1.msra.mxu0 0.0
    %1934 = vmatprep.subr.mxu0 0.0
    %1935 = vmatpush1.msra.mxu0 0.0
    %1936 = vmatprep.subr.mxu0 0.0
    %1937 = vmatpush1.msra.mxu0 0.0
    %1938 = vmatprep.subr.mxu0 0.0
    %1939 = vmatpush1.msra.mxu0 0.0
    %1940 = vmatprep.subr.mxu0 0.0
    %1941 = vmatpush1.msra.mxu0 0.0
    %1942 = vmatprep.mubr.f32.mxu0 0.0
    %1943 = vmatmul.mubr.f32.gmra.mrb[0].mxu0 %v1876
    %v1944 = vpop.f32.mrb[0].mxu0
    %v1945 = vadd.f32 0.0, %v1944
    %v1946 = vpop.f32.mrb[0].mxu0
    %1947 = vdwg.mxu0
    %1948 = vrot.lane.b32.xlu0 %v255, 120
    %v1949 = vpop.permute.xlu0 %1948
    %1950 = vrot.lane.b32.xlu0 %v255, 88
    %v1951 = vpop.permute.xlu0 %1950
    %v1952 = vsel %vm261, %v1949, 0
    %v1954 = vsel %vm261, %v1951, 0
    %1956 = vmatprep.subr.mxu0 0.0
    %1957 = vmatpush1.xpose.msra.mxu0 %v1954
    %1958 = vmatprep.subr.mxu0 0.0
    %1959 = vmatpush1.xpose.msra.mxu0 0.0
    %1960 = vmatprep.subr.mxu0 0.0
    %1961 = vmatpush1.xpose.msra.mxu0 0.0
    %1962 = vmatprep.subr.mxu0 0.0
    %1963 = vmatpush1.xpose.msra.mxu0 0.0
    %1964 = vmatprep.subr.mxu0 0.0
    %1965 = vmatpush1.xpose.msra.mxu0 0.0
    %1966 = vmatprep.subr.mxu0 0.0
    %1967 = vmatpush1.xpose.msra.mxu0 0.0
    %1968 = vmatprep.subr.mxu0 0.0
    %1969 = vmatpush1.xpose.msra.mxu0 0.0
    %1970 = vmatprep.subr.mxu0 0.0
    %1971 = vmatpush1.xpose.msra.mxu0 0.0
    %1972 = vmatprep.subr.mxu0 0.0
    %1973 = vmatpush1.xpose.msra.mxu0 0.0
    %1974 = vmatprep.subr.mxu0 0.0
    %1975 = vmatpush1.xpose.msra.mxu0 0.0
    %1976 = vmatprep.subr.mxu0 0.0
    %1977 = vmatpush1.xpose.msra.mxu0 0.0
    %1978 = vmatprep.subr.mxu0 0.0
    %1979 = vmatpush1.xpose.msra.mxu0 0.0
    %1980 = vmatprep.subr.mxu0 0.0
    %1981 = vmatpush1.xpose.msra.mxu0 0.0
    %1982 = vmatprep.subr.mxu0 0.0
    %1983 = vmatpush1.xpose.msra.mxu0 0.0
    %1984 = vmatprep.subr.mxu0 0.0
    %1985 = vmatpush1.xpose.msra.mxu0 0.0
    %1986 = vmatprep.subr.mxu0 0.0
    %1987 = vmatpush1.xpose.msra.mxu0 0.0
    %1988 = vmatprep.subr.mxu0 0.0
    %1989 = vmatpush1.xpose.msra.mxu0 0.0
    %1990 = vmatprep.subr.mxu0 0.0
    %1991 = vmatpush1.xpose.msra.mxu0 0.0
    %1992 = vmatprep.subr.mxu0 0.0
    %1993 = vmatpush1.xpose.msra.mxu0 0.0
    %1994 = vmatprep.subr.mxu0 0.0
    %1995 = vmatpush1.xpose.msra.mxu0 0.0
    %1996 = vmatprep.subr.mxu0 0.0
    %1997 = vmatpush1.xpose.msra.mxu0 0.0
    %1998 = vmatprep.subr.mxu0 0.0
    %1999 = vmatpush1.xpose.msra.mxu0 0.0
    %2000 = vmatprep.subr.mxu0 0.0
    %2001 = vmatpush1.xpose.msra.mxu0 0.0
    %2002 = vmatprep.subr.mxu0 0.0
    %2003 = vmatpush1.xpose.msra.mxu0 0.0
    %2004 = vmatprep.subr.mxu0 0.0
    %2005 = vmatpush1.xpose.msra.mxu0 0.0
    %2006 = vmatprep.subr.mxu0 0.0
    %2007 = vmatpush1.xpose.msra.mxu0 0.0
    %2008 = vmatprep.subr.mxu0 0.0
    %2009 = vmatpush1.xpose.msra.mxu0 0.0
    %2010 = vmatprep.subr.mxu0 0.0
    %2011 = vmatpush1.xpose.msra.mxu0 0.0
    %2012 = vmatprep.subr.mxu0 0.0
    %2013 = vmatpush1.xpose.msra.mxu0 0.0
    %2014 = vmatprep.subr.mxu0 0.0
    %2015 = vmatpush1.xpose.msra.mxu0 0.0
    %2016 = vmatprep.subr.mxu0 0.0
    %2017 = vmatpush1.xpose.msra.mxu0 0.0
    %2018 = vmatprep.subr.mxu0 0.0
    %2019 = vmatpush1.xpose.msra.mxu0 0.0
    %2020 = vmatprep.mubr.f32.mxu0 0.0
    %2021 = vmatmul.mubr.f32.gmra.mrb[0].mxu0 %v1952
    %v2022 = vpop.f32.mrb[0].mxu0
    %v2023 = vadd.f32 0.0, %v2022
    %v2024 = vpop.f32.mrb[0].mxu0
    %2025 = vdwg.mxu0
    %v2026 = vsel %vm336, %v2023, -inf
    %2027 = vmax.xlane.f32.xlu0 %v2026
    %v2028 = vpop.xlane.xlu0 %2027
    %v2029 = vsub.f32 %v2023, %v2028
    %v2030 = vmul.f32 %v2029, 1.442695
    %v2031 = vpow.pop %v2030
    %v2032 = vsel %vm336, %v2031, 0.0
    %2033 = vadd.xlane.f32.xlu0 %v2032
    %v2034 = vpop.xlane.xlu0 %2033
    %v2035 = vrcp.pop %v2034
    %v2036 = vmul.f32 %v2031, %v2035
    %2037 = vrot.lane.b32.xlu0 %v255, 56
    %v2038 = vpop.permute.xlu0 %2037
    %v2041 = vsel %vm336, %v2036, 0
    %2043 = vmatprep.subr.mxu0 0.0
    %2044 = vmatpush1.msra.mxu0 %v2038
    %2045 = vmatprep.subr.mxu0 0.0
    %2046 = vmatpush1.msra.mxu0 0.0
    %2047 = vmatprep.subr.mxu0 0.0
    %2048 = vmatpush1.msra.mxu0 0.0
    %2049 = vmatprep.subr.mxu0 0.0
    %2050 = vmatpush1.msra.mxu0 0.0
    %2051 = vmatprep.subr.mxu0 0.0
    %2052 = vmatpush1.msra.mxu0 0.0
    %2053 = vmatprep.subr.mxu0 0.0
    %2054 = vmatpush1.msra.mxu0 0.0
    %2055 = vmatprep.subr.mxu0 0.0
    %2056 = vmatpush1.msra.mxu0 0.0
    %2057 = vmatprep.subr.mxu0 0.0
    %2058 = vmatpush1.msra.mxu0 0.0
    %2059 = vmatprep.subr.mxu0 0.0
    %2060 = vmatpush1.msra.mxu0 0.0
    %2061 = vmatprep.subr.mxu0 0.0
    %2062 = vmatpush1.msra.mxu0 0.0
    %2063 = vmatprep.subr.mxu0 0.0
    %2064 = vmatpush1.msra.mxu0 0.0
    %2065 = vmatprep.subr.mxu0 0.0
    %2066 = vmatpush1.msra.mxu0 0.0
    %2067 = vmatprep.subr.mxu0 0.0
    %2068 = vmatpush1.msra.mxu0 0.0
    %2069 = vmatprep.subr.mxu0 0.0
    %2070 = vmatpush1.msra.mxu0 0.0
    %2071 = vmatprep.subr.mxu0 0.0
    %2072 = vmatpush1.msra.mxu0 0.0
    %2073 = vmatprep.subr.mxu0 0.0
    %2074 = vmatpush1.msra.mxu0 0.0
    %2075 = vmatprep.subr.mxu0 0.0
    %2076 = vmatpush1.msra.mxu0 0.0
    %2077 = vmatprep.subr.mxu0 0.0
    %2078 = vmatpush1.msra.mxu0 0.0
    %2079 = vmatprep.subr.mxu0 0.0
    %2080 = vmatpush1.msra.mxu0 0.0
    %2081 = vmatprep.subr.mxu0 0.0
    %2082 = vmatpush1.msra.mxu0 0.0
    %2083 = vmatprep.subr.mxu0 0.0
    %2084 = vmatpush1.msra.mxu0 0.0
    %2085 = vmatprep.subr.mxu0 0.0
    %2086 = vmatpush1.msra.mxu0 0.0
    %2087 = vmatprep.subr.mxu0 0.0
    %2088 = vmatpush1.msra.mxu0 0.0
    %2089 = vmatprep.subr.mxu0 0.0
    %2090 = vmatpush1.msra.mxu0 0.0
    %2091 = vmatprep.subr.mxu0 0.0
    %2092 = vmatpush1.msra.mxu0 0.0
    %2093 = vmatprep.subr.mxu0 0.0
    %2094 = vmatpush1.msra.mxu0 0.0
    %2095 = vmatprep.subr.mxu0 0.0
    %2096 = vmatpush1.msra.mxu0 0.0
    %2097 = vmatprep.subr.mxu0 0.0
    %2098 = vmatpush1.msra.mxu0 0.0
    %2099 = vmatprep.subr.mxu0 0.0
    %2100 = vmatpush1.msra.mxu0 0.0
    %2101 = vmatprep.subr.mxu0 0.0
    %2102 = vmatpush1.msra.mxu0 0.0
    %2103 = vmatprep.subr.mxu0 0.0
    %2104 = vmatpush1.msra.mxu0 0.0
    %2105 = vmatprep.subr.mxu0 0.0
    %2106 = vmatpush1.msra.mxu0 0.0
    %2107 = vmatprep.mubr.f32.mxu0 0.0
    %2108 = vmatmul.mubr.f32.gmra.mrb[0].mxu0 %v2041
    %v2109 = vpop.f32.mrb[0].mxu0
    %v2110 = vadd.f32 0.0, %v2109
    %v2111 = vpop.f32.mrb[0].mxu0
    %2112 = vdwg.mxu0
    %2113 = vrot.lane.b32.xlu0 %v255, 116
    %v2114 = vpop.permute.xlu0 %2113
    %2115 = vrot.lane.b32.xlu0 %v255, 84
    %v2116 = vpop.permute.xlu0 %2115
    %v2117 = vsel %vm261, %v2114, 0
    %v2119 = vsel %vm261, %v2116, 0
    %2121 = vmatprep.subr.mxu0 0.0
    %2122 = vmatpush1.xpose.msra.mxu0 %v2119
    %2123 = vmatprep.subr.mxu0 0.0
    %2124 = vmatpush1.xpose.msra.mxu0 0.0
    %2125 = vmatprep.subr.mxu0 0.0
    %2126 = vmatpush1.xpose.msra.mxu0 0.0
    %2127 = vmatprep.subr.mxu0 0.0
    %2128 = vmatpush1.xpose.msra.mxu0 0.0
    %2129 = vmatprep.subr.mxu0 0.0
    %2130 = vmatpush1.xpose.msra.mxu0 0.0
    %2131 = vmatprep.subr.mxu0 0.0
    %2132 = vmatpush1.xpose.msra.mxu0 0.0
    %2133 = vmatprep.subr.mxu0 0.0
    %2134 = vmatpush1.xpose.msra.mxu0 0.0
    %2135 = vmatprep.subr.mxu0 0.0
    %2136 = vmatpush1.xpose.msra.mxu0 0.0
    %2137 = vmatprep.subr.mxu0 0.0
    %2138 = vmatpush1.xpose.msra.mxu0 0.0
    %2139 = vmatprep.subr.mxu0 0.0
    %2140 = vmatpush1.xpose.msra.mxu0 0.0
    %2141 = vmatprep.subr.mxu0 0.0
    %2142 = vmatpush1.xpose.msra.mxu0 0.0
    %2143 = vmatprep.subr.mxu0 0.0
    %2144 = vmatpush1.xpose.msra.mxu0 0.0
    %2145 = vmatprep.subr.mxu0 0.0
    %2146 = vmatpush1.xpose.msra.mxu0 0.0
    %2147 = vmatprep.subr.mxu0 0.0
    %2148 = vmatpush1.xpose.msra.mxu0 0.0
    %2149 = vmatprep.subr.mxu0 0.0
    %2150 = vmatpush1.xpose.msra.mxu0 0.0
    %2151 = vmatprep.subr.mxu0 0.0
    %2152 = vmatpush1.xpose.msra.mxu0 0.0
    %2153 = vmatprep.subr.mxu0 0.0
    %2154 = vmatpush1.xpose.msra.mxu0 0.0
    %2155 = vmatprep.subr.mxu0 0.0
    %2156 = vmatpush1.xpose.msra.mxu0 0.0
    %2157 = vmatprep.subr.mxu0 0.0
    %2158 = vmatpush1.xpose.msra.mxu0 0.0
    %2159 = vmatprep.subr.mxu0 0.0
    %2160 = vmatpush1.xpose.msra.mxu0 0.0
    %2161 = vmatprep.subr.mxu0 0.0
    %2162 = vmatpush1.xpose.msra.mxu0 0.0
    %2163 = vmatprep.subr.mxu0 0.0
    %2164 = vmatpush1.xpose.msra.mxu0 0.0
    %2165 = vmatprep.subr.mxu0 0.0
    %2166 = vmatpush1.xpose.msra.mxu0 0.0
    %2167 = vmatprep.subr.mxu0 0.0
    %2168 = vmatpush1.xpose.msra.mxu0 0.0
    %2169 = vmatprep.subr.mxu0 0.0
    %2170 = vmatpush1.xpose.msra.mxu0 0.0
    %2171 = vmatprep.subr.mxu0 0.0
    %2172 = vmatpush1.xpose.msra.mxu0 0.0
    %2173 = vmatprep.subr.mxu0 0.0
    %2174 = vmatpush1.xpose.msra.mxu0 0.0
    %2175 = vmatprep.subr.mxu0 0.0
    %2176 = vmatpush1.xpose.msra.mxu0 0.0
    %2177 = vmatprep.subr.mxu0 0.0
    %2178 = vmatpush1.xpose.msra.mxu0 0.0
    %2179 = vmatprep.subr.mxu0 0.0
    %2180 = vmatpush1.xpose.msra.mxu0 0.0
    %2181 = vmatprep.subr.mxu0 0.0
    %2182 = vmatpush1.xpose.msra.mxu0 0.0
    %2183 = vmatprep.subr.mxu0 0.0
    %2184 = vmatpush1.xpose.msra.mxu0 0.0
    %2185 = vmatprep.mubr.f32.mxu0 0.0
    %2186 = vmatmul.mubr.f32.gmra.mrb[0].mxu0 %v2117
    %v2187 = vpop.f32.mrb[0].mxu0
    %v2188 = vadd.f32 0.0, %v2187
    %v2189 = vpop.f32.mrb[0].mxu0
    %2190 = vdwg.mxu0
    %v2191 = vsel %vm336, %v2188, -inf
    %2192 = vmax.xlane.f32.xlu0 %v2191
    %v2193 = vpop.xlane.xlu0 %2192
    %v2194 = vsub.f32 %v2188, %v2193
    %v2195 = vmul.f32 %v2194, 1.442695
    %v2196 = vpow.pop %v2195
    %v2197 = vsel %vm336, %v2196, 0.0
    %2198 = vadd.xlane.f32.xlu0 %v2197
    %v2199 = vpop.xlane.xlu0 %2198
    %v2200 = vrcp.pop %v2199
    %v2201 = vmul.f32 %v2196, %v2200
    %2202 = vrot.lane.b32.xlu0 %v255, 52
    %v2203 = vpop.permute.xlu0 %2202
    %v2206 = vsel %vm336, %v2201, 0
    %2208 = vmatprep.subr.mxu0 0.0
    %2209 = vmatpush1.msra.mxu0 %v2203
    %2210 = vmatprep.subr.mxu0 0.0
    %2211 = vmatpush1.msra.mxu0 0.0
    %2212 = vmatprep.subr.mxu0 0.0
    %2213 = vmatpush1.msra.mxu0 0.0
    %2214 = vmatprep.subr.mxu0 0.0
    %2215 = vmatpush1.msra.mxu0 0.0
    %2216 = vmatprep.subr.mxu0 0.0
    %2217 = vmatpush1.msra.mxu0 0.0
    %2218 = vmatprep.subr.mxu0 0.0
    %2219 = vmatpush1.msra.mxu0 0.0
    %2220 = vmatprep.subr.mxu0 0.0
    %2221 = vmatpush1.msra.mxu0 0.0
    %2222 = vmatprep.subr.mxu0 0.0
    %2223 = vmatpush1.msra.mxu0 0.0
    %2224 = vmatprep.subr.mxu0 0.0
    %2225 = vmatpush1.msra.mxu0 0.0
    %2226 = vmatprep.subr.mxu0 0.0
    %2227 = vmatpush1.msra.mxu0 0.0
    %2228 = vmatprep.subr.mxu0 0.0
    %2229 = vmatpush1.msra.mxu0 0.0
    %2230 = vmatprep.subr.mxu0 0.0
    %2231 = vmatpush1.msra.mxu0 0.0
    %2232 = vmatprep.subr.mxu0 0.0
    %2233 = vmatpush1.msra.mxu0 0.0
    %2234 = vmatprep.subr.mxu0 0.0
    %2235 = vmatpush1.msra.mxu0 0.0
    %2236 = vmatprep.subr.mxu0 0.0
    %2237 = vmatpush1.msra.mxu0 0.0
    %2238 = vmatprep.subr.mxu0 0.0
    %2239 = vmatpush1.msra.mxu0 0.0
    %2240 = vmatprep.subr.mxu0 0.0
    %2241 = vmatpush1.msra.mxu0 0.0
    %2242 = vmatprep.subr.mxu0 0.0
    %2243 = vmatpush1.msra.mxu0 0.0
    %2244 = vmatprep.subr.mxu0 0.0
    %2245 = vmatpush1.msra.mxu0 0.0
    %2246 = vmatprep.subr.mxu0 0.0
    %2247 = vmatpush1.msra.mxu0 0.0
    %2248 = vmatprep.subr.mxu0 0.0
    %2249 = vmatpush1.msra.mxu0 0.0
    %2250 = vmatprep.subr.mxu0 0.0
    %2251 = vmatpush1.msra.mxu0 0.0
    %2252 = vmatprep.subr.mxu0 0.0
    %2253 = vmatpush1.msra.mxu0 0.0
    %2254 = vmatprep.subr.mxu0 0.0
    %2255 = vmatpush1.msra.mxu0 0.0
    %2256 = vmatprep.subr.mxu0 0.0
    %2257 = vmatpush1.msra.mxu0 0.0
    %2258 = vmatprep.subr.mxu0 0.0
    %2259 = vmatpush1.msra.mxu0 0.0
    %2260 = vmatprep.subr.mxu0 0.0
    %2261 = vmatpush1.msra.mxu0 0.0
    %2262 = vmatprep.subr.mxu0 0.0
    %2263 = vmatpush1.msra.mxu0 0.0
    %2264 = vmatprep.subr.mxu0 0.0
    %2265 = vmatpush1.msra.mxu0 0.0
    %2266 = vmatprep.subr.mxu0 0.0
    %2267 = vmatpush1.msra.mxu0 0.0
    %2268 = vmatprep.subr.mxu0 0.0
    %2269 = vmatpush1.msra.mxu0 0.0
    %2270 = vmatprep.subr.mxu0 0.0
    %2271 = vmatpush1.msra.mxu0 0.0
    %2272 = vmatprep.mubr.f32.mxu0 0.0
    %2273 = vmatmul.mubr.f32.gmra.mrb[0].mxu0 %v2206
    %v2274 = vpop.f32.mrb[0].mxu0
    %v2275 = vadd.f32 0.0, %v2274
    %v2276 = vpop.f32.mrb[0].mxu0
    %2277 = vdwg.mxu0
    %2278 = vrot.lane.b32.xlu0 %v255, 112
    %v2279 = vpop.permute.xlu0 %2278
    %2280 = vrot.lane.b32.xlu0 %v255, 80
    %v2281 = vpop.permute.xlu0 %2280
    %v2282 = vsel %vm261, %v2279, 0
    %v2284 = vsel %vm261, %v2281, 0
    %2286 = vmatprep.subr.mxu0 0.0
    %2287 = vmatpush1.xpose.msra.mxu0 %v2284
    %2288 = vmatprep.subr.mxu0 0.0
    %2289 = vmatpush1.xpose.msra.mxu0 0.0
    %2290 = vmatprep.subr.mxu0 0.0
    %2291 = vmatpush1.xpose.msra.mxu0 0.0
    %2292 = vmatprep.subr.mxu0 0.0
    %2293 = vmatpush1.xpose.msra.mxu0 0.0
    %2294 = vmatprep.subr.mxu0 0.0
    %2295 = vmatpush1.xpose.msra.mxu0 0.0
    %2296 = vmatprep.subr.mxu0 0.0
    %2297 = vmatpush1.xpose.msra.mxu0 0.0
    %2298 = vmatprep.subr.mxu0 0.0
    %2299 = vmatpush1.xpose.msra.mxu0 0.0
    %2300 = vmatprep.subr.mxu0 0.0
    %2301 = vmatpush1.xpose.msra.mxu0 0.0
    %2302 = vmatprep.subr.mxu0 0.0
    %2303 = vmatpush1.xpose.msra.mxu0 0.0
    %2304 = vmatprep.subr.mxu0 0.0
    %2305 = vmatpush1.xpose.msra.mxu0 0.0
    %2306 = vmatprep.subr.mxu0 0.0
    %2307 = vmatpush1.xpose.msra.mxu0 0.0
    %2308 = vmatprep.subr.mxu0 0.0
    %2309 = vmatpush1.xpose.msra.mxu0 0.0
    %2310 = vmatprep.subr.mxu0 0.0
    %2311 = vmatpush1.xpose.msra.mxu0 0.0
    %2312 = vmatprep.subr.mxu0 0.0
    %2313 = vmatpush1.xpose.msra.mxu0 0.0
    %2314 = vmatprep.subr.mxu0 0.0
    %2315 = vmatpush1.xpose.msra.mxu0 0.0
    %2316 = vmatprep.subr.mxu0 0.0
    %2317 = vmatpush1.xpose.msra.mxu0 0.0
    %2318 = vmatprep.subr.mxu0 0.0
    %2319 = vmatpush1.xpose.msra.mxu0 0.0
    %2320 = vmatprep.subr.mxu0 0.0
    %2321 = vmatpush1.xpose.msra.mxu0 0.0
    %2322 = vmatprep.subr.mxu0 0.0
    %2323 = vmatpush1.xpose.msra.mxu0 0.0
    %2324 = vmatprep.subr.mxu0 0.0
    %2325 = vmatpush1.xpose.msra.mxu0 0.0
    %2326 = vmatprep.subr.mxu0 0.0
    %2327 = vmatpush1.xpose.msra.mxu0 0.0
    %2328 = vmatprep.subr.mxu0 0.0
    %2329 = vmatpush1.xpose.msra.mxu0 0.0
    %2330 = vmatprep.subr.mxu0 0.0
    %2331 = vmatpush1.xpose.msra.mxu0 0.0
    %2332 = vmatprep.subr.mxu0 0.0
    %2333 = vmatpush1.xpose.msra.mxu0 0.0
    %2334 = vmatprep.subr.mxu0 0.0
    %2335 = vmatpush1.xpose.msra.mxu0 0.0
    %2336 = vmatprep.subr.mxu0 0.0
    %2337 = vmatpush1.xpose.msra.mxu0 0.0
    %2338 = vmatprep.subr.mxu0 0.0
    %2339 = vmatpush1.xpose.msra.mxu0 0.0
    %2340 = vmatprep.subr.mxu0 0.0
    %2341 = vmatpush1.xpose.msra.mxu0 0.0
    %2342 = vmatprep.subr.mxu0 0.0
    %2343 = vmatpush1.xpose.msra.mxu0 0.0
    %2344 = vmatprep.subr.mxu0 0.0
    %2345 = vmatpush1.xpose.msra.mxu0 0.0
    %2346 = vmatprep.subr.mxu0 0.0
    %2347 = vmatpush1.xpose.msra.mxu0 0.0
    %2348 = vmatprep.subr.mxu0 0.0
    %2349 = vmatpush1.xpose.msra.mxu0 0.0
    %2350 = vmatprep.mubr.f32.mxu0 0.0
    %2351 = vmatmul.mubr.f32.gmra.mrb[0].mxu0 %v2282
    %v2352 = vpop.f32.mrb[0].mxu0
    %v2353 = vadd.f32 0.0, %v2352
    %v2354 = vpop.f32.mrb[0].mxu0
    %2355 = vdwg.mxu0
    %v2356 = vsel %vm336, %v2353, -inf
    %2357 = vmax.xlane.f32.xlu0 %v2356
    %v2358 = vpop.xlane.xlu0 %2357
    %v2359 = vsub.f32 %v2353, %v2358
    %v2360 = vmul.f32 %v2359, 1.442695
    %v2361 = vpow.pop %v2360
    %v2362 = vsel %vm336, %v2361, 0.0
    %2363 = vadd.xlane.f32.xlu0 %v2362
    %v2364 = vpop.xlane.xlu0 %2363
    %v2365 = vrcp.pop %v2364
    %v2366 = vmul.f32 %v2361, %v2365
    %2367 = vrot.lane.b32.xlu0 %v255, 48
    %v2368 = vpop.permute.xlu0 %2367
    %v2371 = vsel %vm336, %v2366, 0
    %2373 = vmatprep.subr.mxu0 0.0
    %2374 = vmatpush1.msra.mxu0 %v2368
    %2375 = vmatprep.subr.mxu0 0.0
    %2376 = vmatpush1.msra.mxu0 0.0
    %2377 = vmatprep.subr.mxu0 0.0
    %2378 = vmatpush1.msra.mxu0 0.0
    %2379 = vmatprep.subr.mxu0 0.0
    %2380 = vmatpush1.msra.mxu0 0.0
    %2381 = vmatprep.subr.mxu0 0.0
    %2382 = vmatpush1.msra.mxu0 0.0
    %2383 = vmatprep.subr.mxu0 0.0
    %2384 = vmatpush1.msra.mxu0 0.0
    %2385 = vmatprep.subr.mxu0 0.0
    %2386 = vmatpush1.msra.mxu0 0.0
    %2387 = vmatprep.subr.mxu0 0.0
    %2388 = vmatpush1.msra.mxu0 0.0
    %2389 = vmatprep.subr.mxu0 0.0
    %2390 = vmatpush1.msra.mxu0 0.0
    %2391 = vmatprep.subr.mxu0 0.0
    %2392 = vmatpush1.msra.mxu0 0.0
    %2393 = vmatprep.subr.mxu0 0.0
    %2394 = vmatpush1.msra.mxu0 0.0
    %2395 = vmatprep.subr.mxu0 0.0
    %2396 = vmatpush1.msra.mxu0 0.0
    %2397 = vmatprep.subr.mxu0 0.0
    %2398 = vmatpush1.msra.mxu0 0.0
    %2399 = vmatprep.subr.mxu0 0.0
    %2400 = vmatpush1.msra.mxu0 0.0
    %2401 = vmatprep.subr.mxu0 0.0
    %2402 = vmatpush1.msra.mxu0 0.0
    %2403 = vmatprep.subr.mxu0 0.0
    %2404 = vmatpush1.msra.mxu0 0.0
    %2405 = vmatprep.subr.mxu0 0.0
    %2406 = vmatpush1.msra.mxu0 0.0
    %2407 = vmatprep.subr.mxu0 0.0
    %2408 = vmatpush1.msra.mxu0 0.0
    %2409 = vmatprep.subr.mxu0 0.0
    %2410 = vmatpush1.msra.mxu0 0.0
    %2411 = vmatprep.subr.mxu0 0.0
    %2412 = vmatpush1.msra.mxu0 0.0
    %2413 = vmatprep.subr.mxu0 0.0
    %2414 = vmatpush1.msra.mxu0 0.0
    %2415 = vmatprep.subr.mxu0 0.0
    %2416 = vmatpush1.msra.mxu0 0.0
    %2417 = vmatprep.subr.mxu0 0.0
    %2418 = vmatpush1.msra.mxu0 0.0
    %2419 = vmatprep.subr.mxu0 0.0
    %2420 = vmatpush1.msra.mxu0 0.0
    %2421 = vmatprep.subr.mxu0 0.0
    %2422 = vmatpush1.msra.mxu0 0.0
    %2423 = vmatprep.subr.mxu0 0.0
    %2424 = vmatpush1.msra.mxu0 0.0
    %2425 = vmatprep.subr.mxu0 0.0
    %2426 = vmatpush1.msra.mxu0 0.0
    %2427 = vmatprep.subr.mxu0 0.0
    %2428 = vmatpush1.msra.mxu0 0.0
    %2429 = vmatprep.subr.mxu0 0.0
    %2430 = vmatpush1.msra.mxu0 0.0
    %2431 = vmatprep.subr.mxu0 0.0
    %2432 = vmatpush1.msra.mxu0 0.0
    %2433 = vmatprep.subr.mxu0 0.0
    %2434 = vmatpush1.msra.mxu0 0.0
    %2435 = vmatprep.subr.mxu0 0.0
    %2436 = vmatpush1.msra.mxu0 0.0
    %2437 = vmatprep.mubr.f32.mxu0 0.0
    %2438 = vmatmul.mubr.f32.gmra.mrb[0].mxu0 %v2371
    %v2439 = vpop.f32.mrb[0].mxu0
    %v2440 = vadd.f32 0.0, %v2439
    %v2441 = vpop.f32.mrb[0].mxu0
    %2442 = vdwg.mxu0
    %2443 = vrot.lane.b32.xlu0 %v255, 108
    %v2444 = vpop.permute.xlu0 %2443
    %2445 = vrot.lane.b32.xlu0 %v255, 76
    %v2446 = vpop.permute.xlu0 %2445
    %v2447 = vsel %vm261, %v2444, 0
    %v2449 = vsel %vm261, %v2446, 0
    %2451 = vmatprep.subr.mxu0 0.0
    %2452 = vmatpush1.xpose.msra.mxu0 %v2449
    %2453 = vmatprep.subr.mxu0 0.0
    %2454 = vmatpush1.xpose.msra.mxu0 0.0
    %2455 = vmatprep.subr.mxu0 0.0
    %2456 = vmatpush1.xpose.msra.mxu0 0.0
    %2457 = vmatprep.subr.mxu0 0.0
    %2458 = vmatpush1.xpose.msra.mxu0 0.0
    %2459 = vmatprep.subr.mxu0 0.0
    %2460 = vmatpush1.xpose.msra.mxu0 0.0
    %2461 = vmatprep.subr.mxu0 0.0
    %2462 = vmatpush1.xpose.msra.mxu0 0.0
    %2463 = vmatprep.subr.mxu0 0.0
    %2464 = vmatpush1.xpose.msra.mxu0 0.0
    %2465 = vmatprep.subr.mxu0 0.0
    %2466 = vmatpush1.xpose.msra.mxu0 0.0
    %2467 = vmatprep.subr.mxu0 0.0
    %2468 = vmatpush1.xpose.msra.mxu0 0.0
    %2469 = vmatprep.subr.mxu0 0.0
    %2470 = vmatpush1.xpose.msra.mxu0 0.0
    %2471 = vmatprep.subr.mxu0 0.0
    %2472 = vmatpush1.xpose.msra.mxu0 0.0
    %2473 = vmatprep.subr.mxu0 0.0
    %2474 = vmatpush1.xpose.msra.mxu0 0.0
    %2475 = vmatprep.subr.mxu0 0.0
    %2476 = vmatpush1.xpose.msra.mxu0 0.0
    %2477 = vmatprep.subr.mxu0 0.0
    %2478 = vmatpush1.xpose.msra.mxu0 0.0
    %2479 = vmatprep.subr.mxu0 0.0
    %2480 = vmatpush1.xpose.msra.mxu0 0.0
    %2481 = vmatprep.subr.mxu0 0.0
    %2482 = vmatpush1.xpose.msra.mxu0 0.0
    %2483 = vmatprep.subr.mxu0 0.0
    %2484 = vmatpush1.xpose.msra.mxu0 0.0
    %2485 = vmatprep.subr.mxu0 0.0
    %2486 = vmatpush1.xpose.msra.mxu0 0.0
    %2487 = vmatprep.subr.mxu0 0.0
    %2488 = vmatpush1.xpose.msra.mxu0 0.0
    %2489 = vmatprep.subr.mxu0 0.0
    %2490 = vmatpush1.xpose.msra.mxu0 0.0
    %2491 = vmatprep.subr.mxu0 0.0
    %2492 = vmatpush1.xpose.msra.mxu0 0.0
    %2493 = vmatprep.subr.mxu0 0.0
    %2494 = vmatpush1.xpose.msra.mxu0 0.0
    %2495 = vmatprep.subr.mxu0 0.0
    %2496 = vmatpush1.xpose.msra.mxu0 0.0
    %2497 = vmatprep.subr.mxu0 0.0
    %2498 = vmatpush1.xpose.msra.mxu0 0.0
    %2499 = vmatprep.subr.mxu0 0.0
    %2500 = vmatpush1.xpose.msra.mxu0 0.0
    %2501 = vmatprep.subr.mxu0 0.0
    %2502 = vmatpush1.xpose.msra.mxu0 0.0
    %2503 = vmatprep.subr.mxu0 0.0
    %2504 = vmatpush1.xpose.msra.mxu0 0.0
    %2505 = vmatprep.subr.mxu0 0.0
    %2506 = vmatpush1.xpose.msra.mxu0 0.0
    %2507 = vmatprep.subr.mxu0 0.0
    %2508 = vmatpush1.xpose.msra.mxu0 0.0
    %2509 = vmatprep.subr.mxu0 0.0
    %2510 = vmatpush1.xpose.msra.mxu0 0.0
    %2511 = vmatprep.subr.mxu0 0.0
    %2512 = vmatpush1.xpose.msra.mxu0 0.0
    %2513 = vmatprep.subr.mxu0 0.0
    %2514 = vmatpush1.xpose.msra.mxu0 0.0
    %2515 = vmatprep.mubr.f32.mxu0 0.0
    %2516 = vmatmul.mubr.f32.gmra.mrb[0].mxu0 %v2447
    %v2517 = vpop.f32.mrb[0].mxu0
    %v2518 = vadd.f32 0.0, %v2517
    %v2519 = vpop.f32.mrb[0].mxu0
    %2520 = vdwg.mxu0
    %v2521 = vsel %vm336, %v2518, -inf
    %2522 = vmax.xlane.f32.xlu0 %v2521
    %v2523 = vpop.xlane.xlu0 %2522
    %v2524 = vsub.f32 %v2518, %v2523
    %v2525 = vmul.f32 %v2524, 1.442695
    %v2526 = vpow.pop %v2525
    %v2527 = vsel %vm336, %v2526, 0.0
    %2528 = vadd.xlane.f32.xlu0 %v2527
    %v2529 = vpop.xlane.xlu0 %2528
    %v2530 = vrcp.pop %v2529
    %v2531 = vmul.f32 %v2526, %v2530
    %2532 = vrot.lane.b32.xlu0 %v255, 44
    %v2533 = vpop.permute.xlu0 %2532
    %v2536 = vsel %vm336, %v2531, 0
    %2538 = vmatprep.subr.mxu0 0.0
    %2539 = vmatpush1.msra.mxu0 %v2533
    %2540 = vmatprep.subr.mxu0 0.0
    %2541 = vmatpush1.msra.mxu0 0.0
    %2542 = vmatprep.subr.mxu0 0.0
    %2543 = vmatpush1.msra.mxu0 0.0
    %2544 = vmatprep.subr.mxu0 0.0
    %2545 = vmatpush1.msra.mxu0 0.0
    %2546 = vmatprep.subr.mxu0 0.0
    %2547 = vmatpush1.msra.mxu0 0.0
    %2548 = vmatprep.subr.mxu0 0.0
    %2549 = vmatpush1.msra.mxu0 0.0
    %2550 = vmatprep.subr.mxu0 0.0
    %2551 = vmatpush1.msra.mxu0 0.0
    %2552 = vmatprep.subr.mxu0 0.0
    %2553 = vmatpush1.msra.mxu0 0.0
    %2554 = vmatprep.subr.mxu0 0.0
    %2555 = vmatpush1.msra.mxu0 0.0
    %2556 = vmatprep.subr.mxu0 0.0
    %2557 = vmatpush1.msra.mxu0 0.0
    %2558 = vmatprep.subr.mxu0 0.0
    %2559 = vmatpush1.msra.mxu0 0.0
    %2560 = vmatprep.subr.mxu0 0.0
    %2561 = vmatpush1.msra.mxu0 0.0
    %2562 = vmatprep.subr.mxu0 0.0
    %2563 = vmatpush1.msra.mxu0 0.0
    %2564 = vmatprep.subr.mxu0 0.0
    %2565 = vmatpush1.msra.mxu0 0.0
    %2566 = vmatprep.subr.mxu0 0.0
    %2567 = vmatpush1.msra.mxu0 0.0
    %2568 = vmatprep.subr.mxu0 0.0
    %2569 = vmatpush1.msra.mxu0 0.0
    %2570 = vmatprep.subr.mxu0 0.0
    %2571 = vmatpush1.msra.mxu0 0.0
    %2572 = vmatprep.subr.mxu0 0.0
    %2573 = vmatpush1.msra.mxu0 0.0
    %2574 = vmatprep.subr.mxu0 0.0
    %2575 = vmatpush1.msra.mxu0 0.0
    %2576 = vmatprep.subr.mxu0 0.0
    %2577 = vmatpush1.msra.mxu0 0.0
    %2578 = vmatprep.subr.mxu0 0.0
    %2579 = vmatpush1.msra.mxu0 0.0
    %2580 = vmatprep.subr.mxu0 0.0
    %2581 = vmatpush1.msra.mxu0 0.0
    %2582 = vmatprep.subr.mxu0 0.0
    %2583 = vmatpush1.msra.mxu0 0.0
    %2584 = vmatprep.subr.mxu0 0.0
    %2585 = vmatpush1.msra.mxu0 0.0
    %2586 = vmatprep.subr.mxu0 0.0
    %2587 = vmatpush1.msra.mxu0 0.0
    %2588 = vmatprep.subr.mxu0 0.0
    %2589 = vmatpush1.msra.mxu0 0.0
    %2590 = vmatprep.subr.mxu0 0.0
    %2591 = vmatpush1.msra.mxu0 0.0
    %2592 = vmatprep.subr.mxu0 0.0
    %2593 = vmatpush1.msra.mxu0 0.0
    %2594 = vmatprep.subr.mxu0 0.0
    %2595 = vmatpush1.msra.mxu0 0.0
    %2596 = vmatprep.subr.mxu0 0.0
    %2597 = vmatpush1.msra.mxu0 0.0
    %2598 = vmatprep.subr.mxu0 0.0
    %2599 = vmatpush1.msra.mxu0 0.0
    %2600 = vmatprep.subr.mxu0 0.0
    %2601 = vmatpush1.msra.mxu0 0.0
    %2602 = vmatprep.mubr.f32.mxu0 0.0
    %2603 = vmatmul.mubr.f32.gmra.mrb[0].mxu0 %v2536
    %v2604 = vpop.f32.mrb[0].mxu0
    %v2605 = vadd.f32 0.0, %v2604
    %v2606 = vpop.f32.mrb[0].mxu0
    %2607 = vdwg.mxu0
    %2608 = vrot.lane.b32.xlu0 %v255, 104
    %v2609 = vpop.permute.xlu0 %2608
    %2610 = vrot.lane.b32.xlu0 %v255, 72
    %v2611 = vpop.permute.xlu0 %2610
    %v2612 = vsel %vm261, %v2609, 0
    %v2614 = vsel %vm261, %v2611, 0
    %2616 = vmatprep.subr.mxu0 0.0
    %2617 = vmatpush1.xpose.msra.mxu0 %v2614
    %2618 = vmatprep.subr.mxu0 0.0
    %2619 = vmatpush1.xpose.msra.mxu0 0.0
    %2620 = vmatprep.subr.mxu0 0.0
    %2621 = vmatpush1.xpose.msra.mxu0 0.0
    %2622 = vmatprep.subr.mxu0 0.0
    %2623 = vmatpush1.xpose.msra.mxu0 0.0
    %2624 = vmatprep.subr.mxu0 0.0
    %2625 = vmatpush1.xpose.msra.mxu0 0.0
    %2626 = vmatprep.subr.mxu0 0.0
    %2627 = vmatpush1.xpose.msra.mxu0 0.0
    %2628 = vmatprep.subr.mxu0 0.0
    %2629 = vmatpush1.xpose.msra.mxu0 0.0
    %2630 = vmatprep.subr.mxu0 0.0
    %2631 = vmatpush1.xpose.msra.mxu0 0.0
    %2632 = vmatprep.subr.mxu0 0.0
    %2633 = vmatpush1.xpose.msra.mxu0 0.0
    %2634 = vmatprep.subr.mxu0 0.0
    %2635 = vmatpush1.xpose.msra.mxu0 0.0
    %2636 = vmatprep.subr.mxu0 0.0
    %2637 = vmatpush1.xpose.msra.mxu0 0.0
    %2638 = vmatprep.subr.mxu0 0.0
    %2639 = vmatpush1.xpose.msra.mxu0 0.0
    %2640 = vmatprep.subr.mxu0 0.0
    %2641 = vmatpush1.xpose.msra.mxu0 0.0
    %2642 = vmatprep.subr.mxu0 0.0
    %2643 = vmatpush1.xpose.msra.mxu0 0.0
    %2644 = vmatprep.subr.mxu0 0.0
    %2645 = vmatpush1.xpose.msra.mxu0 0.0
    %2646 = vmatprep.subr.mxu0 0.0
    %2647 = vmatpush1.xpose.msra.mxu0 0.0
    %2648 = vmatprep.subr.mxu0 0.0
    %2649 = vmatpush1.xpose.msra.mxu0 0.0
    %2650 = vmatprep.subr.mxu0 0.0
    %2651 = vmatpush1.xpose.msra.mxu0 0.0
    %2652 = vmatprep.subr.mxu0 0.0
    %2653 = vmatpush1.xpose.msra.mxu0 0.0
    %2654 = vmatprep.subr.mxu0 0.0
    %2655 = vmatpush1.xpose.msra.mxu0 0.0
    %2656 = vmatprep.subr.mxu0 0.0
    %2657 = vmatpush1.xpose.msra.mxu0 0.0
    %2658 = vmatprep.subr.mxu0 0.0
    %2659 = vmatpush1.xpose.msra.mxu0 0.0
    %2660 = vmatprep.subr.mxu0 0.0
    %2661 = vmatpush1.xpose.msra.mxu0 0.0
    %2662 = vmatprep.subr.mxu0 0.0
    %2663 = vmatpush1.xpose.msra.mxu0 0.0
    %2664 = vmatprep.subr.mxu0 0.0
    %2665 = vmatpush1.xpose.msra.mxu0 0.0
    %2666 = vmatprep.subr.mxu0 0.0
    %2667 = vmatpush1.xpose.msra.mxu0 0.0
    %2668 = vmatprep.subr.mxu0 0.0
    %2669 = vmatpush1.xpose.msra.mxu0 0.0
    %2670 = vmatprep.subr.mxu0 0.0
    %2671 = vmatpush1.xpose.msra.mxu0 0.0
    %2672 = vmatprep.subr.mxu0 0.0
    %2673 = vmatpush1.xpose.msra.mxu0 0.0
    %2674 = vmatprep.subr.mxu0 0.0
    %2675 = vmatpush1.xpose.msra.mxu0 0.0
    %2676 = vmatprep.subr.mxu0 0.0
    %2677 = vmatpush1.xpose.msra.mxu0 0.0
    %2678 = vmatprep.subr.mxu0 0.0
    %2679 = vmatpush1.xpose.msra.mxu0 0.0
    %2680 = vmatprep.mubr.f32.mxu0 0.0
    %2681 = vmatmul.mubr.f32.gmra.mrb[0].mxu0 %v2612
    %v2682 = vpop.f32.mrb[0].mxu0
    %v2683 = vadd.f32 0.0, %v2682
    %v2684 = vpop.f32.mrb[0].mxu0
    %2685 = vdwg.mxu0
    %v2686 = vsel %vm336, %v2683, -inf
    %2687 = vmax.xlane.f32.xlu0 %v2686
    %v2688 = vpop.xlane.xlu0 %2687
    %v2689 = vsub.f32 %v2683, %v2688
    %v2690 = vmul.f32 %v2689, 1.442695
    %v2691 = vpow.pop %v2690
    %v2692 = vsel %vm336, %v2691, 0.0
    %2693 = vadd.xlane.f32.xlu0 %v2692
    %v2694 = vpop.xlane.xlu0 %2693
    %v2695 = vrcp.pop %v2694
    %v2696 = vmul.f32 %v2691, %v2695
    %2697 = vrot.lane.b32.xlu0 %v255, 40
    %v2698 = vpop.permute.xlu0 %2697
    %v2701 = vsel %vm336, %v2696, 0
    %2703 = vmatprep.subr.mxu0 0.0
    %2704 = vmatpush1.msra.mxu0 %v2698
    %2705 = vmatprep.subr.mxu0 0.0
    %2706 = vmatpush1.msra.mxu0 0.0
    %2707 = vmatprep.subr.mxu0 0.0
    %2708 = vmatpush1.msra.mxu0 0.0
    %2709 = vmatprep.subr.mxu0 0.0
    %2710 = vmatpush1.msra.mxu0 0.0
    %2711 = vmatprep.subr.mxu0 0.0
    %2712 = vmatpush1.msra.mxu0 0.0
    %2713 = vmatprep.subr.mxu0 0.0
    %2714 = vmatpush1.msra.mxu0 0.0
    %2715 = vmatprep.subr.mxu0 0.0
    %2716 = vmatpush1.msra.mxu0 0.0
    %2717 = vmatprep.subr.mxu0 0.0
    %2718 = vmatpush1.msra.mxu0 0.0
    %2719 = vmatprep.subr.mxu0 0.0
    %2720 = vmatpush1.msra.mxu0 0.0
    %2721 = vmatprep.subr.mxu0 0.0
    %2722 = vmatpush1.msra.mxu0 0.0
    %2723 = vmatprep.subr.mxu0 0.0
    %2724 = vmatpush1.msra.mxu0 0.0
    %2725 = vmatprep.subr.mxu0 0.0
    %2726 = vmatpush1.msra.mxu0 0.0
    %2727 = vmatprep.subr.mxu0 0.0
    %2728 = vmatpush1.msra.mxu0 0.0
    %2729 = vmatprep.subr.mxu0 0.0
    %2730 = vmatpush1.msra.mxu0 0.0
    %2731 = vmatprep.subr.mxu0 0.0
    %2732 = vmatpush1.msra.mxu0 0.0
    %2733 = vmatprep.subr.mxu0 0.0
    %2734 = vmatpush1.msra.mxu0 0.0
    %2735 = vmatprep.subr.mxu0 0.0
    %2736 = vmatpush1.msra.mxu0 0.0
    %2737 = vmatprep.subr.mxu0 0.0
    %2738 = vmatpush1.msra.mxu0 0.0
    %2739 = vmatprep.subr.mxu0 0.0
    %2740 = vmatpush1.msra.mxu0 0.0
    %2741 = vmatprep.subr.mxu0 0.0
    %2742 = vmatpush1.msra.mxu0 0.0
    %2743 = vmatprep.subr.mxu0 0.0
    %2744 = vmatpush1.msra.mxu0 0.0
    %2745 = vmatprep.subr.mxu0 0.0
    %2746 = vmatpush1.msra.mxu0 0.0
    %2747 = vmatprep.subr.mxu0 0.0
    %2748 = vmatpush1.msra.mxu0 0.0
    %2749 = vmatprep.subr.mxu0 0.0
    %2750 = vmatpush1.msra.mxu0 0.0
    %2751 = vmatprep.subr.mxu0 0.0
    %2752 = vmatpush1.msra.mxu0 0.0
    %2753 = vmatprep.subr.mxu0 0.0
    %2754 = vmatpush1.msra.mxu0 0.0
    %2755 = vmatprep.subr.mxu0 0.0
    %2756 = vmatpush1.msra.mxu0 0.0
    %2757 = vmatprep.subr.mxu0 0.0
    %2758 = vmatpush1.msra.mxu0 0.0
    %2759 = vmatprep.subr.mxu0 0.0
    %2760 = vmatpush1.msra.mxu0 0.0
    %2761 = vmatprep.subr.mxu0 0.0
    %2762 = vmatpush1.msra.mxu0 0.0
    %2763 = vmatprep.subr.mxu0 0.0
    %2764 = vmatpush1.msra.mxu0 0.0
    %2765 = vmatprep.subr.mxu0 0.0
    %2766 = vmatpush1.msra.mxu0 0.0
    %2767 = vmatprep.mubr.f32.mxu0 0.0
    %2768 = vmatmul.mubr.f32.gmra.mrb[0].mxu0 %v2701
    %v2769 = vpop.f32.mrb[0].mxu0
    %v2770 = vadd.f32 0.0, %v2769
    %v2771 = vpop.f32.mrb[0].mxu0
    %2772 = vdwg.mxu0
    %2773 = vrot.lane.b32.xlu0 %v255, 100
    %v2774 = vpop.permute.xlu0 %2773
    %2775 = vrot.lane.b32.xlu0 %v255, 68
    %v2776 = vpop.permute.xlu0 %2775
    %v2777 = vsel %vm261, %v2774, 0
    %v2779 = vsel %vm261, %v2776, 0
    %2781 = vmatprep.subr.mxu0 0.0
    %2782 = vmatpush1.xpose.msra.mxu0 %v2779
    %2783 = vmatprep.subr.mxu0 0.0
    %2784 = vmatpush1.xpose.msra.mxu0 0.0
    %2785 = vmatprep.subr.mxu0 0.0
    %2786 = vmatpush1.xpose.msra.mxu0 0.0
    %2787 = vmatprep.subr.mxu0 0.0
    %2788 = vmatpush1.xpose.msra.mxu0 0.0
    %2789 = vmatprep.subr.mxu0 0.0
    %2790 = vmatpush1.xpose.msra.mxu0 0.0
    %2791 = vmatprep.subr.mxu0 0.0
    %2792 = vmatpush1.xpose.msra.mxu0 0.0
    %2793 = vmatprep.subr.mxu0 0.0
    %2794 = vmatpush1.xpose.msra.mxu0 0.0
    %2795 = vmatprep.subr.mxu0 0.0
    %2796 = vmatpush1.xpose.msra.mxu0 0.0
    %2797 = vmatprep.subr.mxu0 0.0
    %2798 = vmatpush1.xpose.msra.mxu0 0.0
    %2799 = vmatprep.subr.mxu0 0.0
    %2800 = vmatpush1.xpose.msra.mxu0 0.0
    %2801 = vmatprep.subr.mxu0 0.0
    %2802 = vmatpush1.xpose.msra.mxu0 0.0
    %2803 = vmatprep.subr.mxu0 0.0
    %2804 = vmatpush1.xpose.msra.mxu0 0.0
    %2805 = vmatprep.subr.mxu0 0.0
    %2806 = vmatpush1.xpose.msra.mxu0 0.0
    %2807 = vmatprep.subr.mxu0 0.0
    %2808 = vmatpush1.xpose.msra.mxu0 0.0
    %2809 = vmatprep.subr.mxu0 0.0
    %2810 = vmatpush1.xpose.msra.mxu0 0.0
    %2811 = vmatprep.subr.mxu0 0.0
    %2812 = vmatpush1.xpose.msra.mxu0 0.0
    %2813 = vmatprep.subr.mxu0 0.0
    %2814 = vmatpush1.xpose.msra.mxu0 0.0
    %2815 = vmatprep.subr.mxu0 0.0
    %2816 = vmatpush1.xpose.msra.mxu0 0.0
    %2817 = vmatprep.subr.mxu0 0.0
    %2818 = vmatpush1.xpose.msra.mxu0 0.0
    %2819 = vmatprep.subr.mxu0 0.0
    %2820 = vmatpush1.xpose.msra.mxu0 0.0
    %2821 = vmatprep.subr.mxu0 0.0
    %2822 = vmatpush1.xpose.msra.mxu0 0.0
    %2823 = vmatprep.subr.mxu0 0.0
    %2824 = vmatpush1.xpose.msra.mxu0 0.0
    %2825 = vmatprep.subr.mxu0 0.0
    %2826 = vmatpush1.xpose.msra.mxu0 0.0
    %2827 = vmatprep.subr.mxu0 0.0
    %2828 = vmatpush1.xpose.msra.mxu0 0.0
    %2829 = vmatprep.subr.mxu0 0.0
    %2830 = vmatpush1.xpose.msra.mxu0 0.0
    %2831 = vmatprep.subr.mxu0 0.0
    %2832 = vmatpush1.xpose.msra.mxu0 0.0
    %2833 = vmatprep.subr.mxu0 0.0
    %2834 = vmatpush1.xpose.msra.mxu0 0.0
    %2835 = vmatprep.subr.mxu0 0.0
    %2836 = vmatpush1.xpose.msra.mxu0 0.0
    %2837 = vmatprep.subr.mxu0 0.0
    %2838 = vmatpush1.xpose.msra.mxu0 0.0
    %2839 = vmatprep.subr.mxu0 0.0
    %2840 = vmatpush1.xpose.msra.mxu0 0.0
    %2841 = vmatprep.subr.mxu0 0.0
    %2842 = vmatpush1.xpose.msra.mxu0 0.0
    %2843 = vmatprep.subr.mxu0 0.0
    %2844 = vmatpush1.xpose.msra.mxu0 0.0
    %2845 = vmatprep.mubr.f32.mxu0 0.0
    %2846 = vmatmul.mubr.f32.gmra.mrb[0].mxu0 %v2777
    %v2847 = vpop.f32.mrb[0].mxu0
    %v2848 = vadd.f32 0.0, %v2847
    %v2849 = vpop.f32.mrb[0].mxu0
    %2850 = vdwg.mxu0
    %v2851 = vsel %vm336, %v2848, -inf
    %2852 = vmax.xlane.f32.xlu0 %v2851
    %v2853 = vpop.xlane.xlu0 %2852
    %v2854 = vsub.f32 %v2848, %v2853
    %v2855 = vmul.f32 %v2854, 1.442695
    %v2856 = vpow.pop %v2855
    %v2857 = vsel %vm336, %v2856, 0.0
    %2858 = vadd.xlane.f32.xlu0 %v2857
    %v2859 = vpop.xlane.xlu0 %2858
    %v2860 = vrcp.pop %v2859
    %v2861 = vmul.f32 %v2856, %v2860
    %2862 = vrot.lane.b32.xlu0 %v255, 36
    %v2863 = vpop.permute.xlu0 %2862
    %v2866 = vsel %vm336, %v2861, 0
    %2868 = vmatprep.subr.mxu0 0.0
    %2869 = vmatpush1.msra.mxu0 %v2863
    %2870 = vmatprep.subr.mxu0 0.0
    %2871 = vmatpush1.msra.mxu0 0.0
    %2872 = vmatprep.subr.mxu0 0.0
    %2873 = vmatpush1.msra.mxu0 0.0
    %2874 = vmatprep.subr.mxu0 0.0
    %2875 = vmatpush1.msra.mxu0 0.0
    %2876 = vmatprep.subr.mxu0 0.0
    %2877 = vmatpush1.msra.mxu0 0.0
    %2878 = vmatprep.subr.mxu0 0.0
    %2879 = vmatpush1.msra.mxu0 0.0
    %2880 = vmatprep.subr.mxu0 0.0
    %2881 = vmatpush1.msra.mxu0 0.0
    %2882 = vmatprep.subr.mxu0 0.0
    %2883 = vmatpush1.msra.mxu0 0.0
    %2884 = vmatprep.subr.mxu0 0.0
    %2885 = vmatpush1.msra.mxu0 0.0
    %2886 = vmatprep.subr.mxu0 0.0
    %2887 = vmatpush1.msra.mxu0 0.0
    %2888 = vmatprep.subr.mxu0 0.0
    %2889 = vmatpush1.msra.mxu0 0.0
    %2890 = vmatprep.subr.mxu0 0.0
    %2891 = vmatpush1.msra.mxu0 0.0
    %2892 = vmatprep.subr.mxu0 0.0
    %2893 = vmatpush1.msra.mxu0 0.0
    %2894 = vmatprep.subr.mxu0 0.0
    %2895 = vmatpush1.msra.mxu0 0.0
    %2896 = vmatprep.subr.mxu0 0.0
    %2897 = vmatpush1.msra.mxu0 0.0
    %2898 = vmatprep.subr.mxu0 0.0
    %2899 = vmatpush1.msra.mxu0 0.0
    %2900 = vmatprep.subr.mxu0 0.0
    %2901 = vmatpush1.msra.mxu0 0.0
    %2902 = vmatprep.subr.mxu0 0.0
    %2903 = vmatpush1.msra.mxu0 0.0
    %2904 = vmatprep.subr.mxu0 0.0
    %2905 = vmatpush1.msra.mxu0 0.0
    %2906 = vmatprep.subr.mxu0 0.0
    %2907 = vmatpush1.msra.mxu0 0.0
    %2908 = vmatprep.subr.mxu0 0.0
    %2909 = vmatpush1.msra.mxu0 0.0
    %2910 = vmatprep.subr.mxu0 0.0
    %2911 = vmatpush1.msra.mxu0 0.0
    %2912 = vmatprep.subr.mxu0 0.0
    %2913 = vmatpush1.msra.mxu0 0.0
    %2914 = vmatprep.subr.mxu0 0.0
    %2915 = vmatpush1.msra.mxu0 0.0
    %2916 = vmatprep.subr.mxu0 0.0
    %2917 = vmatpush1.msra.mxu0 0.0
    %2918 = vmatprep.subr.mxu0 0.0
    %2919 = vmatpush1.msra.mxu0 0.0
    %2920 = vmatprep.subr.mxu0 0.0
    %2921 = vmatpush1.msra.mxu0 0.0
    %2922 = vmatprep.subr.mxu0 0.0
    %2923 = vmatpush1.msra.mxu0 0.0
    %2924 = vmatprep.subr.mxu0 0.0
    %2925 = vmatpush1.msra.mxu0 0.0
    %2926 = vmatprep.subr.mxu0 0.0
    %2927 = vmatpush1.msra.mxu0 0.0
    %2928 = vmatprep.subr.mxu0 0.0
    %2929 = vmatpush1.msra.mxu0 0.0
    %2930 = vmatprep.subr.mxu0 0.0
    %2931 = vmatpush1.msra.mxu0 0.0
    %2932 = vmatprep.mubr.f32.mxu0 0.0
    %2933 = vmatmul.mubr.f32.gmra.mrb[0].mxu0 %v2866
    %v2934 = vpop.f32.mrb[0].mxu0
    %v2935 = vadd.f32 0.0, %v2934
    %v2936 = vpop.f32.mrb[0].mxu0
    %2937 = vdwg.mxu0
    %2939 = vrot.lane.b32.xlu0 %v1945, 4
    %v2940 = vpop.permute.xlu0 %2939
    %2943 = vrot.lane.b32.xlu0 %v2110, 8
    %v2944 = vpop.permute.xlu0 %2943
    %2947 = vrot.lane.b32.xlu0 %v2275, 12
    %v2948 = vpop.permute.xlu0 %2947
    %2951 = vrot.lane.b32.xlu0 %v2440, 16
    %v2952 = vpop.permute.xlu0 %2951
    %2955 = vrot.lane.b32.xlu0 %v2605, 20
    %v2956 = vpop.permute.xlu0 %2955
    %2959 = vrot.lane.b32.xlu0 %v2770, 24
    %v2960 = vpop.permute.xlu0 %2959
    %2963 = vrot.lane.b32.xlu0 %v2935, 28
    %v2964 = vpop.permute.xlu0 %2963
    %v2966 = vsel %vm261, %v1780, %v2940
    %v2967 = vsel %vm336, %v2966, %v2944
    %v2968 = vsel %vm1609, %v2967, %v2948
    %v2969 = vsel %vm1611, %v2968, %v2952
    %v2970 = vsel %vm1613, %v2969, %v2956
    %v2971 = vsel %vm1615, %v2970, %v2960
    %v2972 = vsel %vm1617, %v2971, %v2964
    %s2973 = scalar_lea.vmem %s1, 64
    %v2974 = vld [vmem:[%s2973] sm:$0xff]
    %v2975 = vld [vmem:[%s2973 + $0x8] sm:$0xff]
    %v2976 = vld [vmem:[%s2973 + $0x10] sm:$0xff]
    %v2977 = vld [vmem:[%s2973 + $0x18] sm:$0xff]
    %v2978 = vlaneseq
    %v2979 = vshrl.u32 %v2978, 7
    %v2980 = vsub.s32 2, %v2979
    %v2981 = vrot.slane %v21, %v2980
    %v2983 = vsel %vm176, %v1618, 0
    %v2986 = vsel %vm176, %v2972, 0
    %2988 = vmatprep.subr.mxu0 0.0
    %2989 = vmatpush1.msra.mxu0 %v2974
    %2990 = vmatprep.subr.mxu0 0.0
    %2991 = vmatpush1.msra.mxu0 %v2975
    %2992 = vmatprep.subr.mxu0 0.0
    %2993 = vmatpush1.msra.mxu0 %v2976
    %2994 = vmatprep.subr.mxu0 0.0
    %2995 = vmatpush1.msra.mxu0 %v2977
    %2996 = vmatprep.subr.mxu0 0.0
    %2997 = vmatpush1.msra.mxu0 0.0
    %2998 = vmatprep.subr.mxu0 0.0
    %2999 = vmatpush1.msra.mxu0 0.0
    %3000 = vmatprep.subr.mxu0 0.0
    %3001 = vmatpush1.msra.mxu0 0.0
    %3002 = vmatprep.subr.mxu0 0.0
    %3003 = vmatpush1.msra.mxu0 0.0
    %3004 = vmatprep.subr.mxu0 0.0
    %3005 = vmatpush1.msra.mxu0 0.0
    %3006 = vmatprep.subr.mxu0 0.0
    %3007 = vmatpush1.msra.mxu0 0.0
    %3008 = vmatprep.subr.mxu0 0.0
    %3009 = vmatpush1.msra.mxu0 0.0
    %3010 = vmatprep.subr.mxu0 0.0
    %3011 = vmatpush1.msra.mxu0 0.0
    %3012 = vmatprep.subr.mxu0 0.0
    %3013 = vmatpush1.msra.mxu0 0.0
    %3014 = vmatprep.subr.mxu0 0.0
    %3015 = vmatpush1.msra.mxu0 0.0
    %3016 = vmatprep.subr.mxu0 0.0
    %3017 = vmatpush1.msra.mxu0 0.0
    %3018 = vmatprep.subr.mxu0 0.0
    %3019 = vmatpush1.msra.mxu0 0.0
    %3020 = vmatprep.subr.mxu0 0.0
    %3021 = vmatpush1.msra.mxu0 0.0
    %3022 = vmatprep.subr.mxu0 0.0
    %3023 = vmatpush1.msra.mxu0 0.0
    %3024 = vmatprep.subr.mxu0 0.0
    %3025 = vmatpush1.msra.mxu0 0.0
    %3026 = vmatprep.subr.mxu0 0.0
    %3027 = vmatpush1.msra.mxu0 0.0
    %3028 = vmatprep.subr.mxu0 0.0
    %3029 = vmatpush1.msra.mxu0 0.0
    %3030 = vmatprep.subr.mxu0 0.0
    %3031 = vmatpush1.msra.mxu0 0.0
    %3032 = vmatprep.subr.mxu0 0.0
    %3033 = vmatpush1.msra.mxu0 0.0
    %3034 = vmatprep.subr.mxu0 0.0
    %3035 = vmatpush1.msra.mxu0 0.0
    %3036 = vmatprep.subr.mxu0 0.0
    %3037 = vmatpush1.msra.mxu0 0.0
    %3038 = vmatprep.subr.mxu0 0.0
    %3039 = vmatpush1.msra.mxu0 0.0
    %3040 = vmatprep.subr.mxu0 0.0
    %3041 = vmatpush1.msra.mxu0 0.0
    %3042 = vmatprep.subr.mxu0 0.0
    %3043 = vmatpush1.msra.mxu0 0.0
    %3044 = vmatprep.subr.mxu0 0.0
    %3045 = vmatpush1.msra.mxu0 0.0
    %3046 = vmatprep.subr.mxu0 0.0
    %3047 = vmatpush1.msra.mxu0 0.0
    %3048 = vmatprep.subr.mxu0 0.0
    %3049 = vmatpush1.msra.mxu0 0.0
    %3050 = vmatprep.subr.mxu0 0.0
    %3051 = vmatpush1.msra.mxu0 0.0
    %3052 = vmatprep.mubr.f32.mxu0 0.0
    %3053 = vmatmul.mubr.f32.gmra.mrb[0].mxu0 %v2983
    %v3054 = vpop.f32.mrb[0].mxu0
    %v3055 = vadd.f32 %v2981, %v3054
    %v3056 = vpop.f32.mrb[0].mxu0
    %3057 = vmatprep.mubr.f32.mxu0 0.0
    %3058 = vmatmul.mubr.f32.gmra.mrb[0].mxu0 %v2986
    %v3059 = vpop.f32.mrb[0].mxu0
    %v3060 = vadd.f32 %v2981, %v3059
    %v3061 = vpop.f32.mrb[0].mxu0
    %3062 = vdwg.mxu0
    %v3063 = vadd.f32 %v160, %v3055
    %v3064 = vadd.f32 %v165, %v3060
    %v3065 = vsel %vm176, %v3063, 0.0
    %3066 = vadd.xlane.f32.xlu0 %v3065
    %v3067 = vpop.xlane.xlu0 %3066
    %v3068 = vsel %vm176, %v3064, 0.0
    %3069 = vadd.xlane.f32.xlu0 %v3068
    %v3070 = vpop.xlane.xlu0 %3069
    %v3071 = vrcp.pop 32.0
    %v3072 = vmul.f32 %v3067, %v3071
    %v3073 = vmul.f32 %v3070, %v3071
    %v3074 = vsub.f32 %v3063, %v3072
    %v3075 = vsub.f32 %v3064, %v3073
    %v3076 = vmul.f32 %v3074, %v3074
    %v3077 = vmul.f32 %v3075, %v3075
    %v3078 = vsel %vm176, %v3076, 0.0
    %3079 = vadd.xlane.f32.xlu0 %v3078
    %v3080 = vpop.xlane.xlu0 %3079
    %v3081 = vsel %vm176, %v3077, 0.0
    %3082 = vadd.xlane.f32.xlu0 %v3081
    %v3083 = vpop.xlane.xlu0 %3082
    %v3084 = vmul.f32 %v3080, %v3071
    %v3085 = vmul.f32 %v3083, %v3071
    %v3086 = vadd.f32 %v3084, 1e-05
    %v3087 = vadd.f32 %v3085, 1e-05
    %v3088 = vrsqrt.pop %v3086
    %v3089 = vrsqrt.pop %v3087
    %v3090 = vmul.f32 %v3074, %v3088
    %v3091 = vmul.f32 %v3075, %v3089
    %v3092 = vlaneseq
    %v3093 = vshrl.u32 %v3092, 7
    %v3094 = vsub.s32 4, %v3093
    %v3095 = vrot.slane %v21, %v3094
    %v3096 = vmul.f32 %v3090, %v3095
    %v3097 = vmul.f32 %v3091, %v3095
    %v3098 = vlaneseq
    %v3099 = vshrl.u32 %v3098, 7
    %v3100 = vsub.s32 6, %v3099
    %v3101 = vrot.slane %v21, %v3100
    %v3102 = vadd.f32 %v3096, %v3101
    %v3103 = vadd.f32 %v3097, %v3101
    %s3104 = scalar_lea.vmem %s1, 128
    %v3105 = vld [vmem:[%s3104] sm:$0xff]
    %v3106 = vld [vmem:[%s3104 + $0x8] sm:$0xff]
    %v3107 = vld [vmem:[%s3104 + $0x10] sm:$0xff]
    %v3108 = vld [vmem:[%s3104 + $0x18] sm:$0xff]
    %v3109 = vlaneseq
    %v3110 = vshrl.u32 %v3109, 7
    %v3111 = vsub.s32 4, %v3110
    %v3112 = vrot.slane %v22, %v3111
    %v3114 = vsel %vm176, %v3102, 0
    %v3117 = vsel %vm176, %v3103, 0
    %3119 = vmatprep.subr.mxu0 0.0
    %3120 = vmatpush1.msra.mxu0 %v3105
    %3121 = vmatprep.subr.mxu0 0.0
    %3122 = vmatpush1.msra.mxu0 %v3106
    %3123 = vmatprep.subr.mxu0 0.0
    %3124 = vmatpush1.msra.mxu0 %v3107
    %3125 = vmatprep.subr.mxu0 0.0
    %3126 = vmatpush1.msra.mxu0 %v3108
    %3127 = vmatprep.subr.mxu0 0.0
    %3128 = vmatpush1.msra.mxu0 0.0
    %3129 = vmatprep.subr.mxu0 0.0
    %3130 = vmatpush1.msra.mxu0 0.0
    %3131 = vmatprep.subr.mxu0 0.0
    %3132 = vmatpush1.msra.mxu0 0.0
    %3133 = vmatprep.subr.mxu0 0.0
    %3134 = vmatpush1.msra.mxu0 0.0
    %3135 = vmatprep.subr.mxu0 0.0
    %3136 = vmatpush1.msra.mxu0 0.0
    %3137 = vmatprep.subr.mxu0 0.0
    %3138 = vmatpush1.msra.mxu0 0.0
    %3139 = vmatprep.subr.mxu0 0.0
    %3140 = vmatpush1.msra.mxu0 0.0
    %3141 = vmatprep.subr.mxu0 0.0
    %3142 = vmatpush1.msra.mxu0 0.0
    %3143 = vmatprep.subr.mxu0 0.0
    %3144 = vmatpush1.msra.mxu0 0.0
    %3145 = vmatprep.subr.mxu0 0.0
    %3146 = vmatpush1.msra.mxu0 0.0
    %3147 = vmatprep.subr.mxu0 0.0
    %3148 = vmatpush1.msra.mxu0 0.0
    %3149 = vmatprep.subr.mxu0 0.0
    %3150 = vmatpush1.msra.mxu0 0.0
    %3151 = vmatprep.subr.mxu0 0.0
    %3152 = vmatpush1.msra.mxu0 0.0
    %3153 = vmatprep.subr.mxu0 0.0
    %3154 = vmatpush1.msra.mxu0 0.0
    %3155 = vmatprep.subr.mxu0 0.0
    %3156 = vmatpush1.msra.mxu0 0.0
    %3157 = vmatprep.subr.mxu0 0.0
    %3158 = vmatpush1.msra.mxu0 0.0
    %3159 = vmatprep.subr.mxu0 0.0
    %3160 = vmatpush1.msra.mxu0 0.0
    %3161 = vmatprep.subr.mxu0 0.0
    %3162 = vmatpush1.msra.mxu0 0.0
    %3163 = vmatprep.subr.mxu0 0.0
    %3164 = vmatpush1.msra.mxu0 0.0
    %3165 = vmatprep.subr.mxu0 0.0
    %3166 = vmatpush1.msra.mxu0 0.0
    %3167 = vmatprep.subr.mxu0 0.0
    %3168 = vmatpush1.msra.mxu0 0.0
    %3169 = vmatprep.subr.mxu0 0.0
    %3170 = vmatpush1.msra.mxu0 0.0
    %3171 = vmatprep.subr.mxu0 0.0
    %3172 = vmatpush1.msra.mxu0 0.0
    %3173 = vmatprep.subr.mxu0 0.0
    %3174 = vmatpush1.msra.mxu0 0.0
    %3175 = vmatprep.subr.mxu0 0.0
    %3176 = vmatpush1.msra.mxu0 0.0
    %3177 = vmatprep.subr.mxu0 0.0
    %3178 = vmatpush1.msra.mxu0 0.0
    %3179 = vmatprep.subr.mxu0 0.0
    %3180 = vmatpush1.msra.mxu0 0.0
    %3181 = vmatprep.subr.mxu0 0.0
    %3182 = vmatpush1.msra.mxu0 0.0
    %3183 = vmatprep.mubr.f32.mxu0 0.0
    %3184 = vmatmul.mubr.f32.gmra.mrb[0].mxu0 %v3114
    %v3185 = vpop.f32.mrb[0].mxu0
    %v3186 = vadd.f32 %v3112, %v3185
    %v3187 = vpop.f32.mrb[0].mxu0
    %3188 = vmatprep.mubr.f32.mxu0 0.0
    %3189 = vmatmul.mubr.f32.gmra.mrb[0].mxu0 %v3117
    %v3190 = vpop.f32.mrb[0].mxu0
    %v3191 = vadd.f32 %v3112, %v3190
    %v3192 = vpop.f32.mrb[0].mxu0
    %3193 = vdwg.mxu0
    %v3194 = vmax.f32 %v3186, 0.0
    %v3195 = vmax.f32 %v3191, 0.0
    %v3196 = vlaneseq
    %v3197 = vshrl.u32 %v3196, 7
    %v3198 = vsub.s32 6, %v3197
    %v3199 = vrot.slane %v22, %v3198
    %vm3200 = vcmask 523264
    %v3202 = vsel %vm3200, %v3194, 0
    %v3205 = vsel %vm3200, %v3195, 0
    %3207 = vmatprep.subr.mxu0 0.0
    %3208 = vmatpush1.msra.mxu0 %v27
    %3209 = vmatprep.subr.mxu0 0.0
    %3210 = vmatpush1.msra.mxu0 %v28
    %3211 = vmatprep.subr.mxu0 0.0
    %3212 = vmatpush1.msra.mxu0 %v29
    %3213 = vmatprep.subr.mxu0 0.0
    %3214 = vmatpush1.msra.mxu0 %v30
    %3215 = vmatprep.subr.mxu0 0.0
    %3216 = vmatpush1.msra.mxu0 %v31
    %3217 = vmatprep.subr.mxu0 0.0
    %3218 = vmatpush1.msra.mxu0 %v32
    %3219 = vmatprep.subr.mxu0 0.0
    %3220 = vmatpush1.msra.mxu0 %v33
    %3221 = vmatprep.subr.mxu0 0.0
    %3222 = vmatpush1.msra.mxu0 %v34
    %3223 = vmatprep.subr.mxu0 0.0
    %3224 = vmatpush1.msra.mxu0 0.0
    %3225 = vmatprep.subr.mxu0 0.0
    %3226 = vmatpush1.msra.mxu0 0.0
    %3227 = vmatprep.subr.mxu0 0.0
    %3228 = vmatpush1.msra.mxu0 0.0
    %3229 = vmatprep.subr.mxu0 0.0
    %3230 = vmatpush1.msra.mxu0 0.0
    %3231 = vmatprep.subr.mxu0 0.0
    %3232 = vmatpush1.msra.mxu0 0.0
    %3233 = vmatprep.subr.mxu0 0.0
    %3234 = vmatpush1.msra.mxu0 0.0
    %3235 = vmatprep.subr.mxu0 0.0
    %3236 = vmatpush1.msra.mxu0 0.0
    %3237 = vmatprep.subr.mxu0 0.0
    %3238 = vmatpush1.msra.mxu0 0.0
    %3239 = vmatprep.subr.mxu0 0.0
    %3240 = vmatpush1.msra.mxu0 0.0
    %3241 = vmatprep.subr.mxu0 0.0
    %3242 = vmatpush1.msra.mxu0 0.0
    %3243 = vmatprep.subr.mxu0 0.0
    %3244 = vmatpush1.msra.mxu0 0.0
    %3245 = vmatprep.subr.mxu0 0.0
    %3246 = vmatpush1.msra.mxu0 0.0
    %3247 = vmatprep.subr.mxu0 0.0
    %3248 = vmatpush1.msra.mxu0 0.0
    %3249 = vmatprep.subr.mxu0 0.0
    %3250 = vmatpush1.msra.mxu0 0.0
    %3251 = vmatprep.subr.mxu0 0.0
    %3252 = vmatpush1.msra.mxu0 0.0
    %3253 = vmatprep.subr.mxu0 0.0
    %3254 = vmatpush1.msra.mxu0 0.0
    %3255 = vmatprep.subr.mxu0 0.0
    %3256 = vmatpush1.msra.mxu0 0.0
    %3257 = vmatprep.subr.mxu0 0.0
    %3258 = vmatpush1.msra.mxu0 0.0
    %3259 = vmatprep.subr.mxu0 0.0
    %3260 = vmatpush1.msra.mxu0 0.0
    %3261 = vmatprep.subr.mxu0 0.0
    %3262 = vmatpush1.msra.mxu0 0.0
    %3263 = vmatprep.subr.mxu0 0.0
    %3264 = vmatpush1.msra.mxu0 0.0
    %3265 = vmatprep.subr.mxu0 0.0
    %3266 = vmatpush1.msra.mxu0 0.0
    %3267 = vmatprep.subr.mxu0 0.0
    %3268 = vmatpush1.msra.mxu0 0.0
    %3269 = vmatprep.subr.mxu0 0.0
    %3270 = vmatpush1.msra.mxu0 0.0
    %3271 = vmatprep.mubr.f32.mxu0 0.0
    %3272 = vmatmul.mubr.f32.gmra.mrb[0].mxu0 %v3202
    %v3273 = vpop.f32.mrb[0].mxu0
    %v3274 = vadd.f32 %v3199, %v3273
    %v3275 = vpop.f32.mrb[0].mxu0
    %3276 = vmatprep.mubr.f32.mxu0 0.0
    %3277 = vmatmul.mubr.f32.gmra.mrb[0].mxu0 %v3205
    %v3278 = vpop.f32.mrb[0].mxu0
    %v3279 = vadd.f32 %v3199, %v3278
    %v3280 = vpop.f32.mrb[0].mxu0
    %3281 = vdwg.mxu0
    %v3282 = vadd.f32 %v3102, %v3274
    %v3283 = vadd.f32 %v3103, %v3279
    %v3284 = vsel %vm176, %v3282, 0.0
    %3285 = vadd.xlane.f32.xlu0 %v3284
    %v3286 = vpop.xlane.xlu0 %3285
    %v3287 = vsel %vm176, %v3283, 0.0
    %3288 = vadd.xlane.f32.xlu0 %v3287
    %v3289 = vpop.xlane.xlu0 %3288
    %v3290 = vmul.f32 %v3286, %v3071
    %v3291 = vmul.f32 %v3289, %v3071
    %v3292 = vsub.f32 %v3282, %v3290
    %v3293 = vsub.f32 %v3283, %v3291
    %v3294 = vmul.f32 %v3292, %v3292
    %v3295 = vmul.f32 %v3293, %v3293
    %v3296 = vsel %vm176, %v3294, 0.0
    %3297 = vadd.xlane.f32.xlu0 %v3296
    %v3298 = vpop.xlane.xlu0 %3297
    %v3299 = vsel %vm176, %v3295, 0.0
    %3300 = vadd.xlane.f32.xlu0 %v3299
    %v3301 = vpop.xlane.xlu0 %3300
    %v3302 = vmul.f32 %v3298, %v3071
    %v3303 = vmul.f32 %v3301, %v3071
    %v3304 = vadd.f32 %v3302, 1e-05
    %v3305 = vadd.f32 %v3303, 1e-05
    %v3306 = vrsqrt.pop %v3304
    %v3307 = vrsqrt.pop %v3305
    %v3308 = vmul.f32 %v3292, %v3306
    %v3309 = vmul.f32 %v3293, %v3307
    %v3310 = vlaneseq
    %v3311 = vshrl.u32 %v3310, 7
    %v3312 = vsub.s32 0, %v3311
    %v3313 = vrot.slane %v22, %v3312
    %v3314 = vmul.f32 %v3308, %v3313
    %v3315 = vmul.f32 %v3309, %v3313
    %v3316 = vlaneseq
    %v3317 = vshrl.u32 %v3316, 7
    %v3318 = vsub.s32 2, %v3317
    %v3319 = vrot.slane %v22, %v3318
    %v3320 = vadd.f32 %v3314, %v3319
    %v3321 = vadd.f32 %v3315, %v3319
    %s3322 = scalar_lea.vmem %s1, 32
    %v3323 = vld [vmem:[%s3322] sm:$0xff]
    %v3324 = vld [vmem:[%s3322 + $0x8] sm:$0xff]
    %v3325 = vld [vmem:[%s3322 + $0x10] sm:$0xff]
    %v3326 = vld [vmem:[%s3322 + $0x18] sm:$0xff]
    %v3327 = vlaneseq
    %v3328 = vshrl.u32 %v3327, 7
    %v3329 = vsub.s32 1, %v3328
    %v3330 = vrot.slane %v21, %v3329
    %v3332 = vsel %vm176, %v3320, 0
    %v3335 = vsel %vm176, %v3321, 0
    %3337 = vmatprep.subr.mxu0 0.0
    %3338 = vmatpush1.msra.mxu0 %v3323
    %3339 = vmatprep.subr.mxu0 0.0
    %3340 = vmatpush1.msra.mxu0 %v3324
    %3341 = vmatprep.subr.mxu0 0.0
    %3342 = vmatpush1.msra.mxu0 %v3325
    %3343 = vmatprep.subr.mxu0 0.0
    %3344 = vmatpush1.msra.mxu0 %v3326
    %3345 = vmatprep.subr.mxu0 0.0
    %3346 = vmatpush1.msra.mxu0 0.0
    %3347 = vmatprep.subr.mxu0 0.0
    %3348 = vmatpush1.msra.mxu0 0.0
    %3349 = vmatprep.subr.mxu0 0.0
    %3350 = vmatpush1.msra.mxu0 0.0
    %3351 = vmatprep.subr.mxu0 0.0
    %3352 = vmatpush1.msra.mxu0 0.0
    %3353 = vmatprep.subr.mxu0 0.0
    %3354 = vmatpush1.msra.mxu0 0.0
    %3355 = vmatprep.subr.mxu0 0.0
    %3356 = vmatpush1.msra.mxu0 0.0
    %3357 = vmatprep.subr.mxu0 0.0
    %3358 = vmatpush1.msra.mxu0 0.0
    %3359 = vmatprep.subr.mxu0 0.0
    %3360 = vmatpush1.msra.mxu0 0.0
    %3361 = vmatprep.subr.mxu0 0.0
    %3362 = vmatpush1.msra.mxu0 0.0
    %3363 = vmatprep.subr.mxu0 0.0
    %3364 = vmatpush1.msra.mxu0 0.0
    %3365 = vmatprep.subr.mxu0 0.0
    %3366 = vmatpush1.msra.mxu0 0.0
    %3367 = vmatprep.subr.mxu0 0.0
    %3368 = vmatpush1.msra.mxu0 0.0
    %3369 = vmatprep.subr.mxu0 0.0
    %3370 = vmatpush1.msra.mxu0 0.0
    %3371 = vmatprep.subr.mxu0 0.0
    %3372 = vmatpush1.msra.mxu0 0.0
    %3373 = vmatprep.subr.mxu0 0.0
    %3374 = vmatpush1.msra.mxu0 0.0
    %3375 = vmatprep.subr.mxu0 0.0
    %3376 = vmatpush1.msra.mxu0 0.0
    %3377 = vmatprep.subr.mxu0 0.0
    %3378 = vmatpush1.msra.mxu0 0.0
    %3379 = vmatprep.subr.mxu0 0.0
    %3380 = vmatpush1.msra.mxu0 0.0
    %3381 = vmatprep.subr.mxu0 0.0
    %3382 = vmatpush1.msra.mxu0 0.0
    %3383 = vmatprep.subr.mxu0 0.0
    %3384 = vmatpush1.msra.mxu0 0.0
    %3385 = vmatprep.subr.mxu0 0.0
    %3386 = vmatpush1.msra.mxu0 0.0
    %3387 = vmatprep.subr.mxu0 0.0
    %3388 = vmatpush1.msra.mxu0 0.0
    %3389 = vmatprep.subr.mxu0 0.0
    %3390 = vmatpush1.msra.mxu0 0.0
    %3391 = vmatprep.subr.mxu0 0.0
    %3392 = vmatpush1.msra.mxu0 0.0
    %3393 = vmatprep.subr.mxu0 0.0
    %3394 = vmatpush1.msra.mxu0 0.0
    %3395 = vmatprep.subr.mxu0 0.0
    %3396 = vmatpush1.msra.mxu0 0.0
    %3397 = vmatprep.subr.mxu0 0.0
    %3398 = vmatpush1.msra.mxu0 0.0
    %3399 = vmatprep.subr.mxu0 0.0
    %3400 = vmatpush1.msra.mxu0 0.0
    %3401 = vmatprep.mubr.f32.mxu0 0.0
    %3402 = vmatmul.mubr.f32.gmra.mrb[0].mxu0 %v3332
    %v3403 = vpop.f32.mrb[0].mxu0
    %v3404 = vadd.f32 %v3330, %v3403
    %v3405 = vpop.f32.mrb[0].mxu0
    %3406 = vmatprep.mubr.f32.mxu0 0.0
    %3407 = vmatmul.mubr.f32.gmra.mrb[0].mxu0 %v3335
    %v3408 = vpop.f32.mrb[0].mxu0
    %v3409 = vadd.f32 %v3330, %v3408
    %v3410 = vpop.f32.mrb[0].mxu0
    %3411 = vdwg.mxu0
    %3413 = vrot.lane.b32.xlu0 %v3404, 96
    %v3414 = vpop.permute.xlu0 %3413
    %v3415 = vsel %vm261, %v3404, 0
    %v3417 = vsel %vm261, %v3414, 0
    %3419 = vmatprep.subr.mxu0 0.0
    %3420 = vmatpush1.xpose.msra.mxu0 %v3417
    %3421 = vmatprep.subr.mxu0 0.0
    %3422 = vmatpush1.xpose.msra.mxu0 0.0
    %3423 = vmatprep.subr.mxu0 0.0
    %3424 = vmatpush1.xpose.msra.mxu0 0.0
    %3425 = vmatprep.subr.mxu0 0.0
    %3426 = vmatpush1.xpose.msra.mxu0 0.0
    %3427 = vmatprep.subr.mxu0 0.0
    %3428 = vmatpush1.xpose.msra.mxu0 0.0
    %3429 = vmatprep.subr.mxu0 0.0
    %3430 = vmatpush1.xpose.msra.mxu0 0.0
    %3431 = vmatprep.subr.mxu0 0.0
    %3432 = vmatpush1.xpose.msra.mxu0 0.0
    %3433 = vmatprep.subr.mxu0 0.0
    %3434 = vmatpush1.xpose.msra.mxu0 0.0
    %3435 = vmatprep.subr.mxu0 0.0
    %3436 = vmatpush1.xpose.msra.mxu0 0.0
    %3437 = vmatprep.subr.mxu0 0.0
    %3438 = vmatpush1.xpose.msra.mxu0 0.0
    %3439 = vmatprep.subr.mxu0 0.0
    %3440 = vmatpush1.xpose.msra.mxu0 0.0
    %3441 = vmatprep.subr.mxu0 0.0
    %3442 = vmatpush1.xpose.msra.mxu0 0.0
    %3443 = vmatprep.subr.mxu0 0.0
    %3444 = vmatpush1.xpose.msra.mxu0 0.0
    %3445 = vmatprep.subr.mxu0 0.0
    %3446 = vmatpush1.xpose.msra.mxu0 0.0
    %3447 = vmatprep.subr.mxu0 0.0
    %3448 = vmatpush1.xpose.msra.mxu0 0.0
    %3449 = vmatprep.subr.mxu0 0.0
    %3450 = vmatpush1.xpose.msra.mxu0 0.0
    %3451 = vmatprep.subr.mxu0 0.0
    %3452 = vmatpush1.xpose.msra.mxu0 0.0
    %3453 = vmatprep.subr.mxu0 0.0
    %3454 = vmatpush1.xpose.msra.mxu0 0.0
    %3455 = vmatprep.subr.mxu0 0.0
    %3456 = vmatpush1.xpose.msra.mxu0 0.0
    %3457 = vmatprep.subr.mxu0 0.0
    %3458 = vmatpush1.xpose.msra.mxu0 0.0
    %3459 = vmatprep.subr.mxu0 0.0
    %3460 = vmatpush1.xpose.msra.mxu0 0.0
    %3461 = vmatprep.subr.mxu0 0.0
    %3462 = vmatpush1.xpose.msra.mxu0 0.0
    %3463 = vmatprep.subr.mxu0 0.0
    %3464 = vmatpush1.xpose.msra.mxu0 0.0
    %3465 = vmatprep.subr.mxu0 0.0
    %3466 = vmatpush1.xpose.msra.mxu0 0.0
    %3467 = vmatprep.subr.mxu0 0.0
    %3468 = vmatpush1.xpose.msra.mxu0 0.0
    %3469 = vmatprep.subr.mxu0 0.0
    %3470 = vmatpush1.xpose.msra.mxu0 0.0
    %3471 = vmatprep.subr.mxu0 0.0
    %3472 = vmatpush1.xpose.msra.mxu0 0.0
    %3473 = vmatprep.subr.mxu0 0.0
    %3474 = vmatpush1.xpose.msra.mxu0 0.0
    %3475 = vmatprep.subr.mxu0 0.0
    %3476 = vmatpush1.xpose.msra.mxu0 0.0
    %3477 = vmatprep.subr.mxu0 0.0
    %3478 = vmatpush1.xpose.msra.mxu0 0.0
    %3479 = vmatprep.subr.mxu0 0.0
    %3480 = vmatpush1.xpose.msra.mxu0 0.0
    %3481 = vmatprep.subr.mxu0 0.0
    %3482 = vmatpush1.xpose.msra.mxu0 0.0
    %3483 = vmatprep.mubr.f32.mxu0 0.0
    %3484 = vmatmul.mubr.f32.gmra.mrb[0].mxu0 %v3415
    %v3485 = vpop.f32.mrb[0].mxu0
    %v3486 = vadd.f32 0.0, %v3485
    %v3487 = vpop.f32.mrb[0].mxu0
    %3488 = vdwg.mxu0
    %v3489 = vsel %vm336, %v3486, -inf
    %3490 = vmax.xlane.f32.xlu0 %v3489
    %v3491 = vpop.xlane.xlu0 %3490
    %v3492 = vsub.f32 %v3486, %v3491
    %v3493 = vmul.f32 %v3492, 1.442695
    %v3494 = vpow.pop %v3493
    %v3495 = vsel %vm336, %v3494, 0.0
    %3496 = vadd.xlane.f32.xlu0 %v3495
    %v3497 = vpop.xlane.xlu0 %3496
    %v3498 = vrcp.pop %v3497
    %v3499 = vmul.f32 %v3494, %v3498
    %3500 = vrot.lane.b32.xlu0 %v3404, 64
    %v3501 = vpop.permute.xlu0 %3500
    %v3504 = vsel %vm336, %v3499, 0
    %3506 = vmatprep.subr.mxu0 0.0
    %3507 = vmatpush1.msra.mxu0 %v3501
    %3508 = vmatprep.subr.mxu0 0.0
    %3509 = vmatpush1.msra.mxu0 0.0
    %3510 = vmatprep.subr.mxu0 0.0
    %3511 = vmatpush1.msra.mxu0 0.0
    %3512 = vmatprep.subr.mxu0 0.0
    %3513 = vmatpush1.msra.mxu0 0.0
    %3514 = vmatprep.subr.mxu0 0.0
    %3515 = vmatpush1.msra.mxu0 0.0
    %3516 = vmatprep.subr.mxu0 0.0
    %3517 = vmatpush1.msra.mxu0 0.0
    %3518 = vmatprep.subr.mxu0 0.0
    %3519 = vmatpush1.msra.mxu0 0.0
    %3520 = vmatprep.subr.mxu0 0.0
    %3521 = vmatpush1.msra.mxu0 0.0
    %3522 = vmatprep.subr.mxu0 0.0
    %3523 = vmatpush1.msra.mxu0 0.0
    %3524 = vmatprep.subr.mxu0 0.0
    %3525 = vmatpush1.msra.mxu0 0.0
    %3526 = vmatprep.subr.mxu0 0.0
    %3527 = vmatpush1.msra.mxu0 0.0
    %3528 = vmatprep.subr.mxu0 0.0
    %3529 = vmatpush1.msra.mxu0 0.0
    %3530 = vmatprep.subr.mxu0 0.0
    %3531 = vmatpush1.msra.mxu0 0.0
    %3532 = vmatprep.subr.mxu0 0.0
    %3533 = vmatpush1.msra.mxu0 0.0
    %3534 = vmatprep.subr.mxu0 0.0
    %3535 = vmatpush1.msra.mxu0 0.0
    %3536 = vmatprep.subr.mxu0 0.0
    %3537 = vmatpush1.msra.mxu0 0.0
    %3538 = vmatprep.subr.mxu0 0.0
    %3539 = vmatpush1.msra.mxu0 0.0
    %3540 = vmatprep.subr.mxu0 0.0
    %3541 = vmatpush1.msra.mxu0 0.0
    %3542 = vmatprep.subr.mxu0 0.0
    %3543 = vmatpush1.msra.mxu0 0.0
    %3544 = vmatprep.subr.mxu0 0.0
    %3545 = vmatpush1.msra.mxu0 0.0
    %3546 = vmatprep.subr.mxu0 0.0
    %3547 = vmatpush1.msra.mxu0 0.0
    %3548 = vmatprep.subr.mxu0 0.0
    %3549 = vmatpush1.msra.mxu0 0.0
    %3550 = vmatprep.subr.mxu0 0.0
    %3551 = vmatpush1.msra.mxu0 0.0
    %3552 = vmatprep.subr.mxu0 0.0
    %3553 = vmatpush1.msra.mxu0 0.0
    %3554 = vmatprep.subr.mxu0 0.0
    %3555 = vmatpush1.msra.mxu0 0.0
    %3556 = vmatprep.subr.mxu0 0.0
    %3557 = vmatpush1.msra.mxu0 0.0
    %3558 = vmatprep.subr.mxu0 0.0
    %3559 = vmatpush1.msra.mxu0 0.0
    %3560 = vmatprep.subr.mxu0 0.0
    %3561 = vmatpush1.msra.mxu0 0.0
    %3562 = vmatprep.subr.mxu0 0.0
    %3563 = vmatpush1.msra.mxu0 0.0
    %3564 = vmatprep.subr.mxu0 0.0
    %3565 = vmatpush1.msra.mxu0 0.0
    %3566 = vmatprep.subr.mxu0 0.0
    %3567 = vmatpush1.msra.mxu0 0.0
    %3568 = vmatprep.subr.mxu0 0.0
    %3569 = vmatpush1.msra.mxu0 0.0
    %3570 = vmatprep.mubr.f32.mxu0 0.0
    %3571 = vmatmul.mubr.f32.gmra.mrb[0].mxu0 %v3504
    %v3572 = vpop.f32.mrb[0].mxu0
    %v3573 = vadd.f32 0.0, %v3572
    %v3574 = vpop.f32.mrb[0].mxu0
    %3575 = vdwg.mxu0
    %3576 = vrot.lane.b32.xlu0 %v3404, 124
    %v3577 = vpop.permute.xlu0 %3576
    %3578 = vrot.lane.b32.xlu0 %v3404, 92
    %v3579 = vpop.permute.xlu0 %3578
    %v3580 = vsel %vm261, %v3577, 0
    %v3582 = vsel %vm261, %v3579, 0
    %3584 = vmatprep.subr.mxu0 0.0
    %3585 = vmatpush1.xpose.msra.mxu0 %v3582
    %3586 = vmatprep.subr.mxu0 0.0
    %3587 = vmatpush1.xpose.msra.mxu0 0.0
    %3588 = vmatprep.subr.mxu0 0.0
    %3589 = vmatpush1.xpose.msra.mxu0 0.0
    %3590 = vmatprep.subr.mxu0 0.0
    %3591 = vmatpush1.xpose.msra.mxu0 0.0
    %3592 = vmatprep.subr.mxu0 0.0
    %3593 = vmatpush1.xpose.msra.mxu0 0.0
    %3594 = vmatprep.subr.mxu0 0.0
    %3595 = vmatpush1.xpose.msra.mxu0 0.0
    %3596 = vmatprep.subr.mxu0 0.0
    %3597 = vmatpush1.xpose.msra.mxu0 0.0
    %3598 = vmatprep.subr.mxu0 0.0
    %3599 = vmatpush1.xpose.msra.mxu0 0.0
    %3600 = vmatprep.subr.mxu0 0.0
    %3601 = vmatpush1.xpose.msra.mxu0 0.0
    %3602 = vmatprep.subr.mxu0 0.0
    %3603 = vmatpush1.xpose.msra.mxu0 0.0
    %3604 = vmatprep.subr.mxu0 0.0
    %3605 = vmatpush1.xpose.msra.mxu0 0.0
    %3606 = vmatprep.subr.mxu0 0.0
    %3607 = vmatpush1.xpose.msra.mxu0 0.0
    %3608 = vmatprep.subr.mxu0 0.0
    %3609 = vmatpush1.xpose.msra.mxu0 0.0
    %3610 = vmatprep.subr.mxu0 0.0
    %3611 = vmatpush1.xpose.msra.mxu0 0.0
    %3612 = vmatprep.subr.mxu0 0.0
    %3613 = vmatpush1.xpose.msra.mxu0 0.0
    %3614 = vmatprep.subr.mxu0 0.0
    %3615 = vmatpush1.xpose.msra.mxu0 0.0
    %3616 = vmatprep.subr.mxu0 0.0
    %3617 = vmatpush1.xpose.msra.mxu0 0.0
    %3618 = vmatprep.subr.mxu0 0.0
    %3619 = vmatpush1.xpose.msra.mxu0 0.0
    %3620 = vmatprep.subr.mxu0 0.0
    %3621 = vmatpush1.xpose.msra.mxu0 0.0
    %3622 = vmatprep.subr.mxu0 0.0
    %3623 = vmatpush1.xpose.msra.mxu0 0.0
    %3624 = vmatprep.subr.mxu0 0.0
    %3625 = vmatpush1.xpose.msra.mxu0 0.0
    %3626 = vmatprep.subr.mxu0 0.0
    %3627 = vmatpush1.xpose.msra.mxu0 0.0
    %3628 = vmatprep.subr.mxu0 0.0
    %3629 = vmatpush1.xpose.msra.mxu0 0.0
    %3630 = vmatprep.subr.mxu0 0.0
    %3631 = vmatpush1.xpose.msra.mxu0 0.0
    %3632 = vmatprep.subr.mxu0 0.0
    %3633 = vmatpush1.xpose.msra.mxu0 0.0
    %3634 = vmatprep.subr.mxu0 0.0
    %3635 = vmatpush1.xpose.msra.mxu0 0.0
    %3636 = vmatprep.subr.mxu0 0.0
    %3637 = vmatpush1.xpose.msra.mxu0 0.0
    %3638 = vmatprep.subr.mxu0 0.0
    %3639 = vmatpush1.xpose.msra.mxu0 0.0
    %3640 = vmatprep.subr.mxu0 0.0
    %3641 = vmatpush1.xpose.msra.mxu0 0.0
    %3642 = vmatprep.subr.mxu0 0.0
    %3643 = vmatpush1.xpose.msra.mxu0 0.0
    %3644 = vmatprep.subr.mxu0 0.0
    %3645 = vmatpush1.xpose.msra.mxu0 0.0
    %3646 = vmatprep.subr.mxu0 0.0
    %3647 = vmatpush1.xpose.msra.mxu0 0.0
    %3648 = vmatprep.mubr.f32.mxu0 0.0
    %3649 = vmatmul.mubr.f32.gmra.mrb[0].mxu0 %v3580
    %v3650 = vpop.f32.mrb[0].mxu0
    %v3651 = vadd.f32 0.0, %v3650
    %v3652 = vpop.f32.mrb[0].mxu0
    %3653 = vdwg.mxu0
    %v3654 = vsel %vm336, %v3651, -inf
    %3655 = vmax.xlane.f32.xlu0 %v3654
    %v3656 = vpop.xlane.xlu0 %3655
    %v3657 = vsub.f32 %v3651, %v3656
    %v3658 = vmul.f32 %v3657, 1.442695
    %v3659 = vpow.pop %v3658
    %v3660 = vsel %vm336, %v3659, 0.0
    %3661 = vadd.xlane.f32.xlu0 %v3660
    %v3662 = vpop.xlane.xlu0 %3661
    %v3663 = vrcp.pop %v3662
    %v3664 = vmul.f32 %v3659, %v3663
    %3665 = vrot.lane.b32.xlu0 %v3404, 60
    %v3666 = vpop.permute.xlu0 %3665
    %v3669 = vsel %vm336, %v3664, 0
    %3671 = vmatprep.subr.mxu0 0.0
    %3672 = vmatpush1.msra.mxu0 %v3666
    %3673 = vmatprep.subr.mxu0 0.0
    %3674 = vmatpush1.msra.mxu0 0.0
    %3675 = vmatprep.subr.mxu0 0.0
    %3676 = vmatpush1.msra.mxu0 0.0
    %3677 = vmatprep.subr.mxu0 0.0
    %3678 = vmatpush1.msra.mxu0 0.0
    %3679 = vmatprep.subr.mxu0 0.0
    %3680 = vmatpush1.msra.mxu0 0.0
    %3681 = vmatprep.subr.mxu0 0.0
    %3682 = vmatpush1.msra.mxu0 0.0
    %3683 = vmatprep.subr.mxu0 0.0
    %3684 = vmatpush1.msra.mxu0 0.0
    %3685 = vmatprep.subr.mxu0 0.0
    %3686 = vmatpush1.msra.mxu0 0.0
    %3687 = vmatprep.subr.mxu0 0.0
    %3688 = vmatpush1.msra.mxu0 0.0
    %3689 = vmatprep.subr.mxu0 0.0
    %3690 = vmatpush1.msra.mxu0 0.0
    %3691 = vmatprep.subr.mxu0 0.0
    %3692 = vmatpush1.msra.mxu0 0.0
    %3693 = vmatprep.subr.mxu0 0.0
    %3694 = vmatpush1.msra.mxu0 0.0
    %3695 = vmatprep.subr.mxu0 0.0
    %3696 = vmatpush1.msra.mxu0 0.0
    %3697 = vmatprep.subr.mxu0 0.0
    %3698 = vmatpush1.msra.mxu0 0.0
    %3699 = vmatprep.subr.mxu0 0.0
    %3700 = vmatpush1.msra.mxu0 0.0
    %3701 = vmatprep.subr.mxu0 0.0
    %3702 = vmatpush1.msra.mxu0 0.0
    %3703 = vmatprep.subr.mxu0 0.0
    %3704 = vmatpush1.msra.mxu0 0.0
    %3705 = vmatprep.subr.mxu0 0.0
    %3706 = vmatpush1.msra.mxu0 0.0
    %3707 = vmatprep.subr.mxu0 0.0
    %3708 = vmatpush1.msra.mxu0 0.0
    %3709 = vmatprep.subr.mxu0 0.0
    %3710 = vmatpush1.msra.mxu0 0.0
    %3711 = vmatprep.subr.mxu0 0.0
    %3712 = vmatpush1.msra.mxu0 0.0
    %3713 = vmatprep.subr.mxu0 0.0
    %3714 = vmatpush1.msra.mxu0 0.0
    %3715 = vmatprep.subr.mxu0 0.0
    %3716 = vmatpush1.msra.mxu0 0.0
    %3717 = vmatprep.subr.mxu0 0.0
    %3718 = vmatpush1.msra.mxu0 0.0
    %3719 = vmatprep.subr.mxu0 0.0
    %3720 = vmatpush1.msra.mxu0 0.0
    %3721 = vmatprep.subr.mxu0 0.0
    %3722 = vmatpush1.msra.mxu0 0.0
    %3723 = vmatprep.subr.mxu0 0.0
    %3724 = vmatpush1.msra.mxu0 0.0
    %3725 = vmatprep.subr.mxu0 0.0
    %3726 = vmatpush1.msra.mxu0 0.0
    %3727 = vmatprep.subr.mxu0 0.0
    %3728 = vmatpush1.msra.mxu0 0.0
    %3729 = vmatprep.subr.mxu0 0.0
    %3730 = vmatpush1.msra.mxu0 0.0
    %3731 = vmatprep.subr.mxu0 0.0
    %3732 = vmatpush1.msra.mxu0 0.0
    %3733 = vmatprep.subr.mxu0 0.0
    %3734 = vmatpush1.msra.mxu0 0.0
    %3735 = vmatprep.mubr.f32.mxu0 0.0
    %3736 = vmatmul.mubr.f32.gmra.mrb[0].mxu0 %v3669
    %v3737 = vpop.f32.mrb[0].mxu0
    %v3738 = vadd.f32 0.0, %v3737
    %v3739 = vpop.f32.mrb[0].mxu0
    %3740 = vdwg.mxu0
    %3741 = vrot.lane.b32.xlu0 %v3404, 120
    %v3742 = vpop.permute.xlu0 %3741
    %3743 = vrot.lane.b32.xlu0 %v3404, 88
    %v3744 = vpop.permute.xlu0 %3743
    %v3745 = vsel %vm261, %v3742, 0
    %v3747 = vsel %vm261, %v3744, 0
    %3749 = vmatprep.subr.mxu0 0.0
    %3750 = vmatpush1.xpose.msra.mxu0 %v3747
    %3751 = vmatprep.subr.mxu0 0.0
    %3752 = vmatpush1.xpose.msra.mxu0 0.0
    %3753 = vmatprep.subr.mxu0 0.0
    %3754 = vmatpush1.xpose.msra.mxu0 0.0
    %3755 = vmatprep.subr.mxu0 0.0
    %3756 = vmatpush1.xpose.msra.mxu0 0.0
    %3757 = vmatprep.subr.mxu0 0.0
    %3758 = vmatpush1.xpose.msra.mxu0 0.0
    %3759 = vmatprep.subr.mxu0 0.0
    %3760 = vmatpush1.xpose.msra.mxu0 0.0
    %3761 = vmatprep.subr.mxu0 0.0
    %3762 = vmatpush1.xpose.msra.mxu0 0.0
    %3763 = vmatprep.subr.mxu0 0.0
    %3764 = vmatpush1.xpose.msra.mxu0 0.0
    %3765 = vmatprep.subr.mxu0 0.0
    %3766 = vmatpush1.xpose.msra.mxu0 0.0
    %3767 = vmatprep.subr.mxu0 0.0
    %3768 = vmatpush1.xpose.msra.mxu0 0.0
    %3769 = vmatprep.subr.mxu0 0.0
    %3770 = vmatpush1.xpose.msra.mxu0 0.0
    %3771 = vmatprep.subr.mxu0 0.0
    %3772 = vmatpush1.xpose.msra.mxu0 0.0
    %3773 = vmatprep.subr.mxu0 0.0
    %3774 = vmatpush1.xpose.msra.mxu0 0.0
    %3775 = vmatprep.subr.mxu0 0.0
    %3776 = vmatpush1.xpose.msra.mxu0 0.0
    %3777 = vmatprep.subr.mxu0 0.0
    %3778 = vmatpush1.xpose.msra.mxu0 0.0
    %3779 = vmatprep.subr.mxu0 0.0
    %3780 = vmatpush1.xpose.msra.mxu0 0.0
    %3781 = vmatprep.subr.mxu0 0.0
    %3782 = vmatpush1.xpose.msra.mxu0 0.0
    %3783 = vmatprep.subr.mxu0 0.0
    %3784 = vmatpush1.xpose.msra.mxu0 0.0
    %3785 = vmatprep.subr.mxu0 0.0
    %3786 = vmatpush1.xpose.msra.mxu0 0.0
    %3787 = vmatprep.subr.mxu0 0.0
    %3788 = vmatpush1.xpose.msra.mxu0 0.0
    %3789 = vmatprep.subr.mxu0 0.0
    %3790 = vmatpush1.xpose.msra.mxu0 0.0
    %3791 = vmatprep.subr.mxu0 0.0
    %3792 = vmatpush1.xpose.msra.mxu0 0.0
    %3793 = vmatprep.subr.mxu0 0.0
    %3794 = vmatpush1.xpose.msra.mxu0 0.0
    %3795 = vmatprep.subr.mxu0 0.0
    %3796 = vmatpush1.xpose.msra.mxu0 0.0
    %3797 = vmatprep.subr.mxu0 0.0
    %3798 = vmatpush1.xpose.msra.mxu0 0.0
    %3799 = vmatprep.subr.mxu0 0.0
    %3800 = vmatpush1.xpose.msra.mxu0 0.0
    %3801 = vmatprep.subr.mxu0 0.0
    %3802 = vmatpush1.xpose.msra.mxu0 0.0
    %3803 = vmatprep.subr.mxu0 0.0
    %3804 = vmatpush1.xpose.msra.mxu0 0.0
    %3805 = vmatprep.subr.mxu0 0.0
    %3806 = vmatpush1.xpose.msra.mxu0 0.0
    %3807 = vmatprep.subr.mxu0 0.0
    %3808 = vmatpush1.xpose.msra.mxu0 0.0
    %3809 = vmatprep.subr.mxu0 0.0
    %3810 = vmatpush1.xpose.msra.mxu0 0.0
    %3811 = vmatprep.subr.mxu0 0.0
    %3812 = vmatpush1.xpose.msra.mxu0 0.0
    %3813 = vmatprep.mubr.f32.mxu0 0.0
    %3814 = vmatmul.mubr.f32.gmra.mrb[0].mxu0 %v3745
    %v3815 = vpop.f32.mrb[0].mxu0
    %v3816 = vadd.f32 0.0, %v3815
    %v3817 = vpop.f32.mrb[0].mxu0
    %3818 = vdwg.mxu0
    %v3819 = vsel %vm336, %v3816, -inf
    %3820 = vmax.xlane.f32.xlu0 %v3819
    %v3821 = vpop.xlane.xlu0 %3820
    %v3822 = vsub.f32 %v3816, %v3821
    %v3823 = vmul.f32 %v3822, 1.442695
    %v3824 = vpow.pop %v3823
    %v3825 = vsel %vm336, %v3824, 0.0
    %3826 = vadd.xlane.f32.xlu0 %v3825
    %v3827 = vpop.xlane.xlu0 %3826
    %v3828 = vrcp.pop %v3827
    %v3829 = vmul.f32 %v3824, %v3828
    %3830 = vrot.lane.b32.xlu0 %v3404, 56
    %v3831 = vpop.permute.xlu0 %3830
    %v3834 = vsel %vm336, %v3829, 0
    %3836 = vmatprep.subr.mxu0 0.0
    %3837 = vmatpush1.msra.mxu0 %v3831
    %3838 = vmatprep.subr.mxu0 0.0
    %3839 = vmatpush1.msra.mxu0 0.0
    %3840 = vmatprep.subr.mxu0 0.0
    %3841 = vmatpush1.msra.mxu0 0.0
    %3842 = vmatprep.subr.mxu0 0.0
    %3843 = vmatpush1.msra.mxu0 0.0
    %3844 = vmatprep.subr.mxu0 0.0
    %3845 = vmatpush1.msra.mxu0 0.0
    %3846 = vmatprep.subr.mxu0 0.0
    %3847 = vmatpush1.msra.mxu0 0.0
    %3848 = vmatprep.subr.mxu0 0.0
    %3849 = vmatpush1.msra.mxu0 0.0
    %3850 = vmatprep.subr.mxu0 0.0
    %3851 = vmatpush1.msra.mxu0 0.0
    %3852 = vmatprep.subr.mxu0 0.0
    %3853 = vmatpush1.msra.mxu0 0.0
    %3854 = vmatprep.subr.mxu0 0.0
    %3855 = vmatpush1.msra.mxu0 0.0
    %3856 = vmatprep.subr.mxu0 0.0
    %3857 = vmatpush1.msra.mxu0 0.0
    %3858 = vmatprep.subr.mxu0 0.0
    %3859 = vmatpush1.msra.mxu0 0.0
    %3860 = vmatprep.subr.mxu0 0.0
    %3861 = vmatpush1.msra.mxu0 0.0
    %3862 = vmatprep.subr.mxu0 0.0
    %3863 = vmatpush1.msra.mxu0 0.0
    %3864 = vmatprep.subr.mxu0 0.0
    %3865 = vmatpush1.msra.mxu0 0.0
    %3866 = vmatprep.subr.mxu0 0.0
    %3867 = vmatpush1.msra.mxu0 0.0
    %3868 = vmatprep.subr.mxu0 0.0
    %3869 = vmatpush1.msra.mxu0 0.0
    %3870 = vmatprep.subr.mxu0 0.0
    %3871 = vmatpush1.msra.mxu0 0.0
    %3872 = vmatprep.subr.mxu0 0.0
    %3873 = vmatpush1.msra.mxu0 0.0
    %3874 = vmatprep.subr.mxu0 0.0
    %3875 = vmatpush1.msra.mxu0 0.0
    %3876 = vmatprep.subr.mxu0 0.0
    %3877 = vmatpush1.msra.mxu0 0.0
    %3878 = vmatprep.subr.mxu0 0.0
    %3879 = vmatpush1.msra.mxu0 0.0
    %3880 = vmatprep.subr.mxu0 0.0
    %3881 = vmatpush1.msra.mxu0 0.0
    %3882 = vmatprep.subr.mxu0 0.0
    %3883 = vmatpush1.msra.mxu0 0.0
    %3884 = vmatprep.subr.mxu0 0.0
    %3885 = vmatpush1.msra.mxu0 0.0
    %3886 = vmatprep.subr.mxu0 0.0
    %3887 = vmatpush1.msra.mxu0 0.0
    %3888 = vmatprep.subr.mxu0 0.0
    %3889 = vmatpush1.msra.mxu0 0.0
    %3890 = vmatprep.subr.mxu0 0.0
    %3891 = vmatpush1.msra.mxu0 0.0
    %3892 = vmatprep.subr.mxu0 0.0
    %3893 = vmatpush1.msra.mxu0 0.0
    %3894 = vmatprep.subr.mxu0 0.0
    %3895 = vmatpush1.msra.mxu0 0.0
    %3896 = vmatprep.subr.mxu0 0.0
    %3897 = vmatpush1.msra.mxu0 0.0
    %3898 = vmatprep.subr.mxu0 0.0
    %3899 = vmatpush1.msra.mxu0 0.0
    %3900 = vmatprep.mubr.f32.mxu0 0.0
    %3901 = vmatmul.mubr.f32.gmra.mrb[0].mxu0 %v3834
    %v3902 = vpop.f32.mrb[0].mxu0
    %v3903 = vadd.f32 0.0, %v3902
    %v3904 = vpop.f32.mrb[0].mxu0
    %3905 = vdwg.mxu0
    %3906 = vrot.lane.b32.xlu0 %v3404, 116
    %v3907 = vpop.permute.xlu0 %3906
    %3908 = vrot.lane.b32.xlu0 %v3404, 84
    %v3909 = vpop.permute.xlu0 %3908
    %v3910 = vsel %vm261, %v3907, 0
    %v3912 = vsel %vm261, %v3909, 0
    %3914 = vmatprep.subr.mxu0 0.0
    %3915 = vmatpush1.xpose.msra.mxu0 %v3912
    %3916 = vmatprep.subr.mxu0 0.0
    %3917 = vmatpush1.xpose.msra.mxu0 0.0
    %3918 = vmatprep.subr.mxu0 0.0
    %3919 = vmatpush1.xpose.msra.mxu0 0.0
    %3920 = vmatprep.subr.mxu0 0.0
    %3921 = vmatpush1.xpose.msra.mxu0 0.0
    %3922 = vmatprep.subr.mxu0 0.0
    %3923 = vmatpush1.xpose.msra.mxu0 0.0
    %3924 = vmatprep.subr.mxu0 0.0
    %3925 = vmatpush1.xpose.msra.mxu0 0.0
    %3926 = vmatprep.subr.mxu0 0.0
    %3927 = vmatpush1.xpose.msra.mxu0 0.0
    %3928 = vmatprep.subr.mxu0 0.0
    %3929 = vmatpush1.xpose.msra.mxu0 0.0
    %3930 = vmatprep.subr.mxu0 0.0
    %3931 = vmatpush1.xpose.msra.mxu0 0.0
    %3932 = vmatprep.subr.mxu0 0.0
    %3933 = vmatpush1.xpose.msra.mxu0 0.0
    %3934 = vmatprep.subr.mxu0 0.0
    %3935 = vmatpush1.xpose.msra.mxu0 0.0
    %3936 = vmatprep.subr.mxu0 0.0
    %3937 = vmatpush1.xpose.msra.mxu0 0.0
    %3938 = vmatprep.subr.mxu0 0.0
    %3939 = vmatpush1.xpose.msra.mxu0 0.0
    %3940 = vmatprep.subr.mxu0 0.0
    %3941 = vmatpush1.xpose.msra.mxu0 0.0
    %3942 = vmatprep.subr.mxu0 0.0
    %3943 = vmatpush1.xpose.msra.mxu0 0.0
    %3944 = vmatprep.subr.mxu0 0.0
    %3945 = vmatpush1.xpose.msra.mxu0 0.0
    %3946 = vmatprep.subr.mxu0 0.0
    %3947 = vmatpush1.xpose.msra.mxu0 0.0
    %3948 = vmatprep.subr.mxu0 0.0
    %3949 = vmatpush1.xpose.msra.mxu0 0.0
    %3950 = vmatprep.subr.mxu0 0.0
    %3951 = vmatpush1.xpose.msra.mxu0 0.0
    %3952 = vmatprep.subr.mxu0 0.0
    %3953 = vmatpush1.xpose.msra.mxu0 0.0
    %3954 = vmatprep.subr.mxu0 0.0
    %3955 = vmatpush1.xpose.msra.mxu0 0.0
    %3956 = vmatprep.subr.mxu0 0.0
    %3957 = vmatpush1.xpose.msra.mxu0 0.0
    %3958 = vmatprep.subr.mxu0 0.0
    %3959 = vmatpush1.xpose.msra.mxu0 0.0
    %3960 = vmatprep.subr.mxu0 0.0
    %3961 = vmatpush1.xpose.msra.mxu0 0.0
    %3962 = vmatprep.subr.mxu0 0.0
    %3963 = vmatpush1.xpose.msra.mxu0 0.0
    %3964 = vmatprep.subr.mxu0 0.0
    %3965 = vmatpush1.xpose.msra.mxu0 0.0
    %3966 = vmatprep.subr.mxu0 0.0
    %3967 = vmatpush1.xpose.msra.mxu0 0.0
    %3968 = vmatprep.subr.mxu0 0.0
    %3969 = vmatpush1.xpose.msra.mxu0 0.0
    %3970 = vmatprep.subr.mxu0 0.0
    %3971 = vmatpush1.xpose.msra.mxu0 0.0
    %3972 = vmatprep.subr.mxu0 0.0
    %3973 = vmatpush1.xpose.msra.mxu0 0.0
    %3974 = vmatprep.subr.mxu0 0.0
    %3975 = vmatpush1.xpose.msra.mxu0 0.0
    %3976 = vmatprep.subr.mxu0 0.0
    %3977 = vmatpush1.xpose.msra.mxu0 0.0
    %3978 = vmatprep.mubr.f32.mxu0 0.0
    %3979 = vmatmul.mubr.f32.gmra.mrb[0].mxu0 %v3910
    %v3980 = vpop.f32.mrb[0].mxu0
    %v3981 = vadd.f32 0.0, %v3980
    %v3982 = vpop.f32.mrb[0].mxu0
    %3983 = vdwg.mxu0
    %v3984 = vsel %vm336, %v3981, -inf
    %3985 = vmax.xlane.f32.xlu0 %v3984
    %v3986 = vpop.xlane.xlu0 %3985
    %v3987 = vsub.f32 %v3981, %v3986
    %v3988 = vmul.f32 %v3987, 1.442695
    %v3989 = vpow.pop %v3988
    %v3990 = vsel %vm336, %v3989, 0.0
    %3991 = vadd.xlane.f32.xlu0 %v3990
    %v3992 = vpop.xlane.xlu0 %3991
    %v3993 = vrcp.pop %v3992
    %v3994 = vmul.f32 %v3989, %v3993
    %3995 = vrot.lane.b32.xlu0 %v3404, 52
    %v3996 = vpop.permute.xlu0 %3995
    %v3999 = vsel %vm336, %v3994, 0
    %4001 = vmatprep.subr.mxu0 0.0
    %4002 = vmatpush1.msra.mxu0 %v3996
    %4003 = vmatprep.subr.mxu0 0.0
    %4004 = vmatpush1.msra.mxu0 0.0
    %4005 = vmatprep.subr.mxu0 0.0
    %4006 = vmatpush1.msra.mxu0 0.0
    %4007 = vmatprep.subr.mxu0 0.0
    %4008 = vmatpush1.msra.mxu0 0.0
    %4009 = vmatprep.subr.mxu0 0.0
    %4010 = vmatpush1.msra.mxu0 0.0
    %4011 = vmatprep.subr.mxu0 0.0
    %4012 = vmatpush1.msra.mxu0 0.0
    %4013 = vmatprep.subr.mxu0 0.0
    %4014 = vmatpush1.msra.mxu0 0.0
    %4015 = vmatprep.subr.mxu0 0.0
    %4016 = vmatpush1.msra.mxu0 0.0
    %4017 = vmatprep.subr.mxu0 0.0
    %4018 = vmatpush1.msra.mxu0 0.0
    %4019 = vmatprep.subr.mxu0 0.0
    %4020 = vmatpush1.msra.mxu0 0.0
    %4021 = vmatprep.subr.mxu0 0.0
    %4022 = vmatpush1.msra.mxu0 0.0
    %4023 = vmatprep.subr.mxu0 0.0
    %4024 = vmatpush1.msra.mxu0 0.0
    %4025 = vmatprep.subr.mxu0 0.0
    %4026 = vmatpush1.msra.mxu0 0.0
    %4027 = vmatprep.subr.mxu0 0.0
    %4028 = vmatpush1.msra.mxu0 0.0
    %4029 = vmatprep.subr.mxu0 0.0
    %4030 = vmatpush1.msra.mxu0 0.0
    %4031 = vmatprep.subr.mxu0 0.0
    %4032 = vmatpush1.msra.mxu0 0.0
    %4033 = vmatprep.subr.mxu0 0.0
    %4034 = vmatpush1.msra.mxu0 0.0
    %4035 = vmatprep.subr.mxu0 0.0
    %4036 = vmatpush1.msra.mxu0 0.0
    %4037 = vmatprep.subr.mxu0 0.0
    %4038 = vmatpush1.msra.mxu0 0.0
    %4039 = vmatprep.subr.mxu0 0.0
    %4040 = vmatpush1.msra.mxu0 0.0
    %4041 = vmatprep.subr.mxu0 0.0
    %4042 = vmatpush1.msra.mxu0 0.0
    %4043 = vmatprep.subr.mxu0 0.0
    %4044 = vmatpush1.msra.mxu0 0.0
    %4045 = vmatprep.subr.mxu0 0.0
    %4046 = vmatpush1.msra.mxu0 0.0
    %4047 = vmatprep.subr.mxu0 0.0
    %4048 = vmatpush1.msra.mxu0 0.0
    %4049 = vmatprep.subr.mxu0 0.0
    %4050 = vmatpush1.msra.mxu0 0.0
    %4051 = vmatprep.subr.mxu0 0.0
    %4052 = vmatpush1.msra.mxu0 0.0
    %4053 = vmatprep.subr.mxu0 0.0
    %4054 = vmatpush1.msra.mxu0 0.0
    %4055 = vmatprep.subr.mxu0 0.0
    %4056 = vmatpush1.msra.mxu0 0.0
    %4057 = vmatprep.subr.mxu0 0.0
    %4058 = vmatpush1.msra.mxu0 0.0
    %4059 = vmatprep.subr.mxu0 0.0
    %4060 = vmatpush1.msra.mxu0 0.0
    %4061 = vmatprep.subr.mxu0 0.0
    %4062 = vmatpush1.msra.mxu0 0.0
    %4063 = vmatprep.subr.mxu0 0.0
    %4064 = vmatpush1.msra.mxu0 0.0
    %4065 = vmatprep.mubr.f32.mxu0 0.0
    %4066 = vmatmul.mubr.f32.gmra.mrb[0].mxu0 %v3999
    %v4067 = vpop.f32.mrb[0].mxu0
    %v4068 = vadd.f32 0.0, %v4067
    %v4069 = vpop.f32.mrb[0].mxu0
    %4070 = vdwg.mxu0
    %4071 = vrot.lane.b32.xlu0 %v3404, 112
    %v4072 = vpop.permute.xlu0 %4071
    %4073 = vrot.lane.b32.xlu0 %v3404, 80
    %v4074 = vpop.permute.xlu0 %4073
    %v4075 = vsel %vm261, %v4072, 0
    %v4077 = vsel %vm261, %v4074, 0
    %4079 = vmatprep.subr.mxu0 0.0
    %4080 = vmatpush1.xpose.msra.mxu0 %v4077
    %4081 = vmatprep.subr.mxu0 0.0
    %4082 = vmatpush1.xpose.msra.mxu0 0.0
    %4083 = vmatprep.subr.mxu0 0.0
    %4084 = vmatpush1.xpose.msra.mxu0 0.0
    %4085 = vmatprep.subr.mxu0 0.0
    %4086 = vmatpush1.xpose.msra.mxu0 0.0
    %4087 = vmatprep.subr.mxu0 0.0
    %4088 = vmatpush1.xpose.msra.mxu0 0.0
    %4089 = vmatprep.subr.mxu0 0.0
    %4090 = vmatpush1.xpose.msra.mxu0 0.0
    %4091 = vmatprep.subr.mxu0 0.0
    %4092 = vmatpush1.xpose.msra.mxu0 0.0
    %4093 = vmatprep.subr.mxu0 0.0
    %4094 = vmatpush1.xpose.msra.mxu0 0.0
    %4095 = vmatprep.subr.mxu0 0.0
    %4096 = vmatpush1.xpose.msra.mxu0 0.0
    %4097 = vmatprep.subr.mxu0 0.0
    %4098 = vmatpush1.xpose.msra.mxu0 0.0
    %4099 = vmatprep.subr.mxu0 0.0
    %4100 = vmatpush1.xpose.msra.mxu0 0.0
    %4101 = vmatprep.subr.mxu0 0.0
    %4102 = vmatpush1.xpose.msra.mxu0 0.0
    %4103 = vmatprep.subr.mxu0 0.0
    %4104 = vmatpush1.xpose.msra.mxu0 0.0
    %4105 = vmatprep.subr.mxu0 0.0
    %4106 = vmatpush1.xpose.msra.mxu0 0.0
    %4107 = vmatprep.subr.mxu0 0.0
    %4108 = vmatpush1.xpose.msra.mxu0 0.0
    %4109 = vmatprep.subr.mxu0 0.0
    %4110 = vmatpush1.xpose.msra.mxu0 0.0
    %4111 = vmatprep.subr.mxu0 0.0
    %4112 = vmatpush1.xpose.msra.mxu0 0.0
    %4113 = vmatprep.subr.mxu0 0.0
    %4114 = vmatpush1.xpose.msra.mxu0 0.0
    %4115 = vmatprep.subr.mxu0 0.0
    %4116 = vmatpush1.xpose.msra.mxu0 0.0
    %4117 = vmatprep.subr.mxu0 0.0
    %4118 = vmatpush1.xpose.msra.mxu0 0.0
    %4119 = vmatprep.subr.mxu0 0.0
    %4120 = vmatpush1.xpose.msra.mxu0 0.0
    %4121 = vmatprep.subr.mxu0 0.0
    %4122 = vmatpush1.xpose.msra.mxu0 0.0
    %4123 = vmatprep.subr.mxu0 0.0
    %4124 = vmatpush1.xpose.msra.mxu0 0.0
    %4125 = vmatprep.subr.mxu0 0.0
    %4126 = vmatpush1.xpose.msra.mxu0 0.0
    %4127 = vmatprep.subr.mxu0 0.0
    %4128 = vmatpush1.xpose.msra.mxu0 0.0
    %4129 = vmatprep.subr.mxu0 0.0
    %4130 = vmatpush1.xpose.msra.mxu0 0.0
    %4131 = vmatprep.subr.mxu0 0.0
    %4132 = vmatpush1.xpose.msra.mxu0 0.0
    %4133 = vmatprep.subr.mxu0 0.0
    %4134 = vmatpush1.xpose.msra.mxu0 0.0
    %4135 = vmatprep.subr.mxu0 0.0
    %4136 = vmatpush1.xpose.msra.mxu0 0.0
    %4137 = vmatprep.subr.mxu0 0.0
    %4138 = vmatpush1.xpose.msra.mxu0 0.0
    %4139 = vmatprep.subr.mxu0 0.0
    %4140 = vmatpush1.xpose.msra.mxu0 0.0
    %4141 = vmatprep.subr.mxu0 0.0
    %4142 = vmatpush1.xpose.msra.mxu0 0.0
    %4143 = vmatprep.mubr.f32.mxu0 0.0
    %4144 = vmatmul.mubr.f32.gmra.mrb[0].mxu0 %v4075
    %v4145 = vpop.f32.mrb[0].mxu0
    %v4146 = vadd.f32 0.0, %v4145
    %v4147 = vpop.f32.mrb[0].mxu0
    %4148 = vdwg.mxu0
    %v4149 = vsel %vm336, %v4146, -inf
    %4150 = vmax.xlane.f32.xlu0 %v4149
    %v4151 = vpop.xlane.xlu0 %4150
    %v4152 = vsub.f32 %v4146, %v4151
    %v4153 = vmul.f32 %v4152, 1.442695
    %v4154 = vpow.pop %v4153
    %v4155 = vsel %vm336, %v4154, 0.0
    %4156 = vadd.xlane.f32.xlu0 %v4155
    %v4157 = vpop.xlane.xlu0 %4156
    %v4158 = vrcp.pop %v4157
    %v4159 = vmul.f32 %v4154, %v4158
    %4160 = vrot.lane.b32.xlu0 %v3404, 48
    %v4161 = vpop.permute.xlu0 %4160
    %v4164 = vsel %vm336, %v4159, 0
    %4166 = vmatprep.subr.mxu0 0.0
    %4167 = vmatpush1.msra.mxu0 %v4161
    %4168 = vmatprep.subr.mxu0 0.0
    %4169 = vmatpush1.msra.mxu0 0.0
    %4170 = vmatprep.subr.mxu0 0.0
    %4171 = vmatpush1.msra.mxu0 0.0
    %4172 = vmatprep.subr.mxu0 0.0
    %4173 = vmatpush1.msra.mxu0 0.0
    %4174 = vmatprep.subr.mxu0 0.0
    %4175 = vmatpush1.msra.mxu0 0.0
    %4176 = vmatprep.subr.mxu0 0.0
    %4177 = vmatpush1.msra.mxu0 0.0
    %4178 = vmatprep.subr.mxu0 0.0
    %4179 = vmatpush1.msra.mxu0 0.0
    %4180 = vmatprep.subr.mxu0 0.0
    %4181 = vmatpush1.msra.mxu0 0.0
    %4182 = vmatprep.subr.mxu0 0.0
    %4183 = vmatpush1.msra.mxu0 0.0
    %4184 = vmatprep.subr.mxu0 0.0
    %4185 = vmatpush1.msra.mxu0 0.0
    %4186 = vmatprep.subr.mxu0 0.0
    %4187 = vmatpush1.msra.mxu0 0.0
    %4188 = vmatprep.subr.mxu0 0.0
    %4189 = vmatpush1.msra.mxu0 0.0
    %4190 = vmatprep.subr.mxu0 0.0
    %4191 = vmatpush1.msra.mxu0 0.0
    %4192 = vmatprep.subr.mxu0 0.0
    %4193 = vmatpush1.msra.mxu0 0.0
    %4194 = vmatprep.subr.mxu0 0.0
    %4195 = vmatpush1.msra.mxu0 0.0
    %4196 = vmatprep.subr.mxu0 0.0
    %4197 = vmatpush1.msra.mxu0 0.0
    %4198 = vmatprep.subr.mxu0 0.0
    %4199 = vmatpush1.msra.mxu0 0.0
    %4200 = vmatprep.subr.mxu0 0.0
    %4201 = vmatpush1.msra.mxu0 0.0
    %4202 = vmatprep.subr.mxu0 0.0
    %4203 = vmatpush1.msra.mxu0 0.0
    %4204 = vmatprep.subr.mxu0 0.0
    %4205 = vmatpush1.msra.mxu0 0.0
    %4206 = vmatprep.subr.mxu0 0.0
    %4207 = vmatpush1.msra.mxu0 0.0
    %4208 = vmatprep.subr.mxu0 0.0
    %4209 = vmatpush1.msra.mxu0 0.0
    %4210 = vmatprep.subr.mxu0 0.0
    %4211 = vmatpush1.msra.mxu0 0.0
    %4212 = vmatprep.subr.mxu0 0.0
    %4213 = vmatpush1.msra.mxu0 0.0
    %4214 = vmatprep.subr.mxu0 0.0
    %4215 = vmatpush1.msra.mxu0 0.0
    %4216 = vmatprep.subr.mxu0 0.0
    %4217 = vmatpush1.msra.mxu0 0.0
    %4218 = vmatprep.subr.mxu0 0.0
    %4219 = vmatpush1.msra.mxu0 0.0
    %4220 = vmatprep.subr.mxu0 0.0
    %4221 = vmatpush1.msra.mxu0 0.0
    %4222 = vmatprep.subr.mxu0 0.0
    %4223 = vmatpush1.msra.mxu0 0.0
    %4224 = vmatprep.subr.mxu0 0.0
    %4225 = vmatpush1.msra.mxu0 0.0
    %4226 = vmatprep.subr.mxu0 0.0
    %4227 = vmatpush1.msra.mxu0 0.0
    %4228 = vmatprep.subr.mxu0 0.0
    %4229 = vmatpush1.msra.mxu0 0.0
    %4230 = vmatprep.mubr.f32.mxu0 0.0
    %4231 = vmatmul.mubr.f32.gmra.mrb[0].mxu0 %v4164
    %v4232 = vpop.f32.mrb[0].mxu0
    %v4233 = vadd.f32 0.0, %v4232
    %v4234 = vpop.f32.mrb[0].mxu0
    %4235 = vdwg.mxu0
    %4236 = vrot.lane.b32.xlu0 %v3404, 108
    %v4237 = vpop.permute.xlu0 %4236
    %4238 = vrot.lane.b32.xlu0 %v3404, 76
    %v4239 = vpop.permute.xlu0 %4238
    %v4240 = vsel %vm261, %v4237, 0
    %v4242 = vsel %vm261, %v4239, 0
    %4244 = vmatprep.subr.mxu0 0.0
    %4245 = vmatpush1.xpose.msra.mxu0 %v4242
    %4246 = vmatprep.subr.mxu0 0.0
    %4247 = vmatpush1.xpose.msra.mxu0 0.0
    %4248 = vmatprep.subr.mxu0 0.0
    %4249 = vmatpush1.xpose.msra.mxu0 0.0
    %4250 = vmatprep.subr.mxu0 0.0
    %4251 = vmatpush1.xpose.msra.mxu0 0.0
    %4252 = vmatprep.subr.mxu0 0.0
    %4253 = vmatpush1.xpose.msra.mxu0 0.0
    %4254 = vmatprep.subr.mxu0 0.0
    %4255 = vmatpush1.xpose.msra.mxu0 0.0
    %4256 = vmatprep.subr.mxu0 0.0
    %4257 = vmatpush1.xpose.msra.mxu0 0.0
    %4258 = vmatprep.subr.mxu0 0.0
    %4259 = vmatpush1.xpose.msra.mxu0 0.0
    %4260 = vmatprep.subr.mxu0 0.0
    %4261 = vmatpush1.xpose.msra.mxu0 0.0
    %4262 = vmatprep.subr.mxu0 0.0
    %4263 = vmatpush1.xpose.msra.mxu0 0.0
    %4264 = vmatprep.subr.mxu0 0.0
    %4265 = vmatpush1.xpose.msra.mxu0 0.0
    %4266 = vmatprep.subr.mxu0 0.0
    %4267 = vmatpush1.xpose.msra.mxu0 0.0
    %4268 = vmatprep.subr.mxu0 0.0
    %4269 = vmatpush1.xpose.msra.mxu0 0.0
    %4270 = vmatprep.subr.mxu0 0.0
    %4271 = vmatpush1.xpose.msra.mxu0 0.0
    %4272 = vmatprep.subr.mxu0 0.0
    %4273 = vmatpush1.xpose.msra.mxu0 0.0
    %4274 = vmatprep.subr.mxu0 0.0
    %4275 = vmatpush1.xpose.msra.mxu0 0.0
    %4276 = vmatprep.subr.mxu0 0.0
    %4277 = vmatpush1.xpose.msra.mxu0 0.0
    %4278 = vmatprep.subr.mxu0 0.0
    %4279 = vmatpush1.xpose.msra.mxu0 0.0
    %4280 = vmatprep.subr.mxu0 0.0
    %4281 = vmatpush1.xpose.msra.mxu0 0.0
    %4282 = vmatprep.subr.mxu0 0.0
    %4283 = vmatpush1.xpose.msra.mxu0 0.0
    %4284 = vmatprep.subr.mxu0 0.0
    %4285 = vmatpush1.xpose.msra.mxu0 0.0
    %4286 = vmatprep.subr.mxu0 0.0
    %4287 = vmatpush1.xpose.msra.mxu0 0.0
    %4288 = vmatprep.subr.mxu0 0.0
    %4289 = vmatpush1.xpose.msra.mxu0 0.0
    %4290 = vmatprep.subr.mxu0 0.0
    %4291 = vmatpush1.xpose.msra.mxu0 0.0
    %4292 = vmatprep.subr.mxu0 0.0
    %4293 = vmatpush1.xpose.msra.mxu0 0.0
    %4294 = vmatprep.subr.mxu0 0.0
    %4295 = vmatpush1.xpose.msra.mxu0 0.0
    %4296 = vmatprep.subr.mxu0 0.0
    %4297 = vmatpush1.xpose.msra.mxu0 0.0
    %4298 = vmatprep.subr.mxu0 0.0
    %4299 = vmatpush1.xpose.msra.mxu0 0.0
    %4300 = vmatprep.subr.mxu0 0.0
    %4301 = vmatpush1.xpose.msra.mxu0 0.0
    %4302 = vmatprep.subr.mxu0 0.0
    %4303 = vmatpush1.xpose.msra.mxu0 0.0
    %4304 = vmatprep.subr.mxu0 0.0
    %4305 = vmatpush1.xpose.msra.mxu0 0.0
    %4306 = vmatprep.subr.mxu0 0.0
    %4307 = vmatpush1.xpose.msra.mxu0 0.0
    %4308 = vmatprep.mubr.f32.mxu0 0.0
    %4309 = vmatmul.mubr.f32.gmra.mrb[0].mxu0 %v4240
    %v4310 = vpop.f32.mrb[0].mxu0
    %v4311 = vadd.f32 0.0, %v4310
    %v4312 = vpop.f32.mrb[0].mxu0
    %4313 = vdwg.mxu0
    %v4314 = vsel %vm336, %v4311, -inf
    %4315 = vmax.xlane.f32.xlu0 %v4314
    %v4316 = vpop.xlane.xlu0 %4315
    %v4317 = vsub.f32 %v4311, %v4316
    %v4318 = vmul.f32 %v4317, 1.442695
    %v4319 = vpow.pop %v4318
    %v4320 = vsel %vm336, %v4319, 0.0
    %4321 = vadd.xlane.f32.xlu0 %v4320
    %v4322 = vpop.xlane.xlu0 %4321
    %v4323 = vrcp.pop %v4322
    %v4324 = vmul.f32 %v4319, %v4323
    %4325 = vrot.lane.b32.xlu0 %v3404, 44
    %v4326 = vpop.permute.xlu0 %4325
    %v4329 = vsel %vm336, %v4324, 0
    %4331 = vmatprep.subr.mxu0 0.0
    %4332 = vmatpush1.msra.mxu0 %v4326
    %4333 = vmatprep.subr.mxu0 0.0
    %4334 = vmatpush1.msra.mxu0 0.0
    %4335 = vmatprep.subr.mxu0 0.0
    %4336 = vmatpush1.msra.mxu0 0.0
    %4337 = vmatprep.subr.mxu0 0.0
    %4338 = vmatpush1.msra.mxu0 0.0
    %4339 = vmatprep.subr.mxu0 0.0
    %4340 = vmatpush1.msra.mxu0 0.0
    %4341 = vmatprep.subr.mxu0 0.0
    %4342 = vmatpush1.msra.mxu0 0.0
    %4343 = vmatprep.subr.mxu0 0.0
    %4344 = vmatpush1.msra.mxu0 0.0
    %4345 = vmatprep.subr.mxu0 0.0
    %4346 = vmatpush1.msra.mxu0 0.0
    %4347 = vmatprep.subr.mxu0 0.0
    %4348 = vmatpush1.msra.mxu0 0.0
    %4349 = vmatprep.subr.mxu0 0.0
    %4350 = vmatpush1.msra.mxu0 0.0
    %4351 = vmatprep.subr.mxu0 0.0
    %4352 = vmatpush1.msra.mxu0 0.0
    %4353 = vmatprep.subr.mxu0 0.0
    %4354 = vmatpush1.msra.mxu0 0.0
    %4355 = vmatprep.subr.mxu0 0.0
    %4356 = vmatpush1.msra.mxu0 0.0
    %4357 = vmatprep.subr.mxu0 0.0
    %4358 = vmatpush1.msra.mxu0 0.0
    %4359 = vmatprep.subr.mxu0 0.0
    %4360 = vmatpush1.msra.mxu0 0.0
    %4361 = vmatprep.subr.mxu0 0.0
    %4362 = vmatpush1.msra.mxu0 0.0
    %4363 = vmatprep.subr.mxu0 0.0
    %4364 = vmatpush1.msra.mxu0 0.0
    %4365 = vmatprep.subr.mxu0 0.0
    %4366 = vmatpush1.msra.mxu0 0.0
    %4367 = vmatprep.subr.mxu0 0.0
    %4368 = vmatpush1.msra.mxu0 0.0
    %4369 = vmatprep.subr.mxu0 0.0
    %4370 = vmatpush1.msra.mxu0 0.0
    %4371 = vmatprep.subr.mxu0 0.0
    %4372 = vmatpush1.msra.mxu0 0.0
    %4373 = vmatprep.subr.mxu0 0.0
    %4374 = vmatpush1.msra.mxu0 0.0
    %4375 = vmatprep.subr.mxu0 0.0
    %4376 = vmatpush1.msra.mxu0 0.0
    %4377 = vmatprep.subr.mxu0 0.0
    %4378 = vmatpush1.msra.mxu0 0.0
    %4379 = vmatprep.subr.mxu0 0.0
    %4380 = vmatpush1.msra.mxu0 0.0
    %4381 = vmatprep.subr.mxu0 0.0
    %4382 = vmatpush1.msra.mxu0 0.0
    %4383 = vmatprep.subr.mxu0 0.0
    %4384 = vmatpush1.msra.mxu0 0.0
    %4385 = vmatprep.subr.mxu0 0.0
    %4386 = vmatpush1.msra.mxu0 0.0
    %4387 = vmatprep.subr.mxu0 0.0
    %4388 = vmatpush1.msra.mxu0 0.0
    %4389 = vmatprep.subr.mxu0 0.0
    %4390 = vmatpush1.msra.mxu0 0.0
    %4391 = vmatprep.subr.mxu0 0.0
    %4392 = vmatpush1.msra.mxu0 0.0
    %4393 = vmatprep.subr.mxu0 0.0
    %4394 = vmatpush1.msra.mxu0 0.0
    %4395 = vmatprep.mubr.f32.mxu0 0.0
    %4396 = vmatmul.mubr.f32.gmra.mrb[0].mxu0 %v4329
    %v4397 = vpop.f32.mrb[0].mxu0
    %v4398 = vadd.f32 0.0, %v4397
    %v4399 = vpop.f32.mrb[0].mxu0
    %4400 = vdwg.mxu0
    %4401 = vrot.lane.b32.xlu0 %v3404, 104
    %v4402 = vpop.permute.xlu0 %4401
    %4403 = vrot.lane.b32.xlu0 %v3404, 72
    %v4404 = vpop.permute.xlu0 %4403
    %v4405 = vsel %vm261, %v4402, 0
    %v4407 = vsel %vm261, %v4404, 0
    %4409 = vmatprep.subr.mxu0 0.0
    %4410 = vmatpush1.xpose.msra.mxu0 %v4407
    %4411 = vmatprep.subr.mxu0 0.0
    %4412 = vmatpush1.xpose.msra.mxu0 0.0
    %4413 = vmatprep.subr.mxu0 0.0
    %4414 = vmatpush1.xpose.msra.mxu0 0.0
    %4415 = vmatprep.subr.mxu0 0.0
    %4416 = vmatpush1.xpose.msra.mxu0 0.0
    %4417 = vmatprep.subr.mxu0 0.0
    %4418 = vmatpush1.xpose.msra.mxu0 0.0
    %4419 = vmatprep.subr.mxu0 0.0
    %4420 = vmatpush1.xpose.msra.mxu0 0.0
    %4421 = vmatprep.subr.mxu0 0.0
    %4422 = vmatpush1.xpose.msra.mxu0 0.0
    %4423 = vmatprep.subr.mxu0 0.0
    %4424 = vmatpush1.xpose.msra.mxu0 0.0
    %4425 = vmatprep.subr.mxu0 0.0
    %4426 = vmatpush1.xpose.msra.mxu0 0.0
    %4427 = vmatprep.subr.mxu0 0.0
    %4428 = vmatpush1.xpose.msra.mxu0 0.0
    %4429 = vmatprep.subr.mxu0 0.0
    %4430 = vmatpush1.xpose.msra.mxu0 0.0
    %4431 = vmatprep.subr.mxu0 0.0
    %4432 = vmatpush1.xpose.msra.mxu0 0.0
    %4433 = vmatprep.subr.mxu0 0.0
    %4434 = vmatpush1.xpose.msra.mxu0 0.0
    %4435 = vmatprep.subr.mxu0 0.0
    %4436 = vmatpush1.xpose.msra.mxu0 0.0
    %4437 = vmatprep.subr.mxu0 0.0
    %4438 = vmatpush1.xpose.msra.mxu0 0.0
    %4439 = vmatprep.subr.mxu0 0.0
    %4440 = vmatpush1.xpose.msra.mxu0 0.0
    %4441 = vmatprep.subr.mxu0 0.0
    %4442 = vmatpush1.xpose.msra.mxu0 0.0
    %4443 = vmatprep.subr.mxu0 0.0
    %4444 = vmatpush1.xpose.msra.mxu0 0.0
    %4445 = vmatprep.subr.mxu0 0.0
    %4446 = vmatpush1.xpose.msra.mxu0 0.0
    %4447 = vmatprep.subr.mxu0 0.0
    %4448 = vmatpush1.xpose.msra.mxu0 0.0
    %4449 = vmatprep.subr.mxu0 0.0
    %4450 = vmatpush1.xpose.msra.mxu0 0.0
    %4451 = vmatprep.subr.mxu0 0.0
    %4452 = vmatpush1.xpose.msra.mxu0 0.0
    %4453 = vmatprep.subr.mxu0 0.0
    %4454 = vmatpush1.xpose.msra.mxu0 0.0
    %4455 = vmatprep.subr.mxu0 0.0
    %4456 = vmatpush1.xpose.msra.mxu0 0.0
    %4457 = vmatprep.subr.mxu0 0.0
    %4458 = vmatpush1.xpose.msra.mxu0 0.0
    %4459 = vmatprep.subr.mxu0 0.0
    %4460 = vmatpush1.xpose.msra.mxu0 0.0
    %4461 = vmatprep.subr.mxu0 0.0
    %4462 = vmatpush1.xpose.msra.mxu0 0.0
    %4463 = vmatprep.subr.mxu0 0.0
    %4464 = vmatpush1.xpose.msra.mxu0 0.0
    %4465 = vmatprep.subr.mxu0 0.0
    %4466 = vmatpush1.xpose.msra.mxu0 0.0
    %4467 = vmatprep.subr.mxu0 0.0
    %4468 = vmatpush1.xpose.msra.mxu0 0.0
    %4469 = vmatprep.subr.mxu0 0.0
    %4470 = vmatpush1.xpose.msra.mxu0 0.0
    %4471 = vmatprep.subr.mxu0 0.0
    %4472 = vmatpush1.xpose.msra.mxu0 0.0
    %4473 = vmatprep.mubr.f32.mxu0 0.0
    %4474 = vmatmul.mubr.f32.gmra.mrb[0].mxu0 %v4405
    %v4475 = vpop.f32.mrb[0].mxu0
    %v4476 = vadd.f32 0.0, %v4475
    %v4477 = vpop.f32.mrb[0].mxu0
    %4478 = vdwg.mxu0
    %v4479 = vsel %vm336, %v4476, -inf
    %4480 = vmax.xlane.f32.xlu0 %v4479
    %v4481 = vpop.xlane.xlu0 %4480
    %v4482 = vsub.f32 %v4476, %v4481
    %v4483 = vmul.f32 %v4482, 1.442695
    %v4484 = vpow.pop %v4483
    %v4485 = vsel %vm336, %v4484, 0.0
    %4486 = vadd.xlane.f32.xlu0 %v4485
    %v4487 = vpop.xlane.xlu0 %4486
    %v4488 = vrcp.pop %v4487
    %v4489 = vmul.f32 %v4484, %v4488
    %4490 = vrot.lane.b32.xlu0 %v3404, 40
    %v4491 = vpop.permute.xlu0 %4490
    %v4494 = vsel %vm336, %v4489, 0
    %4496 = vmatprep.subr.mxu0 0.0
    %4497 = vmatpush1.msra.mxu0 %v4491
    %4498 = vmatprep.subr.mxu0 0.0
    %4499 = vmatpush1.msra.mxu0 0.0
    %4500 = vmatprep.subr.mxu0 0.0
    %4501 = vmatpush1.msra.mxu0 0.0
    %4502 = vmatprep.subr.mxu0 0.0
    %4503 = vmatpush1.msra.mxu0 0.0
    %4504 = vmatprep.subr.mxu0 0.0
    %4505 = vmatpush1.msra.mxu0 0.0
    %4506 = vmatprep.subr.mxu0 0.0
    %4507 = vmatpush1.msra.mxu0 0.0
    %4508 = vmatprep.subr.mxu0 0.0
    %4509 = vmatpush1.msra.mxu0 0.0
    %4510 = vmatprep.subr.mxu0 0.0
    %4511 = vmatpush1.msra.mxu0 0.0
    %4512 = vmatprep.subr.mxu0 0.0
    %4513 = vmatpush1.msra.mxu0 0.0
    %4514 = vmatprep.subr.mxu0 0.0
    %4515 = vmatpush1.msra.mxu0 0.0
    %4516 = vmatprep.subr.mxu0 0.0
    %4517 = vmatpush1.msra.mxu0 0.0
    %4518 = vmatprep.subr.mxu0 0.0
    %4519 = vmatpush1.msra.mxu0 0.0
    %4520 = vmatprep.subr.mxu0 0.0
    %4521 = vmatpush1.msra.mxu0 0.0
    %4522 = vmatprep.subr.mxu0 0.0
    %4523 = vmatpush1.msra.mxu0 0.0
    %4524 = vmatprep.subr.mxu0 0.0
    %4525 = vmatpush1.msra.mxu0 0.0
    %4526 = vmatprep.subr.mxu0 0.0
    %4527 = vmatpush1.msra.mxu0 0.0
    %4528 = vmatprep.subr.mxu0 0.0
    %4529 = vmatpush1.msra.mxu0 0.0
    %4530 = vmatprep.subr.mxu0 0.0
    %4531 = vmatpush1.msra.mxu0 0.0
    %4532 = vmatprep.subr.mxu0 0.0
    %4533 = vmatpush1.msra.mxu0 0.0
    %4534 = vmatprep.subr.mxu0 0.0
    %4535 = vmatpush1.msra.mxu0 0.0
    %4536 = vmatprep.subr.mxu0 0.0
    %4537 = vmatpush1.msra.mxu0 0.0
    %4538 = vmatprep.subr.mxu0 0.0
    %4539 = vmatpush1.msra.mxu0 0.0
    %4540 = vmatprep.subr.mxu0 0.0
    %4541 = vmatpush1.msra.mxu0 0.0
    %4542 = vmatprep.subr.mxu0 0.0
    %4543 = vmatpush1.msra.mxu0 0.0
    %4544 = vmatprep.subr.mxu0 0.0
    %4545 = vmatpush1.msra.mxu0 0.0
    %4546 = vmatprep.subr.mxu0 0.0
    %4547 = vmatpush1.msra.mxu0 0.0
    %4548 = vmatprep.subr.mxu0 0.0
    %4549 = vmatpush1.msra.mxu0 0.0
    %4550 = vmatprep.subr.mxu0 0.0
    %4551 = vmatpush1.msra.mxu0 0.0
    %4552 = vmatprep.subr.mxu0 0.0
    %4553 = vmatpush1.msra.mxu0 0.0
    %4554 = vmatprep.subr.mxu0 0.0
    %4555 = vmatpush1.msra.mxu0 0.0
    %4556 = vmatprep.subr.mxu0 0.0
    %4557 = vmatpush1.msra.mxu0 0.0
    %4558 = vmatprep.subr.mxu0 0.0
    %4559 = vmatpush1.msra.mxu0 0.0
    %4560 = vmatprep.mubr.f32.mxu0 0.0
    %4561 = vmatmul.mubr.f32.gmra.mrb[0].mxu0 %v4494
    %v4562 = vpop.f32.mrb[0].mxu0
    %v4563 = vadd.f32 0.0, %v4562
    %v4564 = vpop.f32.mrb[0].mxu0
    %4565 = vdwg.mxu0
    %4566 = vrot.lane.b32.xlu0 %v3404, 100
    %v4567 = vpop.permute.xlu0 %4566
    %4568 = vrot.lane.b32.xlu0 %v3404, 68
    %v4569 = vpop.permute.xlu0 %4568
    %v4570 = vsel %vm261, %v4567, 0
    %v4572 = vsel %vm261, %v4569, 0
    %4574 = vmatprep.subr.mxu0 0.0
    %4575 = vmatpush1.xpose.msra.mxu0 %v4572
    %4576 = vmatprep.subr.mxu0 0.0
    %4577 = vmatpush1.xpose.msra.mxu0 0.0
    %4578 = vmatprep.subr.mxu0 0.0
    %4579 = vmatpush1.xpose.msra.mxu0 0.0
    %4580 = vmatprep.subr.mxu0 0.0
    %4581 = vmatpush1.xpose.msra.mxu0 0.0
    %4582 = vmatprep.subr.mxu0 0.0
    %4583 = vmatpush1.xpose.msra.mxu0 0.0
    %4584 = vmatprep.subr.mxu0 0.0
    %4585 = vmatpush1.xpose.msra.mxu0 0.0
    %4586 = vmatprep.subr.mxu0 0.0
    %4587 = vmatpush1.xpose.msra.mxu0 0.0
    %4588 = vmatprep.subr.mxu0 0.0
    %4589 = vmatpush1.xpose.msra.mxu0 0.0
    %4590 = vmatprep.subr.mxu0 0.0
    %4591 = vmatpush1.xpose.msra.mxu0 0.0
    %4592 = vmatprep.subr.mxu0 0.0
    %4593 = vmatpush1.xpose.msra.mxu0 0.0
    %4594 = vmatprep.subr.mxu0 0.0
    %4595 = vmatpush1.xpose.msra.mxu0 0.0
    %4596 = vmatprep.subr.mxu0 0.0
    %4597 = vmatpush1.xpose.msra.mxu0 0.0
    %4598 = vmatprep.subr.mxu0 0.0
    %4599 = vmatpush1.xpose.msra.mxu0 0.0
    %4600 = vmatprep.subr.mxu0 0.0
    %4601 = vmatpush1.xpose.msra.mxu0 0.0
    %4602 = vmatprep.subr.mxu0 0.0
    %4603 = vmatpush1.xpose.msra.mxu0 0.0
    %4604 = vmatprep.subr.mxu0 0.0
    %4605 = vmatpush1.xpose.msra.mxu0 0.0
    %4606 = vmatprep.subr.mxu0 0.0
    %4607 = vmatpush1.xpose.msra.mxu0 0.0
    %4608 = vmatprep.subr.mxu0 0.0
    %4609 = vmatpush1.xpose.msra.mxu0 0.0
    %4610 = vmatprep.subr.mxu0 0.0
    %4611 = vmatpush1.xpose.msra.mxu0 0.0
    %4612 = vmatprep.subr.mxu0 0.0
    %4613 = vmatpush1.xpose.msra.mxu0 0.0
    %4614 = vmatprep.subr.mxu0 0.0
    %4615 = vmatpush1.xpose.msra.mxu0 0.0
    %4616 = vmatprep.subr.mxu0 0.0
    %4617 = vmatpush1.xpose.msra.mxu0 0.0
    %4618 = vmatprep.subr.mxu0 0.0
    %4619 = vmatpush1.xpose.msra.mxu0 0.0
    %4620 = vmatprep.subr.mxu0 0.0
    %4621 = vmatpush1.xpose.msra.mxu0 0.0
    %4622 = vmatprep.subr.mxu0 0.0
    %4623 = vmatpush1.xpose.msra.mxu0 0.0
    %4624 = vmatprep.subr.mxu0 0.0
    %4625 = vmatpush1.xpose.msra.mxu0 0.0
    %4626 = vmatprep.subr.mxu0 0.0
    %4627 = vmatpush1.xpose.msra.mxu0 0.0
    %4628 = vmatprep.subr.mxu0 0.0
    %4629 = vmatpush1.xpose.msra.mxu0 0.0
    %4630 = vmatprep.subr.mxu0 0.0
    %4631 = vmatpush1.xpose.msra.mxu0 0.0
    %4632 = vmatprep.subr.mxu0 0.0
    %4633 = vmatpush1.xpose.msra.mxu0 0.0
    %4634 = vmatprep.subr.mxu0 0.0
    %4635 = vmatpush1.xpose.msra.mxu0 0.0
    %4636 = vmatprep.subr.mxu0 0.0
    %4637 = vmatpush1.xpose.msra.mxu0 0.0
    %4638 = vmatprep.mubr.f32.mxu0 0.0
    %4639 = vmatmul.mubr.f32.gmra.mrb[0].mxu0 %v4570
    %v4640 = vpop.f32.mrb[0].mxu0
    %v4641 = vadd.f32 0.0, %v4640
    %v4642 = vpop.f32.mrb[0].mxu0
    %4643 = vdwg.mxu0
    %v4644 = vsel %vm336, %v4641, -inf
    %4645 = vmax.xlane.f32.xlu0 %v4644
    %v4646 = vpop.xlane.xlu0 %4645
    %v4647 = vsub.f32 %v4641, %v4646
    %v4648 = vmul.f32 %v4647, 1.442695
    %v4649 = vpow.pop %v4648
    %v4650 = vsel %vm336, %v4649, 0.0
    %4651 = vadd.xlane.f32.xlu0 %v4650
    %v4652 = vpop.xlane.xlu0 %4651
    %v4653 = vrcp.pop %v4652
    %v4654 = vmul.f32 %v4649, %v4653
    %4655 = vrot.lane.b32.xlu0 %v3404, 36
    %v4656 = vpop.permute.xlu0 %4655
    %v4659 = vsel %vm336, %v4654, 0
    %4661 = vmatprep.subr.mxu0 0.0
    %4662 = vmatpush1.msra.mxu0 %v4656
    %4663 = vmatprep.subr.mxu0 0.0
    %4664 = vmatpush1.msra.mxu0 0.0
    %4665 = vmatprep.subr.mxu0 0.0
    %4666 = vmatpush1.msra.mxu0 0.0
    %4667 = vmatprep.subr.mxu0 0.0
    %4668 = vmatpush1.msra.mxu0 0.0
    %4669 = vmatprep.subr.mxu0 0.0
    %4670 = vmatpush1.msra.mxu0 0.0
    %4671 = vmatprep.subr.mxu0 0.0
    %4672 = vmatpush1.msra.mxu0 0.0
    %4673 = vmatprep.subr.mxu0 0.0
    %4674 = vmatpush1.msra.mxu0 0.0
    %4675 = vmatprep.subr.mxu0 0.0
    %4676 = vmatpush1.msra.mxu0 0.0
    %4677 = vmatprep.subr.mxu0 0.0
    %4678 = vmatpush1.msra.mxu0 0.0
    %4679 = vmatprep.subr.mxu0 0.0
    %4680 = vmatpush1.msra.mxu0 0.0
    %4681 = vmatprep.subr.mxu0 0.0
    %4682 = vmatpush1.msra.mxu0 0.0
    %4683 = vmatprep.subr.mxu0 0.0
    %4684 = vmatpush1.msra.mxu0 0.0
    %4685 = vmatprep.subr.mxu0 0.0
    %4686 = vmatpush1.msra.mxu0 0.0
    %4687 = vmatprep.subr.mxu0 0.0
    %4688 = vmatpush1.msra.mxu0 0.0
    %4689 = vmatprep.subr.mxu0 0.0
    %4690 = vmatpush1.msra.mxu0 0.0
    %4691 = vmatprep.subr.mxu0 0.0
    %4692 = vmatpush1.msra.mxu0 0.0
    %4693 = vmatprep.subr.mxu0 0.0
    %4694 = vmatpush1.msra.mxu0 0.0
    %4695 = vmatprep.subr.mxu0 0.0
    %4696 = vmatpush1.msra.mxu0 0.0
    %4697 = vmatprep.subr.mxu0 0.0
    %4698 = vmatpush1.msra.mxu0 0.0
    %4699 = vmatprep.subr.mxu0 0.0
    %4700 = vmatpush1.msra.mxu0 0.0
    %4701 = vmatprep.subr.mxu0 0.0
    %4702 = vmatpush1.msra.mxu0 0.0
    %4703 = vmatprep.subr.mxu0 0.0
    %4704 = vmatpush1.msra.mxu0 0.0
    %4705 = vmatprep.subr.mxu0 0.0
    %4706 = vmatpush1.msra.mxu0 0.0
    %4707 = vmatprep.subr.mxu0 0.0
    %4708 = vmatpush1.msra.mxu0 0.0
    %4709 = vmatprep.subr.mxu0 0.0
    %4710 = vmatpush1.msra.mxu0 0.0
    %4711 = vmatprep.subr.mxu0 0.0
    %4712 = vmatpush1.msra.mxu0 0.0
    %4713 = vmatprep.subr.mxu0 0.0
    %4714 = vmatpush1.msra.mxu0 0.0
    %4715 = vmatprep.subr.mxu0 0.0
    %4716 = vmatpush1.msra.mxu0 0.0
    %4717 = vmatprep.subr.mxu0 0.0
    %4718 = vmatpush1.msra.mxu0 0.0
    %4719 = vmatprep.subr.mxu0 0.0
    %4720 = vmatpush1.msra.mxu0 0.0
    %4721 = vmatprep.subr.mxu0 0.0
    %4722 = vmatpush1.msra.mxu0 0.0
    %4723 = vmatprep.subr.mxu0 0.0
    %4724 = vmatpush1.msra.mxu0 0.0
    %4725 = vmatprep.mubr.f32.mxu0 0.0
    %4726 = vmatmul.mubr.f32.gmra.mrb[0].mxu0 %v4659
    %v4727 = vpop.f32.mrb[0].mxu0
    %v4728 = vadd.f32 0.0, %v4727
    %v4729 = vpop.f32.mrb[0].mxu0
    %4730 = vdwg.mxu0
    %4732 = vrot.lane.b32.xlu0 %v3738, 4
    %v4733 = vpop.permute.xlu0 %4732
    %4736 = vrot.lane.b32.xlu0 %v3903, 8
    %v4737 = vpop.permute.xlu0 %4736
    %4740 = vrot.lane.b32.xlu0 %v4068, 12
    %v4741 = vpop.permute.xlu0 %4740
    %4744 = vrot.lane.b32.xlu0 %v4233, 16
    %v4745 = vpop.permute.xlu0 %4744
    %4748 = vrot.lane.b32.xlu0 %v4398, 20
    %v4749 = vpop.permute.xlu0 %4748
    %4752 = vrot.lane.b32.xlu0 %v4563, 24
    %v4753 = vpop.permute.xlu0 %4752
    %4756 = vrot.lane.b32.xlu0 %v4728, 28
    %v4757 = vpop.permute.xlu0 %4756
    %v4759 = vsel %vm261, %v3573, %v4733
    %v4760 = vsel %vm336, %v4759, %v4737
    %v4761 = vsel %vm1609, %v4760, %v4741
    %v4762 = vsel %vm1611, %v4761, %v4745
    %v4763 = vsel %vm1613, %v4762, %v4749
    %v4764 = vsel %vm1615, %v4763, %v4753
    %v4765 = vsel %vm1617, %v4764, %v4757
    %4767 = vrot.lane.b32.xlu0 %v3409, 96
    %v4768 = vpop.permute.xlu0 %4767
    %v4769 = vsel %vm261, %v3409, 0
    %v4771 = vsel %vm261, %v4768, 0
    %4773 = vmatprep.subr.mxu0 0.0
    %4774 = vmatpush1.xpose.msra.mxu0 %v4771
    %4775 = vmatprep.subr.mxu0 0.0
    %4776 = vmatpush1.xpose.msra.mxu0 0.0
    %4777 = vmatprep.subr.mxu0 0.0
    %4778 = vmatpush1.xpose.msra.mxu0 0.0
    %4779 = vmatprep.subr.mxu0 0.0
    %4780 = vmatpush1.xpose.msra.mxu0 0.0
    %4781 = vmatprep.subr.mxu0 0.0
    %4782 = vmatpush1.xpose.msra.mxu0 0.0
    %4783 = vmatprep.subr.mxu0 0.0
    %4784 = vmatpush1.xpose.msra.mxu0 0.0
    %4785 = vmatprep.subr.mxu0 0.0
    %4786 = vmatpush1.xpose.msra.mxu0 0.0
    %4787 = vmatprep.subr.mxu0 0.0
    %4788 = vmatpush1.xpose.msra.mxu0 0.0
    %4789 = vmatprep.subr.mxu0 0.0
    %4790 = vmatpush1.xpose.msra.mxu0 0.0
    %4791 = vmatprep.subr.mxu0 0.0
    %4792 = vmatpush1.xpose.msra.mxu0 0.0
    %4793 = vmatprep.subr.mxu0 0.0
    %4794 = vmatpush1.xpose.msra.mxu0 0.0
    %4795 = vmatprep.subr.mxu0 0.0
    %4796 = vmatpush1.xpose.msra.mxu0 0.0
    %4797 = vmatprep.subr.mxu0 0.0
    %4798 = vmatpush1.xpose.msra.mxu0 0.0
    %4799 = vmatprep.subr.mxu0 0.0
    %4800 = vmatpush1.xpose.msra.mxu0 0.0
    %4801 = vmatprep.subr.mxu0 0.0
    %4802 = vmatpush1.xpose.msra.mxu0 0.0
    %4803 = vmatprep.subr.mxu0 0.0
    %4804 = vmatpush1.xpose.msra.mxu0 0.0
    %4805 = vmatprep.subr.mxu0 0.0
    %4806 = vmatpush1.xpose.msra.mxu0 0.0
    %4807 = vmatprep.subr.mxu0 0.0
    %4808 = vmatpush1.xpose.msra.mxu0 0.0
    %4809 = vmatprep.subr.mxu0 0.0
    %4810 = vmatpush1.xpose.msra.mxu0 0.0
    %4811 = vmatprep.subr.mxu0 0.0
    %4812 = vmatpush1.xpose.msra.mxu0 0.0
    %4813 = vmatprep.subr.mxu0 0.0
    %4814 = vmatpush1.xpose.msra.mxu0 0.0
    %4815 = vmatprep.subr.mxu0 0.0
    %4816 = vmatpush1.xpose.msra.mxu0 0.0
    %4817 = vmatprep.subr.mxu0 0.0
    %4818 = vmatpush1.xpose.msra.mxu0 0.0
    %4819 = vmatprep.subr.mxu0 0.0
    %4820 = vmatpush1.xpose.msra.mxu0 0.0
    %4821 = vmatprep.subr.mxu0 0.0
    %4822 = vmatpush1.xpose.msra.mxu0 0.0
    %4823 = vmatprep.subr.mxu0 0.0
    %4824 = vmatpush1.xpose.msra.mxu0 0.0
    %4825 = vmatprep.subr.mxu0 0.0
    %4826 = vmatpush1.xpose.msra.mxu0 0.0
    %4827 = vmatprep.subr.mxu0 0.0
    %4828 = vmatpush1.xpose.msra.mxu0 0.0
    %4829 = vmatprep.subr.mxu0 0.0
    %4830 = vmatpush1.xpose.msra.mxu0 0.0
    %4831 = vmatprep.subr.mxu0 0.0
    %4832 = vmatpush1.xpose.msra.mxu0 0.0
    %4833 = vmatprep.subr.mxu0 0.0
    %4834 = vmatpush1.xpose.msra.mxu0 0.0
    %4835 = vmatprep.subr.mxu0 0.0
    %4836 = vmatpush1.xpose.msra.mxu0 0.0
    %4837 = vmatprep.mubr.f32.mxu0 0.0
    %4838 = vmatmul.mubr.f32.gmra.mrb[0].mxu0 %v4769
    %v4839 = vpop.f32.mrb[0].mxu0
    %v4840 = vadd.f32 0.0, %v4839
    %v4841 = vpop.f32.mrb[0].mxu0
    %4842 = vdwg.mxu0
    %v4843 = vsel %vm336, %v4840, -inf
    %4844 = vmax.xlane.f32.xlu0 %v4843
    %v4845 = vpop.xlane.xlu0 %4844
    %v4846 = vsub.f32 %v4840, %v4845
    %v4847 = vmul.f32 %v4846, 1.442695
    %v4848 = vpow.pop %v4847
    %v4849 = vsel %vm336, %v4848, 0.0
    %4850 = vadd.xlane.f32.xlu0 %v4849
    %v4851 = vpop.xlane.xlu0 %4850
    %v4852 = vrcp.pop %v4851
    %v4853 = vmul.f32 %v4848, %v4852
    %4854 = vrot.lane.b32.xlu0 %v3409, 64
    %v4855 = vpop.permute.xlu0 %4854
    %v4858 = vsel %vm336, %v4853, 0
    %4860 = vmatprep.subr.mxu0 0.0
    %4861 = vmatpush1.msra.mxu0 %v4855
    %4862 = vmatprep.subr.mxu0 0.0
    %4863 = vmatpush1.msra.mxu0 0.0
    %4864 = vmatprep.subr.mxu0 0.0
    %4865 = vmatpush1.msra.mxu0 0.0
    %4866 = vmatprep.subr.mxu0 0.0
    %4867 = vmatpush1.msra.mxu0 0.0
    %4868 = vmatprep.subr.mxu0 0.0
    %4869 = vmatpush1.msra.mxu0 0.0
    %4870 = vmatprep.subr.mxu0 0.0
    %4871 = vmatpush1.msra.mxu0 0.0
    %4872 = vmatprep.subr.mxu0 0.0
    %4873 = vmatpush1.msra.mxu0 0.0
    %4874 = vmatprep.subr.mxu0 0.0
    %4875 = vmatpush1.msra.mxu0 0.0
    %4876 = vmatprep.subr.mxu0 0.0
    %4877 = vmatpush1.msra.mxu0 0.0
    %4878 = vmatprep.subr.mxu0 0.0
    %4879 = vmatpush1.msra.mxu0 0.0
    %4880 = vmatprep.subr.mxu0 0.0
    %4881 = vmatpush1.msra.mxu0 0.0
    %4882 = vmatprep.subr.mxu0 0.0
    %4883 = vmatpush1.msra.mxu0 0.0
    %4884 = vmatprep.subr.mxu0 0.0
    %4885 = vmatpush1.msra.mxu0 0.0
    %4886 = vmatprep.subr.mxu0 0.0
    %4887 = vmatpush1.msra.mxu0 0.0
    %4888 = vmatprep.subr.mxu0 0.0
    %4889 = vmatpush1.msra.mxu0 0.0
    %4890 = vmatprep.subr.mxu0 0.0
    %4891 = vmatpush1.msra.mxu0 0.0
    %4892 = vmatprep.subr.mxu0 0.0
    %4893 = vmatpush1.msra.mxu0 0.0
    %4894 = vmatprep.subr.mxu0 0.0
    %4895 = vmatpush1.msra.mxu0 0.0
    %4896 = vmatprep.subr.mxu0 0.0
    %4897 = vmatpush1.msra.mxu0 0.0
    %4898 = vmatprep.subr.mxu0 0.0
    %4899 = vmatpush1.msra.mxu0 0.0
    %4900 = vmatprep.subr.mxu0 0.0
    %4901 = vmatpush1.msra.mxu0 0.0
    %4902 = vmatprep.subr.mxu0 0.0
    %4903 = vmatpush1.msra.mxu0 0.0
    %4904 = vmatprep.subr.mxu0 0.0
    %4905 = vmatpush1.msra.mxu0 0.0
    %4906 = vmatprep.subr.mxu0 0.0
    %4907 = vmatpush1.msra.mxu0 0.0
    %4908 = vmatprep.subr.mxu0 0.0
    %4909 = vmatpush1.msra.mxu0 0.0
    %4910 = vmatprep.subr.mxu0 0.0
    %4911 = vmatpush1.msra.mxu0 0.0
    %4912 = vmatprep.subr.mxu0 0.0
    %4913 = vmatpush1.msra.mxu0 0.0
    %4914 = vmatprep.subr.mxu0 0.0
    %4915 = vmatpush1.msra.mxu0 0.0
    %4916 = vmatprep.subr.mxu0 0.0
    %4917 = vmatpush1.msra.mxu0 0.0
    %4918 = vmatprep.subr.mxu0 0.0
    %4919 = vmatpush1.msra.mxu0 0.0
    %4920 = vmatprep.subr.mxu0 0.0
    %4921 = vmatpush1.msra.mxu0 0.0
    %4922 = vmatprep.subr.mxu0 0.0
    %4923 = vmatpush1.msra.mxu0 0.0
    %4924 = vmatprep.mubr.f32.mxu0 0.0
    %4925 = vmatmul.mubr.f32.gmra.mrb[0].mxu0 %v4858
    %v4926 = vpop.f32.mrb[0].mxu0
    %v4927 = vadd.f32 0.0, %v4926
    %v4928 = vpop.f32.mrb[0].mxu0
    %4929 = vdwg.mxu0
    %4930 = vrot.lane.b32.xlu0 %v3409, 124
    %v4931 = vpop.permute.xlu0 %4930
    %4932 = vrot.lane.b32.xlu0 %v3409, 92
    %v4933 = vpop.permute.xlu0 %4932
    %v4934 = vsel %vm261, %v4931, 0
    %v4936 = vsel %vm261, %v4933, 0
    %4938 = vmatprep.subr.mxu0 0.0
    %4939 = vmatpush1.xpose.msra.mxu0 %v4936
    %4940 = vmatprep.subr.mxu0 0.0
    %4941 = vmatpush1.xpose.msra.mxu0 0.0
    %4942 = vmatprep.subr.mxu0 0.0
    %4943 = vmatpush1.xpose.msra.mxu0 0.0
    %4944 = vmatprep.subr.mxu0 0.0
    %4945 = vmatpush1.xpose.msra.mxu0 0.0
    %4946 = vmatprep.subr.mxu0 0.0
    %4947 = vmatpush1.xpose.msra.mxu0 0.0
    %4948 = vmatprep.subr.mxu0 0.0
    %4949 = vmatpush1.xpose.msra.mxu0 0.0
    %4950 = vmatprep.subr.mxu0 0.0
    %4951 = vmatpush1.xpose.msra.mxu0 0.0
    %4952 = vmatprep.subr.mxu0 0.0
    %4953 = vmatpush1.xpose.msra.mxu0 0.0
    %4954 = vmatprep.subr.mxu0 0.0
    %4955 = vmatpush1.xpose.msra.mxu0 0.0
    %4956 = vmatprep.subr.mxu0 0.0
    %4957 = vmatpush1.xpose.msra.mxu0 0.0
    %4958 = vmatprep.subr.mxu0 0.0
    %4959 = vmatpush1.xpose.msra.mxu0 0.0
    %4960 = vmatprep.subr.mxu0 0.0
    %4961 = vmatpush1.xpose.msra.mxu0 0.0
    %4962 = vmatprep.subr.mxu0 0.0
    %4963 = vmatpush1.xpose.msra.mxu0 0.0
    %4964 = vmatprep.subr.mxu0 0.0
    %4965 = vmatpush1.xpose.msra.mxu0 0.0
    %4966 = vmatprep.subr.mxu0 0.0
    %4967 = vmatpush1.xpose.msra.mxu0 0.0
    %4968 = vmatprep.subr.mxu0 0.0
    %4969 = vmatpush1.xpose.msra.mxu0 0.0
    %4970 = vmatprep.subr.mxu0 0.0
    %4971 = vmatpush1.xpose.msra.mxu0 0.0
    %4972 = vmatprep.subr.mxu0 0.0
    %4973 = vmatpush1.xpose.msra.mxu0 0.0
    %4974 = vmatprep.subr.mxu0 0.0
    %4975 = vmatpush1.xpose.msra.mxu0 0.0
    %4976 = vmatprep.subr.mxu0 0.0
    %4977 = vmatpush1.xpose.msra.mxu0 0.0
    %4978 = vmatprep.subr.mxu0 0.0
    %4979 = vmatpush1.xpose.msra.mxu0 0.0
    %4980 = vmatprep.subr.mxu0 0.0
    %4981 = vmatpush1.xpose.msra.mxu0 0.0
    %4982 = vmatprep.subr.mxu0 0.0
    %4983 = vmatpush1.xpose.msra.mxu0 0.0
    %4984 = vmatprep.subr.mxu0 0.0
    %4985 = vmatpush1.xpose.msra.mxu0 0.0
    %4986 = vmatprep.subr.mxu0 0.0
    %4987 = vmatpush1.xpose.msra.mxu0 0.0
    %4988 = vmatprep.subr.mxu0 0.0
    %4989 = vmatpush1.xpose.msra.mxu0 0.0
    %4990 = vmatprep.subr.mxu0 0.0
    %4991 = vmatpush1.xpose.msra.mxu0 0.0
    %4992 = vmatprep.subr.mxu0 0.0
    %4993 = vmatpush1.xpose.msra.mxu0 0.0
    %4994 = vmatprep.subr.mxu0 0.0
    %4995 = vmatpush1.xpose.msra.mxu0 0.0
    %4996 = vmatprep.subr.mxu0 0.0
    %4997 = vmatpush1.xpose.msra.mxu0 0.0
    %4998 = vmatprep.subr.mxu0 0.0
    %4999 = vmatpush1.xpose.msra.mxu0 0.0
    %5000 = vmatprep.subr.mxu0 0.0
    %5001 = vmatpush1.xpose.msra.mxu0 0.0
    %5002 = vmatprep.mubr.f32.mxu0 0.0
    %5003 = vmatmul.mubr.f32.gmra.mrb[0].mxu0 %v4934
    %v5004 = vpop.f32.mrb[0].mxu0
    %v5005 = vadd.f32 0.0, %v5004
    %v5006 = vpop.f32.mrb[0].mxu0
    %5007 = vdwg.mxu0
    %v5008 = vsel %vm336, %v5005, -inf
    %5009 = vmax.xlane.f32.xlu0 %v5008
    %v5010 = vpop.xlane.xlu0 %5009
    %v5011 = vsub.f32 %v5005, %v5010
    %v5012 = vmul.f32 %v5011, 1.442695
    %v5013 = vpow.pop %v5012
    %v5014 = vsel %vm336, %v5013, 0.0
    %5015 = vadd.xlane.f32.xlu0 %v5014
    %v5016 = vpop.xlane.xlu0 %5015
    %v5017 = vrcp.pop %v5016
    %v5018 = vmul.f32 %v5013, %v5017
    %5019 = vrot.lane.b32.xlu0 %v3409, 60
    %v5020 = vpop.permute.xlu0 %5019
    %v5023 = vsel %vm336, %v5018, 0
    %5025 = vmatprep.subr.mxu0 0.0
    %5026 = vmatpush1.msra.mxu0 %v5020
    %5027 = vmatprep.subr.mxu0 0.0
    %5028 = vmatpush1.msra.mxu0 0.0
    %5029 = vmatprep.subr.mxu0 0.0
    %5030 = vmatpush1.msra.mxu0 0.0
    %5031 = vmatprep.subr.mxu0 0.0
    %5032 = vmatpush1.msra.mxu0 0.0
    %5033 = vmatprep.subr.mxu0 0.0
    %5034 = vmatpush1.msra.mxu0 0.0
    %5035 = vmatprep.subr.mxu0 0.0
    %5036 = vmatpush1.msra.mxu0 0.0
    %5037 = vmatprep.subr.mxu0 0.0
    %5038 = vmatpush1.msra.mxu0 0.0
    %5039 = vmatprep.subr.mxu0 0.0
    %5040 = vmatpush1.msra.mxu0 0.0
    %5041 = vmatprep.subr.mxu0 0.0
    %5042 = vmatpush1.msra.mxu0 0.0
    %5043 = vmatprep.subr.mxu0 0.0
    %5044 = vmatpush1.msra.mxu0 0.0
    %5045 = vmatprep.subr.mxu0 0.0
    %5046 = vmatpush1.msra.mxu0 0.0
    %5047 = vmatprep.subr.mxu0 0.0
    %5048 = vmatpush1.msra.mxu0 0.0
    %5049 = vmatprep.subr.mxu0 0.0
    %5050 = vmatpush1.msra.mxu0 0.0
    %5051 = vmatprep.subr.mxu0 0.0
    %5052 = vmatpush1.msra.mxu0 0.0
    %5053 = vmatprep.subr.mxu0 0.0
    %5054 = vmatpush1.msra.mxu0 0.0
    %5055 = vmatprep.subr.mxu0 0.0
    %5056 = vmatpush1.msra.mxu0 0.0
    %5057 = vmatprep.subr.mxu0 0.0
    %5058 = vmatpush1.msra.mxu0 0.0
    %5059 = vmatprep.subr.mxu0 0.0
    %5060 = vmatpush1.msra.mxu0 0.0
    %5061 = vmatprep.subr.mxu0 0.0
    %5062 = vmatpush1.msra.mxu0 0.0
    %5063 = vmatprep.subr.mxu0 0.0
    %5064 = vmatpush1.msra.mxu0 0.0
    %5065 = vmatprep.subr.mxu0 0.0
    %5066 = vmatpush1.msra.mxu0 0.0
    %5067 = vmatprep.subr.mxu0 0.0
    %5068 = vmatpush1.msra.mxu0 0.0
    %5069 = vmatprep.subr.mxu0 0.0
    %5070 = vmatpush1.msra.mxu0 0.0
    %5071 = vmatprep.subr.mxu0 0.0
    %5072 = vmatpush1.msra.mxu0 0.0
    %5073 = vmatprep.subr.mxu0 0.0
    %5074 = vmatpush1.msra.mxu0 0.0
    %5075 = vmatprep.subr.mxu0 0.0
    %5076 = vmatpush1.msra.mxu0 0.0
    %5077 = vmatprep.subr.mxu0 0.0
    %5078 = vmatpush1.msra.mxu0 0.0
    %5079 = vmatprep.subr.mxu0 0.0
    %5080 = vmatpush1.msra.mxu0 0.0
    %5081 = vmatprep.subr.mxu0 0.0
    %5082 = vmatpush1.msra.mxu0 0.0
    %5083 = vmatprep.subr.mxu0 0.0
    %5084 = vmatpush1.msra.mxu0 0.0
    %5085 = vmatprep.subr.mxu0 0.0
    %5086 = vmatpush1.msra.mxu0 0.0
    %5087 = vmatprep.subr.mxu0 0.0
    %5088 = vmatpush1.msra.mxu0 0.0
    %5089 = vmatprep.mubr.f32.mxu0 0.0
    %5090 = vmatmul.mubr.f32.gmra.mrb[0].mxu0 %v5023
    %v5091 = vpop.f32.mrb[0].mxu0
    %v5092 = vadd.f32 0.0, %v5091
    %v5093 = vpop.f32.mrb[0].mxu0
    %5094 = vdwg.mxu0
    %5095 = vrot.lane.b32.xlu0 %v3409, 120
    %v5096 = vpop.permute.xlu0 %5095
    %5097 = vrot.lane.b32.xlu0 %v3409, 88
    %v5098 = vpop.permute.xlu0 %5097
    %v5099 = vsel %vm261, %v5096, 0
    %v5101 = vsel %vm261, %v5098, 0
    %5103 = vmatprep.subr.mxu0 0.0
    %5104 = vmatpush1.xpose.msra.mxu0 %v5101
    %5105 = vmatprep.subr.mxu0 0.0
    %5106 = vmatpush1.xpose.msra.mxu0 0.0
    %5107 = vmatprep.subr.mxu0 0.0
    %5108 = vmatpush1.xpose.msra.mxu0 0.0
    %5109 = vmatprep.subr.mxu0 0.0
    %5110 = vmatpush1.xpose.msra.mxu0 0.0
    %5111 = vmatprep.subr.mxu0 0.0
    %5112 = vmatpush1.xpose.msra.mxu0 0.0
    %5113 = vmatprep.subr.mxu0 0.0
    %5114 = vmatpush1.xpose.msra.mxu0 0.0
    %5115 = vmatprep.subr.mxu0 0.0
    %5116 = vmatpush1.xpose.msra.mxu0 0.0
    %5117 = vmatprep.subr.mxu0 0.0
    %5118 = vmatpush1.xpose.msra.mxu0 0.0
    %5119 = vmatprep.subr.mxu0 0.0
    %5120 = vmatpush1.xpose.msra.mxu0 0.0
    %5121 = vmatprep.subr.mxu0 0.0
    %5122 = vmatpush1.xpose.msra.mxu0 0.0
    %5123 = vmatprep.subr.mxu0 0.0
    %5124 = vmatpush1.xpose.msra.mxu0 0.0
    %5125 = vmatprep.subr.mxu0 0.0
    %5126 = vmatpush1.xpose.msra.mxu0 0.0
    %5127 = vmatprep.subr.mxu0 0.0
    %5128 = vmatpush1.xpose.msra.mxu0 0.0
    %5129 = vmatprep.subr.mxu0 0.0
    %5130 = vmatpush1.xpose.msra.mxu0 0.0
    %5131 = vmatprep.subr.mxu0 0.0
    %5132 = vmatpush1.xpose.msra.mxu0 0.0
    %5133 = vmatprep.subr.mxu0 0.0
    %5134 = vmatpush1.xpose.msra.mxu0 0.0
    %5135 = vmatprep.subr.mxu0 0.0
    %5136 = vmatpush1.xpose.msra.mxu0 0.0
    %5137 = vmatprep.subr.mxu0 0.0
    %5138 = vmatpush1.xpose.msra.mxu0 0.0
    %5139 = vmatprep.subr.mxu0 0.0
    %5140 = vmatpush1.xpose.msra.mxu0 0.0
    %5141 = vmatprep.subr.mxu0 0.0
    %5142 = vmatpush1.xpose.msra.mxu0 0.0
    %5143 = vmatprep.subr.mxu0 0.0
    %5144 = vmatpush1.xpose.msra.mxu0 0.0
    %5145 = vmatprep.subr.mxu0 0.0
    %5146 = vmatpush1.xpose.msra.mxu0 0.0
    %5147 = vmatprep.subr.mxu0 0.0
    %5148 = vmatpush1.xpose.msra.mxu0 0.0
    %5149 = vmatprep.subr.mxu0 0.0
    %5150 = vmatpush1.xpose.msra.mxu0 0.0
    %5151 = vmatprep.subr.mxu0 0.0
    %5152 = vmatpush1.xpose.msra.mxu0 0.0
    %5153 = vmatprep.subr.mxu0 0.0
    %5154 = vmatpush1.xpose.msra.mxu0 0.0
    %5155 = vmatprep.subr.mxu0 0.0
    %5156 = vmatpush1.xpose.msra.mxu0 0.0
    %5157 = vmatprep.subr.mxu0 0.0
    %5158 = vmatpush1.xpose.msra.mxu0 0.0
    %5159 = vmatprep.subr.mxu0 0.0
    %5160 = vmatpush1.xpose.msra.mxu0 0.0
    %5161 = vmatprep.subr.mxu0 0.0
    %5162 = vmatpush1.xpose.msra.mxu0 0.0
    %5163 = vmatprep.subr.mxu0 0.0
    %5164 = vmatpush1.xpose.msra.mxu0 0.0
    %5165 = vmatprep.subr.mxu0 0.0
    %5166 = vmatpush1.xpose.msra.mxu0 0.0
    %5167 = vmatprep.mubr.f32.mxu0 0.0
    %5168 = vmatmul.mubr.f32.gmra.mrb[0].mxu0 %v5099
    %v5169 = vpop.f32.mrb[0].mxu0
    %v5170 = vadd.f32 0.0, %v5169
    %v5171 = vpop.f32.mrb[0].mxu0
    %5172 = vdwg.mxu0
    %v5173 = vsel %vm336, %v5170, -inf
    %5174 = vmax.xlane.f32.xlu0 %v5173
    %v5175 = vpop.xlane.xlu0 %5174
    %v5176 = vsub.f32 %v5170, %v5175
    %v5177 = vmul.f32 %v5176, 1.442695
    %v5178 = vpow.pop %v5177
    %v5179 = vsel %vm336, %v5178, 0.0
    %5180 = vadd.xlane.f32.xlu0 %v5179
    %v5181 = vpop.xlane.xlu0 %5180
    %v5182 = vrcp.pop %v5181
    %v5183 = vmul.f32 %v5178, %v5182
    %5184 = vrot.lane.b32.xlu0 %v3409, 56
    %v5185 = vpop.permute.xlu0 %5184
    %v5188 = vsel %vm336, %v5183, 0
    %5190 = vmatprep.subr.mxu0 0.0
    %5191 = vmatpush1.msra.mxu0 %v5185
    %5192 = vmatprep.subr.mxu0 0.0
    %5193 = vmatpush1.msra.mxu0 0.0
    %5194 = vmatprep.subr.mxu0 0.0
    %5195 = vmatpush1.msra.mxu0 0.0
    %5196 = vmatprep.subr.mxu0 0.0
    %5197 = vmatpush1.msra.mxu0 0.0
    %5198 = vmatprep.subr.mxu0 0.0
    %5199 = vmatpush1.msra.mxu0 0.0
    %5200 = vmatprep.subr.mxu0 0.0
    %5201 = vmatpush1.msra.mxu0 0.0
    %5202 = vmatprep.subr.mxu0 0.0
    %5203 = vmatpush1.msra.mxu0 0.0
    %5204 = vmatprep.subr.mxu0 0.0
    %5205 = vmatpush1.msra.mxu0 0.0
    %5206 = vmatprep.subr.mxu0 0.0
    %5207 = vmatpush1.msra.mxu0 0.0
    %5208 = vmatprep.subr.mxu0 0.0
    %5209 = vmatpush1.msra.mxu0 0.0
    %5210 = vmatprep.subr.mxu0 0.0
    %5211 = vmatpush1.msra.mxu0 0.0
    %5212 = vmatprep.subr.mxu0 0.0
    %5213 = vmatpush1.msra.mxu0 0.0
    %5214 = vmatprep.subr.mxu0 0.0
    %5215 = vmatpush1.msra.mxu0 0.0
    %5216 = vmatprep.subr.mxu0 0.0
    %5217 = vmatpush1.msra.mxu0 0.0
    %5218 = vmatprep.subr.mxu0 0.0
    %5219 = vmatpush1.msra.mxu0 0.0
    %5220 = vmatprep.subr.mxu0 0.0
    %5221 = vmatpush1.msra.mxu0 0.0
    %5222 = vmatprep.subr.mxu0 0.0
    %5223 = vmatpush1.msra.mxu0 0.0
    %5224 = vmatprep.subr.mxu0 0.0
    %5225 = vmatpush1.msra.mxu0 0.0
    %5226 = vmatprep.subr.mxu0 0.0
    %5227 = vmatpush1.msra.mxu0 0.0
    %5228 = vmatprep.subr.mxu0 0.0
    %5229 = vmatpush1.msra.mxu0 0.0
    %5230 = vmatprep.subr.mxu0 0.0
    %5231 = vmatpush1.msra.mxu0 0.0
    %5232 = vmatprep.subr.mxu0 0.0
    %5233 = vmatpush1.msra.mxu0 0.0
    %5234 = vmatprep.subr.mxu0 0.0
    %5235 = vmatpush1.msra.mxu0 0.0
    %5236 = vmatprep.subr.mxu0 0.0
    %5237 = vmatpush1.msra.mxu0 0.0
    %5238 = vmatprep.subr.mxu0 0.0
    %5239 = vmatpush1.msra.mxu0 0.0
    %5240 = vmatprep.subr.mxu0 0.0
    %5241 = vmatpush1.msra.mxu0 0.0
    %5242 = vmatprep.subr.mxu0 0.0
    %5243 = vmatpush1.msra.mxu0 0.0
    %5244 = vmatprep.subr.mxu0 0.0
    %5245 = vmatpush1.msra.mxu0 0.0
    %5246 = vmatprep.subr.mxu0 0.0
    %5247 = vmatpush1.msra.mxu0 0.0
    %5248 = vmatprep.subr.mxu0 0.0
    %5249 = vmatpush1.msra.mxu0 0.0
    %5250 = vmatprep.subr.mxu0 0.0
    %5251 = vmatpush1.msra.mxu0 0.0
    %5252 = vmatprep.subr.mxu0 0.0
    %5253 = vmatpush1.msra.mxu0 0.0
    %5254 = vmatprep.mubr.f32.mxu0 0.0
    %5255 = vmatmul.mubr.f32.gmra.mrb[0].mxu0 %v5188
    %v5256 = vpop.f32.mrb[0].mxu0
    %v5257 = vadd.f32 0.0, %v5256
    %v5258 = vpop.f32.mrb[0].mxu0
    %5259 = vdwg.mxu0
    %5260 = vrot.lane.b32.xlu0 %v3409, 116
    %v5261 = vpop.permute.xlu0 %5260
    %5262 = vrot.lane.b32.xlu0 %v3409, 84
    %v5263 = vpop.permute.xlu0 %5262
    %v5264 = vsel %vm261, %v5261, 0
    %v5266 = vsel %vm261, %v5263, 0
    %5268 = vmatprep.subr.mxu0 0.0
    %5269 = vmatpush1.xpose.msra.mxu0 %v5266
    %5270 = vmatprep.subr.mxu0 0.0
    %5271 = vmatpush1.xpose.msra.mxu0 0.0
    %5272 = vmatprep.subr.mxu0 0.0
    %5273 = vmatpush1.xpose.msra.mxu0 0.0
    %5274 = vmatprep.subr.mxu0 0.0
    %5275 = vmatpush1.xpose.msra.mxu0 0.0
    %5276 = vmatprep.subr.mxu0 0.0
    %5277 = vmatpush1.xpose.msra.mxu0 0.0
    %5278 = vmatprep.subr.mxu0 0.0
    %5279 = vmatpush1.xpose.msra.mxu0 0.0
    %5280 = vmatprep.subr.mxu0 0.0
    %5281 = vmatpush1.xpose.msra.mxu0 0.0
    %5282 = vmatprep.subr.mxu0 0.0
    %5283 = vmatpush1.xpose.msra.mxu0 0.0
    %5284 = vmatprep.subr.mxu0 0.0
    %5285 = vmatpush1.xpose.msra.mxu0 0.0
    %5286 = vmatprep.subr.mxu0 0.0
    %5287 = vmatpush1.xpose.msra.mxu0 0.0
    %5288 = vmatprep.subr.mxu0 0.0
    %5289 = vmatpush1.xpose.msra.mxu0 0.0
    %5290 = vmatprep.subr.mxu0 0.0
    %5291 = vmatpush1.xpose.msra.mxu0 0.0
    %5292 = vmatprep.subr.mxu0 0.0
    %5293 = vmatpush1.xpose.msra.mxu0 0.0
    %5294 = vmatprep.subr.mxu0 0.0
    %5295 = vmatpush1.xpose.msra.mxu0 0.0
    %5296 = vmatprep.subr.mxu0 0.0
    %5297 = vmatpush1.xpose.msra.mxu0 0.0
    %5298 = vmatprep.subr.mxu0 0.0
    %5299 = vmatpush1.xpose.msra.mxu0 0.0
    %5300 = vmatprep.subr.mxu0 0.0
    %5301 = vmatpush1.xpose.msra.mxu0 0.0
    %5302 = vmatprep.subr.mxu0 0.0
    %5303 = vmatpush1.xpose.msra.mxu0 0.0
    %5304 = vmatprep.subr.mxu0 0.0
    %5305 = vmatpush1.xpose.msra.mxu0 0.0
    %5306 = vmatprep.subr.mxu0 0.0
    %5307 = vmatpush1.xpose.msra.mxu0 0.0
    %5308 = vmatprep.subr.mxu0 0.0
    %5309 = vmatpush1.xpose.msra.mxu0 0.0
    %5310 = vmatprep.subr.mxu0 0.0
    %5311 = vmatpush1.xpose.msra.mxu0 0.0
    %5312 = vmatprep.subr.mxu0 0.0
    %5313 = vmatpush1.xpose.msra.mxu0 0.0
    %5314 = vmatprep.subr.mxu0 0.0
    %5315 = vmatpush1.xpose.msra.mxu0 0.0
    %5316 = vmatprep.subr.mxu0 0.0
    %5317 = vmatpush1.xpose.msra.mxu0 0.0
    %5318 = vmatprep.subr.mxu0 0.0
    %5319 = vmatpush1.xpose.msra.mxu0 0.0
    %5320 = vmatprep.subr.mxu0 0.0
    %5321 = vmatpush1.xpose.msra.mxu0 0.0
    %5322 = vmatprep.subr.mxu0 0.0
    %5323 = vmatpush1.xpose.msra.mxu0 0.0
    %5324 = vmatprep.subr.mxu0 0.0
    %5325 = vmatpush1.xpose.msra.mxu0 0.0
    %5326 = vmatprep.subr.mxu0 0.0
    %5327 = vmatpush1.xpose.msra.mxu0 0.0
    %5328 = vmatprep.subr.mxu0 0.0
    %5329 = vmatpush1.xpose.msra.mxu0 0.0
    %5330 = vmatprep.subr.mxu0 0.0
    %5331 = vmatpush1.xpose.msra.mxu0 0.0
    %5332 = vmatprep.mubr.f32.mxu0 0.0
    %5333 = vmatmul.mubr.f32.gmra.mrb[0].mxu0 %v5264
    %v5334 = vpop.f32.mrb[0].mxu0
    %v5335 = vadd.f32 0.0, %v5334
    %v5336 = vpop.f32.mrb[0].mxu0
    %5337 = vdwg.mxu0
    %v5338 = vsel %vm336, %v5335, -inf
    %5339 = vmax.xlane.f32.xlu0 %v5338
    %v5340 = vpop.xlane.xlu0 %5339
    %v5341 = vsub.f32 %v5335, %v5340
    %v5342 = vmul.f32 %v5341, 1.442695
    %v5343 = vpow.pop %v5342
    %v5344 = vsel %vm336, %v5343, 0.0
    %5345 = vadd.xlane.f32.xlu0 %v5344
    %v5346 = vpop.xlane.xlu0 %5345
    %v5347 = vrcp.pop %v5346
    %v5348 = vmul.f32 %v5343, %v5347
    %5349 = vrot.lane.b32.xlu0 %v3409, 52
    %v5350 = vpop.permute.xlu0 %5349
    %v5353 = vsel %vm336, %v5348, 0
    %5355 = vmatprep.subr.mxu0 0.0
    %5356 = vmatpush1.msra.mxu0 %v5350
    %5357 = vmatprep.subr.mxu0 0.0
    %5358 = vmatpush1.msra.mxu0 0.0
    %5359 = vmatprep.subr.mxu0 0.0
    %5360 = vmatpush1.msra.mxu0 0.0
    %5361 = vmatprep.subr.mxu0 0.0
    %5362 = vmatpush1.msra.mxu0 0.0
    %5363 = vmatprep.subr.mxu0 0.0
    %5364 = vmatpush1.msra.mxu0 0.0
    %5365 = vmatprep.subr.mxu0 0.0
    %5366 = vmatpush1.msra.mxu0 0.0
    %5367 = vmatprep.subr.mxu0 0.0
    %5368 = vmatpush1.msra.mxu0 0.0
    %5369 = vmatprep.subr.mxu0 0.0
    %5370 = vmatpush1.msra.mxu0 0.0
    %5371 = vmatprep.subr.mxu0 0.0
    %5372 = vmatpush1.msra.mxu0 0.0
    %5373 = vmatprep.subr.mxu0 0.0
    %5374 = vmatpush1.msra.mxu0 0.0
    %5375 = vmatprep.subr.mxu0 0.0
    %5376 = vmatpush1.msra.mxu0 0.0
    %5377 = vmatprep.subr.mxu0 0.0
    %5378 = vmatpush1.msra.mxu0 0.0
    %5379 = vmatprep.subr.mxu0 0.0
    %5380 = vmatpush1.msra.mxu0 0.0
    %5381 = vmatprep.subr.mxu0 0.0
    %5382 = vmatpush1.msra.mxu0 0.0
    %5383 = vmatprep.subr.mxu0 0.0
    %5384 = vmatpush1.msra.mxu0 0.0
    %5385 = vmatprep.subr.mxu0 0.0
    %5386 = vmatpush1.msra.mxu0 0.0
    %5387 = vmatprep.subr.mxu0 0.0
    %5388 = vmatpush1.msra.mxu0 0.0
    %5389 = vmatprep.subr.mxu0 0.0
    %5390 = vmatpush1.msra.mxu0 0.0
    %5391 = vmatprep.subr.mxu0 0.0
    %5392 = vmatpush1.msra.mxu0 0.0
    %5393 = vmatprep.subr.mxu0 0.0
    %5394 = vmatpush1.msra.mxu0 0.0
    %5395 = vmatprep.subr.mxu0 0.0
    %5396 = vmatpush1.msra.mxu0 0.0
    %5397 = vmatprep.subr.mxu0 0.0
    %5398 = vmatpush1.msra.mxu0 0.0
    %5399 = vmatprep.subr.mxu0 0.0
    %5400 = vmatpush1.msra.mxu0 0.0
    %5401 = vmatprep.subr.mxu0 0.0
    %5402 = vmatpush1.msra.mxu0 0.0
    %5403 = vmatprep.subr.mxu0 0.0
    %5404 = vmatpush1.msra.mxu0 0.0
    %5405 = vmatprep.subr.mxu0 0.0
    %5406 = vmatpush1.msra.mxu0 0.0
    %5407 = vmatprep.subr.mxu0 0.0
    %5408 = vmatpush1.msra.mxu0 0.0
    %5409 = vmatprep.subr.mxu0 0.0
    %5410 = vmatpush1.msra.mxu0 0.0
    %5411 = vmatprep.subr.mxu0 0.0
    %5412 = vmatpush1.msra.mxu0 0.0
    %5413 = vmatprep.subr.mxu0 0.0
    %5414 = vmatpush1.msra.mxu0 0.0
    %5415 = vmatprep.subr.mxu0 0.0
    %5416 = vmatpush1.msra.mxu0 0.0
    %5417 = vmatprep.subr.mxu0 0.0
    %5418 = vmatpush1.msra.mxu0 0.0
    %5419 = vmatprep.mubr.f32.mxu0 0.0
    %5420 = vmatmul.mubr.f32.gmra.mrb[0].mxu0 %v5353
    %v5421 = vpop.f32.mrb[0].mxu0
    %v5422 = vadd.f32 0.0, %v5421
    %v5423 = vpop.f32.mrb[0].mxu0
    %5424 = vdwg.mxu0
    %5425 = vrot.lane.b32.xlu0 %v3409, 112
    %v5426 = vpop.permute.xlu0 %5425
    %5427 = vrot.lane.b32.xlu0 %v3409, 80
    %v5428 = vpop.permute.xlu0 %5427
    %v5429 = vsel %vm261, %v5426, 0
    %v5431 = vsel %vm261, %v5428, 0
    %5433 = vmatprep.subr.mxu0 0.0
    %5434 = vmatpush1.xpose.msra.mxu0 %v5431
    %5435 = vmatprep.subr.mxu0 0.0
    %5436 = vmatpush1.xpose.msra.mxu0 0.0
    %5437 = vmatprep.subr.mxu0 0.0
    %5438 = vmatpush1.xpose.msra.mxu0 0.0
    %5439 = vmatprep.subr.mxu0 0.0
    %5440 = vmatpush1.xpose.msra.mxu0 0.0
    %5441 = vmatprep.subr.mxu0 0.0
    %5442 = vmatpush1.xpose.msra.mxu0 0.0
    %5443 = vmatprep.subr.mxu0 0.0
    %5444 = vmatpush1.xpose.msra.mxu0 0.0
    %5445 = vmatprep.subr.mxu0 0.0
    %5446 = vmatpush1.xpose.msra.mxu0 0.0
    %5447 = vmatprep.subr.mxu0 0.0
    %5448 = vmatpush1.xpose.msra.mxu0 0.0
    %5449 = vmatprep.subr.mxu0 0.0
    %5450 = vmatpush1.xpose.msra.mxu0 0.0
    %5451 = vmatprep.subr.mxu0 0.0
    %5452 = vmatpush1.xpose.msra.mxu0 0.0
    %5453 = vmatprep.subr.mxu0 0.0
    %5454 = vmatpush1.xpose.msra.mxu0 0.0
    %5455 = vmatprep.subr.mxu0 0.0
    %5456 = vmatpush1.xpose.msra.mxu0 0.0
    %5457 = vmatprep.subr.mxu0 0.0
    %5458 = vmatpush1.xpose.msra.mxu0 0.0
    %5459 = vmatprep.subr.mxu0 0.0
    %5460 = vmatpush1.xpose.msra.mxu0 0.0
    %5461 = vmatprep.subr.mxu0 0.0
    %5462 = vmatpush1.xpose.msra.mxu0 0.0
    %5463 = vmatprep.subr.mxu0 0.0
    %5464 = vmatpush1.xpose.msra.mxu0 0.0
    %5465 = vmatprep.subr.mxu0 0.0
    %5466 = vmatpush1.xpose.msra.mxu0 0.0
    %5467 = vmatprep.subr.mxu0 0.0
    %5468 = vmatpush1.xpose.msra.mxu0 0.0
    %5469 = vmatprep.subr.mxu0 0.0
    %5470 = vmatpush1.xpose.msra.mxu0 0.0
    %5471 = vmatprep.subr.mxu0 0.0
    %5472 = vmatpush1.xpose.msra.mxu0 0.0
    %5473 = vmatprep.subr.mxu0 0.0
    %5474 = vmatpush1.xpose.msra.mxu0 0.0
    %5475 = vmatprep.subr.mxu0 0.0
    %5476 = vmatpush1.xpose.msra.mxu0 0.0
    %5477 = vmatprep.subr.mxu0 0.0
    %5478 = vmatpush1.xpose.msra.mxu0 0.0
    %5479 = vmatprep.subr.mxu0 0.0
    %5480 = vmatpush1.xpose.msra.mxu0 0.0
    %5481 = vmatprep.subr.mxu0 0.0
    %5482 = vmatpush1.xpose.msra.mxu0 0.0
    %5483 = vmatprep.subr.mxu0 0.0
    %5484 = vmatpush1.xpose.msra.mxu0 0.0
    %5485 = vmatprep.subr.mxu0 0.0
    %5486 = vmatpush1.xpose.msra.mxu0 0.0
    %5487 = vmatprep.subr.mxu0 0.0
    %5488 = vmatpush1.xpose.msra.mxu0 0.0
    %5489 = vmatprep.subr.mxu0 0.0
    %5490 = vmatpush1.xpose.msra.mxu0 0.0
    %5491 = vmatprep.subr.mxu0 0.0
    %5492 = vmatpush1.xpose.msra.mxu0 0.0
    %5493 = vmatprep.subr.mxu0 0.0
    %5494 = vmatpush1.xpose.msra.mxu0 0.0
    %5495 = vmatprep.subr.mxu0 0.0
    %5496 = vmatpush1.xpose.msra.mxu0 0.0
    %5497 = vmatprep.mubr.f32.mxu0 0.0
    %5498 = vmatmul.mubr.f32.gmra.mrb[0].mxu0 %v5429
    %v5499 = vpop.f32.mrb[0].mxu0
    %v5500 = vadd.f32 0.0, %v5499
    %v5501 = vpop.f32.mrb[0].mxu0
    %5502 = vdwg.mxu0
    %v5503 = vsel %vm336, %v5500, -inf
    %5504 = vmax.xlane.f32.xlu0 %v5503
    %v5505 = vpop.xlane.xlu0 %5504
    %v5506 = vsub.f32 %v5500, %v5505
    %v5507 = vmul.f32 %v5506, 1.442695
    %v5508 = vpow.pop %v5507
    %v5509 = vsel %vm336, %v5508, 0.0
    %5510 = vadd.xlane.f32.xlu0 %v5509
    %v5511 = vpop.xlane.xlu0 %5510
    %v5512 = vrcp.pop %v5511
    %v5513 = vmul.f32 %v5508, %v5512
    %5514 = vrot.lane.b32.xlu0 %v3409, 48
    %v5515 = vpop.permute.xlu0 %5514
    %v5518 = vsel %vm336, %v5513, 0
    %5520 = vmatprep.subr.mxu0 0.0
    %5521 = vmatpush1.msra.mxu0 %v5515
    %5522 = vmatprep.subr.mxu0 0.0
    %5523 = vmatpush1.msra.mxu0 0.0
    %5524 = vmatprep.subr.mxu0 0.0
    %5525 = vmatpush1.msra.mxu0 0.0
    %5526 = vmatprep.subr.mxu0 0.0
    %5527 = vmatpush1.msra.mxu0 0.0
    %5528 = vmatprep.subr.mxu0 0.0
    %5529 = vmatpush1.msra.mxu0 0.0
    %5530 = vmatprep.subr.mxu0 0.0
    %5531 = vmatpush1.msra.mxu0 0.0
    %5532 = vmatprep.subr.mxu0 0.0
    %5533 = vmatpush1.msra.mxu0 0.0
    %5534 = vmatprep.subr.mxu0 0.0
    %5535 = vmatpush1.msra.mxu0 0.0
    %5536 = vmatprep.subr.mxu0 0.0
    %5537 = vmatpush1.msra.mxu0 0.0
    %5538 = vmatprep.subr.mxu0 0.0
    %5539 = vmatpush1.msra.mxu0 0.0
    %5540 = vmatprep.subr.mxu0 0.0
    %5541 = vmatpush1.msra.mxu0 0.0
    %5542 = vmatprep.subr.mxu0 0.0
    %5543 = vmatpush1.msra.mxu0 0.0
    %5544 = vmatprep.subr.mxu0 0.0
    %5545 = vmatpush1.msra.mxu0 0.0
    %5546 = vmatprep.subr.mxu0 0.0
    %5547 = vmatpush1.msra.mxu0 0.0
    %5548 = vmatprep.subr.mxu0 0.0
    %5549 = vmatpush1.msra.mxu0 0.0
    %5550 = vmatprep.subr.mxu0 0.0
    %5551 = vmatpush1.msra.mxu0 0.0
    %5552 = vmatprep.subr.mxu0 0.0
    %5553 = vmatpush1.msra.mxu0 0.0
    %5554 = vmatprep.subr.mxu0 0.0
    %5555 = vmatpush1.msra.mxu0 0.0
    %5556 = vmatprep.subr.mxu0 0.0
    %5557 = vmatpush1.msra.mxu0 0.0
    %5558 = vmatprep.subr.mxu0 0.0
    %5559 = vmatpush1.msra.mxu0 0.0
    %5560 = vmatprep.subr.mxu0 0.0
    %5561 = vmatpush1.msra.mxu0 0.0
    %5562 = vmatprep.subr.mxu0 0.0
    %5563 = vmatpush1.msra.mxu0 0.0
    %5564 = vmatprep.subr.mxu0 0.0
    %5565 = vmatpush1.msra.mxu0 0.0
    %5566 = vmatprep.subr.mxu0 0.0
    %5567 = vmatpush1.msra.mxu0 0.0
    %5568 = vmatprep.subr.mxu0 0.0
    %5569 = vmatpush1.msra.mxu0 0.0
    %5570 = vmatprep.subr.mxu0 0.0
    %5571 = vmatpush1.msra.mxu0 0.0
    %5572 = vmatprep.subr.mxu0 0.0
    %5573 = vmatpush1.msra.mxu0 0.0
    %5574 = vmatprep.subr.mxu0 0.0
    %5575 = vmatpush1.msra.mxu0 0.0
    %5576 = vmatprep.subr.mxu0 0.0
    %5577 = vmatpush1.msra.mxu0 0.0
    %5578 = vmatprep.subr.mxu0 0.0
    %5579 = vmatpush1.msra.mxu0 0.0
    %5580 = vmatprep.subr.mxu0 0.0
    %5581 = vmatpush1.msra.mxu0 0.0
    %5582 = vmatprep.subr.mxu0 0.0
    %5583 = vmatpush1.msra.mxu0 0.0
    %5584 = vmatprep.mubr.f32.mxu0 0.0
    %5585 = vmatmul.mubr.f32.gmra.mrb[0].mxu0 %v5518
    %v5586 = vpop.f32.mrb[0].mxu0
    %v5587 = vadd.f32 0.0, %v5586
    %v5588 = vpop.f32.mrb[0].mxu0
    %5589 = vdwg.mxu0
    %5590 = vrot.lane.b32.xlu0 %v3409, 108
    %v5591 = vpop.permute.xlu0 %5590
    %5592 = vrot.lane.b32.xlu0 %v3409, 76
    %v5593 = vpop.permute.xlu0 %5592
    %v5594 = vsel %vm261, %v5591, 0
    %v5596 = vsel %vm261, %v5593, 0
    %5598 = vmatprep.subr.mxu0 0.0
    %5599 = vmatpush1.xpose.msra.mxu0 %v5596
    %5600 = vmatprep.subr.mxu0 0.0
    %5601 = vmatpush1.xpose.msra.mxu0 0.0
    %5602 = vmatprep.subr.mxu0 0.0
    %5603 = vmatpush1.xpose.msra.mxu0 0.0
    %5604 = vmatprep.subr.mxu0 0.0
    %5605 = vmatpush1.xpose.msra.mxu0 0.0
    %5606 = vmatprep.subr.mxu0 0.0
    %5607 = vmatpush1.xpose.msra.mxu0 0.0
    %5608 = vmatprep.subr.mxu0 0.0
    %5609 = vmatpush1.xpose.msra.mxu0 0.0
    %5610 = vmatprep.subr.mxu0 0.0
    %5611 = vmatpush1.xpose.msra.mxu0 0.0
    %5612 = vmatprep.subr.mxu0 0.0
    %5613 = vmatpush1.xpose.msra.mxu0 0.0
    %5614 = vmatprep.subr.mxu0 0.0
    %5615 = vmatpush1.xpose.msra.mxu0 0.0
    %5616 = vmatprep.subr.mxu0 0.0
    %5617 = vmatpush1.xpose.msra.mxu0 0.0
    %5618 = vmatprep.subr.mxu0 0.0
    %5619 = vmatpush1.xpose.msra.mxu0 0.0
    %5620 = vmatprep.subr.mxu0 0.0
    %5621 = vmatpush1.xpose.msra.mxu0 0.0
    %5622 = vmatprep.subr.mxu0 0.0
    %5623 = vmatpush1.xpose.msra.mxu0 0.0
    %5624 = vmatprep.subr.mxu0 0.0
    %5625 = vmatpush1.xpose.msra.mxu0 0.0
    %5626 = vmatprep.subr.mxu0 0.0
    %5627 = vmatpush1.xpose.msra.mxu0 0.0
    %5628 = vmatprep.subr.mxu0 0.0
    %5629 = vmatpush1.xpose.msra.mxu0 0.0
    %5630 = vmatprep.subr.mxu0 0.0
    %5631 = vmatpush1.xpose.msra.mxu0 0.0
    %5632 = vmatprep.subr.mxu0 0.0
    %5633 = vmatpush1.xpose.msra.mxu0 0.0
    %5634 = vmatprep.subr.mxu0 0.0
    %5635 = vmatpush1.xpose.msra.mxu0 0.0
    %5636 = vmatprep.subr.mxu0 0.0
    %5637 = vmatpush1.xpose.msra.mxu0 0.0
    %5638 = vmatprep.subr.mxu0 0.0
    %5639 = vmatpush1.xpose.msra.mxu0 0.0
    %5640 = vmatprep.subr.mxu0 0.0
    %5641 = vmatpush1.xpose.msra.mxu0 0.0
    %5642 = vmatprep.subr.mxu0 0.0
    %5643 = vmatpush1.xpose.msra.mxu0 0.0
    %5644 = vmatprep.subr.mxu0 0.0
    %5645 = vmatpush1.xpose.msra.mxu0 0.0
    %5646 = vmatprep.subr.mxu0 0.0
    %5647 = vmatpush1.xpose.msra.mxu0 0.0
    %5648 = vmatprep.subr.mxu0 0.0
    %5649 = vmatpush1.xpose.msra.mxu0 0.0
    %5650 = vmatprep.subr.mxu0 0.0
    %5651 = vmatpush1.xpose.msra.mxu0 0.0
    %5652 = vmatprep.subr.mxu0 0.0
    %5653 = vmatpush1.xpose.msra.mxu0 0.0
    %5654 = vmatprep.subr.mxu0 0.0
    %5655 = vmatpush1.xpose.msra.mxu0 0.0
    %5656 = vmatprep.subr.mxu0 0.0
    %5657 = vmatpush1.xpose.msra.mxu0 0.0
    %5658 = vmatprep.subr.mxu0 0.0
    %5659 = vmatpush1.xpose.msra.mxu0 0.0
    %5660 = vmatprep.subr.mxu0 0.0
    %5661 = vmatpush1.xpose.msra.mxu0 0.0
    %5662 = vmatprep.mubr.f32.mxu0 0.0
    %5663 = vmatmul.mubr.f32.gmra.mrb[0].mxu0 %v5594
    %v5664 = vpop.f32.mrb[0].mxu0
    %v5665 = vadd.f32 0.0, %v5664
    %v5666 = vpop.f32.mrb[0].mxu0
    %5667 = vdwg.mxu0
    %v5668 = vsel %vm336, %v5665, -inf
    %5669 = vmax.xlane.f32.xlu0 %v5668
    %v5670 = vpop.xlane.xlu0 %5669
    %v5671 = vsub.f32 %v5665, %v5670
    %v5672 = vmul.f32 %v5671, 1.442695
    %v5673 = vpow.pop %v5672
    %v5674 = vsel %vm336, %v5673, 0.0
    %5675 = vadd.xlane.f32.xlu0 %v5674
    %v5676 = vpop.xlane.xlu0 %5675
    %v5677 = vrcp.pop %v5676
    %v5678 = vmul.f32 %v5673, %v5677
    %5679 = vrot.lane.b32.xlu0 %v3409, 44
    %v5680 = vpop.permute.xlu0 %5679
    %v5683 = vsel %vm336, %v5678, 0
    %5685 = vmatprep.subr.mxu0 0.0
    %5686 = vmatpush1.msra.mxu0 %v5680
    %5687 = vmatprep.subr.mxu0 0.0
    %5688 = vmatpush1.msra.mxu0 0.0
    %5689 = vmatprep.subr.mxu0 0.0
    %5690 = vmatpush1.msra.mxu0 0.0
    %5691 = vmatprep.subr.mxu0 0.0
    %5692 = vmatpush1.msra.mxu0 0.0
    %5693 = vmatprep.subr.mxu0 0.0
    %5694 = vmatpush1.msra.mxu0 0.0
    %5695 = vmatprep.subr.mxu0 0.0
    %5696 = vmatpush1.msra.mxu0 0.0
    %5697 = vmatprep.subr.mxu0 0.0
    %5698 = vmatpush1.msra.mxu0 0.0
    %5699 = vmatprep.subr.mxu0 0.0
    %5700 = vmatpush1.msra.mxu0 0.0
    %5701 = vmatprep.subr.mxu0 0.0
    %5702 = vmatpush1.msra.mxu0 0.0
    %5703 = vmatprep.subr.mxu0 0.0
    %5704 = vmatpush1.msra.mxu0 0.0
    %5705 = vmatprep.subr.mxu0 0.0
    %5706 = vmatpush1.msra.mxu0 0.0
    %5707 = vmatprep.subr.mxu0 0.0
    %5708 = vmatpush1.msra.mxu0 0.0
    %5709 = vmatprep.subr.mxu0 0.0
    %5710 = vmatpush1.msra.mxu0 0.0
    %5711 = vmatprep.subr.mxu0 0.0
    %5712 = vmatpush1.msra.mxu0 0.0
    %5713 = vmatprep.subr.mxu0 0.0
    %5714 = vmatpush1.msra.mxu0 0.0
    %5715 = vmatprep.subr.mxu0 0.0
    %5716 = vmatpush1.msra.mxu0 0.0
    %5717 = vmatprep.subr.mxu0 0.0
    %5718 = vmatpush1.msra.mxu0 0.0
    %5719 = vmatprep.subr.mxu0 0.0
    %5720 = vmatpush1.msra.mxu0 0.0
    %5721 = vmatprep.subr.mxu0 0.0
    %5722 = vmatpush1.msra.mxu0 0.0
    %5723 = vmatprep.subr.mxu0 0.0
    %5724 = vmatpush1.msra.mxu0 0.0
    %5725 = vmatprep.subr.mxu0 0.0
    %5726 = vmatpush1.msra.mxu0 0.0
    %5727 = vmatprep.subr.mxu0 0.0
    %5728 = vmatpush1.msra.mxu0 0.0
    %5729 = vmatprep.subr.mxu0 0.0
    %5730 = vmatpush1.msra.mxu0 0.0
    %5731 = vmatprep.subr.mxu0 0.0
    %5732 = vmatpush1.msra.mxu0 0.0
    %5733 = vmatprep.subr.mxu0 0.0
    %5734 = vmatpush1.msra.mxu0 0.0
    %5735 = vmatprep.subr.mxu0 0.0
    %5736 = vmatpush1.msra.mxu0 0.0
    %5737 = vmatprep.subr.mxu0 0.0
    %5738 = vmatpush1.msra.mxu0 0.0
    %5739 = vmatprep.subr.mxu0 0.0
    %5740 = vmatpush1.msra.mxu0 0.0
    %5741 = vmatprep.subr.mxu0 0.0
    %5742 = vmatpush1.msra.mxu0 0.0
    %5743 = vmatprep.subr.mxu0 0.0
    %5744 = vmatpush1.msra.mxu0 0.0
    %5745 = vmatprep.subr.mxu0 0.0
    %5746 = vmatpush1.msra.mxu0 0.0
    %5747 = vmatprep.subr.mxu0 0.0
    %5748 = vmatpush1.msra.mxu0 0.0
    %5749 = vmatprep.mubr.f32.mxu0 0.0
    %5750 = vmatmul.mubr.f32.gmra.mrb[0].mxu0 %v5683
    %v5751 = vpop.f32.mrb[0].mxu0
    %v5752 = vadd.f32 0.0, %v5751
    %v5753 = vpop.f32.mrb[0].mxu0
    %5754 = vdwg.mxu0
    %5755 = vrot.lane.b32.xlu0 %v3409, 104
    %v5756 = vpop.permute.xlu0 %5755
    %5757 = vrot.lane.b32.xlu0 %v3409, 72
    %v5758 = vpop.permute.xlu0 %5757
    %v5759 = vsel %vm261, %v5756, 0
    %v5761 = vsel %vm261, %v5758, 0
    %5763 = vmatprep.subr.mxu0 0.0
    %5764 = vmatpush1.xpose.msra.mxu0 %v5761
    %5765 = vmatprep.subr.mxu0 0.0
    %5766 = vmatpush1.xpose.msra.mxu0 0.0
    %5767 = vmatprep.subr.mxu0 0.0
    %5768 = vmatpush1.xpose.msra.mxu0 0.0
    %5769 = vmatprep.subr.mxu0 0.0
    %5770 = vmatpush1.xpose.msra.mxu0 0.0
    %5771 = vmatprep.subr.mxu0 0.0
    %5772 = vmatpush1.xpose.msra.mxu0 0.0
    %5773 = vmatprep.subr.mxu0 0.0
    %5774 = vmatpush1.xpose.msra.mxu0 0.0
    %5775 = vmatprep.subr.mxu0 0.0
    %5776 = vmatpush1.xpose.msra.mxu0 0.0
    %5777 = vmatprep.subr.mxu0 0.0
    %5778 = vmatpush1.xpose.msra.mxu0 0.0
    %5779 = vmatprep.subr.mxu0 0.0
    %5780 = vmatpush1.xpose.msra.mxu0 0.0
    %5781 = vmatprep.subr.mxu0 0.0
    %5782 = vmatpush1.xpose.msra.mxu0 0.0
    %5783 = vmatprep.subr.mxu0 0.0
    %5784 = vmatpush1.xpose.msra.mxu0 0.0
    %5785 = vmatprep.subr.mxu0 0.0
    %5786 = vmatpush1.xpose.msra.mxu0 0.0
    %5787 = vmatprep.subr.mxu0 0.0
    %5788 = vmatpush1.xpose.msra.mxu0 0.0
    %5789 = vmatprep.subr.mxu0 0.0
    %5790 = vmatpush1.xpose.msra.mxu0 0.0
    %5791 = vmatprep.subr.mxu0 0.0
    %5792 = vmatpush1.xpose.msra.mxu0 0.0
    %5793 = vmatprep.subr.mxu0 0.0
    %5794 = vmatpush1.xpose.msra.mxu0 0.0
    %5795 = vmatprep.subr.mxu0 0.0
    %5796 = vmatpush1.xpose.msra.mxu0 0.0
    %5797 = vmatprep.subr.mxu0 0.0
    %5798 = vmatpush1.xpose.msra.mxu0 0.0
    %5799 = vmatprep.subr.mxu0 0.0
    %5800 = vmatpush1.xpose.msra.mxu0 0.0
    %5801 = vmatprep.subr.mxu0 0.0
    %5802 = vmatpush1.xpose.msra.mxu0 0.0
    %5803 = vmatprep.subr.mxu0 0.0
    %5804 = vmatpush1.xpose.msra.mxu0 0.0
    %5805 = vmatprep.subr.mxu0 0.0
    %5806 = vmatpush1.xpose.msra.mxu0 0.0
    %5807 = vmatprep.subr.mxu0 0.0
    %5808 = vmatpush1.xpose.msra.mxu0 0.0
    %5809 = vmatprep.subr.mxu0 0.0
    %5810 = vmatpush1.xpose.msra.mxu0 0.0
    %5811 = vmatprep.subr.mxu0 0.0
    %5812 = vmatpush1.xpose.msra.mxu0 0.0
    %5813 = vmatprep.subr.mxu0 0.0
    %5814 = vmatpush1.xpose.msra.mxu0 0.0
    %5815 = vmatprep.subr.mxu0 0.0
    %5816 = vmatpush1.xpose.msra.mxu0 0.0
    %5817 = vmatprep.subr.mxu0 0.0
    %5818 = vmatpush1.xpose.msra.mxu0 0.0
    %5819 = vmatprep.subr.mxu0 0.0
    %5820 = vmatpush1.xpose.msra.mxu0 0.0
    %5821 = vmatprep.subr.mxu0 0.0
    %5822 = vmatpush1.xpose.msra.mxu0 0.0
    %5823 = vmatprep.subr.mxu0 0.0
    %5824 = vmatpush1.xpose.msra.mxu0 0.0
    %5825 = vmatprep.subr.mxu0 0.0
    %5826 = vmatpush1.xpose.msra.mxu0 0.0
    %5827 = vmatprep.mubr.f32.mxu0 0.0
    %5828 = vmatmul.mubr.f32.gmra.mrb[0].mxu0 %v5759
    %v5829 = vpop.f32.mrb[0].mxu0
    %v5830 = vadd.f32 0.0, %v5829
    %v5831 = vpop.f32.mrb[0].mxu0
    %5832 = vdwg.mxu0
    %v5833 = vsel %vm336, %v5830, -inf
    %5834 = vmax.xlane.f32.xlu0 %v5833
    %v5835 = vpop.xlane.xlu0 %5834
    %v5836 = vsub.f32 %v5830, %v5835
    %v5837 = vmul.f32 %v5836, 1.442695
    %v5838 = vpow.pop %v5837
    %v5839 = vsel %vm336, %v5838, 0.0
    %5840 = vadd.xlane.f32.xlu0 %v5839
    %v5841 = vpop.xlane.xlu0 %5840
    %v5842 = vrcp.pop %v5841
    %v5843 = vmul.f32 %v5838, %v5842
    %5844 = vrot.lane.b32.xlu0 %v3409, 40
    %v5845 = vpop.permute.xlu0 %5844
    %v5848 = vsel %vm336, %v5843, 0
    %5850 = vmatprep.subr.mxu0 0.0
    %5851 = vmatpush1.msra.mxu0 %v5845
    %5852 = vmatprep.subr.mxu0 0.0
    %5853 = vmatpush1.msra.mxu0 0.0
    %5854 = vmatprep.subr.mxu0 0.0
    %5855 = vmatpush1.msra.mxu0 0.0
    %5856 = vmatprep.subr.mxu0 0.0
    %5857 = vmatpush1.msra.mxu0 0.0
    %5858 = vmatprep.subr.mxu0 0.0
    %5859 = vmatpush1.msra.mxu0 0.0
    %5860 = vmatprep.subr.mxu0 0.0
    %5861 = vmatpush1.msra.mxu0 0.0
    %5862 = vmatprep.subr.mxu0 0.0
    %5863 = vmatpush1.msra.mxu0 0.0
    %5864 = vmatprep.subr.mxu0 0.0
    %5865 = vmatpush1.msra.mxu0 0.0
    %5866 = vmatprep.subr.mxu0 0.0
    %5867 = vmatpush1.msra.mxu0 0.0
    %5868 = vmatprep.subr.mxu0 0.0
    %5869 = vmatpush1.msra.mxu0 0.0
    %5870 = vmatprep.subr.mxu0 0.0
    %5871 = vmatpush1.msra.mxu0 0.0
    %5872 = vmatprep.subr.mxu0 0.0
    %5873 = vmatpush1.msra.mxu0 0.0
    %5874 = vmatprep.subr.mxu0 0.0
    %5875 = vmatpush1.msra.mxu0 0.0
    %5876 = vmatprep.subr.mxu0 0.0
    %5877 = vmatpush1.msra.mxu0 0.0
    %5878 = vmatprep.subr.mxu0 0.0
    %5879 = vmatpush1.msra.mxu0 0.0
    %5880 = vmatprep.subr.mxu0 0.0
    %5881 = vmatpush1.msra.mxu0 0.0
    %5882 = vmatprep.subr.mxu0 0.0
    %5883 = vmatpush1.msra.mxu0 0.0
    %5884 = vmatprep.subr.mxu0 0.0
    %5885 = vmatpush1.msra.mxu0 0.0
    %5886 = vmatprep.subr.mxu0 0.0
    %5887 = vmatpush1.msra.mxu0 0.0
    %5888 = vmatprep.subr.mxu0 0.0
    %5889 = vmatpush1.msra.mxu0 0.0
    %5890 = vmatprep.subr.mxu0 0.0
    %5891 = vmatpush1.msra.mxu0 0.0
    %5892 = vmatprep.subr.mxu0 0.0
    %5893 = vmatpush1.msra.mxu0 0.0
    %5894 = vmatprep.subr.mxu0 0.0
    %5895 = vmatpush1.msra.mxu0 0.0
    %5896 = vmatprep.subr.mxu0 0.0
    %5897 = vmatpush1.msra.mxu0 0.0
    %5898 = vmatprep.subr.mxu0 0.0
    %5899 = vmatpush1.msra.mxu0 0.0
    %5900 = vmatprep.subr.mxu0 0.0
    %5901 = vmatpush1.msra.mxu0 0.0
    %5902 = vmatprep.subr.mxu0 0.0
    %5903 = vmatpush1.msra.mxu0 0.0
    %5904 = vmatprep.subr.mxu0 0.0
    %5905 = vmatpush1.msra.mxu0 0.0
    %5906 = vmatprep.subr.mxu0 0.0
    %5907 = vmatpush1.msra.mxu0 0.0
    %5908 = vmatprep.subr.mxu0 0.0
    %5909 = vmatpush1.msra.mxu0 0.0
    %5910 = vmatprep.subr.mxu0 0.0
    %5911 = vmatpush1.msra.mxu0 0.0
    %5912 = vmatprep.subr.mxu0 0.0
    %5913 = vmatpush1.msra.mxu0 0.0
    %5914 = vmatprep.mubr.f32.mxu0 0.0
    %5915 = vmatmul.mubr.f32.gmra.mrb[0].mxu0 %v5848
    %v5916 = vpop.f32.mrb[0].mxu0
    %v5917 = vadd.f32 0.0, %v5916
    %v5918 = vpop.f32.mrb[0].mxu0
    %5919 = vdwg.mxu0
    %5920 = vrot.lane.b32.xlu0 %v3409, 100
    %v5921 = vpop.permute.xlu0 %5920
    %5922 = vrot.lane.b32.xlu0 %v3409, 68
    %v5923 = vpop.permute.xlu0 %5922
    %v5924 = vsel %vm261, %v5921, 0
    %v5926 = vsel %vm261, %v5923, 0
    %5928 = vmatprep.subr.mxu0 0.0
    %5929 = vmatpush1.xpose.msra.mxu0 %v5926
    %5930 = vmatprep.subr.mxu0 0.0
    %5931 = vmatpush1.xpose.msra.mxu0 0.0
    %5932 = vmatprep.subr.mxu0 0.0
    %5933 = vmatpush1.xpose.msra.mxu0 0.0
    %5934 = vmatprep.subr.mxu0 0.0
    %5935 = vmatpush1.xpose.msra.mxu0 0.0
    %5936 = vmatprep.subr.mxu0 0.0
    %5937 = vmatpush1.xpose.msra.mxu0 0.0
    %5938 = vmatprep.subr.mxu0 0.0
    %5939 = vmatpush1.xpose.msra.mxu0 0.0
    %5940 = vmatprep.subr.mxu0 0.0
    %5941 = vmatpush1.xpose.msra.mxu0 0.0
    %5942 = vmatprep.subr.mxu0 0.0
    %5943 = vmatpush1.xpose.msra.mxu0 0.0
    %5944 = vmatprep.subr.mxu0 0.0
    %5945 = vmatpush1.xpose.msra.mxu0 0.0
    %5946 = vmatprep.subr.mxu0 0.0
    %5947 = vmatpush1.xpose.msra.mxu0 0.0
    %5948 = vmatprep.subr.mxu0 0.0
    %5949 = vmatpush1.xpose.msra.mxu0 0.0
    %5950 = vmatprep.subr.mxu0 0.0
    %5951 = vmatpush1.xpose.msra.mxu0 0.0
    %5952 = vmatprep.subr.mxu0 0.0
    %5953 = vmatpush1.xpose.msra.mxu0 0.0
    %5954 = vmatprep.subr.mxu0 0.0
    %5955 = vmatpush1.xpose.msra.mxu0 0.0
    %5956 = vmatprep.subr.mxu0 0.0
    %5957 = vmatpush1.xpose.msra.mxu0 0.0
    %5958 = vmatprep.subr.mxu0 0.0
    %5959 = vmatpush1.xpose.msra.mxu0 0.0
    %5960 = vmatprep.subr.mxu0 0.0
    %5961 = vmatpush1.xpose.msra.mxu0 0.0
    %5962 = vmatprep.subr.mxu0 0.0
    %5963 = vmatpush1.xpose.msra.mxu0 0.0
    %5964 = vmatprep.subr.mxu0 0.0
    %5965 = vmatpush1.xpose.msra.mxu0 0.0
    %5966 = vmatprep.subr.mxu0 0.0
    %5967 = vmatpush1.xpose.msra.mxu0 0.0
    %5968 = vmatprep.subr.mxu0 0.0
    %5969 = vmatpush1.xpose.msra.mxu0 0.0
    %5970 = vmatprep.subr.mxu0 0.0
    %5971 = vmatpush1.xpose.msra.mxu0 0.0
    %5972 = vmatprep.subr.mxu0 0.0
    %5973 = vmatpush1.xpose.msra.mxu0 0.0
    %5974 = vmatprep.subr.mxu0 0.0
    %5975 = vmatpush1.xpose.msra.mxu0 0.0
    %5976 = vmatprep.subr.mxu0 0.0
    %5977 = vmatpush1.xpose.msra.mxu0 0.0
    %5978 = vmatprep.subr.mxu0 0.0
    %5979 = vmatpush1.xpose.msra.mxu0 0.0
    %5980 = vmatprep.subr.mxu0 0.0
    %5981 = vmatpush1.xpose.msra.mxu0 0.0
    %5982 = vmatprep.subr.mxu0 0.0
    %5983 = vmatpush1.xpose.msra.mxu0 0.0
    %5984 = vmatprep.subr.mxu0 0.0
    %5985 = vmatpush1.xpose.msra.mxu0 0.0
    %5986 = vmatprep.subr.mxu0 0.0
    %5987 = vmatpush1.xpose.msra.mxu0 0.0
    %5988 = vmatprep.subr.mxu0 0.0
    %5989 = vmatpush1.xpose.msra.mxu0 0.0
    %5990 = vmatprep.subr.mxu0 0.0
    %5991 = vmatpush1.xpose.msra.mxu0 0.0
    %5992 = vmatprep.mubr.f32.mxu0 0.0
    %5993 = vmatmul.mubr.f32.gmra.mrb[0].mxu0 %v5924
    %v5994 = vpop.f32.mrb[0].mxu0
    %v5995 = vadd.f32 0.0, %v5994
    %v5996 = vpop.f32.mrb[0].mxu0
    %5997 = vdwg.mxu0
    %v5998 = vsel %vm336, %v5995, -inf
    %5999 = vmax.xlane.f32.xlu0 %v5998
    %v6000 = vpop.xlane.xlu0 %5999
    %v6001 = vsub.f32 %v5995, %v6000
    %v6002 = vmul.f32 %v6001, 1.442695
    %v6003 = vpow.pop %v6002
    %v6004 = vsel %vm336, %v6003, 0.0
    %6005 = vadd.xlane.f32.xlu0 %v6004
    %v6006 = vpop.xlane.xlu0 %6005
    %v6007 = vrcp.pop %v6006
    %v6008 = vmul.f32 %v6003, %v6007
    %6009 = vrot.lane.b32.xlu0 %v3409, 36
    %v6010 = vpop.permute.xlu0 %6009
    %v6013 = vsel %vm336, %v6008, 0
    %6015 = vmatprep.subr.mxu0 0.0
    %6016 = vmatpush1.msra.mxu0 %v6010
    %6017 = vmatprep.subr.mxu0 0.0
    %6018 = vmatpush1.msra.mxu0 0.0
    %6019 = vmatprep.subr.mxu0 0.0
    %6020 = vmatpush1.msra.mxu0 0.0
    %6021 = vmatprep.subr.mxu0 0.0
    %6022 = vmatpush1.msra.mxu0 0.0
    %6023 = vmatprep.subr.mxu0 0.0
    %6024 = vmatpush1.msra.mxu0 0.0
    %6025 = vmatprep.subr.mxu0 0.0
    %6026 = vmatpush1.msra.mxu0 0.0
    %6027 = vmatprep.subr.mxu0 0.0
    %6028 = vmatpush1.msra.mxu0 0.0
    %6029 = vmatprep.subr.mxu0 0.0
    %6030 = vmatpush1.msra.mxu0 0.0
    %6031 = vmatprep.subr.mxu0 0.0
    %6032 = vmatpush1.msra.mxu0 0.0
    %6033 = vmatprep.subr.mxu0 0.0
    %6034 = vmatpush1.msra.mxu0 0.0
    %6035 = vmatprep.subr.mxu0 0.0
    %6036 = vmatpush1.msra.mxu0 0.0
    %6037 = vmatprep.subr.mxu0 0.0
    %6038 = vmatpush1.msra.mxu0 0.0
    %6039 = vmatprep.subr.mxu0 0.0
    %6040 = vmatpush1.msra.mxu0 0.0
    %6041 = vmatprep.subr.mxu0 0.0
    %6042 = vmatpush1.msra.mxu0 0.0
    %6043 = vmatprep.subr.mxu0 0.0
    %6044 = vmatpush1.msra.mxu0 0.0
    %6045 = vmatprep.subr.mxu0 0.0
    %6046 = vmatpush1.msra.mxu0 0.0
    %6047 = vmatprep.subr.mxu0 0.0
    %6048 = vmatpush1.msra.mxu0 0.0
    %6049 = vmatprep.subr.mxu0 0.0
    %6050 = vmatpush1.msra.mxu0 0.0
    %6051 = vmatprep.subr.mxu0 0.0
    %6052 = vmatpush1.msra.mxu0 0.0
    %6053 = vmatprep.subr.mxu0 0.0
    %6054 = vmatpush1.msra.mxu0 0.0
    %6055 = vmatprep.subr.mxu0 0.0
    %6056 = vmatpush1.msra.mxu0 0.0
    %6057 = vmatprep.subr.mxu0 0.0
    %6058 = vmatpush1.msra.mxu0 0.0
    %6059 = vmatprep.subr.mxu0 0.0
    %6060 = vmatpush1.msra.mxu0 0.0
    %6061 = vmatprep.subr.mxu0 0.0
    %6062 = vmatpush1.msra.mxu0 0.0
    %6063 = vmatprep.subr.mxu0 0.0
    %6064 = vmatpush1.msra.mxu0 0.0
    %6065 = vmatprep.subr.mxu0 0.0
    %6066 = vmatpush1.msra.mxu0 0.0
    %6067 = vmatprep.subr.mxu0 0.0
    %6068 = vmatpush1.msra.mxu0 0.0
    %6069 = vmatprep.subr.mxu0 0.0
    %6070 = vmatpush1.msra.mxu0 0.0
    %6071 = vmatprep.subr.mxu0 0.0
    %6072 = vmatpush1.msra.mxu0 0.0
    %6073 = vmatprep.subr.mxu0 0.0
    %6074 = vmatpush1.msra.mxu0 0.0
    %6075 = vmatprep.subr.mxu0 0.0
    %6076 = vmatpush1.msra.mxu0 0.0
    %6077 = vmatprep.subr.mxu0 0.0
    %6078 = vmatpush1.msra.mxu0 0.0
    %6079 = vmatprep.mubr.f32.mxu0 0.0
    %6080 = vmatmul.mubr.f32.gmra.mrb[0].mxu0 %v6013
    %v6081 = vpop.f32.mrb[0].mxu0
    %v6082 = vadd.f32 0.0, %v6081
    %v6083 = vpop.f32.mrb[0].mxu0
    %6084 = vdwg.mxu0
    %6086 = vrot.lane.b32.xlu0 %v5092, 4
    %v6087 = vpop.permute.xlu0 %6086
    %6090 = vrot.lane.b32.xlu0 %v5257, 8
    %v6091 = vpop.permute.xlu0 %6090
    %6094 = vrot.lane.b32.xlu0 %v5422, 12
    %v6095 = vpop.permute.xlu0 %6094
    %6098 = vrot.lane.b32.xlu0 %v5587, 16
    %v6099 = vpop.permute.xlu0 %6098
    %6102 = vrot.lane.b32.xlu0 %v5752, 20
    %v6103 = vpop.permute.xlu0 %6102
    %6106 = vrot.lane.b32.xlu0 %v5917, 24
    %v6107 = vpop.permute.xlu0 %6106
    %6110 = vrot.lane.b32.xlu0 %v6082, 28
    %v6111 = vpop.permute.xlu0 %6110
    %v6113 = vsel %vm261, %v4927, %v6087
    %v6114 = vsel %vm336, %v6113, %v6091
    %v6115 = vsel %vm1609, %v6114, %v6095
    %v6116 = vsel %vm1611, %v6115, %v6099
    %v6117 = vsel %vm1613, %v6116, %v6103
    %v6118 = vsel %vm1615, %v6117, %v6107
    %v6119 = vsel %vm1617, %v6118, %v6111
    %s6120 = scalar_lea.vmem %s1, 96
    %v6121 = vld [vmem:[%s6120] sm:$0xff]
    %v6122 = vld [vmem:[%s6120 + $0x8] sm:$0xff]
    %v6123 = vld [vmem:[%s6120 + $0x10] sm:$0xff]
    %v6124 = vld [vmem:[%s6120 + $0x18] sm:$0xff]
    %v6125 = vlaneseq
    %v6126 = vshrl.u32 %v6125, 7
    %v6127 = vsub.s32 3, %v6126
    %v6128 = vrot.slane %v21, %v6127
    %v6130 = vsel %vm176, %v4765, 0
    %v6133 = vsel %vm176, %v6119, 0
    %6135 = vmatprep.subr.mxu0 0.0
    %6136 = vmatpush1.msra.mxu0 %v6121
    %6137 = vmatprep.subr.mxu0 0.0
    %6138 = vmatpush1.msra.mxu0 %v6122
    %6139 = vmatprep.subr.mxu0 0.0
    %6140 = vmatpush1.msra.mxu0 %v6123
    %6141 = vmatprep.subr.mxu0 0.0
    %6142 = vmatpush1.msra.mxu0 %v6124
    %6143 = vmatprep.subr.mxu0 0.0
    %6144 = vmatpush1.msra.mxu0 0.0
    %6145 = vmatprep.subr.mxu0 0.0
    %6146 = vmatpush1.msra.mxu0 0.0
    %6147 = vmatprep.subr.mxu0 0.0
    %6148 = vmatpush1.msra.mxu0 0.0
    %6149 = vmatprep.subr.mxu0 0.0
    %6150 = vmatpush1.msra.mxu0 0.0
    %6151 = vmatprep.subr.mxu0 0.0
    %6152 = vmatpush1.msra.mxu0 0.0
    %6153 = vmatprep.subr.mxu0 0.0
    %6154 = vmatpush1.msra.mxu0 0.0
    %6155 = vmatprep.subr.mxu0 0.0
    %6156 = vmatpush1.msra.mxu0 0.0
    %6157 = vmatprep.subr.mxu0 0.0
    %6158 = vmatpush1.msra.mxu0 0.0
    %6159 = vmatprep.subr.mxu0 0.0
    %6160 = vmatpush1.msra.mxu0 0.0
    %6161 = vmatprep.subr.mxu0 0.0
    %6162 = vmatpush1.msra.mxu0 0.0
    %6163 = vmatprep.subr.mxu0 0.0
    %6164 = vmatpush1.msra.mxu0 0.0
    %6165 = vmatprep.subr.mxu0 0.0
    %6166 = vmatpush1.msra.mxu0 0.0
    %6167 = vmatprep.subr.mxu0 0.0
    %6168 = vmatpush1.msra.mxu0 0.0
    %6169 = vmatprep.subr.mxu0 0.0
    %6170 = vmatpush1.msra.mxu0 0.0
    %6171 = vmatprep.subr.mxu0 0.0
    %6172 = vmatpush1.msra.mxu0 0.0
    %6173 = vmatprep.subr.mxu0 0.0
    %6174 = vmatpush1.msra.mxu0 0.0
    %6175 = vmatprep.subr.mxu0 0.0
    %6176 = vmatpush1.msra.mxu0 0.0
    %6177 = vmatprep.subr.mxu0 0.0
    %6178 = vmatpush1.msra.mxu0 0.0
    %6179 = vmatprep.subr.mxu0 0.0
    %6180 = vmatpush1.msra.mxu0 0.0
    %6181 = vmatprep.subr.mxu0 0.0
    %6182 = vmatpush1.msra.mxu0 0.0
    %6183 = vmatprep.subr.mxu0 0.0
    %6184 = vmatpush1.msra.mxu0 0.0
    %6185 = vmatprep.subr.mxu0 0.0
    %6186 = vmatpush1.msra.mxu0 0.0
    %6187 = vmatprep.subr.mxu0 0.0
    %6188 = vmatpush1.msra.mxu0 0.0
    %6189 = vmatprep.subr.mxu0 0.0
    %6190 = vmatpush1.msra.mxu0 0.0
    %6191 = vmatprep.subr.mxu0 0.0
    %6192 = vmatpush1.msra.mxu0 0.0
    %6193 = vmatprep.subr.mxu0 0.0
    %6194 = vmatpush1.msra.mxu0 0.0
    %6195 = vmatprep.subr.mxu0 0.0
    %6196 = vmatpush1.msra.mxu0 0.0
    %6197 = vmatprep.subr.mxu0 0.0
    %6198 = vmatpush1.msra.mxu0 0.0
    %6199 = vmatprep.mubr.f32.mxu0 0.0
    %6200 = vmatmul.mubr.f32.gmra.mrb[0].mxu0 %v6130
    %v6201 = vpop.f32.mrb[0].mxu0
    %v6202 = vadd.f32 %v6128, %v6201
    %v6203 = vpop.f32.mrb[0].mxu0
    %6204 = vmatprep.mubr.f32.mxu0 0.0
    %6205 = vmatmul.mubr.f32.gmra.mrb[0].mxu0 %v6133
    %v6206 = vpop.f32.mrb[0].mxu0
    %v6207 = vadd.f32 %v6128, %v6206
    %v6208 = vpop.f32.mrb[0].mxu0
    %6209 = vdwg.mxu0
    %v6210 = vadd.f32 %v3320, %v6202
    %v6211 = vadd.f32 %v3321, %v6207
    %v6212 = vsel %vm176, %v6210, 0.0
    %6213 = vadd.xlane.f32.xlu0 %v6212
    %v6214 = vpop.xlane.xlu0 %6213
    %v6215 = vsel %vm176, %v6211, 0.0
    %6216 = vadd.xlane.f32.xlu0 %v6215
    %v6217 = vpop.xlane.xlu0 %6216
    %v6218 = vmul.f32 %v6214, %v3071
    %v6219 = vmul.f32 %v6217, %v3071
    %v6220 = vsub.f32 %v6210, %v6218
    %v6221 = vsub.f32 %v6211, %v6219
    %v6222 = vmul.f32 %v6220, %v6220
    %v6223 = vmul.f32 %v6221, %v6221
    %v6224 = vsel %vm176, %v6222, 0.0
    %6225 = vadd.xlane.f32.xlu0 %v6224
    %v6226 = vpop.xlane.xlu0 %6225
    %v6227 = vsel %vm176, %v6223, 0.0
    %6228 = vadd.xlane.f32.xlu0 %v6227
    %v6229 = vpop.xlane.xlu0 %6228
    %v6230 = vmul.f32 %v6226, %v3071
    %v6231 = vmul.f32 %v6229, %v3071
    %v6232 = vadd.f32 %v6230, 1e-05
    %v6233 = vadd.f32 %v6231, 1e-05
    %v6234 = vrsqrt.pop %v6232
    %v6235 = vrsqrt.pop %v6233
    %v6236 = vmul.f32 %v6220, %v6234
    %v6237 = vmul.f32 %v6221, %v6235
    %v6238 = vlaneseq
    %v6239 = vshrl.u32 %v6238, 7
    %v6240 = vsub.s32 5, %v6239
    %v6241 = vrot.slane %v21, %v6240
    %v6242 = vmul.f32 %v6236, %v6241
    %v6243 = vmul.f32 %v6237, %v6241
    %v6244 = vlaneseq
    %v6245 = vshrl.u32 %v6244, 7
    %v6246 = vsub.s32 7, %v6245
    %v6247 = vrot.slane %v21, %v6246
    %v6248 = vadd.f32 %v6242, %v6247
    %v6249 = vadd.f32 %v6243, %v6247
    %s6250 = scalar_lea.vmem %s1, 160
    %v6251 = vld [vmem:[%s6250] sm:$0xff]
    %v6252 = vld [vmem:[%s6250 + $0x8] sm:$0xff]
    %v6253 = vld [vmem:[%s6250 + $0x10] sm:$0xff]
    %v6254 = vld [vmem:[%s6250 + $0x18] sm:$0xff]
    %v6255 = vlaneseq
    %v6256 = vshrl.u32 %v6255, 7
    %v6257 = vsub.s32 5, %v6256
    %v6258 = vrot.slane %v22, %v6257
    %v6260 = vsel %vm176, %v6248, 0
    %v6263 = vsel %vm176, %v6249, 0
    %6265 = vmatprep.subr.mxu0 0.0
    %6266 = vmatpush1.msra.mxu0 %v6251
    %6267 = vmatprep.subr.mxu0 0.0
    %6268 = vmatpush1.msra.mxu0 %v6252
    %6269 = vmatprep.subr.mxu0 0.0
    %6270 = vmatpush1.msra.mxu0 %v6253
    %6271 = vmatprep.subr.mxu0 0.0
    %6272 = vmatpush1.msra.mxu0 %v6254
    %6273 = vmatprep.subr.mxu0 0.0
    %6274 = vmatpush1.msra.mxu0 0.0
    %6275 = vmatprep.subr.mxu0 0.0
    %6276 = vmatpush1.msra.mxu0 0.0
    %6277 = vmatprep.subr.mxu0 0.0
    %6278 = vmatpush1.msra.mxu0 0.0
    %6279 = vmatprep.subr.mxu0 0.0
    %6280 = vmatpush1.msra.mxu0 0.0
    %6281 = vmatprep.subr.mxu0 0.0
    %6282 = vmatpush1.msra.mxu0 0.0
    %6283 = vmatprep.subr.mxu0 0.0
    %6284 = vmatpush1.msra.mxu0 0.0
    %6285 = vmatprep.subr.mxu0 0.0
    %6286 = vmatpush1.msra.mxu0 0.0
    %6287 = vmatprep.subr.mxu0 0.0
    %6288 = vmatpush1.msra.mxu0 0.0
    %6289 = vmatprep.subr.mxu0 0.0
    %6290 = vmatpush1.msra.mxu0 0.0
    %6291 = vmatprep.subr.mxu0 0.0
    %6292 = vmatpush1.msra.mxu0 0.0
    %6293 = vmatprep.subr.mxu0 0.0
    %6294 = vmatpush1.msra.mxu0 0.0
    %6295 = vmatprep.subr.mxu0 0.0
    %6296 = vmatpush1.msra.mxu0 0.0
    %6297 = vmatprep.subr.mxu0 0.0
    %6298 = vmatpush1.msra.mxu0 0.0
    %6299 = vmatprep.subr.mxu0 0.0
    %6300 = vmatpush1.msra.mxu0 0.0
    %6301 = vmatprep.subr.mxu0 0.0
    %6302 = vmatpush1.msra.mxu0 0.0
    %6303 = vmatprep.subr.mxu0 0.0
    %6304 = vmatpush1.msra.mxu0 0.0
    %6305 = vmatprep.subr.mxu0 0.0
    %6306 = vmatpush1.msra.mxu0 0.0
    %6307 = vmatprep.subr.mxu0 0.0
    %6308 = vmatpush1.msra.mxu0 0.0
    %6309 = vmatprep.subr.mxu0 0.0
    %6310 = vmatpush1.msra.mxu0 0.0
    %6311 = vmatprep.subr.mxu0 0.0
    %6312 = vmatpush1.msra.mxu0 0.0
    %6313 = vmatprep.subr.mxu0 0.0
    %6314 = vmatpush1.msra.mxu0 0.0
    %6315 = vmatprep.subr.mxu0 0.0
    %6316 = vmatpush1.msra.mxu0 0.0
    %6317 = vmatprep.subr.mxu0 0.0
    %6318 = vmatpush1.msra.mxu0 0.0
    %6319 = vmatprep.subr.mxu0 0.0
    %6320 = vmatpush1.msra.mxu0 0.0
    %6321 = vmatprep.subr.mxu0 0.0
    %6322 = vmatpush1.msra.mxu0 0.0
    %6323 = vmatprep.subr.mxu0 0.0
    %6324 = vmatpush1.msra.mxu0 0.0
    %6325 = vmatprep.subr.mxu0 0.0
    %6326 = vmatpush1.msra.mxu0 0.0
    %6327 = vmatprep.subr.mxu0 0.0
    %6328 = vmatpush1.msra.mxu0 0.0
    %6329 = vmatprep.mubr.f32.mxu0 0.0
    %6330 = vmatmul.mubr.f32.gmra.mrb[0].mxu0 %v6260
    %v6331 = vpop.f32.mrb[0].mxu0
    %v6332 = vadd.f32 %v6258, %v6331
    %v6333 = vpop.f32.mrb[0].mxu0
    %6334 = vmatprep.mubr.f32.mxu0 0.0
    %6335 = vmatmul.mubr.f32.gmra.mrb[0].mxu0 %v6263
    %v6336 = vpop.f32.mrb[0].mxu0
    %v6337 = vadd.f32 %v6258, %v6336
    %v6338 = vpop.f32.mrb[0].mxu0
    %6339 = vdwg.mxu0
    %v6340 = vmax.f32 %v6332, 0.0
    %v6341 = vmax.f32 %v6337, 0.0
    %v6342 = vlaneseq
    %v6343 = vshrl.u32 %v6342, 7
    %v6344 = vsub.s32 7, %v6343
    %v6345 = vrot.slane %v22, %v6344
    %6354 = vrot.lane.b32.xlu0 %v27, 96
    %v6355 = vpop.permute.xlu0 %6354
    %6356 = vrot.lane.b32.xlu0 %v28, 96
    %v6357 = vpop.permute.xlu0 %6356
    %6358 = vrot.lane.b32.xlu0 %v29, 96
    %v6359 = vpop.permute.xlu0 %6358
    %6360 = vrot.lane.b32.xlu0 %v30, 96
    %v6361 = vpop.permute.xlu0 %6360
    %6362 = vrot.lane.b32.xlu0 %v31, 96
    %v6363 = vpop.permute.xlu0 %6362
    %6364 = vrot.lane.b32.xlu0 %v32, 96
    %v6365 = vpop.permute.xlu0 %6364
    %6366 = vrot.lane.b32.xlu0 %v33, 96
    %v6367 = vpop.permute.xlu0 %6366
    %6368 = vrot.lane.b32.xlu0 %v34, 96
    %v6369 = vpop.permute.xlu0 %6368
    %v6379 = vsel %vm3200, %v6340, 0
    %v6382 = vsel %vm3200, %v6341, 0
    %6384 = vmatprep.subr.mxu0 0.0
    %6385 = vmatpush1.msra.mxu0 %v6355
    %6386 = vmatprep.subr.mxu0 0.0
    %6387 = vmatpush1.msra.mxu0 %v6357
    %6388 = vmatprep.subr.mxu0 0.0
    %6389 = vmatpush1.msra.mxu0 %v6359
    %6390 = vmatprep.subr.mxu0 0.0
    %6391 = vmatpush1.msra.mxu0 %v6361
    %6392 = vmatprep.subr.mxu0 0.0
    %6393 = vmatpush1.msra.mxu0 %v6363
    %6394 = vmatprep.subr.mxu0 0.0
    %6395 = vmatpush1.msra.mxu0 %v6365
    %6396 = vmatprep.subr.mxu0 0.0
    %6397 = vmatpush1.msra.mxu0 %v6367
    %6398 = vmatprep.subr.mxu0 0.0
    %6399 = vmatpush1.msra.mxu0 %v6369
    %6400 = vmatprep.subr.mxu0 0.0
    %6401 = vmatpush1.msra.mxu0 0.0
    %6402 = vmatprep.subr.mxu0 0.0
    %6403 = vmatpush1.msra.mxu0 0.0
    %6404 = vmatprep.subr.mxu0 0.0
    %6405 = vmatpush1.msra.mxu0 0.0
    %6406 = vmatprep.subr.mxu0 0.0
    %6407 = vmatpush1.msra.mxu0 0.0
    %6408 = vmatprep.subr.mxu0 0.0
    %6409 = vmatpush1.msra.mxu0 0.0
    %6410 = vmatprep.subr.mxu0 0.0
    %6411 = vmatpush1.msra.mxu0 0.0
    %6412 = vmatprep.subr.mxu0 0.0
    %6413 = vmatpush1.msra.mxu0 0.0
    %6414 = vmatprep.subr.mxu0 0.0
    %6415 = vmatpush1.msra.mxu0 0.0
    %6416 = vmatprep.subr.mxu0 0.0
    %6417 = vmatpush1.msra.mxu0 0.0
    %6418 = vmatprep.subr.mxu0 0.0
    %6419 = vmatpush1.msra.mxu0 0.0
    %6420 = vmatprep.subr.mxu0 0.0
    %6421 = vmatpush1.msra.mxu0 0.0
    %6422 = vmatprep.subr.mxu0 0.0
    %6423 = vmatpush1.msra.mxu0 0.0
    %6424 = vmatprep.subr.mxu0 0.0
    %6425 = vmatpush1.msra.mxu0 0.0
    %6426 = vmatprep.subr.mxu0 0.0
    %6427 = vmatpush1.msra.mxu0 0.0
    %6428 = vmatprep.subr.mxu0 0.0
    %6429 = vmatpush1.msra.mxu0 0.0
    %6430 = vmatprep.subr.mxu0 0.0
    %6431 = vmatpush1.msra.mxu0 0.0
    %6432 = vmatprep.subr.mxu0 0.0
    %6433 = vmatpush1.msra.mxu0 0.0
    %6434 = vmatprep.subr.mxu0 0.0
    %6435 = vmatpush1.msra.mxu0 0.0
    %6436 = vmatprep.subr.mxu0 0.0
    %6437 = vmatpush1.msra.mxu0 0.0
    %6438 = vmatprep.subr.mxu0 0.0
    %6439 = vmatpush1.msra.mxu0 0.0
    %6440 = vmatprep.subr.mxu0 0.0
    %6441 = vmatpush1.msra.mxu0 0.0
    %6442 = vmatprep.subr.mxu0 0.0
    %6443 = vmatpush1.msra.mxu0 0.0
    %6444 = vmatprep.subr.mxu0 0.0
    %6445 = vmatpush1.msra.mxu0 0.0
    %6446 = vmatprep.subr.mxu0 0.0
    %6447 = vmatpush1.msra.mxu0 0.0
    %6448 = vmatprep.mubr.f32.mxu0 0.0
    %6449 = vmatmul.mubr.f32.gmra.mrb[0].mxu0 %v6379
    %v6450 = vpop.f32.mrb[0].mxu0
    %v6451 = vadd.f32 %v6345, %v6450
    %v6452 = vpop.f32.mrb[0].mxu0
    %6453 = vmatprep.mubr.f32.mxu0 0.0
    %6454 = vmatmul.mubr.f32.gmra.mrb[0].mxu0 %v6382
    %v6455 = vpop.f32.mrb[0].mxu0
    %v6456 = vadd.f32 %v6345, %v6455
    %v6457 = vpop.f32.mrb[0].mxu0
    %6458 = vdwg.mxu0
    %v6459 = vadd.f32 %v6248, %v6451
    %v6460 = vadd.f32 %v6249, %v6456
    %v6461 = vsel %vm176, %v6459, 0.0
    %6462 = vadd.xlane.f32.xlu0 %v6461
    %v6463 = vpop.xlane.xlu0 %6462
    %v6464 = vsel %vm176, %v6460, 0.0
    %6465 = vadd.xlane.f32.xlu0 %v6464
    %v6466 = vpop.xlane.xlu0 %6465
    %v6467 = vmul.f32 %v6463, %v3071
    %v6468 = vmul.f32 %v6466, %v3071
    %v6469 = vsub.f32 %v6459, %v6467
    %v6470 = vsub.f32 %v6460, %v6468
    %v6471 = vmul.f32 %v6469, %v6469
    %v6472 = vmul.f32 %v6470, %v6470
    %v6473 = vsel %vm176, %v6471, 0.0
    %6474 = vadd.xlane.f32.xlu0 %v6473
    %v6475 = vpop.xlane.xlu0 %6474
    %v6476 = vsel %vm176, %v6472, 0.0
    %6477 = vadd.xlane.f32.xlu0 %v6476
    %v6478 = vpop.xlane.xlu0 %6477
    %v6479 = vmul.f32 %v6475, %v3071
    %v6480 = vmul.f32 %v6478, %v3071
    %v6481 = vadd.f32 %v6479, 1e-05
    %v6482 = vadd.f32 %v6480, 1e-05
    %v6483 = vrsqrt.pop %v6481
    %v6484 = vrsqrt.pop %v6482
    %v6485 = vmul.f32 %v6469, %v6483
    %v6486 = vmul.f32 %v6470, %v6484
    %v6487 = vlaneseq
    %v6488 = vshrl.u32 %v6487, 7
    %v6489 = vsub.s32 1, %v6488
    %v6490 = vrot.slane %v22, %v6489
    %v6491 = vmul.f32 %v6485, %v6490
    %v6492 = vmul.f32 %v6486, %v6490
    %v6493 = vlaneseq
    %v6494 = vshrl.u32 %v6493, 7
    %v6495 = vsub.s32 3, %v6494
    %v6496 = vrot.slane %v22, %v6495
    %v6497 = vadd.f32 %v6491, %v6496
    %v6498 = vadd.f32 %v6492, %v6496
    %s6499 = scalar_lea.vmem %s1, 192
    %v6500 = vld [vmem:[%s6499] sm:$0xff]
    %v6501 = vld [vmem:[%s6499 + $0x8] sm:$0xff]
    %v6502 = vld [vmem:[%s6499 + $0x10] sm:$0xff]
    %v6503 = vld [vmem:[%s6499 + $0x18] sm:$0xff]
    %v6504 = vlaneseq
    %v6505 = vshrl.u32 %v6504, 7
    %v6506 = vsub.s32 0, %v6505
    %v6507 = vrot.slane %v23, %v6506
    %v6509 = vsel %vm176, %v6497, 0
    %v6512 = vsel %vm176, %v6498, 0
    %6514 = vmatprep.subr.mxu0 0.0
    %6515 = vmatpush1.msra.mxu0 %v6500
    %6516 = vmatprep.subr.mxu0 0.0
    %6517 = vmatpush1.msra.mxu0 %v6501
    %6518 = vmatprep.subr.mxu0 0.0
    %6519 = vmatpush1.msra.mxu0 %v6502
    %6520 = vmatprep.subr.mxu0 0.0
    %6521 = vmatpush1.msra.mxu0 %v6503
    %6522 = vmatprep.subr.mxu0 0.0
    %6523 = vmatpush1.msra.mxu0 0.0
    %6524 = vmatprep.subr.mxu0 0.0
    %6525 = vmatpush1.msra.mxu0 0.0
    %6526 = vmatprep.subr.mxu0 0.0
    %6527 = vmatpush1.msra.mxu0 0.0
    %6528 = vmatprep.subr.mxu0 0.0
    %6529 = vmatpush1.msra.mxu0 0.0
    %6530 = vmatprep.subr.mxu0 0.0
    %6531 = vmatpush1.msra.mxu0 0.0
    %6532 = vmatprep.subr.mxu0 0.0
    %6533 = vmatpush1.msra.mxu0 0.0
    %6534 = vmatprep.subr.mxu0 0.0
    %6535 = vmatpush1.msra.mxu0 0.0
    %6536 = vmatprep.subr.mxu0 0.0
    %6537 = vmatpush1.msra.mxu0 0.0
    %6538 = vmatprep.subr.mxu0 0.0
    %6539 = vmatpush1.msra.mxu0 0.0
    %6540 = vmatprep.subr.mxu0 0.0
    %6541 = vmatpush1.msra.mxu0 0.0
    %6542 = vmatprep.subr.mxu0 0.0
    %6543 = vmatpush1.msra.mxu0 0.0
    %6544 = vmatprep.subr.mxu0 0.0
    %6545 = vmatpush1.msra.mxu0 0.0
    %6546 = vmatprep.subr.mxu0 0.0
    %6547 = vmatpush1.msra.mxu0 0.0
    %6548 = vmatprep.subr.mxu0 0.0
    %6549 = vmatpush1.msra.mxu0 0.0
    %6550 = vmatprep.subr.mxu0 0.0
    %6551 = vmatpush1.msra.mxu0 0.0
    %6552 = vmatprep.subr.mxu0 0.0
    %6553 = vmatpush1.msra.mxu0 0.0
    %6554 = vmatprep.subr.mxu0 0.0
    %6555 = vmatpush1.msra.mxu0 0.0
    %6556 = vmatprep.subr.mxu0 0.0
    %6557 = vmatpush1.msra.mxu0 0.0
    %6558 = vmatprep.subr.mxu0 0.0
    %6559 = vmatpush1.msra.mxu0 0.0
    %6560 = vmatprep.subr.mxu0 0.0
    %6561 = vmatpush1.msra.mxu0 0.0
    %6562 = vmatprep.subr.mxu0 0.0
    %6563 = vmatpush1.msra.mxu0 0.0
    %6564 = vmatprep.subr.mxu0 0.0
    %6565 = vmatpush1.msra.mxu0 0.0
    %6566 = vmatprep.subr.mxu0 0.0
    %6567 = vmatpush1.msra.mxu0 0.0
    %6568 = vmatprep.subr.mxu0 0.0
    %6569 = vmatpush1.msra.mxu0 0.0
    %6570 = vmatprep.subr.mxu0 0.0
    %6571 = vmatpush1.msra.mxu0 0.0
    %6572 = vmatprep.subr.mxu0 0.0
    %6573 = vmatpush1.msra.mxu0 0.0
    %6574 = vmatprep.subr.mxu0 0.0
    %6575 = vmatpush1.msra.mxu0 0.0
    %6576 = vmatprep.subr.mxu0 0.0
    %6577 = vmatpush1.msra.mxu0 0.0
    %6578 = vmatprep.mubr.f32.mxu0 0.0
    %6579 = vmatmul.mubr.f32.gmra.mrb[0].mxu0 %v6509
    %v6580 = vpop.f32.mrb[0].mxu0
    %v6581 = vadd.f32 %v6507, %v6580
    %v6582 = vpop.f32.mrb[0].mxu0
    %6583 = vmatprep.mubr.f32.mxu0 0.0
    %6584 = vmatmul.mubr.f32.gmra.mrb[0].mxu0 %v6512
    %v6585 = vpop.f32.mrb[0].mxu0
    %v6586 = vadd.f32 %v6507, %v6585
    %v6587 = vpop.f32.mrb[0].mxu0
    %6588 = vdwg.mxu0
    %s6589 = scalar_lea.vmem %s1, 224
    %v6590 = vld [vmem:[%s6589] sm:$0xff]
    %v6591 = vld [vmem:[%s6589 + $0x8] sm:$0xff]
    %v6592 = vld [vmem:[%s6589 + $0x10] sm:$0xff]
    %v6593 = vld [vmem:[%s6589 + $0x18] sm:$0xff]
    %s6594 = scalar_lea.vmem %s1, 256
    %v6595 = vld [vmem:[%s6594] sm:$0xff]
    %v6596 = vld [vmem:[%s6594 + $0x8] sm:$0xff]
    %v6597 = vld [vmem:[%s6594 + $0x10] sm:$0xff]
    %v6598 = vld [vmem:[%s6594 + $0x18] sm:$0xff]
    %v6600 = vsel %vm176, 0.0, 0
    %6602 = vmatprep.subr.mxu0 0.0
    %6603 = vmatpush1.msra.mxu0 %v6590
    %6604 = vmatprep.subr.mxu0 0.0
    %6605 = vmatpush1.msra.mxu0 %v6591
    %6606 = vmatprep.subr.mxu0 0.0
    %6607 = vmatpush1.msra.mxu0 %v6592
    %6608 = vmatprep.subr.mxu0 0.0
    %6609 = vmatpush1.msra.mxu0 %v6593
    %6610 = vmatprep.subr.mxu0 0.0
    %6611 = vmatpush1.msra.mxu0 0.0
    %6612 = vmatprep.subr.mxu0 0.0
    %6613 = vmatpush1.msra.mxu0 0.0
    %6614 = vmatprep.subr.mxu0 0.0
    %6615 = vmatpush1.msra.mxu0 0.0
    %6616 = vmatprep.subr.mxu0 0.0
    %6617 = vmatpush1.msra.mxu0 0.0
    %6618 = vmatprep.subr.mxu0 0.0
    %6619 = vmatpush1.msra.mxu0 0.0
    %6620 = vmatprep.subr.mxu0 0.0
    %6621 = vmatpush1.msra.mxu0 0.0
    %6622 = vmatprep.subr.mxu0 0.0
    %6623 = vmatpush1.msra.mxu0 0.0
    %6624 = vmatprep.subr.mxu0 0.0
    %6625 = vmatpush1.msra.mxu0 0.0
    %6626 = vmatprep.subr.mxu0 0.0
    %6627 = vmatpush1.msra.mxu0 0.0
    %6628 = vmatprep.subr.mxu0 0.0
    %6629 = vmatpush1.msra.mxu0 0.0
    %6630 = vmatprep.subr.mxu0 0.0
    %6631 = vmatpush1.msra.mxu0 0.0
    %6632 = vmatprep.subr.mxu0 0.0
    %6633 = vmatpush1.msra.mxu0 0.0
    %6634 = vmatprep.subr.mxu0 0.0
    %6635 = vmatpush1.msra.mxu0 0.0
    %6636 = vmatprep.subr.mxu0 0.0
    %6637 = vmatpush1.msra.mxu0 0.0
    %6638 = vmatprep.subr.mxu0 0.0
    %6639 = vmatpush1.msra.mxu0 0.0
    %6640 = vmatprep.subr.mxu0 0.0
    %6641 = vmatpush1.msra.mxu0 0.0
    %6642 = vmatprep.subr.mxu0 0.0
    %6643 = vmatpush1.msra.mxu0 0.0
    %6644 = vmatprep.subr.mxu0 0.0
    %6645 = vmatpush1.msra.mxu0 0.0
    %6646 = vmatprep.subr.mxu0 0.0
    %6647 = vmatpush1.msra.mxu0 0.0
    %6648 = vmatprep.subr.mxu0 0.0
    %6649 = vmatpush1.msra.mxu0 0.0
    %6650 = vmatprep.subr.mxu0 0.0
    %6651 = vmatpush1.msra.mxu0 0.0
    %6652 = vmatprep.subr.mxu0 0.0
    %6653 = vmatpush1.msra.mxu0 0.0
    %6654 = vmatprep.subr.mxu0 0.0
    %6655 = vmatpush1.msra.mxu0 0.0
    %6656 = vmatprep.subr.mxu0 0.0
    %6657 = vmatpush1.msra.mxu0 0.0
    %6658 = vmatprep.subr.mxu0 0.0
    %6659 = vmatpush1.msra.mxu0 0.0
    %6660 = vmatprep.subr.mxu0 0.0
    %6661 = vmatpush1.msra.mxu0 0.0
    %6662 = vmatprep.subr.mxu0 0.0
    %6663 = vmatpush1.msra.mxu0 0.0
    %6664 = vmatprep.subr.mxu0 0.0
    %6665 = vmatpush1.msra.mxu0 0.0
    %6666 = vmatprep.mubr.f32.mxu0 0.0
    %6667 = vmatmul.mubr.f32.gmra.mrb[0].mxu0 %v6600
    %v6668 = vpop.f32.mrb[0].mxu0
    %v6669 = vadd.f32 0.0, %v6668
    %v6670 = vpop.f32.mrb[0].mxu0
    %6671 = vdwg.mxu0
    %v6672 = vadd.f32 %v6581, %v6669
    %v6673 = vxor.u32 %v6672, 2147483648
    %v6674 = vmul.f32 %v6673, 1.442695
    %v6675 = vpow.pop %v6674
    %v6676 = vadd.f32 %v6675, 1.0
    %v6677 = vrcp.pop %v6676
    %v6678 = vmul.f32 1.0, %v6677
    %v6679 = vtanh.pop %v6672
    %v6680 = vmul.f32 %v6678, 0.0
    %6682 = vrot.lane.b32.xlu0 %v6679, 64
    %v6683 = vpop.permute.xlu0 %6682
    %v6685 = vmul.f32 %v6678, %v6683
    %6687 = vrot.lane.b32.xlu0 %v6685, 32
    %v6688 = vpop.permute.xlu0 %6687
    %v6690 = vadd.f32 %v6680, %v6688
    %v6691 = vtanh.pop %v6690
    %6693 = vrot.lane.b32.xlu0 %v6691, 64
    %v6694 = vpop.permute.xlu0 %6693
    %v6696 = vmul.f32 %v6678, %v6694
    %6698 = vrot.lane.b32.xlu0 %v6696, 32
    %v6699 = vpop.permute.xlu0 %6698
    %v6700 = vsel %vm176, %v6699, 0
    %6702 = vmatprep.subr.mxu0 0.0
    %6703 = vmatpush1.msra.mxu0 %v6590
    %6704 = vmatprep.subr.mxu0 0.0
    %6705 = vmatpush1.msra.mxu0 %v6591
    %6706 = vmatprep.subr.mxu0 0.0
    %6707 = vmatpush1.msra.mxu0 %v6592
    %6708 = vmatprep.subr.mxu0 0.0
    %6709 = vmatpush1.msra.mxu0 %v6593
    %6710 = vmatprep.subr.mxu0 0.0
    %6711 = vmatpush1.msra.mxu0 0.0
    %6712 = vmatprep.subr.mxu0 0.0
    %6713 = vmatpush1.msra.mxu0 0.0
    %6714 = vmatprep.subr.mxu0 0.0
    %6715 = vmatpush1.msra.mxu0 0.0
    %6716 = vmatprep.subr.mxu0 0.0
    %6717 = vmatpush1.msra.mxu0 0.0
    %6718 = vmatprep.subr.mxu0 0.0
    %6719 = vmatpush1.msra.mxu0 0.0
    %6720 = vmatprep.subr.mxu0 0.0
    %6721 = vmatpush1.msra.mxu0 0.0
    %6722 = vmatprep.subr.mxu0 0.0
    %6723 = vmatpush1.msra.mxu0 0.0
    %6724 = vmatprep.subr.mxu0 0.0
    %6725 = vmatpush1.msra.mxu0 0.0
    %6726 = vmatprep.subr.mxu0 0.0
    %6727 = vmatpush1.msra.mxu0 0.0
    %6728 = vmatprep.subr.mxu0 0.0
    %6729 = vmatpush1.msra.mxu0 0.0
    %6730 = vmatprep.subr.mxu0 0.0
    %6731 = vmatpush1.msra.mxu0 0.0
    %6732 = vmatprep.subr.mxu0 0.0
    %6733 = vmatpush1.msra.mxu0 0.0
    %6734 = vmatprep.subr.mxu0 0.0
    %6735 = vmatpush1.msra.mxu0 0.0
    %6736 = vmatprep.subr.mxu0 0.0
    %6737 = vmatpush1.msra.mxu0 0.0
    %6738 = vmatprep.subr.mxu0 0.0
    %6739 = vmatpush1.msra.mxu0 0.0
    %6740 = vmatprep.subr.mxu0 0.0
    %6741 = vmatpush1.msra.mxu0 0.0
    %6742 = vmatprep.subr.mxu0 0.0
    %6743 = vmatpush1.msra.mxu0 0.0
    %6744 = vmatprep.subr.mxu0 0.0
    %6745 = vmatpush1.msra.mxu0 0.0
    %6746 = vmatprep.subr.mxu0 0.0
    %6747 = vmatpush1.msra.mxu0 0.0
    %6748 = vmatprep.subr.mxu0 0.0
    %6749 = vmatpush1.msra.mxu0 0.0
    %6750 = vmatprep.subr.mxu0 0.0
    %6751 = vmatpush1.msra.mxu0 0.0
    %6752 = vmatprep.subr.mxu0 0.0
    %6753 = vmatpush1.msra.mxu0 0.0
    %6754 = vmatprep.subr.mxu0 0.0
    %6755 = vmatpush1.msra.mxu0 0.0
    %6756 = vmatprep.subr.mxu0 0.0
    %6757 = vmatpush1.msra.mxu0 0.0
    %6758 = vmatprep.subr.mxu0 0.0
    %6759 = vmatpush1.msra.mxu0 0.0
    %6760 = vmatprep.subr.mxu0 0.0
    %6761 = vmatpush1.msra.mxu0 0.0
    %6762 = vmatprep.subr.mxu0 0.0
    %6763 = vmatpush1.msra.mxu0 0.0
    %6764 = vmatprep.subr.mxu0 0.0
    %6765 = vmatpush1.msra.mxu0 0.0
    %6766 = vmatprep.mubr.f32.mxu0 0.0
    %6767 = vmatmul.mubr.f32.gmra.mrb[0].mxu0 %v6700
    %v6768 = vpop.f32.mrb[0].mxu0
    %v6769 = vadd.f32 0.0, %v6768
    %v6770 = vpop.f32.mrb[0].mxu0
    %6771 = vdwg.mxu0
    %v6773 = vrot.slane %v6769, 7
    %v6775 = vadd.f32 %v6581, %v6773
    %v6776 = vxor.u32 %v6775, 2147483648
    %v6777 = vmul.f32 %v6776, 1.442695
    %v6778 = vpow.pop %v6777
    %v6779 = vadd.f32 %v6778, 1.0
    %v6780 = vrcp.pop %v6779
    %v6781 = vmul.f32 1.0, %v6780
    %v6782 = vtanh.pop %v6775
    %v6784 = vrot.slane %v6690, 7
    %v6786 = vmul.f32 %v6781, %v6784
    %6788 = vrot.lane.b32.xlu0 %v6782, 64
    %v6789 = vpop.permute.xlu0 %6788
    %v6791 = vmul.f32 %v6781, %v6789
    %6793 = vrot.lane.b32.xlu0 %v6791, 32
    %v6794 = vpop.permute.xlu0 %6793
    %v6796 = vadd.f32 %v6786, %v6794
    %v6797 = vtanh.pop %v6796
    %6799 = vrot.lane.b32.xlu0 %v6797, 64
    %v6800 = vpop.permute.xlu0 %6799
    %v6802 = vmul.f32 %v6781, %v6800
    %v6804 = vrot.slane %v6802, 1
    %6805 = vrot.lane.b32.xlu0 %v6804, 32
    %v6806 = vpop.permute.xlu0 %6805
    %v6807 = vsel %vm176, %v6806, 0
    %6809 = vmatprep.subr.mxu0 0.0
    %6810 = vmatpush1.msra.mxu0 %v6590
    %6811 = vmatprep.subr.mxu0 0.0
    %6812 = vmatpush1.msra.mxu0 %v6591
    %6813 = vmatprep.subr.mxu0 0.0
    %6814 = vmatpush1.msra.mxu0 %v6592
    %6815 = vmatprep.subr.mxu0 0.0
    %6816 = vmatpush1.msra.mxu0 %v6593
    %6817 = vmatprep.subr.mxu0 0.0
    %6818 = vmatpush1.msra.mxu0 0.0
    %6819 = vmatprep.subr.mxu0 0.0
    %6820 = vmatpush1.msra.mxu0 0.0
    %6821 = vmatprep.subr.mxu0 0.0
    %6822 = vmatpush1.msra.mxu0 0.0
    %6823 = vmatprep.subr.mxu0 0.0
    %6824 = vmatpush1.msra.mxu0 0.0
    %6825 = vmatprep.subr.mxu0 0.0
    %6826 = vmatpush1.msra.mxu0 0.0
    %6827 = vmatprep.subr.mxu0 0.0
    %6828 = vmatpush1.msra.mxu0 0.0
    %6829 = vmatprep.subr.mxu0 0.0
    %6830 = vmatpush1.msra.mxu0 0.0
    %6831 = vmatprep.subr.mxu0 0.0
    %6832 = vmatpush1.msra.mxu0 0.0
    %6833 = vmatprep.subr.mxu0 0.0
    %6834 = vmatpush1.msra.mxu0 0.0
    %6835 = vmatprep.subr.mxu0 0.0
    %6836 = vmatpush1.msra.mxu0 0.0
    %6837 = vmatprep.subr.mxu0 0.0
    %6838 = vmatpush1.msra.mxu0 0.0
    %6839 = vmatprep.subr.mxu0 0.0
    %6840 = vmatpush1.msra.mxu0 0.0
    %6841 = vmatprep.subr.mxu0 0.0
    %6842 = vmatpush1.msra.mxu0 0.0
    %6843 = vmatprep.subr.mxu0 0.0
    %6844 = vmatpush1.msra.mxu0 0.0
    %6845 = vmatprep.subr.mxu0 0.0
    %6846 = vmatpush1.msra.mxu0 0.0
    %6847 = vmatprep.subr.mxu0 0.0
    %6848 = vmatpush1.msra.mxu0 0.0
    %6849 = vmatprep.subr.mxu0 0.0
    %6850 = vmatpush1.msra.mxu0 0.0
    %6851 = vmatprep.subr.mxu0 0.0
    %6852 = vmatpush1.msra.mxu0 0.0
    %6853 = vmatprep.subr.mxu0 0.0
    %6854 = vmatpush1.msra.mxu0 0.0
    %6855 = vmatprep.subr.mxu0 0.0
    %6856 = vmatpush1.msra.mxu0 0.0
    %6857 = vmatprep.subr.mxu0 0.0
    %6858 = vmatpush1.msra.mxu0 0.0
    %6859 = vmatprep.subr.mxu0 0.0
    %6860 = vmatpush1.msra.mxu0 0.0
    %6861 = vmatprep.subr.mxu0 0.0
    %6862 = vmatpush1.msra.mxu0 0.0
    %6863 = vmatprep.subr.mxu0 0.0
    %6864 = vmatpush1.msra.mxu0 0.0
    %6865 = vmatprep.subr.mxu0 0.0
    %6866 = vmatpush1.msra.mxu0 0.0
    %6867 = vmatprep.subr.mxu0 0.0
    %6868 = vmatpush1.msra.mxu0 0.0
    %6869 = vmatprep.subr.mxu0 0.0
    %6870 = vmatpush1.msra.mxu0 0.0
    %6871 = vmatprep.subr.mxu0 0.0
    %6872 = vmatpush1.msra.mxu0 0.0
    %6873 = vmatprep.mubr.f32.mxu0 0.0
    %6874 = vmatmul.mubr.f32.gmra.mrb[0].mxu0 %v6807
    %v6875 = vpop.f32.mrb[0].mxu0
    %v6876 = vadd.f32 0.0, %v6875
    %v6877 = vpop.f32.mrb[0].mxu0
    %6878 = vdwg.mxu0
    %v6880 = vrot.slane %v6876, 6
    %v6882 = vadd.f32 %v6581, %v6880
    %v6883 = vxor.u32 %v6882, 2147483648
    %v6884 = vmul.f32 %v6883, 1.442695
    %v6885 = vpow.pop %v6884
    %v6886 = vadd.f32 %v6885, 1.0
    %v6887 = vrcp.pop %v6886
    %v6888 = vmul.f32 1.0, %v6887
    %v6889 = vtanh.pop %v6882
    %v6891 = vrot.slane %v6796, 7
    %v6893 = vmul.f32 %v6888, %v6891
    %6895 = vrot.lane.b32.xlu0 %v6889, 64
    %v6896 = vpop.permute.xlu0 %6895
    %v6898 = vmul.f32 %v6888, %v6896
    %6900 = vrot.lane.b32.xlu0 %v6898, 32
    %v6901 = vpop.permute.xlu0 %6900
    %v6903 = vadd.f32 %v6893, %v6901
    %v6904 = vtanh.pop %v6903
    %6906 = vrot.lane.b32.xlu0 %v6904, 64
    %v6907 = vpop.permute.xlu0 %6906
    %v6909 = vmul.f32 %v6888, %v6907
    %v6911 = vrot.slane %v6909, 2
    %6912 = vrot.lane.b32.xlu0 %v6911, 32
    %v6913 = vpop.permute.xlu0 %6912
    %v6914 = vsel %vm176, %v6913, 0
    %6916 = vmatprep.subr.mxu0 0.0
    %6917 = vmatpush1.msra.mxu0 %v6590
    %6918 = vmatprep.subr.mxu0 0.0
    %6919 = vmatpush1.msra.mxu0 %v6591
    %6920 = vmatprep.subr.mxu0 0.0
    %6921 = vmatpush1.msra.mxu0 %v6592
    %6922 = vmatprep.subr.mxu0 0.0
    %6923 = vmatpush1.msra.mxu0 %v6593
    %6924 = vmatprep.subr.mxu0 0.0
    %6925 = vmatpush1.msra.mxu0 0.0
    %6926 = vmatprep.subr.mxu0 0.0
    %6927 = vmatpush1.msra.mxu0 0.0
    %6928 = vmatprep.subr.mxu0 0.0
    %6929 = vmatpush1.msra.mxu0 0.0
    %6930 = vmatprep.subr.mxu0 0.0
    %6931 = vmatpush1.msra.mxu0 0.0
    %6932 = vmatprep.subr.mxu0 0.0
    %6933 = vmatpush1.msra.mxu0 0.0
    %6934 = vmatprep.subr.mxu0 0.0
    %6935 = vmatpush1.msra.mxu0 0.0
    %6936 = vmatprep.subr.mxu0 0.0
    %6937 = vmatpush1.msra.mxu0 0.0
    %6938 = vmatprep.subr.mxu0 0.0
    %6939 = vmatpush1.msra.mxu0 0.0
    %6940 = vmatprep.subr.mxu0 0.0
    %6941 = vmatpush1.msra.mxu0 0.0
    %6942 = vmatprep.subr.mxu0 0.0
    %6943 = vmatpush1.msra.mxu0 0.0
    %6944 = vmatprep.subr.mxu0 0.0
    %6945 = vmatpush1.msra.mxu0 0.0
    %6946 = vmatprep.subr.mxu0 0.0
    %6947 = vmatpush1.msra.mxu0 0.0
    %6948 = vmatprep.subr.mxu0 0.0
    %6949 = vmatpush1.msra.mxu0 0.0
    %6950 = vmatprep.subr.mxu0 0.0
    %6951 = vmatpush1.msra.mxu0 0.0
    %6952 = vmatprep.subr.mxu0 0.0
    %6953 = vmatpush1.msra.mxu0 0.0
    %6954 = vmatprep.subr.mxu0 0.0
    %6955 = vmatpush1.msra.mxu0 0.0
    %6956 = vmatprep.subr.mxu0 0.0
    %6957 = vmatpush1.msra.mxu0 0.0
    %6958 = vmatprep.subr.mxu0 0.0
    %6959 = vmatpush1.msra.mxu0 0.0
    %6960 = vmatprep.subr.mxu0 0.0
    %6961 = vmatpush1.msra.mxu0 0.0
    %6962 = vmatprep.subr.mxu0 0.0
    %6963 = vmatpush1.msra.mxu0 0.0
    %6964 = vmatprep.subr.mxu0 0.0
    %6965 = vmatpush1.msra.mxu0 0.0
    %6966 = vmatprep.subr.mxu0 0.0
    %6967 = vmatpush1.msra.mxu0 0.0
    %6968 = vmatprep.subr.mxu0 0.0
    %6969 = vmatpush1.msra.mxu0 0.0
    %6970 = vmatprep.subr.mxu0 0.0
    %6971 = vmatpush1.msra.mxu0 0.0
    %6972 = vmatprep.subr.mxu0 0.0
    %6973 = vmatpush1.msra.mxu0 0.0
    %6974 = vmatprep.subr.mxu0 0.0
    %6975 = vmatpush1.msra.mxu0 0.0
    %6976 = vmatprep.subr.mxu0 0.0
    %6977 = vmatpush1.msra.mxu0 0.0
    %6978 = vmatprep.subr.mxu0 0.0
    %6979 = vmatpush1.msra.mxu0 0.0
    %6980 = vmatprep.mubr.f32.mxu0 0.0
    %6981 = vmatmul.mubr.f32.gmra.mrb[0].mxu0 %v6914
    %v6982 = vpop.f32.mrb[0].mxu0
    %v6983 = vadd.f32 0.0, %v6982
    %v6984 = vpop.f32.mrb[0].mxu0
    %6985 = vdwg.mxu0
    %v6987 = vrot.slane %v6983, 5
    %v6989 = vadd.f32 %v6581, %v6987
    %v6990 = vxor.u32 %v6989, 2147483648
    %v6991 = vmul.f32 %v6990, 1.442695
    %v6992 = vpow.pop %v6991
    %v6993 = vadd.f32 %v6992, 1.0
    %v6994 = vrcp.pop %v6993
    %v6995 = vmul.f32 1.0, %v6994
    %v6996 = vtanh.pop %v6989
    %v6998 = vrot.slane %v6903, 7
    %v7000 = vmul.f32 %v6995, %v6998
    %7002 = vrot.lane.b32.xlu0 %v6996, 64
    %v7003 = vpop.permute.xlu0 %7002
    %v7005 = vmul.f32 %v6995, %v7003
    %7007 = vrot.lane.b32.xlu0 %v7005, 32
    %v7008 = vpop.permute.xlu0 %7007
    %v7010 = vadd.f32 %v7000, %v7008
    %v7011 = vtanh.pop %v7010
    %7013 = vrot.lane.b32.xlu0 %v7011, 64
    %v7014 = vpop.permute.xlu0 %7013
    %v7016 = vmul.f32 %v6995, %v7014
    %v7018 = vrot.slane %v7016, 3
    %7019 = vrot.lane.b32.xlu0 %v7018, 32
    %v7020 = vpop.permute.xlu0 %7019
    %v7021 = vsel %vm176, %v7020, 0
    %7023 = vmatprep.subr.mxu0 0.0
    %7024 = vmatpush1.msra.mxu0 %v6590
    %7025 = vmatprep.subr.mxu0 0.0
    %7026 = vmatpush1.msra.mxu0 %v6591
    %7027 = vmatprep.subr.mxu0 0.0
    %7028 = vmatpush1.msra.mxu0 %v6592
    %7029 = vmatprep.subr.mxu0 0.0
    %7030 = vmatpush1.msra.mxu0 %v6593
    %7031 = vmatprep.subr.mxu0 0.0
    %7032 = vmatpush1.msra.mxu0 0.0
    %7033 = vmatprep.subr.mxu0 0.0
    %7034 = vmatpush1.msra.mxu0 0.0
    %7035 = vmatprep.subr.mxu0 0.0
    %7036 = vmatpush1.msra.mxu0 0.0
    %7037 = vmatprep.subr.mxu0 0.0
    %7038 = vmatpush1.msra.mxu0 0.0
    %7039 = vmatprep.subr.mxu0 0.0
    %7040 = vmatpush1.msra.mxu0 0.0
    %7041 = vmatprep.subr.mxu0 0.0
    %7042 = vmatpush1.msra.mxu0 0.0
    %7043 = vmatprep.subr.mxu0 0.0
    %7044 = vmatpush1.msra.mxu0 0.0
    %7045 = vmatprep.subr.mxu0 0.0
    %7046 = vmatpush1.msra.mxu0 0.0
    %7047 = vmatprep.subr.mxu0 0.0
    %7048 = vmatpush1.msra.mxu0 0.0
    %7049 = vmatprep.subr.mxu0 0.0
    %7050 = vmatpush1.msra.mxu0 0.0
    %7051 = vmatprep.subr.mxu0 0.0
    %7052 = vmatpush1.msra.mxu0 0.0
    %7053 = vmatprep.subr.mxu0 0.0
    %7054 = vmatpush1.msra.mxu0 0.0
    %7055 = vmatprep.subr.mxu0 0.0
    %7056 = vmatpush1.msra.mxu0 0.0
    %7057 = vmatprep.subr.mxu0 0.0
    %7058 = vmatpush1.msra.mxu0 0.0
    %7059 = vmatprep.subr.mxu0 0.0
    %7060 = vmatpush1.msra.mxu0 0.0
    %7061 = vmatprep.subr.mxu0 0.0
    %7062 = vmatpush1.msra.mxu0 0.0
    %7063 = vmatprep.subr.mxu0 0.0
    %7064 = vmatpush1.msra.mxu0 0.0
    %7065 = vmatprep.subr.mxu0 0.0
    %7066 = vmatpush1.msra.mxu0 0.0
    %7067 = vmatprep.subr.mxu0 0.0
    %7068 = vmatpush1.msra.mxu0 0.0
    %7069 = vmatprep.subr.mxu0 0.0
    %7070 = vmatpush1.msra.mxu0 0.0
    %7071 = vmatprep.subr.mxu0 0.0
    %7072 = vmatpush1.msra.mxu0 0.0
    %7073 = vmatprep.subr.mxu0 0.0
    %7074 = vmatpush1.msra.mxu0 0.0
    %7075 = vmatprep.subr.mxu0 0.0
    %7076 = vmatpush1.msra.mxu0 0.0
    %7077 = vmatprep.subr.mxu0 0.0
    %7078 = vmatpush1.msra.mxu0 0.0
    %7079 = vmatprep.subr.mxu0 0.0
    %7080 = vmatpush1.msra.mxu0 0.0
    %7081 = vmatprep.subr.mxu0 0.0
    %7082 = vmatpush1.msra.mxu0 0.0
    %7083 = vmatprep.subr.mxu0 0.0
    %7084 = vmatpush1.msra.mxu0 0.0
    %7085 = vmatprep.subr.mxu0 0.0
    %7086 = vmatpush1.msra.mxu0 0.0
    %7087 = vmatprep.mubr.f32.mxu0 0.0
    %7088 = vmatmul.mubr.f32.gmra.mrb[0].mxu0 %v7021
    %v7089 = vpop.f32.mrb[0].mxu0
    %v7090 = vadd.f32 0.0, %v7089
    %v7091 = vpop.f32.mrb[0].mxu0
    %7092 = vdwg.mxu0
    %v7094 = vrot.slane %v7090, 4
    %v7096 = vadd.f32 %v6581, %v7094
    %v7097 = vxor.u32 %v7096, 2147483648
    %v7098 = vmul.f32 %v7097, 1.442695
    %v7099 = vpow.pop %v7098
    %v7100 = vadd.f32 %v7099, 1.0
    %v7101 = vrcp.pop %v7100
    %v7102 = vmul.f32 1.0, %v7101
    %v7103 = vtanh.pop %v7096
    %v7105 = vrot.slane %v7010, 7
    %v7107 = vmul.f32 %v7102, %v7105
    %7109 = vrot.lane.b32.xlu0 %v7103, 64
    %v7110 = vpop.permute.xlu0 %7109
    %v7112 = vmul.f32 %v7102, %v7110
    %7114 = vrot.lane.b32.xlu0 %v7112, 32
    %v7115 = vpop.permute.xlu0 %7114
    %v7117 = vadd.f32 %v7107, %v7115
    %v7118 = vtanh.pop %v7117
    %7120 = vrot.lane.b32.xlu0 %v7118, 64
    %v7121 = vpop.permute.xlu0 %7120
    %v7123 = vmul.f32 %v7102, %v7121
    %v7125 = vrot.slane %v7123, 4
    %7126 = vrot.lane.b32.xlu0 %v7125, 32
    %v7127 = vpop.permute.xlu0 %7126
    %v7128 = vsel %vm176, %v7127, 0
    %7130 = vmatprep.subr.mxu0 0.0
    %7131 = vmatpush1.msra.mxu0 %v6590
    %7132 = vmatprep.subr.mxu0 0.0
    %7133 = vmatpush1.msra.mxu0 %v6591
    %7134 = vmatprep.subr.mxu0 0.0
    %7135 = vmatpush1.msra.mxu0 %v6592
    %7136 = vmatprep.subr.mxu0 0.0
    %7137 = vmatpush1.msra.mxu0 %v6593
    %7138 = vmatprep.subr.mxu0 0.0
    %7139 = vmatpush1.msra.mxu0 0.0
    %7140 = vmatprep.subr.mxu0 0.0
    %7141 = vmatpush1.msra.mxu0 0.0
    %7142 = vmatprep.subr.mxu0 0.0
    %7143 = vmatpush1.msra.mxu0 0.0
    %7144 = vmatprep.subr.mxu0 0.0
    %7145 = vmatpush1.msra.mxu0 0.0
    %7146 = vmatprep.subr.mxu0 0.0
    %7147 = vmatpush1.msra.mxu0 0.0
    %7148 = vmatprep.subr.mxu0 0.0
    %7149 = vmatpush1.msra.mxu0 0.0
    %7150 = vmatprep.subr.mxu0 0.0
    %7151 = vmatpush1.msra.mxu0 0.0
    %7152 = vmatprep.subr.mxu0 0.0
    %7153 = vmatpush1.msra.mxu0 0.0
    %7154 = vmatprep.subr.mxu0 0.0
    %7155 = vmatpush1.msra.mxu0 0.0
    %7156 = vmatprep.subr.mxu0 0.0
    %7157 = vmatpush1.msra.mxu0 0.0
    %7158 = vmatprep.subr.mxu0 0.0
    %7159 = vmatpush1.msra.mxu0 0.0
    %7160 = vmatprep.subr.mxu0 0.0
    %7161 = vmatpush1.msra.mxu0 0.0
    %7162 = vmatprep.subr.mxu0 0.0
    %7163 = vmatpush1.msra.mxu0 0.0
    %7164 = vmatprep.subr.mxu0 0.0
    %7165 = vmatpush1.msra.mxu0 0.0
    %7166 = vmatprep.subr.mxu0 0.0
    %7167 = vmatpush1.msra.mxu0 0.0
    %7168 = vmatprep.subr.mxu0 0.0
    %7169 = vmatpush1.msra.mxu0 0.0
    %7170 = vmatprep.subr.mxu0 0.0
    %7171 = vmatpush1.msra.mxu0 0.0
    %7172 = vmatprep.subr.mxu0 0.0
    %7173 = vmatpush1.msra.mxu0 0.0
    %7174 = vmatprep.subr.mxu0 0.0
    %7175 = vmatpush1.msra.mxu0 0.0
    %7176 = vmatprep.subr.mxu0 0.0
    %7177 = vmatpush1.msra.mxu0 0.0
    %7178 = vmatprep.subr.mxu0 0.0
    %7179 = vmatpush1.msra.mxu0 0.0
    %7180 = vmatprep.subr.mxu0 0.0
    %7181 = vmatpush1.msra.mxu0 0.0
    %7182 = vmatprep.subr.mxu0 0.0
    %7183 = vmatpush1.msra.mxu0 0.0
    %7184 = vmatprep.subr.mxu0 0.0
    %7185 = vmatpush1.msra.mxu0 0.0
    %7186 = vmatprep.subr.mxu0 0.0
    %7187 = vmatpush1.msra.mxu0 0.0
    %7188 = vmatprep.subr.mxu0 0.0
    %7189 = vmatpush1.msra.mxu0 0.0
    %7190 = vmatprep.subr.mxu0 0.0
    %7191 = vmatpush1.msra.mxu0 0.0
    %7192 = vmatprep.subr.mxu0 0.0
    %7193 = vmatpush1.msra.mxu0 0.0
    %7194 = vmatprep.mubr.f32.mxu0 0.0
    %7195 = vmatmul.mubr.f32.gmra.mrb[0].mxu0 %v7128
    %v7196 = vpop.f32.mrb[0].mxu0
    %v7197 = vadd.f32 0.0, %v7196
    %v7198 = vpop.f32.mrb[0].mxu0
    %7199 = vdwg.mxu0
    %v7201 = vrot.slane %v7197, 3
    %v7203 = vadd.f32 %v6581, %v7201
    %v7204 = vxor.u32 %v7203, 2147483648
    %v7205 = vmul.f32 %v7204, 1.442695
    %v7206 = vpow.pop %v7205
    %v7207 = vadd.f32 %v7206, 1.0
    %v7208 = vrcp.pop %v7207
    %v7209 = vmul.f32 1.0, %v7208
    %v7210 = vtanh.pop %v7203
    %v7212 = vrot.slane %v7117, 7
    %v7214 = vmul.f32 %v7209, %v7212
    %7216 = vrot.lane.b32.xlu0 %v7210, 64
    %v7217 = vpop.permute.xlu0 %7216
    %v7219 = vmul.f32 %v7209, %v7217
    %7221 = vrot.lane.b32.xlu0 %v7219, 32
    %v7222 = vpop.permute.xlu0 %7221
    %v7224 = vadd.f32 %v7214, %v7222
    %v7225 = vtanh.pop %v7224
    %7227 = vrot.lane.b32.xlu0 %v7225, 64
    %v7228 = vpop.permute.xlu0 %7227
    %v7230 = vmul.f32 %v7209, %v7228
    %v7232 = vrot.slane %v7230, 5
    %7233 = vrot.lane.b32.xlu0 %v7232, 32
    %v7234 = vpop.permute.xlu0 %7233
    %v7235 = vsel %vm176, %v7234, 0
    %7237 = vmatprep.subr.mxu0 0.0
    %7238 = vmatpush1.msra.mxu0 %v6590
    %7239 = vmatprep.subr.mxu0 0.0
    %7240 = vmatpush1.msra.mxu0 %v6591
    %7241 = vmatprep.subr.mxu0 0.0
    %7242 = vmatpush1.msra.mxu0 %v6592
    %7243 = vmatprep.subr.mxu0 0.0
    %7244 = vmatpush1.msra.mxu0 %v6593
    %7245 = vmatprep.subr.mxu0 0.0
    %7246 = vmatpush1.msra.mxu0 0.0
    %7247 = vmatprep.subr.mxu0 0.0
    %7248 = vmatpush1.msra.mxu0 0.0
    %7249 = vmatprep.subr.mxu0 0.0
    %7250 = vmatpush1.msra.mxu0 0.0
    %7251 = vmatprep.subr.mxu0 0.0
    %7252 = vmatpush1.msra.mxu0 0.0
    %7253 = vmatprep.subr.mxu0 0.0
    %7254 = vmatpush1.msra.mxu0 0.0
    %7255 = vmatprep.subr.mxu0 0.0
    %7256 = vmatpush1.msra.mxu0 0.0
    %7257 = vmatprep.subr.mxu0 0.0
    %7258 = vmatpush1.msra.mxu0 0.0
    %7259 = vmatprep.subr.mxu0 0.0
    %7260 = vmatpush1.msra.mxu0 0.0
    %7261 = vmatprep.subr.mxu0 0.0
    %7262 = vmatpush1.msra.mxu0 0.0
    %7263 = vmatprep.subr.mxu0 0.0
    %7264 = vmatpush1.msra.mxu0 0.0
    %7265 = vmatprep.subr.mxu0 0.0
    %7266 = vmatpush1.msra.mxu0 0.0
    %7267 = vmatprep.subr.mxu0 0.0
    %7268 = vmatpush1.msra.mxu0 0.0
    %7269 = vmatprep.subr.mxu0 0.0
    %7270 = vmatpush1.msra.mxu0 0.0
    %7271 = vmatprep.subr.mxu0 0.0
    %7272 = vmatpush1.msra.mxu0 0.0
    %7273 = vmatprep.subr.mxu0 0.0
    %7274 = vmatpush1.msra.mxu0 0.0
    %7275 = vmatprep.subr.mxu0 0.0
    %7276 = vmatpush1.msra.mxu0 0.0
    %7277 = vmatprep.subr.mxu0 0.0
    %7278 = vmatpush1.msra.mxu0 0.0
    %7279 = vmatprep.subr.mxu0 0.0
    %7280 = vmatpush1.msra.mxu0 0.0
    %7281 = vmatprep.subr.mxu0 0.0
    %7282 = vmatpush1.msra.mxu0 0.0
    %7283 = vmatprep.subr.mxu0 0.0
    %7284 = vmatpush1.msra.mxu0 0.0
    %7285 = vmatprep.subr.mxu0 0.0
    %7286 = vmatpush1.msra.mxu0 0.0
    %7287 = vmatprep.subr.mxu0 0.0
    %7288 = vmatpush1.msra.mxu0 0.0
    %7289 = vmatprep.subr.mxu0 0.0
    %7290 = vmatpush1.msra.mxu0 0.0
    %7291 = vmatprep.subr.mxu0 0.0
    %7292 = vmatpush1.msra.mxu0 0.0
    %7293 = vmatprep.subr.mxu0 0.0
    %7294 = vmatpush1.msra.mxu0 0.0
    %7295 = vmatprep.subr.mxu0 0.0
    %7296 = vmatpush1.msra.mxu0 0.0
    %7297 = vmatprep.subr.mxu0 0.0
    %7298 = vmatpush1.msra.mxu0 0.0
    %7299 = vmatprep.subr.mxu0 0.0
    %7300 = vmatpush1.msra.mxu0 0.0
    %7301 = vmatprep.mubr.f32.mxu0 0.0
    %7302 = vmatmul.mubr.f32.gmra.mrb[0].mxu0 %v7235
    %v7303 = vpop.f32.mrb[0].mxu0
    %v7304 = vadd.f32 0.0, %v7303
    %v7305 = vpop.f32.mrb[0].mxu0
    %7306 = vdwg.mxu0
    %v7308 = vrot.slane %v7304, 2
    %v7310 = vadd.f32 %v6581, %v7308
    %v7311 = vxor.u32 %v7310, 2147483648
    %v7312 = vmul.f32 %v7311, 1.442695
    %v7313 = vpow.pop %v7312
    %v7314 = vadd.f32 %v7313, 1.0
    %v7315 = vrcp.pop %v7314
    %v7316 = vmul.f32 1.0, %v7315
    %v7317 = vtanh.pop %v7310
    %v7319 = vrot.slane %v7224, 7
    %v7321 = vmul.f32 %v7316, %v7319
    %7323 = vrot.lane.b32.xlu0 %v7317, 64
    %v7324 = vpop.permute.xlu0 %7323
    %v7326 = vmul.f32 %v7316, %v7324
    %7328 = vrot.lane.b32.xlu0 %v7326, 32
    %v7329 = vpop.permute.xlu0 %7328
    %v7331 = vadd.f32 %v7321, %v7329
    %v7332 = vtanh.pop %v7331
    %7334 = vrot.lane.b32.xlu0 %v7332, 64
    %v7335 = vpop.permute.xlu0 %7334
    %v7337 = vmul.f32 %v7316, %v7335
    %v7339 = vrot.slane %v7337, 6
    %7340 = vrot.lane.b32.xlu0 %v7339, 32
    %v7341 = vpop.permute.xlu0 %7340
    %v7342 = vsel %vm176, %v7341, 0
    %7344 = vmatprep.subr.mxu0 0.0
    %7345 = vmatpush1.msra.mxu0 %v6590
    %7346 = vmatprep.subr.mxu0 0.0
    %7347 = vmatpush1.msra.mxu0 %v6591
    %7348 = vmatprep.subr.mxu0 0.0
    %7349 = vmatpush1.msra.mxu0 %v6592
    %7350 = vmatprep.subr.mxu0 0.0
    %7351 = vmatpush1.msra.mxu0 %v6593
    %7352 = vmatprep.subr.mxu0 0.0
    %7353 = vmatpush1.msra.mxu0 0.0
    %7354 = vmatprep.subr.mxu0 0.0
    %7355 = vmatpush1.msra.mxu0 0.0
    %7356 = vmatprep.subr.mxu0 0.0
    %7357 = vmatpush1.msra.mxu0 0.0
    %7358 = vmatprep.subr.mxu0 0.0
    %7359 = vmatpush1.msra.mxu0 0.0
    %7360 = vmatprep.subr.mxu0 0.0
    %7361 = vmatpush1.msra.mxu0 0.0
    %7362 = vmatprep.subr.mxu0 0.0
    %7363 = vmatpush1.msra.mxu0 0.0
    %7364 = vmatprep.subr.mxu0 0.0
    %7365 = vmatpush1.msra.mxu0 0.0
    %7366 = vmatprep.subr.mxu0 0.0
    %7367 = vmatpush1.msra.mxu0 0.0
    %7368 = vmatprep.subr.mxu0 0.0
    %7369 = vmatpush1.msra.mxu0 0.0
    %7370 = vmatprep.subr.mxu0 0.0
    %7371 = vmatpush1.msra.mxu0 0.0
    %7372 = vmatprep.subr.mxu0 0.0
    %7373 = vmatpush1.msra.mxu0 0.0
    %7374 = vmatprep.subr.mxu0 0.0
    %7375 = vmatpush1.msra.mxu0 0.0
    %7376 = vmatprep.subr.mxu0 0.0
    %7377 = vmatpush1.msra.mxu0 0.0
    %7378 = vmatprep.subr.mxu0 0.0
    %7379 = vmatpush1.msra.mxu0 0.0
    %7380 = vmatprep.subr.mxu0 0.0
    %7381 = vmatpush1.msra.mxu0 0.0
    %7382 = vmatprep.subr.mxu0 0.0
    %7383 = vmatpush1.msra.mxu0 0.0
    %7384 = vmatprep.subr.mxu0 0.0
    %7385 = vmatpush1.msra.mxu0 0.0
    %7386 = vmatprep.subr.mxu0 0.0
    %7387 = vmatpush1.msra.mxu0 0.0
    %7388 = vmatprep.subr.mxu0 0.0
    %7389 = vmatpush1.msra.mxu0 0.0
    %7390 = vmatprep.subr.mxu0 0.0
    %7391 = vmatpush1.msra.mxu0 0.0
    %7392 = vmatprep.subr.mxu0 0.0
    %7393 = vmatpush1.msra.mxu0 0.0
    %7394 = vmatprep.subr.mxu0 0.0
    %7395 = vmatpush1.msra.mxu0 0.0
    %7396 = vmatprep.subr.mxu0 0.0
    %7397 = vmatpush1.msra.mxu0 0.0
    %7398 = vmatprep.subr.mxu0 0.0
    %7399 = vmatpush1.msra.mxu0 0.0
    %7400 = vmatprep.subr.mxu0 0.0
    %7401 = vmatpush1.msra.mxu0 0.0
    %7402 = vmatprep.subr.mxu0 0.0
    %7403 = vmatpush1.msra.mxu0 0.0
    %7404 = vmatprep.subr.mxu0 0.0
    %7405 = vmatpush1.msra.mxu0 0.0
    %7406 = vmatprep.subr.mxu0 0.0
    %7407 = vmatpush1.msra.mxu0 0.0
    %7408 = vmatprep.mubr.f32.mxu0 0.0
    %7409 = vmatmul.mubr.f32.gmra.mrb[0].mxu0 %v7342
    %v7410 = vpop.f32.mrb[0].mxu0
    %v7411 = vadd.f32 0.0, %v7410
    %v7412 = vpop.f32.mrb[0].mxu0
    %7413 = vdwg.mxu0
    %v7415 = vrot.slane %v7411, 1
    %v7417 = vadd.f32 %v6581, %v7415
    %v7418 = vxor.u32 %v7417, 2147483648
    %v7419 = vmul.f32 %v7418, 1.442695
    %v7420 = vpow.pop %v7419
    %v7421 = vadd.f32 %v7420, 1.0
    %v7422 = vrcp.pop %v7421
    %v7423 = vmul.f32 1.0, %v7422
    %v7424 = vtanh.pop %v7417
    %v7426 = vrot.slane %v7331, 7
    %v7428 = vmul.f32 %v7423, %v7426
    %7430 = vrot.lane.b32.xlu0 %v7424, 64
    %v7431 = vpop.permute.xlu0 %7430
    %v7433 = vmul.f32 %v7423, %v7431
    %7435 = vrot.lane.b32.xlu0 %v7433, 32
    %v7436 = vpop.permute.xlu0 %7435
    %v7438 = vadd.f32 %v7428, %v7436
    %v7439 = vtanh.pop %v7438
    %7441 = vrot.lane.b32.xlu0 %v7439, 64
    %v7442 = vpop.permute.xlu0 %7441
    %v7444 = vmul.f32 %v7423, %v7442
    %vm7445 = vcmask 1040384
    %v7446 = vsel %vm7445, %v6696, %v6802
    %vm7447 = vcmask 1041408
    %v7448 = vsel %vm7447, %v7446, %v6909
    %v7449 = vsel %vm89, %v7448, %v7016
    %vm7450 = vcmask 1043456
    %v7451 = vsel %vm7450, %v7449, %v7123
    %vm7452 = vcmask 1044480
    %v7453 = vsel %vm7452, %v7451, %v7230
    %vm7454 = vcmask 1045504
    %v7455 = vsel %vm7454, %v7453, %v7337
    %vm7456 = vcmask 1046528
    %v7457 = vsel %vm7456, %v7455, %v7444
    %v7458 = vlaneseq
    %v7459 = vshrl.u32 %v7458, 7
    %v7460 = vsub.s32 1, %v7459
    %v7461 = vrot.slane %v23, %v7460
    %7463 = vrot.lane.b32.xlu0 %v7457, 32
    %v7464 = vpop.permute.xlu0 %7463
    %v7465 = vsel %vm176, %v7464, 0
    %7467 = vmatprep.subr.mxu0 0.0
    %7468 = vmatpush1.msra.mxu0 %v6595
    %7469 = vmatprep.subr.mxu0 0.0
    %7470 = vmatpush1.msra.mxu0 %v6596
    %7471 = vmatprep.subr.mxu0 0.0
    %7472 = vmatpush1.msra.mxu0 %v6597
    %7473 = vmatprep.subr.mxu0 0.0
    %7474 = vmatpush1.msra.mxu0 %v6598
    %7475 = vmatprep.subr.mxu0 0.0
    %7476 = vmatpush1.msra.mxu0 0.0
    %7477 = vmatprep.subr.mxu0 0.0
    %7478 = vmatpush1.msra.mxu0 0.0
    %7479 = vmatprep.subr.mxu0 0.0
    %7480 = vmatpush1.msra.mxu0 0.0
    %7481 = vmatprep.subr.mxu0 0.0
    %7482 = vmatpush1.msra.mxu0 0.0
    %7483 = vmatprep.subr.mxu0 0.0
    %7484 = vmatpush1.msra.mxu0 0.0
    %7485 = vmatprep.subr.mxu0 0.0
    %7486 = vmatpush1.msra.mxu0 0.0
    %7487 = vmatprep.subr.mxu0 0.0
    %7488 = vmatpush1.msra.mxu0 0.0
    %7489 = vmatprep.subr.mxu0 0.0
    %7490 = vmatpush1.msra.mxu0 0.0
    %7491 = vmatprep.subr.mxu0 0.0
    %7492 = vmatpush1.msra.mxu0 0.0
    %7493 = vmatprep.subr.mxu0 0.0
    %7494 = vmatpush1.msra.mxu0 0.0
    %7495 = vmatprep.subr.mxu0 0.0
    %7496 = vmatpush1.msra.mxu0 0.0
    %7497 = vmatprep.subr.mxu0 0.0
    %7498 = vmatpush1.msra.mxu0 0.0
    %7499 = vmatprep.subr.mxu0 0.0
    %7500 = vmatpush1.msra.mxu0 0.0
    %7501 = vmatprep.subr.mxu0 0.0
    %7502 = vmatpush1.msra.mxu0 0.0
    %7503 = vmatprep.subr.mxu0 0.0
    %7504 = vmatpush1.msra.mxu0 0.0
    %7505 = vmatprep.subr.mxu0 0.0
    %7506 = vmatpush1.msra.mxu0 0.0
    %7507 = vmatprep.subr.mxu0 0.0
    %7508 = vmatpush1.msra.mxu0 0.0
    %7509 = vmatprep.subr.mxu0 0.0
    %7510 = vmatpush1.msra.mxu0 0.0
    %7511 = vmatprep.subr.mxu0 0.0
    %7512 = vmatpush1.msra.mxu0 0.0
    %7513 = vmatprep.subr.mxu0 0.0
    %7514 = vmatpush1.msra.mxu0 0.0
    %7515 = vmatprep.subr.mxu0 0.0
    %7516 = vmatpush1.msra.mxu0 0.0
    %7517 = vmatprep.subr.mxu0 0.0
    %7518 = vmatpush1.msra.mxu0 0.0
    %7519 = vmatprep.subr.mxu0 0.0
    %7520 = vmatpush1.msra.mxu0 0.0
    %7521 = vmatprep.subr.mxu0 0.0
    %7522 = vmatpush1.msra.mxu0 0.0
    %7523 = vmatprep.subr.mxu0 0.0
    %7524 = vmatpush1.msra.mxu0 0.0
    %7525 = vmatprep.subr.mxu0 0.0
    %7526 = vmatpush1.msra.mxu0 0.0
    %7527 = vmatprep.subr.mxu0 0.0
    %7528 = vmatpush1.msra.mxu0 0.0
    %7529 = vmatprep.subr.mxu0 0.0
    %7530 = vmatpush1.msra.mxu0 0.0
    %7531 = vmatprep.mubr.f32.mxu0 0.0
    %7532 = vmatmul.mubr.f32.gmra.mrb[0].mxu0 %v7465
    %v7533 = vpop.f32.mrb[0].mxu0
    %v7534 = vadd.f32 %v7461, %v7533
    %v7535 = vpop.f32.mrb[0].mxu0
    %7536 = vdwg.mxu0
    %v7537 = vsel %vm336, %v7534, -inf
    %7538 = vmax.xlane.f32.xlu0 %v7537
    %v7539 = vpop.xlane.xlu0 %7538
    %v7540 = vsub.f32 %v7534, %v7539
    %v7541 = vmul.f32 %v7540, 1.442695
    %v7542 = vpow.pop %v7541
    %v7543 = vsel %vm336, %v7542, 0.0
    %7544 = vadd.xlane.f32.xlu0 %v7543
    %v7545 = vpop.xlane.xlu0 %7544
    %v7546 = vrcp.pop %v7545
    %v7547 = vmul.f32 %v7542, %v7546
    %7548 = vxpose.xlu0.b32.start [1/16] %v7547, 128
    %7549 = vxpose.xlu0.b32.cont [2/16] 0.0, 128
    %7550 = vxpose.xlu0.b32.cont [3/16] 0.0, 128
    %7551 = vxpose.xlu0.b32.cont [4/16] 0.0, 128
    %7552 = vxpose.xlu0.b32.cont [5/16] 0.0, 128
    %7553 = vxpose.xlu0.b32.cont [6/16] 0.0, 128
    %7554 = vxpose.xlu0.b32.cont [7/16] 0.0, 128
    %7555 = vxpose.xlu0.b32.cont [8/16] 0.0, 128
    %7556 = vxpose.xlu0.b32.cont [9/16] 0.0, 128
    %7557 = vxpose.xlu0.b32.cont [10/16] 0.0, 128
    %7558 = vxpose.xlu0.b32.cont [11/16] 0.0, 128
    %7559 = vxpose.xlu0.b32.cont [12/16] 0.0, 128
    %7560 = vxpose.xlu0.b32.cont [13/16] 0.0, 128
    %7561 = vxpose.xlu0.b32.cont [14/16] 0.0, 128
    %7562 = vxpose.xlu0.b32.cont [15/16] 0.0, 128
    %7563 = vxpose.xlu0.b32.end [16/16] 0.0, 128
    %v7564 = vpop.trf.xlu0
    %v7565 = vpop.trf.xlu0
    %v7566 = vpop.trf.xlu0
    %v7567 = vpop.trf.xlu0
    %v7568 = vpop.trf.xlu0
    %v7569 = vpop.trf.xlu0
    %v7570 = vpop.trf.xlu0
    %v7571 = vpop.trf.xlu0
    %v7572 = vpop.trf.xlu0
    %v7573 = vpop.trf.xlu0
    %v7574 = vpop.trf.xlu0
    %v7575 = vpop.trf.xlu0
    %v7576 = vpop.trf.xlu0
    %v7577 = vpop.trf.xlu0
    %v7578 = vpop.trf.xlu0
    %v7579 = vpop.trf.xlu0
    %v7580 = vsel %vm336, %v7564, 0.0
    %7581 = vadd.xlane.f32.xlu0 %v7580
    %v7582 = vpop.xlane.xlu0 %7581
    %v7585 = vsel %vm336, %v7564, 0
    %7587 = vmatprep.subr.mxu0 0.0
    %7588 = vmatpush1.msra.mxu0 %v7464
    %7589 = vmatprep.subr.mxu0 0.0
    %7590 = vmatpush1.msra.mxu0 0.0
    %7591 = vmatprep.subr.mxu0 0.0
    %7592 = vmatpush1.msra.mxu0 0.0
    %7593 = vmatprep.subr.mxu0 0.0
    %7594 = vmatpush1.msra.mxu0 0.0
    %7595 = vmatprep.subr.mxu0 0.0
    %7596 = vmatpush1.msra.mxu0 0.0
    %7597 = vmatprep.subr.mxu0 0.0
    %7598 = vmatpush1.msra.mxu0 0.0
    %7599 = vmatprep.subr.mxu0 0.0
    %7600 = vmatpush1.msra.mxu0 0.0
    %7601 = vmatprep.subr.mxu0 0.0
    %7602 = vmatpush1.msra.mxu0 0.0
    %7603 = vmatprep.subr.mxu0 0.0
    %7604 = vmatpush1.msra.mxu0 0.0
    %7605 = vmatprep.subr.mxu0 0.0
    %7606 = vmatpush1.msra.mxu0 0.0
    %7607 = vmatprep.subr.mxu0 0.0
    %7608 = vmatpush1.msra.mxu0 0.0
    %7609 = vmatprep.subr.mxu0 0.0
    %7610 = vmatpush1.msra.mxu0 0.0
    %7611 = vmatprep.subr.mxu0 0.0
    %7612 = vmatpush1.msra.mxu0 0.0
    %7613 = vmatprep.subr.mxu0 0.0
    %7614 = vmatpush1.msra.mxu0 0.0
    %7615 = vmatprep.subr.mxu0 0.0
    %7616 = vmatpush1.msra.mxu0 0.0
    %7617 = vmatprep.subr.mxu0 0.0
    %7618 = vmatpush1.msra.mxu0 0.0
    %7619 = vmatprep.subr.mxu0 0.0
    %7620 = vmatpush1.msra.mxu0 0.0
    %7621 = vmatprep.subr.mxu0 0.0
    %7622 = vmatpush1.msra.mxu0 0.0
    %7623 = vmatprep.subr.mxu0 0.0
    %7624 = vmatpush1.msra.mxu0 0.0
    %7625 = vmatprep.subr.mxu0 0.0
    %7626 = vmatpush1.msra.mxu0 0.0
    %7627 = vmatprep.subr.mxu0 0.0
    %7628 = vmatpush1.msra.mxu0 0.0
    %7629 = vmatprep.subr.mxu0 0.0
    %7630 = vmatpush1.msra.mxu0 0.0
    %7631 = vmatprep.subr.mxu0 0.0
    %7632 = vmatpush1.msra.mxu0 0.0
    %7633 = vmatprep.subr.mxu0 0.0
    %7634 = vmatpush1.msra.mxu0 0.0
    %7635 = vmatprep.subr.mxu0 0.0
    %7636 = vmatpush1.msra.mxu0 0.0
    %7637 = vmatprep.subr.mxu0 0.0
    %7638 = vmatpush1.msra.mxu0 0.0
    %7639 = vmatprep.subr.mxu0 0.0
    %7640 = vmatpush1.msra.mxu0 0.0
    %7641 = vmatprep.subr.mxu0 0.0
    %7642 = vmatpush1.msra.mxu0 0.0
    %7643 = vmatprep.subr.mxu0 0.0
    %7644 = vmatpush1.msra.mxu0 0.0
    %7645 = vmatprep.subr.mxu0 0.0
    %7646 = vmatpush1.msra.mxu0 0.0
    %7647 = vmatprep.subr.mxu0 0.0
    %7648 = vmatpush1.msra.mxu0 0.0
    %7649 = vmatprep.subr.mxu0 0.0
    %7650 = vmatpush1.msra.mxu0 0.0
    %7651 = vmatprep.mubr.f32.mxu0 0.0
    %7652 = vmatmul.mubr.f32.gmra.mrb[0].mxu0 %v7585
    %v7653 = vpop.f32.mrb[0].mxu0
    %v7654 = vadd.f32 0.0, %v7653
    %v7655 = vpop.f32.mrb[0].mxu0
    %7656 = vdwg.mxu0
    %v7657 = vmul.f32 %v24, %v7582
    %v7658 = vsub.f32 %v7654, %v7657
    %v7659 = vmul.f32 %v7658, %v7658
    %v7660 = vsel %vm176, %v7659, 0.0
    %7661 = vadd.xlane.f32.xlu0 %v7660
    %v7662 = vpop.xlane.xlu0 %7661
    %v7663 = vrot.slane %v7662, 4
    %v7664 = vadd.f32 %v7662, %v7663
    %v7665 = vrot.slane %v7664, 2
    %v7666 = vadd.f32 %v7664, %v7665
    %v7667 = vrot.slane %v7666, 1
    %v7668 = vadd.f32 %v7666, %v7667
    %s7669 = vtos %v7668
    %v7670 = vstv %s7669
    %v7671 = vrsqrt.pop %v7670
    %v7672 = vmul.f32 %v7670, %v7671
    %vm7673 = vcmp.eq.f32.partialorder %v7670, inf
    %v7674 = vsel %vm7673, %v7670, %v7672
    %vm7675 = vcmp.eq.f32.partialorder %v7670, 0.0
    %v7676 = vand.u32 %v7670, 2147483648
    %v7677 = vsel %vm7675, %v7676, %v7674
    %v7678 = vmax.f32 %v7677, 1e-12
    %v7679 = vrcp.pop %v7678
    %v7680 = vmul.f32 1.0, %v7679
    %v7682 = vrot.slane %v7658, 1
    %7683 = vrot.lane.b32.xlu0 %v7682, 32
    %v7684 = vpop.permute.xlu0 %7683
    %v7686 = vrot.slane %v7658, 2
    %7687 = vrot.lane.b32.xlu0 %v7686, 64
    %v7688 = vpop.permute.xlu0 %7687
    %v7690 = vrot.slane %v7658, 3
    %7691 = vrot.lane.b32.xlu0 %v7690, 96
    %v7692 = vpop.permute.xlu0 %7691
    %v7694 = vrot.slane %v7658, 4
    %v7696 = vrot.slane %v7658, 5
    %7697 = vrot.lane.b32.xlu0 %v7696, 32
    %v7698 = vpop.permute.xlu0 %7697
    %v7700 = vrot.slane %v7658, 6
    %7701 = vrot.lane.b32.xlu0 %v7700, 64
    %v7702 = vpop.permute.xlu0 %7701
    %v7704 = vrot.slane %v7658, 7
    %7705 = vrot.lane.b32.xlu0 %v7704, 96
    %v7706 = vpop.permute.xlu0 %7705
    %v7708 = vsel %vm176, %v7658, %v7684
    %v7709 = vsel %vm3200, %v7708, %v7688
    %vm7710 = vcmask 785408
    %v7711 = vsel %vm7710, %v7709, %v7692
    %v7712 = vsel %vm176, %v7694, %v7698
    %v7713 = vsel %vm3200, %v7712, %v7702
    %v7714 = vsel %vm7710, %v7713, %v7706
    %7715 = vmatprep.subr.mxu0 %v36
    %7716 = vmatpush1.xpose.msra.mxu0 %v35
    %7717 = vmatprep.subr.mxu0 0.0
    %7718 = vmatpush1.xpose.msra.mxu0 0.0
    %7719 = vmatprep.subr.mxu0 0.0
    %7720 = vmatpush1.xpose.msra.mxu0 0.0
    %7721 = vmatprep.subr.mxu0 0.0
    %7722 = vmatpush1.xpose.msra.mxu0 0.0
    %7723 = vmatprep.subr.mxu0 0.0
    %7724 = vmatpush1.xpose.msra.mxu0 0.0
    %7725 = vmatprep.subr.mxu0 0.0
    %7726 = vmatpush1.xpose.msra.mxu0 0.0
    %7727 = vmatprep.subr.mxu0 0.0
    %7728 = vmatpush1.xpose.msra.mxu0 0.0
    %7729 = vmatprep.subr.mxu0 0.0
    %7730 = vmatpush1.xpose.msra.mxu0 0.0
    %7731 = vmatprep.subr.mxu0 0.0
    %7732 = vmatpush1.xpose.msra.mxu0 0.0
    %7733 = vmatprep.subr.mxu0 0.0
    %7734 = vmatpush1.xpose.msra.mxu0 0.0
    %7735 = vmatprep.subr.mxu0 0.0
    %7736 = vmatpush1.xpose.msra.mxu0 0.0
    %7737 = vmatprep.subr.mxu0 0.0
    %7738 = vmatpush1.xpose.msra.mxu0 0.0
    %7739 = vmatprep.subr.mxu0 0.0
    %7740 = vmatpush1.xpose.msra.mxu0 0.0
    %7741 = vmatprep.subr.mxu0 0.0
    %7742 = vmatpush1.xpose.msra.mxu0 0.0
    %7743 = vmatprep.subr.mxu0 0.0
    %7744 = vmatpush1.xpose.msra.mxu0 0.0
    %7745 = vmatprep.subr.mxu0 0.0
    %7746 = vmatpush1.xpose.msra.mxu0 0.0
    %7747 = vmatprep.subr.mxu0 0.0
    %7748 = vmatpush1.xpose.msra.mxu0 0.0
    %7749 = vmatprep.subr.mxu0 0.0
    %7750 = vmatpush1.xpose.msra.mxu0 0.0
    %7751 = vmatprep.subr.mxu0 0.0
    %7752 = vmatpush1.xpose.msra.mxu0 0.0
    %7753 = vmatprep.subr.mxu0 0.0
    %7754 = vmatpush1.xpose.msra.mxu0 0.0
    %7755 = vmatprep.subr.mxu0 0.0
    %7756 = vmatpush1.xpose.msra.mxu0 0.0
    %7757 = vmatprep.subr.mxu0 0.0
    %7758 = vmatpush1.xpose.msra.mxu0 0.0
    %7759 = vmatprep.subr.mxu0 0.0
    %7760 = vmatpush1.xpose.msra.mxu0 0.0
    %7761 = vmatprep.subr.mxu0 0.0
    %7762 = vmatpush1.xpose.msra.mxu0 0.0
    %7763 = vmatprep.subr.mxu0 0.0
    %7764 = vmatpush1.xpose.msra.mxu0 0.0
    %7765 = vmatprep.subr.mxu0 0.0
    %7766 = vmatpush1.xpose.msra.mxu0 0.0
    %7767 = vmatprep.subr.mxu0 0.0
    %7768 = vmatpush1.xpose.msra.mxu0 0.0
    %7769 = vmatprep.subr.mxu0 0.0
    %7770 = vmatpush1.xpose.msra.mxu0 0.0
    %7771 = vmatprep.subr.mxu0 0.0
    %7772 = vmatpush1.xpose.msra.mxu0 0.0
    %7773 = vmatprep.subr.mxu0 0.0
    %7774 = vmatpush1.xpose.msra.mxu0 0.0
    %7775 = vmatprep.subr.mxu0 0.0
    %7776 = vmatpush1.xpose.msra.mxu0 0.0
    %7777 = vmatprep.subr.mxu0 0.0
    %7778 = vmatpush1.xpose.msra.mxu0 0.0
    %7779 = vmatprep.mubr.f32.mxu0 %v7714
    %7780 = vmatmul.mubr.f32.gmra.mrb[0].mxu0 %v7711
    %v7781 = vpop.f32.mrb[0].mxu0
    %v7782 = vadd.f32 0.0, %v7781
    %v7783 = vpop.f32.mrb[0].mxu0
    %7784 = vdwg.mxu0
    %v7785 = vmul.f32 %v7782, %v7680
    %v7787 = vrot.slane %v23, 2
    %v7789 = vadd.f32 %v7785, %v7787
    %vm7790 = vcmask 32768
    %7791 = vst.msk [vmem:[#allocation2] sm:$0x1] %vm7790, %v7789
    %v7792 = vadd.f32 %v6586, %v6669
    %v7793 = vxor.u32 %v7792, 2147483648
    %v7794 = vmul.f32 %v7793, 1.442695
    %v7795 = vpow.pop %v7794
    %v7796 = vadd.f32 %v7795, 1.0
    %v7797 = vrcp.pop %v7796
    %v7798 = vmul.f32 1.0, %v7797
    %v7799 = vtanh.pop %v7792
    %v7800 = vmul.f32 %v7798, 0.0
    %7802 = vrot.lane.b32.xlu0 %v7799, 64
    %v7803 = vpop.permute.xlu0 %7802
    %v7805 = vmul.f32 %v7798, %v7803
    %7807 = vrot.lane.b32.xlu0 %v7805, 32
    %v7808 = vpop.permute.xlu0 %7807
    %v7810 = vadd.f32 %v7800, %v7808
    %v7811 = vtanh.pop %v7810
    %7813 = vrot.lane.b32.xlu0 %v7811, 64
    %v7814 = vpop.permute.xlu0 %7813
    %v7816 = vmul.f32 %v7798, %v7814
    %7818 = vrot.lane.b32.xlu0 %v7816, 32
    %v7819 = vpop.permute.xlu0 %7818
    %v7820 = vsel %vm176, %v7819, 0
    %7822 = vmatprep.subr.mxu0 0.0
    %7823 = vmatpush1.msra.mxu0 %v6590
    %7824 = vmatprep.subr.mxu0 0.0
    %7825 = vmatpush1.msra.mxu0 %v6591
    %7826 = vmatprep.subr.mxu0 0.0
    %7827 = vmatpush1.msra.mxu0 %v6592
    %7828 = vmatprep.subr.mxu0 0.0
    %7829 = vmatpush1.msra.mxu0 %v6593
    %7830 = vmatprep.subr.mxu0 0.0
    %7831 = vmatpush1.msra.mxu0 0.0
    %7832 = vmatprep.subr.mxu0 0.0
    %7833 = vmatpush1.msra.mxu0 0.0
    %7834 = vmatprep.subr.mxu0 0.0
    %7835 = vmatpush1.msra.mxu0 0.0
    %7836 = vmatprep.subr.mxu0 0.0
    %7837 = vmatpush1.msra.mxu0 0.0
    %7838 = vmatprep.subr.mxu0 0.0
    %7839 = vmatpush1.msra.mxu0 0.0
    %7840 = vmatprep.subr.mxu0 0.0
    %7841 = vmatpush1.msra.mxu0 0.0
    %7842 = vmatprep.subr.mxu0 0.0
    %7843 = vmatpush1.msra.mxu0 0.0
    %7844 = vmatprep.subr.mxu0 0.0
    %7845 = vmatpush1.msra.mxu0 0.0
    %7846 = vmatprep.subr.mxu0 0.0
    %7847 = vmatpush1.msra.mxu0 0.0
    %7848 = vmatprep.subr.mxu0 0.0
    %7849 = vmatpush1.msra.mxu0 0.0
    %7850 = vmatprep.subr.mxu0 0.0
    %7851 = vmatpush1.msra.mxu0 0.0
    %7852 = vmatprep.subr.mxu0 0.0
    %7853 = vmatpush1.msra.mxu0 0.0
    %7854 = vmatprep.subr.mxu0 0.0
    %7855 = vmatpush1.msra.mxu0 0.0
    %7856 = vmatprep.subr.mxu0 0.0
    %7857 = vmatpush1.msra.mxu0 0.0
    %7858 = vmatprep.subr.mxu0 0.0
    %7859 = vmatpush1.msra.mxu0 0.0
    %7860 = vmatprep.subr.mxu0 0.0
    %7861 = vmatpush1.msra.mxu0 0.0
    %7862 = vmatprep.subr.mxu0 0.0
    %7863 = vmatpush1.msra.mxu0 0.0
    %7864 = vmatprep.subr.mxu0 0.0
    %7865 = vmatpush1.msra.mxu0 0.0
    %7866 = vmatprep.subr.mxu0 0.0
    %7867 = vmatpush1.msra.mxu0 0.0
    %7868 = vmatprep.subr.mxu0 0.0
    %7869 = vmatpush1.msra.mxu0 0.0
    %7870 = vmatprep.subr.mxu0 0.0
    %7871 = vmatpush1.msra.mxu0 0.0
    %7872 = vmatprep.subr.mxu0 0.0
    %7873 = vmatpush1.msra.mxu0 0.0
    %7874 = vmatprep.subr.mxu0 0.0
    %7875 = vmatpush1.msra.mxu0 0.0
    %7876 = vmatprep.subr.mxu0 0.0
    %7877 = vmatpush1.msra.mxu0 0.0
    %7878 = vmatprep.subr.mxu0 0.0
    %7879 = vmatpush1.msra.mxu0 0.0
    %7880 = vmatprep.subr.mxu0 0.0
    %7881 = vmatpush1.msra.mxu0 0.0
    %7882 = vmatprep.subr.mxu0 0.0
    %7883 = vmatpush1.msra.mxu0 0.0
    %7884 = vmatprep.subr.mxu0 0.0
    %7885 = vmatpush1.msra.mxu0 0.0
    %7886 = vmatprep.mubr.f32.mxu0 0.0
    %7887 = vmatmul.mubr.f32.gmra.mrb[0].mxu0 %v7820
    %v7888 = vpop.f32.mrb[0].mxu0
    %v7889 = vadd.f32 0.0, %v7888
    %v7890 = vpop.f32.mrb[0].mxu0
    %7891 = vdwg.mxu0
    %v7893 = vrot.slane %v7889, 7
    %v7895 = vadd.f32 %v6586, %v7893
    %v7896 = vxor.u32 %v7895, 2147483648
    %v7897 = vmul.f32 %v7896, 1.442695
    %v7898 = vpow.pop %v7897
    %v7899 = vadd.f32 %v7898, 1.0
    %v7900 = vrcp.pop %v7899
    %v7901 = vmul.f32 1.0, %v7900
    %v7902 = vtanh.pop %v7895
    %v7904 = vrot.slane %v7810, 7
    %v7906 = vmul.f32 %v7901, %v7904
    %7908 = vrot.lane.b32.xlu0 %v7902, 64
    %v7909 = vpop.permute.xlu0 %7908
    %v7911 = vmul.f32 %v7901, %v7909
    %7913 = vrot.lane.b32.xlu0 %v7911, 32
    %v7914 = vpop.permute.xlu0 %7913
    %v7916 = vadd.f32 %v7906, %v7914
    %v7917 = vtanh.pop %v7916
    %7919 = vrot.lane.b32.xlu0 %v7917, 64
    %v7920 = vpop.permute.xlu0 %7919
    %v7922 = vmul.f32 %v7901, %v7920
    %v7924 = vrot.slane %v7922, 1
    %7925 = vrot.lane.b32.xlu0 %v7924, 32
    %v7926 = vpop.permute.xlu0 %7925
    %v7927 = vsel %vm176, %v7926, 0
    %7929 = vmatprep.subr.mxu0 0.0
    %7930 = vmatpush1.msra.mxu0 %v6590
    %7931 = vmatprep.subr.mxu0 0.0
    %7932 = vmatpush1.msra.mxu0 %v6591
    %7933 = vmatprep.subr.mxu0 0.0
    %7934 = vmatpush1.msra.mxu0 %v6592
    %7935 = vmatprep.subr.mxu0 0.0
    %7936 = vmatpush1.msra.mxu0 %v6593
    %7937 = vmatprep.subr.mxu0 0.0
    %7938 = vmatpush1.msra.mxu0 0.0
    %7939 = vmatprep.subr.mxu0 0.0
    %7940 = vmatpush1.msra.mxu0 0.0
    %7941 = vmatprep.subr.mxu0 0.0
    %7942 = vmatpush1.msra.mxu0 0.0
    %7943 = vmatprep.subr.mxu0 0.0
    %7944 = vmatpush1.msra.mxu0 0.0
    %7945 = vmatprep.subr.mxu0 0.0
    %7946 = vmatpush1.msra.mxu0 0.0
    %7947 = vmatprep.subr.mxu0 0.0
    %7948 = vmatpush1.msra.mxu0 0.0
    %7949 = vmatprep.subr.mxu0 0.0
    %7950 = vmatpush1.msra.mxu0 0.0
    %7951 = vmatprep.subr.mxu0 0.0
    %7952 = vmatpush1.msra.mxu0 0.0
    %7953 = vmatprep.subr.mxu0 0.0
    %7954 = vmatpush1.msra.mxu0 0.0
    %7955 = vmatprep.subr.mxu0 0.0
    %7956 = vmatpush1.msra.mxu0 0.0
    %7957 = vmatprep.subr.mxu0 0.0
    %7958 = vmatpush1.msra.mxu0 0.0
    %7959 = vmatprep.subr.mxu0 0.0
    %7960 = vmatpush1.msra.mxu0 0.0
    %7961 = vmatprep.subr.mxu0 0.0
    %7962 = vmatpush1.msra.mxu0 0.0
    %7963 = vmatprep.subr.mxu0 0.0
    %7964 = vmatpush1.msra.mxu0 0.0
    %7965 = vmatprep.subr.mxu0 0.0
    %7966 = vmatpush1.msra.mxu0 0.0
    %7967 = vmatprep.subr.mxu0 0.0
    %7968 = vmatpush1.msra.mxu0 0.0
    %7969 = vmatprep.subr.mxu0 0.0
    %7970 = vmatpush1.msra.mxu0 0.0
    %7971 = vmatprep.subr.mxu0 0.0
    %7972 = vmatpush1.msra.mxu0 0.0
    %7973 = vmatprep.subr.mxu0 0.0
    %7974 = vmatpush1.msra.mxu0 0.0
    %7975 = vmatprep.subr.mxu0 0.0
    %7976 = vmatpush1.msra.mxu0 0.0
    %7977 = vmatprep.subr.mxu0 0.0
    %7978 = vmatpush1.msra.mxu0 0.0
    %7979 = vmatprep.subr.mxu0 0.0
    %7980 = vmatpush1.msra.mxu0 0.0
    %7981 = vmatprep.subr.mxu0 0.0
    %7982 = vmatpush1.msra.mxu0 0.0
    %7983 = vmatprep.subr.mxu0 0.0
    %7984 = vmatpush1.msra.mxu0 0.0
    %7985 = vmatprep.subr.mxu0 0.0
    %7986 = vmatpush1.msra.mxu0 0.0
    %7987 = vmatprep.subr.mxu0 0.0
    %7988 = vmatpush1.msra.mxu0 0.0
    %7989 = vmatprep.subr.mxu0 0.0
    %7990 = vmatpush1.msra.mxu0 0.0
    %7991 = vmatprep.subr.mxu0 0.0
    %7992 = vmatpush1.msra.mxu0 0.0
    %7993 = vmatprep.mubr.f32.mxu0 0.0
    %7994 = vmatmul.mubr.f32.gmra.mrb[0].mxu0 %v7927
    %v7995 = vpop.f32.mrb[0].mxu0
    %v7996 = vadd.f32 0.0, %v7995
    %v7997 = vpop.f32.mrb[0].mxu0
    %7998 = vdwg.mxu0
    %v8000 = vrot.slane %v7996, 6
    %v8002 = vadd.f32 %v6586, %v8000
    %v8003 = vxor.u32 %v8002, 2147483648
    %v8004 = vmul.f32 %v8003, 1.442695
    %v8005 = vpow.pop %v8004
    %v8006 = vadd.f32 %v8005, 1.0
    %v8007 = vrcp.pop %v8006
    %v8008 = vmul.f32 1.0, %v8007
    %v8009 = vtanh.pop %v8002
    %v8011 = vrot.slane %v7916, 7
    %v8013 = vmul.f32 %v8008, %v8011
    %8015 = vrot.lane.b32.xlu0 %v8009, 64
    %v8016 = vpop.permute.xlu0 %8015
    %v8018 = vmul.f32 %v8008, %v8016
    %8020 = vrot.lane.b32.xlu0 %v8018, 32
    %v8021 = vpop.permute.xlu0 %8020
    %v8023 = vadd.f32 %v8013, %v8021
    %v8024 = vtanh.pop %v8023
    %8026 = vrot.lane.b32.xlu0 %v8024, 64
    %v8027 = vpop.permute.xlu0 %8026
    %v8029 = vmul.f32 %v8008, %v8027
    %v8031 = vrot.slane %v8029, 2
    %8032 = vrot.lane.b32.xlu0 %v8031, 32
    %v8033 = vpop.permute.xlu0 %8032
    %v8034 = vsel %vm176, %v8033, 0
    %8036 = vmatprep.subr.mxu0 0.0
    %8037 = vmatpush1.msra.mxu0 %v6590
    %8038 = vmatprep.subr.mxu0 0.0
    %8039 = vmatpush1.msra.mxu0 %v6591
    %8040 = vmatprep.subr.mxu0 0.0
    %8041 = vmatpush1.msra.mxu0 %v6592
    %8042 = vmatprep.subr.mxu0 0.0
    %8043 = vmatpush1.msra.mxu0 %v6593
    %8044 = vmatprep.subr.mxu0 0.0
    %8045 = vmatpush1.msra.mxu0 0.0
    %8046 = vmatprep.subr.mxu0 0.0
    %8047 = vmatpush1.msra.mxu0 0.0
    %8048 = vmatprep.subr.mxu0 0.0
    %8049 = vmatpush1.msra.mxu0 0.0
    %8050 = vmatprep.subr.mxu0 0.0
    %8051 = vmatpush1.msra.mxu0 0.0
    %8052 = vmatprep.subr.mxu0 0.0
    %8053 = vmatpush1.msra.mxu0 0.0
    %8054 = vmatprep.subr.mxu0 0.0
    %8055 = vmatpush1.msra.mxu0 0.0
    %8056 = vmatprep.subr.mxu0 0.0
    %8057 = vmatpush1.msra.mxu0 0.0
    %8058 = vmatprep.subr.mxu0 0.0
    %8059 = vmatpush1.msra.mxu0 0.0
    %8060 = vmatprep.subr.mxu0 0.0
    %8061 = vmatpush1.msra.mxu0 0.0
    %8062 = vmatprep.subr.mxu0 0.0
    %8063 = vmatpush1.msra.mxu0 0.0
    %8064 = vmatprep.subr.mxu0 0.0
    %8065 = vmatpush1.msra.mxu0 0.0
    %8066 = vmatprep.subr.mxu0 0.0
    %8067 = vmatpush1.msra.mxu0 0.0
    %8068 = vmatprep.subr.mxu0 0.0
    %8069 = vmatpush1.msra.mxu0 0.0
    %8070 = vmatprep.subr.mxu0 0.0
    %8071 = vmatpush1.msra.mxu0 0.0
    %8072 = vmatprep.subr.mxu0 0.0
    %8073 = vmatpush1.msra.mxu0 0.0
    %8074 = vmatprep.subr.mxu0 0.0
    %8075 = vmatpush1.msra.mxu0 0.0
    %8076 = vmatprep.subr.mxu0 0.0
    %8077 = vmatpush1.msra.mxu0 0.0
    %8078 = vmatprep.subr.mxu0 0.0
    %8079 = vmatpush1.msra.mxu0 0.0
    %8080 = vmatprep.subr.mxu0 0.0
    %8081 = vmatpush1.msra.mxu0 0.0
    %8082 = vmatprep.subr.mxu0 0.0
    %8083 = vmatpush1.msra.mxu0 0.0
    %8084 = vmatprep.subr.mxu0 0.0
    %8085 = vmatpush1.msra.mxu0 0.0
    %8086 = vmatprep.subr.mxu0 0.0
    %8087 = vmatpush1.msra.mxu0 0.0
    %8088 = vmatprep.subr.mxu0 0.0
    %8089 = vmatpush1.msra.mxu0 0.0
    %8090 = vmatprep.subr.mxu0 0.0
    %8091 = vmatpush1.msra.mxu0 0.0
    %8092 = vmatprep.subr.mxu0 0.0
    %8093 = vmatpush1.msra.mxu0 0.0
    %8094 = vmatprep.subr.mxu0 0.0
    %8095 = vmatpush1.msra.mxu0 0.0
    %8096 = vmatprep.subr.mxu0 0.0
    %8097 = vmatpush1.msra.mxu0 0.0
    %8098 = vmatprep.subr.mxu0 0.0
    %8099 = vmatpush1.msra.mxu0 0.0
    %8100 = vmatprep.mubr.f32.mxu0 0.0
    %8101 = vmatmul.mubr.f32.gmra.mrb[0].mxu0 %v8034
    %v8102 = vpop.f32.mrb[0].mxu0
    %v8103 = vadd.f32 0.0, %v8102
    %v8104 = vpop.f32.mrb[0].mxu0
    %8105 = vdwg.mxu0
    %v8107 = vrot.slane %v8103, 5
    %v8109 = vadd.f32 %v6586, %v8107
    %v8110 = vxor.u32 %v8109, 2147483648
    %v8111 = vmul.f32 %v8110, 1.442695
    %v8112 = vpow.pop %v8111
    %v8113 = vadd.f32 %v8112, 1.0
    %v8114 = vrcp.pop %v8113
    %v8115 = vmul.f32 1.0, %v8114
    %v8116 = vtanh.pop %v8109
    %v8118 = vrot.slane %v8023, 7
    %v8120 = vmul.f32 %v8115, %v8118
    %8122 = vrot.lane.b32.xlu0 %v8116, 64
    %v8123 = vpop.permute.xlu0 %8122
    %v8125 = vmul.f32 %v8115, %v8123
    %8127 = vrot.lane.b32.xlu0 %v8125, 32
    %v8128 = vpop.permute.xlu0 %8127
    %v8130 = vadd.f32 %v8120, %v8128
    %v8131 = vtanh.pop %v8130
    %8133 = vrot.lane.b32.xlu0 %v8131, 64
    %v8134 = vpop.permute.xlu0 %8133
    %v8136 = vmul.f32 %v8115, %v8134
    %v8138 = vrot.slane %v8136, 3
    %8139 = vrot.lane.b32.xlu0 %v8138, 32
    %v8140 = vpop.permute.xlu0 %8139
    %v8141 = vsel %vm176, %v8140, 0
    %8143 = vmatprep.subr.mxu0 0.0
    %8144 = vmatpush1.msra.mxu0 %v6590
    %8145 = vmatprep.subr.mxu0 0.0
    %8146 = vmatpush1.msra.mxu0 %v6591
    %8147 = vmatprep.subr.mxu0 0.0
    %8148 = vmatpush1.msra.mxu0 %v6592
    %8149 = vmatprep.subr.mxu0 0.0
    %8150 = vmatpush1.msra.mxu0 %v6593
    %8151 = vmatprep.subr.mxu0 0.0
    %8152 = vmatpush1.msra.mxu0 0.0
    %8153 = vmatprep.subr.mxu0 0.0
    %8154 = vmatpush1.msra.mxu0 0.0
    %8155 = vmatprep.subr.mxu0 0.0
    %8156 = vmatpush1.msra.mxu0 0.0
    %8157 = vmatprep.subr.mxu0 0.0
    %8158 = vmatpush1.msra.mxu0 0.0
    %8159 = vmatprep.subr.mxu0 0.0
    %8160 = vmatpush1.msra.mxu0 0.0
    %8161 = vmatprep.subr.mxu0 0.0
    %8162 = vmatpush1.msra.mxu0 0.0
    %8163 = vmatprep.subr.mxu0 0.0
    %8164 = vmatpush1.msra.mxu0 0.0
    %8165 = vmatprep.subr.mxu0 0.0
    %8166 = vmatpush1.msra.mxu0 0.0
    %8167 = vmatprep.subr.mxu0 0.0
    %8168 = vmatpush1.msra.mxu0 0.0
    %8169 = vmatprep.subr.mxu0 0.0
    %8170 = vmatpush1.msra.mxu0 0.0
    %8171 = vmatprep.subr.mxu0 0.0
    %8172 = vmatpush1.msra.mxu0 0.0
    %8173 = vmatprep.subr.mxu0 0.0
    %8174 = vmatpush1.msra.mxu0 0.0
    %8175 = vmatprep.subr.mxu0 0.0
    %8176 = vmatpush1.msra.mxu0 0.0
    %8177 = vmatprep.subr.mxu0 0.0
    %8178 = vmatpush1.msra.mxu0 0.0
    %8179 = vmatprep.subr.mxu0 0.0
    %8180 = vmatpush1.msra.mxu0 0.0
    %8181 = vmatprep.subr.mxu0 0.0
    %8182 = vmatpush1.msra.mxu0 0.0
    %8183 = vmatprep.subr.mxu0 0.0
    %8184 = vmatpush1.msra.mxu0 0.0
    %8185 = vmatprep.subr.mxu0 0.0
    %8186 = vmatpush1.msra.mxu0 0.0
    %8187 = vmatprep.subr.mxu0 0.0
    %8188 = vmatpush1.msra.mxu0 0.0
    %8189 = vmatprep.subr.mxu0 0.0
    %8190 = vmatpush1.msra.mxu0 0.0
    %8191 = vmatprep.subr.mxu0 0.0
    %8192 = vmatpush1.msra.mxu0 0.0
    %8193 = vmatprep.subr.mxu0 0.0
    %8194 = vmatpush1.msra.mxu0 0.0
    %8195 = vmatprep.subr.mxu0 0.0
    %8196 = vmatpush1.msra.mxu0 0.0
    %8197 = vmatprep.subr.mxu0 0.0
    %8198 = vmatpush1.msra.mxu0 0.0
    %8199 = vmatprep.subr.mxu0 0.0
    %8200 = vmatpush1.msra.mxu0 0.0
    %8201 = vmatprep.subr.mxu0 0.0
    %8202 = vmatpush1.msra.mxu0 0.0
    %8203 = vmatprep.subr.mxu0 0.0
    %8204 = vmatpush1.msra.mxu0 0.0
    %8205 = vmatprep.subr.mxu0 0.0
    %8206 = vmatpush1.msra.mxu0 0.0
    %8207 = vmatprep.mubr.f32.mxu0 0.0
    %8208 = vmatmul.mubr.f32.gmra.mrb[0].mxu0 %v8141
    %v8209 = vpop.f32.mrb[0].mxu0
    %v8210 = vadd.f32 0.0, %v8209
    %v8211 = vpop.f32.mrb[0].mxu0
    %8212 = vdwg.mxu0
    %v8214 = vrot.slane %v8210, 4
    %v8216 = vadd.f32 %v6586, %v8214
    %v8217 = vxor.u32 %v8216, 2147483648
    %v8218 = vmul.f32 %v8217, 1.442695
    %v8219 = vpow.pop %v8218
    %v8220 = vadd.f32 %v8219, 1.0
    %v8221 = vrcp.pop %v8220
    %v8222 = vmul.f32 1.0, %v8221
    %v8223 = vtanh.pop %v8216
    %v8225 = vrot.slane %v8130, 7
    %v8227 = vmul.f32 %v8222, %v8225
    %8229 = vrot.lane.b32.xlu0 %v8223, 64
    %v8230 = vpop.permute.xlu0 %8229
    %v8232 = vmul.f32 %v8222, %v8230
    %8234 = vrot.lane.b32.xlu0 %v8232, 32
    %v8235 = vpop.permute.xlu0 %8234
    %v8237 = vadd.f32 %v8227, %v8235
    %v8238 = vtanh.pop %v8237
    %8240 = vrot.lane.b32.xlu0 %v8238, 64
    %v8241 = vpop.permute.xlu0 %8240
    %v8243 = vmul.f32 %v8222, %v8241
    %v8245 = vrot.slane %v8243, 4
    %8246 = vrot.lane.b32.xlu0 %v8245, 32
    %v8247 = vpop.permute.xlu0 %8246
    %v8248 = vsel %vm176, %v8247, 0
    %8250 = vmatprep.subr.mxu0 0.0
    %8251 = vmatpush1.msra.mxu0 %v6590
    %8252 = vmatprep.subr.mxu0 0.0
    %8253 = vmatpush1.msra.mxu0 %v6591
    %8254 = vmatprep.subr.mxu0 0.0
    %8255 = vmatpush1.msra.mxu0 %v6592
    %8256 = vmatprep.subr.mxu0 0.0
    %8257 = vmatpush1.msra.mxu0 %v6593
    %8258 = vmatprep.subr.mxu0 0.0
    %8259 = vmatpush1.msra.mxu0 0.0
    %8260 = vmatprep.subr.mxu0 0.0
    %8261 = vmatpush1.msra.mxu0 0.0
    %8262 = vmatprep.subr.mxu0 0.0
    %8263 = vmatpush1.msra.mxu0 0.0
    %8264 = vmatprep.subr.mxu0 0.0
    %8265 = vmatpush1.msra.mxu0 0.0
    %8266 = vmatprep.subr.mxu0 0.0
    %8267 = vmatpush1.msra.mxu0 0.0
    %8268 = vmatprep.subr.mxu0 0.0
    %8269 = vmatpush1.msra.mxu0 0.0
    %8270 = vmatprep.subr.mxu0 0.0
    %8271 = vmatpush1.msra.mxu0 0.0
    %8272 = vmatprep.subr.mxu0 0.0
    %8273 = vmatpush1.msra.mxu0 0.0
    %8274 = vmatprep.subr.mxu0 0.0
    %8275 = vmatpush1.msra.mxu0 0.0
    %8276 = vmatprep.subr.mxu0 0.0
    %8277 = vmatpush1.msra.mxu0 0.0
    %8278 = vmatprep.subr.mxu0 0.0
    %8279 = vmatpush1.msra.mxu0 0.0
    %8280 = vmatprep.subr.mxu0 0.0
    %8281 = vmatpush1.msra.mxu0 0.0
    %8282 = vmatprep.subr.mxu0 0.0
    %8283 = vmatpush1.msra.mxu0 0.0
    %8284 = vmatprep.subr.mxu0 0.0
    %8285 = vmatpush1.msra.mxu0 0.0
    %8286 = vmatprep.subr.mxu0 0.0
    %8287 = vmatpush1.msra.mxu0 0.0
    %8288 = vmatprep.subr.mxu0 0.0
    %8289 = vmatpush1.msra.mxu0 0.0
    %8290 = vmatprep.subr.mxu0 0.0
    %8291 = vmatpush1.msra.mxu0 0.0
    %8292 = vmatprep.subr.mxu0 0.0
    %8293 = vmatpush1.msra.mxu0 0.0
    %8294 = vmatprep.subr.mxu0 0.0
    %8295 = vmatpush1.msra.mxu0 0.0
    %8296 = vmatprep.subr.mxu0 0.0
    %8297 = vmatpush1.msra.mxu0 0.0
    %8298 = vmatprep.subr.mxu0 0.0
    %8299 = vmatpush1.msra.mxu0 0.0
    %8300 = vmatprep.subr.mxu0 0.0
    %8301 = vmatpush1.msra.mxu0 0.0
    %8302 = vmatprep.subr.mxu0 0.0
    %8303 = vmatpush1.msra.mxu0 0.0
    %8304 = vmatprep.subr.mxu0 0.0
    %8305 = vmatpush1.msra.mxu0 0.0
    %8306 = vmatprep.subr.mxu0 0.0
    %8307 = vmatpush1.msra.mxu0 0.0
    %8308 = vmatprep.subr.mxu0 0.0
    %8309 = vmatpush1.msra.mxu0 0.0
    %8310 = vmatprep.subr.mxu0 0.0
    %8311 = vmatpush1.msra.mxu0 0.0
    %8312 = vmatprep.subr.mxu0 0.0
    %8313 = vmatpush1.msra.mxu0 0.0
    %8314 = vmatprep.mubr.f32.mxu0 0.0
    %8315 = vmatmul.mubr.f32.gmra.mrb[0].mxu0 %v8248
    %v8316 = vpop.f32.mrb[0].mxu0
    %v8317 = vadd.f32 0.0, %v8316
    %v8318 = vpop.f32.mrb[0].mxu0
    %8319 = vdwg.mxu0
    %v8321 = vrot.slane %v8317, 3
    %v8323 = vadd.f32 %v6586, %v8321
    %v8324 = vxor.u32 %v8323, 2147483648
    %v8325 = vmul.f32 %v8324, 1.442695
    %v8326 = vpow.pop %v8325
    %v8327 = vadd.f32 %v8326, 1.0
    %v8328 = vrcp.pop %v8327
    %v8329 = vmul.f32 1.0, %v8328
    %v8330 = vtanh.pop %v8323
    %v8332 = vrot.slane %v8237, 7
    %v8334 = vmul.f32 %v8329, %v8332
    %8336 = vrot.lane.b32.xlu0 %v8330, 64
    %v8337 = vpop.permute.xlu0 %8336
    %v8339 = vmul.f32 %v8329, %v8337
    %8341 = vrot.lane.b32.xlu0 %v8339, 32
    %v8342 = vpop.permute.xlu0 %8341
    %v8344 = vadd.f32 %v8334, %v8342
    %v8345 = vtanh.pop %v8344
    %8347 = vrot.lane.b32.xlu0 %v8345, 64
    %v8348 = vpop.permute.xlu0 %8347
    %v8350 = vmul.f32 %v8329, %v8348
    %v8352 = vrot.slane %v8350, 5
    %8353 = vrot.lane.b32.xlu0 %v8352, 32
    %v8354 = vpop.permute.xlu0 %8353
    %v8355 = vsel %vm176, %v8354, 0
    %8357 = vmatprep.subr.mxu0 0.0
    %8358 = vmatpush1.msra.mxu0 %v6590
    %8359 = vmatprep.subr.mxu0 0.0
    %8360 = vmatpush1.msra.mxu0 %v6591
    %8361 = vmatprep.subr.mxu0 0.0
    %8362 = vmatpush1.msra.mxu0 %v6592
    %8363 = vmatprep.subr.mxu0 0.0
    %8364 = vmatpush1.msra.mxu0 %v6593
    %8365 = vmatprep.subr.mxu0 0.0
    %8366 = vmatpush1.msra.mxu0 0.0
    %8367 = vmatprep.subr.mxu0 0.0
    %8368 = vmatpush1.msra.mxu0 0.0
    %8369 = vmatprep.subr.mxu0 0.0
    %8370 = vmatpush1.msra.mxu0 0.0
    %8371 = vmatprep.subr.mxu0 0.0
    %8372 = vmatpush1.msra.mxu0 0.0
    %8373 = vmatprep.subr.mxu0 0.0
    %8374 = vmatpush1.msra.mxu0 0.0
    %8375 = vmatprep.subr.mxu0 0.0
    %8376 = vmatpush1.msra.mxu0 0.0
    %8377 = vmatprep.subr.mxu0 0.0
    %8378 = vmatpush1.msra.mxu0 0.0
    %8379 = vmatprep.subr.mxu0 0.0
    %8380 = vmatpush1.msra.mxu0 0.0
    %8381 = vmatprep.subr.mxu0 0.0
    %8382 = vmatpush1.msra.mxu0 0.0
    %8383 = vmatprep.subr.mxu0 0.0
    %8384 = vmatpush1.msra.mxu0 0.0
    %8385 = vmatprep.subr.mxu0 0.0
    %8386 = vmatpush1.msra.mxu0 0.0
    %8387 = vmatprep.subr.mxu0 0.0
    %8388 = vmatpush1.msra.mxu0 0.0
    %8389 = vmatprep.subr.mxu0 0.0
    %8390 = vmatpush1.msra.mxu0 0.0
    %8391 = vmatprep.subr.mxu0 0.0
    %8392 = vmatpush1.msra.mxu0 0.0
    %8393 = vmatprep.subr.mxu0 0.0
    %8394 = vmatpush1.msra.mxu0 0.0
    %8395 = vmatprep.subr.mxu0 0.0
    %8396 = vmatpush1.msra.mxu0 0.0
    %8397 = vmatprep.subr.mxu0 0.0
    %8398 = vmatpush1.msra.mxu0 0.0
    %8399 = vmatprep.subr.mxu0 0.0
    %8400 = vmatpush1.msra.mxu0 0.0
    %8401 = vmatprep.subr.mxu0 0.0
    %8402 = vmatpush1.msra.mxu0 0.0
    %8403 = vmatprep.subr.mxu0 0.0
    %8404 = vmatpush1.msra.mxu0 0.0
    %8405 = vmatprep.subr.mxu0 0.0
    %8406 = vmatpush1.msra.mxu0 0.0
    %8407 = vmatprep.subr.mxu0 0.0
    %8408 = vmatpush1.msra.mxu0 0.0
    %8409 = vmatprep.subr.mxu0 0.0
    %8410 = vmatpush1.msra.mxu0 0.0
    %8411 = vmatprep.subr.mxu0 0.0
    %8412 = vmatpush1.msra.mxu0 0.0
    %8413 = vmatprep.subr.mxu0 0.0
    %8414 = vmatpush1.msra.mxu0 0.0
    %8415 = vmatprep.subr.mxu0 0.0
    %8416 = vmatpush1.msra.mxu0 0.0
    %8417 = vmatprep.subr.mxu0 0.0
    %8418 = vmatpush1.msra.mxu0 0.0
    %8419 = vmatprep.subr.mxu0 0.0
    %8420 = vmatpush1.msra.mxu0 0.0
    %8421 = vmatprep.mubr.f32.mxu0 0.0
    %8422 = vmatmul.mubr.f32.gmra.mrb[0].mxu0 %v8355
    %v8423 = vpop.f32.mrb[0].mxu0
    %v8424 = vadd.f32 0.0, %v8423
    %v8425 = vpop.f32.mrb[0].mxu0
    %8426 = vdwg.mxu0
    %v8428 = vrot.slane %v8424, 2
    %v8430 = vadd.f32 %v6586, %v8428
    %v8431 = vxor.u32 %v8430, 2147483648
    %v8432 = vmul.f32 %v8431, 1.442695
    %v8433 = vpow.pop %v8432
    %v8434 = vadd.f32 %v8433, 1.0
    %v8435 = vrcp.pop %v8434
    %v8436 = vmul.f32 1.0, %v8435
    %v8437 = vtanh.pop %v8430
    %v8439 = vrot.slane %v8344, 7
    %v8441 = vmul.f32 %v8436, %v8439
    %8443 = vrot.lane.b32.xlu0 %v8437, 64
    %v8444 = vpop.permute.xlu0 %8443
    %v8446 = vmul.f32 %v8436, %v8444
    %8448 = vrot.lane.b32.xlu0 %v8446, 32
    %v8449 = vpop.permute.xlu0 %8448
    %v8451 = vadd.f32 %v8441, %v8449
    %v8452 = vtanh.pop %v8451
    %8454 = vrot.lane.b32.xlu0 %v8452, 64
    %v8455 = vpop.permute.xlu0 %8454
    %v8457 = vmul.f32 %v8436, %v8455
    %v8459 = vrot.slane %v8457, 6
    %8460 = vrot.lane.b32.xlu0 %v8459, 32
    %v8461 = vpop.permute.xlu0 %8460
    %v8462 = vsel %vm176, %v8461, 0
    %8464 = vmatprep.subr.mxu0 0.0
    %8465 = vmatpush1.msra.mxu0 %v6590
    %8466 = vmatprep.subr.mxu0 0.0
    %8467 = vmatpush1.msra.mxu0 %v6591
    %8468 = vmatprep.subr.mxu0 0.0
    %8469 = vmatpush1.msra.mxu0 %v6592
    %8470 = vmatprep.subr.mxu0 0.0
    %8471 = vmatpush1.msra.mxu0 %v6593
    %8472 = vmatprep.subr.mxu0 0.0
    %8473 = vmatpush1.msra.mxu0 0.0
    %8474 = vmatprep.subr.mxu0 0.0
    %8475 = vmatpush1.msra.mxu0 0.0
    %8476 = vmatprep.subr.mxu0 0.0
    %8477 = vmatpush1.msra.mxu0 0.0
    %8478 = vmatprep.subr.mxu0 0.0
    %8479 = vmatpush1.msra.mxu0 0.0
    %8480 = vmatprep.subr.mxu0 0.0
    %8481 = vmatpush1.msra.mxu0 0.0
    %8482 = vmatprep.subr.mxu0 0.0
    %8483 = vmatpush1.msra.mxu0 0.0
    %8484 = vmatprep.subr.mxu0 0.0
    %8485 = vmatpush1.msra.mxu0 0.0
    %8486 = vmatprep.subr.mxu0 0.0
    %8487 = vmatpush1.msra.mxu0 0.0
    %8488 = vmatprep.subr.mxu0 0.0
    %8489 = vmatpush1.msra.mxu0 0.0
    %8490 = vmatprep.subr.mxu0 0.0
    %8491 = vmatpush1.msra.mxu0 0.0
    %8492 = vmatprep.subr.mxu0 0.0
    %8493 = vmatpush1.msra.mxu0 0.0
    %8494 = vmatprep.subr.mxu0 0.0
    %8495 = vmatpush1.msra.mxu0 0.0
    %8496 = vmatprep.subr.mxu0 0.0
    %8497 = vmatpush1.msra.mxu0 0.0
    %8498 = vmatprep.subr.mxu0 0.0
    %8499 = vmatpush1.msra.mxu0 0.0
    %8500 = vmatprep.subr.mxu0 0.0
    %8501 = vmatpush1.msra.mxu0 0.0
    %8502 = vmatprep.subr.mxu0 0.0
    %8503 = vmatpush1.msra.mxu0 0.0
    %8504 = vmatprep.subr.mxu0 0.0
    %8505 = vmatpush1.msra.mxu0 0.0
    %8506 = vmatprep.subr.mxu0 0.0
    %8507 = vmatpush1.msra.mxu0 0.0
    %8508 = vmatprep.subr.mxu0 0.0
    %8509 = vmatpush1.msra.mxu0 0.0
    %8510 = vmatprep.subr.mxu0 0.0
    %8511 = vmatpush1.msra.mxu0 0.0
    %8512 = vmatprep.subr.mxu0 0.0
    %8513 = vmatpush1.msra.mxu0 0.0
    %8514 = vmatprep.subr.mxu0 0.0
    %8515 = vmatpush1.msra.mxu0 0.0
    %8516 = vmatprep.subr.mxu0 0.0
    %8517 = vmatpush1.msra.mxu0 0.0
    %8518 = vmatprep.subr.mxu0 0.0
    %8519 = vmatpush1.msra.mxu0 0.0
    %8520 = vmatprep.subr.mxu0 0.0
    %8521 = vmatpush1.msra.mxu0 0.0
    %8522 = vmatprep.subr.mxu0 0.0
    %8523 = vmatpush1.msra.mxu0 0.0
    %8524 = vmatprep.subr.mxu0 0.0
    %8525 = vmatpush1.msra.mxu0 0.0
    %8526 = vmatprep.subr.mxu0 0.0
    %8527 = vmatpush1.msra.mxu0 0.0
    %8528 = vmatprep.mubr.f32.mxu0 0.0
    %8529 = vmatmul.mubr.f32.gmra.mrb[0].mxu0 %v8462
    %v8530 = vpop.f32.mrb[0].mxu0
    %v8531 = vadd.f32 0.0, %v8530
    %v8532 = vpop.f32.mrb[0].mxu0
    %8533 = vdwg.mxu0
    %v8535 = vrot.slane %v8531, 1
    %v8537 = vadd.f32 %v6586, %v8535
    %v8538 = vxor.u32 %v8537, 2147483648
    %v8539 = vmul.f32 %v8538, 1.442695
    %v8540 = vpow.pop %v8539
    %v8541 = vadd.f32 %v8540, 1.0
    %v8542 = vrcp.pop %v8541
    %v8543 = vmul.f32 1.0, %v8542
    %v8544 = vtanh.pop %v8537
    %v8546 = vrot.slane %v8451, 7
    %v8548 = vmul.f32 %v8543, %v8546
    %8550 = vrot.lane.b32.xlu0 %v8544, 64
    %v8551 = vpop.permute.xlu0 %8550
    %v8553 = vmul.f32 %v8543, %v8551
    %8555 = vrot.lane.b32.xlu0 %v8553, 32
    %v8556 = vpop.permute.xlu0 %8555
    %v8558 = vadd.f32 %v8548, %v8556
    %v8559 = vtanh.pop %v8558
    %8561 = vrot.lane.b32.xlu0 %v8559, 64
    %v8562 = vpop.permute.xlu0 %8561
    %v8564 = vmul.f32 %v8543, %v8562
    %v8565 = vsel %vm7445, %v7816, %v7922
    %v8566 = vsel %vm7447, %v8565, %v8029
    %v8567 = vsel %vm89, %v8566, %v8136
    %v8568 = vsel %vm7450, %v8567, %v8243
    %v8569 = vsel %vm7452, %v8568, %v8350
    %v8570 = vsel %vm7454, %v8569, %v8457
    %v8571 = vsel %vm7456, %v8570, %v8564
    %8573 = vrot.lane.b32.xlu0 %v8571, 32
    %v8574 = vpop.permute.xlu0 %8573
    %v8575 = vsel %vm176, %v8574, 0
    %8577 = vmatprep.subr.mxu0 0.0
    %8578 = vmatpush1.msra.mxu0 %v6595
    %8579 = vmatprep.subr.mxu0 0.0
    %8580 = vmatpush1.msra.mxu0 %v6596
    %8581 = vmatprep.subr.mxu0 0.0
    %8582 = vmatpush1.msra.mxu0 %v6597
    %8583 = vmatprep.subr.mxu0 0.0
    %8584 = vmatpush1.msra.mxu0 %v6598
    %8585 = vmatprep.subr.mxu0 0.0
    %8586 = vmatpush1.msra.mxu0 0.0
    %8587 = vmatprep.subr.mxu0 0.0
    %8588 = vmatpush1.msra.mxu0 0.0
    %8589 = vmatprep.subr.mxu0 0.0
    %8590 = vmatpush1.msra.mxu0 0.0
    %8591 = vmatprep.subr.mxu0 0.0
    %8592 = vmatpush1.msra.mxu0 0.0
    %8593 = vmatprep.subr.mxu0 0.0
    %8594 = vmatpush1.msra.mxu0 0.0
    %8595 = vmatprep.subr.mxu0 0.0
    %8596 = vmatpush1.msra.mxu0 0.0
    %8597 = vmatprep.subr.mxu0 0.0
    %8598 = vmatpush1.msra.mxu0 0.0
    %8599 = vmatprep.subr.mxu0 0.0
    %8600 = vmatpush1.msra.mxu0 0.0
    %8601 = vmatprep.subr.mxu0 0.0
    %8602 = vmatpush1.msra.mxu0 0.0
    %8603 = vmatprep.subr.mxu0 0.0
    %8604 = vmatpush1.msra.mxu0 0.0
    %8605 = vmatprep.subr.mxu0 0.0
    %8606 = vmatpush1.msra.mxu0 0.0
    %8607 = vmatprep.subr.mxu0 0.0
    %8608 = vmatpush1.msra.mxu0 0.0
    %8609 = vmatprep.subr.mxu0 0.0
    %8610 = vmatpush1.msra.mxu0 0.0
    %8611 = vmatprep.subr.mxu0 0.0
    %8612 = vmatpush1.msra.mxu0 0.0
    %8613 = vmatprep.subr.mxu0 0.0
    %8614 = vmatpush1.msra.mxu0 0.0
    %8615 = vmatprep.subr.mxu0 0.0
    %8616 = vmatpush1.msra.mxu0 0.0
    %8617 = vmatprep.subr.mxu0 0.0
    %8618 = vmatpush1.msra.mxu0 0.0
    %8619 = vmatprep.subr.mxu0 0.0
    %8620 = vmatpush1.msra.mxu0 0.0
    %8621 = vmatprep.subr.mxu0 0.0
    %8622 = vmatpush1.msra.mxu0 0.0
    %8623 = vmatprep.subr.mxu0 0.0
    %8624 = vmatpush1.msra.mxu0 0.0
    %8625 = vmatprep.subr.mxu0 0.0
    %8626 = vmatpush1.msra.mxu0 0.0
    %8627 = vmatprep.subr.mxu0 0.0
    %8628 = vmatpush1.msra.mxu0 0.0
    %8629 = vmatprep.subr.mxu0 0.0
    %8630 = vmatpush1.msra.mxu0 0.0
    %8631 = vmatprep.subr.mxu0 0.0
    %8632 = vmatpush1.msra.mxu0 0.0
    %8633 = vmatprep.subr.mxu0 0.0
    %8634 = vmatpush1.msra.mxu0 0.0
    %8635 = vmatprep.subr.mxu0 0.0
    %8636 = vmatpush1.msra.mxu0 0.0
    %8637 = vmatprep.subr.mxu0 0.0
    %8638 = vmatpush1.msra.mxu0 0.0
    %8639 = vmatprep.subr.mxu0 0.0
    %8640 = vmatpush1.msra.mxu0 0.0
    %8641 = vmatprep.mubr.f32.mxu0 0.0
    %8642 = vmatmul.mubr.f32.gmra.mrb[0].mxu0 %v8575
    %v8643 = vpop.f32.mrb[0].mxu0
    %v8644 = vadd.f32 %v7461, %v8643
    %v8645 = vpop.f32.mrb[0].mxu0
    %8646 = vdwg.mxu0
    %v8647 = vsel %vm336, %v8644, -inf
    %8648 = vmax.xlane.f32.xlu0 %v8647
    %v8649 = vpop.xlane.xlu0 %8648
    %v8650 = vsub.f32 %v8644, %v8649
    %v8651 = vmul.f32 %v8650, 1.442695
    %v8652 = vpow.pop %v8651
    %v8653 = vsel %vm336, %v8652, 0.0
    %8654 = vadd.xlane.f32.xlu0 %v8653
    %v8655 = vpop.xlane.xlu0 %8654
    %v8656 = vrcp.pop %v8655
    %v8657 = vmul.f32 %v8652, %v8656
    %8658 = vxpose.xlu0.b32.start [1/16] %v8657, 128
    %8659 = vxpose.xlu0.b32.cont [2/16] 0.0, 128
    %8660 = vxpose.xlu0.b32.cont [3/16] 0.0, 128
    %8661 = vxpose.xlu0.b32.cont [4/16] 0.0, 128
    %8662 = vxpose.xlu0.b32.cont [5/16] 0.0, 128
    %8663 = vxpose.xlu0.b32.cont [6/16] 0.0, 128
    %8664 = vxpose.xlu0.b32.cont [7/16] 0.0, 128
    %8665 = vxpose.xlu0.b32.cont [8/16] 0.0, 128
    %8666 = vxpose.xlu0.b32.cont [9/16] 0.0, 128
    %8667 = vxpose.xlu0.b32.cont [10/16] 0.0, 128
    %8668 = vxpose.xlu0.b32.cont [11/16] 0.0, 128
    %8669 = vxpose.xlu0.b32.cont [12/16] 0.0, 128
    %8670 = vxpose.xlu0.b32.cont [13/16] 0.0, 128
    %8671 = vxpose.xlu0.b32.cont [14/16] 0.0, 128
    %8672 = vxpose.xlu0.b32.cont [15/16] 0.0, 128
    %8673 = vxpose.xlu0.b32.end [16/16] 0.0, 128
    %v8674 = vpop.trf.xlu0
    %v8675 = vpop.trf.xlu0
    %v8676 = vpop.trf.xlu0
    %v8677 = vpop.trf.xlu0
    %v8678 = vpop.trf.xlu0
    %v8679 = vpop.trf.xlu0
    %v8680 = vpop.trf.xlu0
    %v8681 = vpop.trf.xlu0
    %v8682 = vpop.trf.xlu0
    %v8683 = vpop.trf.xlu0
    %v8684 = vpop.trf.xlu0
    %v8685 = vpop.trf.xlu0
    %v8686 = vpop.trf.xlu0
    %v8687 = vpop.trf.xlu0
    %v8688 = vpop.trf.xlu0
    %v8689 = vpop.trf.xlu0
    %v8690 = vsel %vm336, %v8674, 0.0
    %8691 = vadd.xlane.f32.xlu0 %v8690
    %v8692 = vpop.xlane.xlu0 %8691
    %v8695 = vsel %vm336, %v8674, 0
    %8697 = vmatprep.subr.mxu0 0.0
    %8698 = vmatpush1.msra.mxu0 %v8574
    %8699 = vmatprep.subr.mxu0 0.0
    %8700 = vmatpush1.msra.mxu0 0.0
    %8701 = vmatprep.subr.mxu0 0.0
    %8702 = vmatpush1.msra.mxu0 0.0
    %8703 = vmatprep.subr.mxu0 0.0
    %8704 = vmatpush1.msra.mxu0 0.0
    %8705 = vmatprep.subr.mxu0 0.0
    %8706 = vmatpush1.msra.mxu0 0.0
    %8707 = vmatprep.subr.mxu0 0.0
    %8708 = vmatpush1.msra.mxu0 0.0
    %8709 = vmatprep.subr.mxu0 0.0
    %8710 = vmatpush1.msra.mxu0 0.0
    %8711 = vmatprep.subr.mxu0 0.0
    %8712 = vmatpush1.msra.mxu0 0.0
    %8713 = vmatprep.subr.mxu0 0.0
    %8714 = vmatpush1.msra.mxu0 0.0
    %8715 = vmatprep.subr.mxu0 0.0
    %8716 = vmatpush1.msra.mxu0 0.0
    %8717 = vmatprep.subr.mxu0 0.0
    %8718 = vmatpush1.msra.mxu0 0.0
    %8719 = vmatprep.subr.mxu0 0.0
    %8720 = vmatpush1.msra.mxu0 0.0
    %8721 = vmatprep.subr.mxu0 0.0
    %8722 = vmatpush1.msra.mxu0 0.0
    %8723 = vmatprep.subr.mxu0 0.0
    %8724 = vmatpush1.msra.mxu0 0.0
    %8725 = vmatprep.subr.mxu0 0.0
    %8726 = vmatpush1.msra.mxu0 0.0
    %8727 = vmatprep.subr.mxu0 0.0
    %8728 = vmatpush1.msra.mxu0 0.0
    %8729 = vmatprep.subr.mxu0 0.0
    %8730 = vmatpush1.msra.mxu0 0.0
    %8731 = vmatprep.subr.mxu0 0.0
    %8732 = vmatpush1.msra.mxu0 0.0
    %8733 = vmatprep.subr.mxu0 0.0
    %8734 = vmatpush1.msra.mxu0 0.0
    %8735 = vmatprep.subr.mxu0 0.0
    %8736 = vmatpush1.msra.mxu0 0.0
    %8737 = vmatprep.subr.mxu0 0.0
    %8738 = vmatpush1.msra.mxu0 0.0
    %8739 = vmatprep.subr.mxu0 0.0
    %8740 = vmatpush1.msra.mxu0 0.0
    %8741 = vmatprep.subr.mxu0 0.0
    %8742 = vmatpush1.msra.mxu0 0.0
    %8743 = vmatprep.subr.mxu0 0.0
    %8744 = vmatpush1.msra.mxu0 0.0
    %8745 = vmatprep.subr.mxu0 0.0
    %8746 = vmatpush1.msra.mxu0 0.0
    %8747 = vmatprep.subr.mxu0 0.0
    %8748 = vmatpush1.msra.mxu0 0.0
    %8749 = vmatprep.subr.mxu0 0.0
    %8750 = vmatpush1.msra.mxu0 0.0
    %8751 = vmatprep.subr.mxu0 0.0
    %8752 = vmatpush1.msra.mxu0 0.0
    %8753 = vmatprep.subr.mxu0 0.0
    %8754 = vmatpush1.msra.mxu0 0.0
    %8755 = vmatprep.subr.mxu0 0.0
    %8756 = vmatpush1.msra.mxu0 0.0
    %8757 = vmatprep.subr.mxu0 0.0
    %8758 = vmatpush1.msra.mxu0 0.0
    %8759 = vmatprep.subr.mxu0 0.0
    %8760 = vmatpush1.msra.mxu0 0.0
    %8761 = vmatprep.mubr.f32.mxu0 0.0
    %8762 = vmatmul.mubr.f32.gmra.mrb[0].mxu0 %v8695
    %v8763 = vpop.f32.mrb[0].mxu0
    %v8764 = vadd.f32 0.0, %v8763
    %v8765 = vpop.f32.mrb[0].mxu0
    %8766 = vdwg.mxu0
    %v8767 = vmul.f32 %v24, %v8692
    %v8768 = vsub.f32 %v8764, %v8767
    %v8769 = vmul.f32 %v8768, %v8768
    %v8770 = vsel %vm176, %v8769, 0.0
    %8771 = vadd.xlane.f32.xlu0 %v8770
    %v8772 = vpop.xlane.xlu0 %8771
    %v8773 = vrot.slane %v8772, 4
    %v8774 = vadd.f32 %v8772, %v8773
    %v8775 = vrot.slane %v8774, 2
    %v8776 = vadd.f32 %v8774, %v8775
    %v8777 = vrot.slane %v8776, 1
    %v8778 = vadd.f32 %v8776, %v8777
    %s8779 = vtos %v8778
    %v8780 = vstv %s8779
    %v8781 = vrsqrt.pop %v8780
    %v8782 = vmul.f32 %v8780, %v8781
    %vm8783 = vcmp.eq.f32.partialorder %v8780, inf
    %v8784 = vsel %vm8783, %v8780, %v8782
    %vm8785 = vcmp.eq.f32.partialorder %v8780, 0.0
    %v8786 = vand.u32 %v8780, 2147483648
    %v8787 = vsel %vm8785, %v8786, %v8784
    %v8788 = vmax.f32 %v8787, 1e-12
    %v8789 = vrcp.pop %v8788
    %v8790 = vmul.f32 1.0, %v8789
    %v8792 = vrot.slane %v8768, 1
    %8793 = vrot.lane.b32.xlu0 %v8792, 32
    %v8794 = vpop.permute.xlu0 %8793
    %v8796 = vrot.slane %v8768, 2
    %8797 = vrot.lane.b32.xlu0 %v8796, 64
    %v8798 = vpop.permute.xlu0 %8797
    %v8800 = vrot.slane %v8768, 3
    %8801 = vrot.lane.b32.xlu0 %v8800, 96
    %v8802 = vpop.permute.xlu0 %8801
    %v8804 = vrot.slane %v8768, 4
    %v8806 = vrot.slane %v8768, 5
    %8807 = vrot.lane.b32.xlu0 %v8806, 32
    %v8808 = vpop.permute.xlu0 %8807
    %v8810 = vrot.slane %v8768, 6
    %8811 = vrot.lane.b32.xlu0 %v8810, 64
    %v8812 = vpop.permute.xlu0 %8811
    %v8814 = vrot.slane %v8768, 7
    %8815 = vrot.lane.b32.xlu0 %v8814, 96
    %v8816 = vpop.permute.xlu0 %8815
    %v8818 = vsel %vm176, %v8768, %v8794
    %v8819 = vsel %vm3200, %v8818, %v8798
    %v8820 = vsel %vm7710, %v8819, %v8802
    %v8821 = vsel %vm176, %v8804, %v8808
    %v8822 = vsel %vm3200, %v8821, %v8812
    %v8823 = vsel %vm7710, %v8822, %v8816
    %8824 = vmatprep.subr.mxu0 %v36
    %8825 = vmatpush1.xpose.msra.mxu0 %v35
    %8826 = vmatprep.subr.mxu0 0.0
    %8827 = vmatpush1.xpose.msra.mxu0 0.0
    %8828 = vmatprep.subr.mxu0 0.0
    %8829 = vmatpush1.xpose.msra.mxu0 0.0
    %8830 = vmatprep.subr.mxu0 0.0
    %8831 = vmatpush1.xpose.msra.mxu0 0.0
    %8832 = vmatprep.subr.mxu0 0.0
    %8833 = vmatpush1.xpose.msra.mxu0 0.0
    %8834 = vmatprep.subr.mxu0 0.0
    %8835 = vmatpush1.xpose.msra.mxu0 0.0
    %8836 = vmatprep.subr.mxu0 0.0
    %8837 = vmatpush1.xpose.msra.mxu0 0.0
    %8838 = vmatprep.subr.mxu0 0.0
    %8839 = vmatpush1.xpose.msra.mxu0 0.0
    %8840 = vmatprep.subr.mxu0 0.0
    %8841 = vmatpush1.xpose.msra.mxu0 0.0
    %8842 = vmatprep.subr.mxu0 0.0
    %8843 = vmatpush1.xpose.msra.mxu0 0.0
    %8844 = vmatprep.subr.mxu0 0.0
    %8845 = vmatpush1.xpose.msra.mxu0 0.0
    %8846 = vmatprep.subr.mxu0 0.0
    %8847 = vmatpush1.xpose.msra.mxu0 0.0
    %8848 = vmatprep.subr.mxu0 0.0
    %8849 = vmatpush1.xpose.msra.mxu0 0.0
    %8850 = vmatprep.subr.mxu0 0.0
    %8851 = vmatpush1.xpose.msra.mxu0 0.0
    %8852 = vmatprep.subr.mxu0 0.0
    %8853 = vmatpush1.xpose.msra.mxu0 0.0
    %8854 = vmatprep.subr.mxu0 0.0
    %8855 = vmatpush1.xpose.msra.mxu0 0.0
    %8856 = vmatprep.subr.mxu0 0.0
    %8857 = vmatpush1.xpose.msra.mxu0 0.0
    %8858 = vmatprep.subr.mxu0 0.0
    %8859 = vmatpush1.xpose.msra.mxu0 0.0
    %8860 = vmatprep.subr.mxu0 0.0
    %8861 = vmatpush1.xpose.msra.mxu0 0.0
    %8862 = vmatprep.subr.mxu0 0.0
    %8863 = vmatpush1.xpose.msra.mxu0 0.0
    %8864 = vmatprep.subr.mxu0 0.0
    %8865 = vmatpush1.xpose.msra.mxu0 0.0
    %8866 = vmatprep.subr.mxu0 0.0
    %8867 = vmatpush1.xpose.msra.mxu0 0.0
    %8868 = vmatprep.subr.mxu0 0.0
    %8869 = vmatpush1.xpose.msra.mxu0 0.0
    %8870 = vmatprep.subr.mxu0 0.0
    %8871 = vmatpush1.xpose.msra.mxu0 0.0
    %8872 = vmatprep.subr.mxu0 0.0
    %8873 = vmatpush1.xpose.msra.mxu0 0.0
    %8874 = vmatprep.subr.mxu0 0.0
    %8875 = vmatpush1.xpose.msra.mxu0 0.0
    %8876 = vmatprep.subr.mxu0 0.0
    %8877 = vmatpush1.xpose.msra.mxu0 0.0
    %8878 = vmatprep.subr.mxu0 0.0
    %8879 = vmatpush1.xpose.msra.mxu0 0.0
    %8880 = vmatprep.subr.mxu0 0.0
    %8881 = vmatpush1.xpose.msra.mxu0 0.0
    %8882 = vmatprep.subr.mxu0 0.0
    %8883 = vmatpush1.xpose.msra.mxu0 0.0
    %8884 = vmatprep.subr.mxu0 0.0
    %8885 = vmatpush1.xpose.msra.mxu0 0.0
    %8886 = vmatprep.subr.mxu0 0.0
    %8887 = vmatpush1.xpose.msra.mxu0 0.0
    %8888 = vmatprep.mubr.f32.mxu0 %v8823
    %8889 = vmatmul.mubr.f32.gmra.mrb[0].mxu0 %v8820
    %v8890 = vpop.f32.mrb[0].mxu0
    %v8891 = vadd.f32 0.0, %v8890
    %v8892 = vpop.f32.mrb[0].mxu0
    %8893 = vdwg.mxu0
    %v8894 = vmul.f32 %v8891, %v8790
    %v8895 = vadd.f32 %v8894, %v7787
    %s8896 = scalar_lea.vmem [#allocation2], 1
    %8897 = vst.msk [vmem:[%s8896] sm:$0x1] %vm7790, %v8895
    // Predicated region
    $region22: #{hybrid_forward.1} parent=1 // pred_check
      _
    $region23: #{hybrid_forward.1} parent=1 // pred_check_branch
      %8899 = sbr.rel (0) target = $region25
    $region24: #{hybrid_forward.1} parent=1 // pred_region
      %s8901 = ssub.s32 32, 32
      %8902 = vsyncadd [#allocation3], %s8901
      %s8903 = sshll.u32 [#allocation2], 4
      %s8904 = int_to_ptr.vmem [resolvable:$true] %s8903
      %8909 = dma.vmem_to_hbm [thread:$0]  %s8904, 32, %s5, [#allocation3], 16, 16, 1
    $region25: #{hybrid_forward.1} parent=1 // pred_fallthru
      _
    // Predicated region
    $region26: #{hybrid_forward.1} parent=1 // pred_check
      _
    $region27: #{hybrid_forward.1} parent=1 // pred_check_branch
      %8911 = sbr.rel (0) target = $region29
    $region28: #{hybrid_forward.1} parent=1 // pred_region
      %8912 = dma.done [#allocation3], 32
    $region29: #{hybrid_forward.1} parent=1 // pred_fallthru
      _
    %8913 = vsyncpa [#allocation3], 1

</llo_original>
